<compile_context>
chip_gen: v7x
topology: tpu7x:2x2x1
jax: 0.10.0
libtpu: 0.0.40
codegen_flags: <defaults>
</compile_context>

<pallas_src>
import functools

import jax
import jax.numpy as jnp
from jax import lax
from jax.experimental import pallas as pl
from jax.experimental.pallas import tpu as pltpu


# ---------------------------------------------------------------------------
# Fused kernel: pre_conv -> (pos) -> attention -> final_conv, one batch element
# per grid step.
# ---------------------------------------------------------------------------
def _fused_attention_layer_kernel(*refs, qk_pad, has_pos):
    if has_pos:
        (x_ref, pos_ref, pre_w_ref, pre_s_ref, pre_b_ref, wqkv_ref, bqkv_ref,
         g_ref, fin_wT_ref, fin_s_ref, fin_b_ref, o_ref, xp1_scr, xp2_scr) = refs
    else:
        (x_ref, pre_w_ref, pre_s_ref, pre_b_ref, wqkv_ref, bqkv_ref,
         g_ref, fin_wT_ref, fin_s_ref, fin_b_ref, o_ref, xp1_scr, xp2_scr) = refs
        pos_ref = None

    H, W = x_ref.shape[1], x_ref.shape[2]
    HW = H * W
    C = wqkv_ref.shape[0]
    bf16, f32 = jnp.bfloat16, jnp.float32

    def fill_halo(xp_scr, x_hwc_bf16):
        """Write the (H,W,Cc) bf16 activation into the scratch interior; zero only
        the 1-pixel border strips (not the whole scratch)."""
        Cc = xp_scr.shape[-1]
        xp_scr[0:1, :, :] = jnp.zeros((1, W + 2, Cc), bf16)
        xp_scr[H + 1:H + 2, :, :] = jnp.zeros((1, W + 2, Cc), bf16)
        xp_scr[:, 0:1, :] = jnp.zeros((H + 2, 1, Cc), bf16)
        xp_scr[:, W + 1:W + 2, :] = jnp.zeros((H + 2, 1, Cc), bf16)
        xp_scr[1:H + 1, 1:W + 1, :] = x_hwc_bf16

    def patches(xp_scr):
        """Yield the 9 shifted (HW, Cc) bf16 views of the halo scratch."""
        Cc = xp_scr.shape[-1]
        for dh in range(3):
            for dw in range(3):
                yield xp_scr[dh:dh + H, dw:dw + W, :].reshape(HW, Cc)

    # ---- stage 1: pre_conv (3x3 + folded BN + ReLU) -> (HW, C) --------------
    fill_halo(xp1_scr, x_ref[0].astype(bf16))
    acc = jnp.zeros((HW, C), f32)
    for t, patch in enumerate(patches(xp1_scr)):
        acc = acc + jnp.dot(patch, pre_w_ref[t], preferred_element_type=f32)
    x = jnp.maximum(acc * pre_s_ref[...] + pre_b_ref[...], 0.0)   # f32 (HW, C)

    if has_pos:
        x = x + pos_ref[0].reshape(HW, C)

    # ---- stage 2: position attention -----------------------------------------
    # Fused QKV 1x1 conv; wq/wk are zero-padded to 128 columns -> q/k are
    # lane-aligned 128-wide slabs, v starts at a 128-aligned offset.
    qkv = jnp.dot(x.astype(bf16), wqkv_ref[...],
                  preferred_element_type=f32) + bqkv_ref[...]     # (HW, 2*128 + C)
    q = qkv[:, :qk_pad]
    key = qkv[:, qk_pad:2 * qk_pad]
    v = qkv[:, 2 * qk_pad:]
    energy = lax.dot_general(q.astype(bf16), key.astype(bf16),
                             (((1,), (1,)), ((), ())),
                             preferred_element_type=f32)          # (HW, HW)
    m = jnp.max(energy, axis=-1, keepdims=True)
    p = jnp.exp(energy - m)
    # NOTE: approx reciprocal -> attention rows don't sum to exactly 1 (within bf16 noise).
    attn = p * pl.reciprocal(jnp.sum(p, axis=-1, keepdims=True), approx=True)
    out = jnp.dot(attn.astype(bf16), v.astype(bf16),
                  preferred_element_type=f32)                     # (HW, C)
    feat = g_ref[0, 0] * out + x                                  # gamma*out + x

    # ---- stage 3: final_conv, computed transposed -> (C, HW), lane-dense ----
    fill_halo(xp2_scr, feat.reshape(H, W, C).astype(bf16))
    acc_t = jnp.zeros((C, HW), f32)
    for t, patch in enumerate(patches(xp2_scr)):
        # fin_wT_ref[t]: (Cout, Cin); contract both operands on their channel dim.
        acc_t = acc_t + lax.dot_general(fin_wT_ref[t], patch,
                                        (((1,), (1,)), ((), ())),
                                        preferred_element_type=f32)
    y_t = jnp.maximum(acc_t * fin_s_ref[...] + fin_b_ref[...], 0.0)  # (C, HW) f32
    o_ref[0] = y_t                                                # dense 256-lane store


# ---------------------------------------------------------------------------
# Parameter folding / packing (done once, outside the kernel)
# ---------------------------------------------------------------------------
def _fold_bn(bn_gamma, bn_beta, bn_mean, bn_var, eps=1e-5):
    scale = bn_gamma / jnp.sqrt(bn_var + eps)
    shift = bn_beta - bn_mean * scale
    return scale, shift


def pack_params(raw):
    cin = raw["pre_w"].shape[2]
    c = raw["pre_w"].shape[3]
    qk = raw["wq"].shape[1]
    qk_pad = ((qk + 127) // 128) * 128           # pad q/k slabs to full 128 lanes

    pre_scale, pre_shift = _fold_bn(raw["pre_bn_gamma"], raw["pre_bn_beta"],
                                    raw["pre_bn_mean"], raw["pre_bn_var"])
    fin_scale, fin_shift = _fold_bn(raw["final_bn_gamma"], raw["final_bn_beta"],
                                    raw["final_bn_mean"], raw["final_bn_var"])

    wq_p = jnp.zeros((c, qk_pad), jnp.float32).at[:, :qk].set(raw["wq"])
    wk_p = jnp.zeros((c, qk_pad), jnp.float32).at[:, :qk].set(raw["wk"])
    bq_p = jnp.zeros((qk_pad,), jnp.float32).at[:qk].set(raw["bq"])
    bk_p = jnp.zeros((qk_pad,), jnp.float32).at[:qk].set(raw["bk"])

    return dict(
        # pre conv: per-tap (Cin, Cout) -> standard orientation
        pre_w=raw["pre_w"].reshape(9, cin, c).astype(jnp.bfloat16),
        pre_scale=pre_scale.reshape(1, c).astype(jnp.float32),
        pre_shift=pre_shift.reshape(1, c).astype(jnp.float32),
        wqkv=jnp.concatenate([wq_p, wk_p, raw["wv"]], axis=1).astype(jnp.bfloat16),
        bqkv=jnp.concatenate([bq_p, bk_p, raw["bv"]]).reshape(1, -1).astype(jnp.float32),
        gamma=raw["gamma"].reshape(1, 1).astype(jnp.float32),
        # final conv: per-tap transposed (Cout, Cin) so the kernel accumulates (C, HW)
        fin_wT=jnp.transpose(raw["final_w"].reshape(9, c, c), (0, 2, 1)).astype(jnp.bfloat16),
        fin_scale=fin_scale.reshape(c, 1).astype(jnp.float32),
        fin_shift=fin_shift.reshape(c, 1).astype(jnp.float32),
    )


# ---------------------------------------------------------------------------
# Public forward: NCHW in, NCHW out (like the PyTorch module)
# ---------------------------------------------------------------------------
def attention_layer_forward(x_nchw, packed, pos_nchw=None):
    # TODO(synk): accept NHWC x/pos directly at production sizes to drop these
    # input-side HBM transpose passes (output side is already transpose-free).
    x = jnp.transpose(x_nchw, (0, 2, 3, 1)).astype(jnp.float32)   # NCHW -> NHWC
    B, H, W, Cin = x.shape
    C = packed["pre_w"].shape[2]
    qk_pad = (packed["wqkv"].shape[1] - C) // 2
    has_pos = pos_nchw is not None

    inputs = [x]
    in_specs = [pl.BlockSpec((1, H, W, Cin), lambda b: (b, 0, 0, 0))]
    if has_pos:
        pos = jnp.transpose(pos_nchw, (0, 2, 3, 1)).astype(jnp.float32)
        inputs.append(pos)
        in_specs.append(pl.BlockSpec((1, H, W, C), lambda b: (b, 0, 0, 0)))

    for name in ("pre_w", "pre_scale", "pre_shift", "wqkv", "bqkv"):
        arr = packed[name]
        inputs.append(arr)
        in_specs.append(pl.BlockSpec(arr.shape, lambda b, nd=arr.ndim: (0,) * nd))
    inputs.append(packed["gamma"])                                # scalar -> SMEM
    in_specs.append(pl.BlockSpec(memory_space=pltpu.MemorySpace.SMEM))
    for name in ("fin_wT", "fin_scale", "fin_shift"):
        arr = packed[name]
        inputs.append(arr)
        in_specs.append(pl.BlockSpec(arr.shape, lambda b, nd=arr.ndim: (0,) * nd))

    kernel = functools.partial(_fused_attention_layer_kernel,
                               qk_pad=qk_pad, has_pos=has_pos)

    out_cf = pl.pallas_call(
        kernel,
        out_shape=jax.ShapeDtypeStruct((B, C, H * W), jnp.float32),
        grid=(B,),
        in_specs=in_specs,
        out_specs=pl.BlockSpec((1, C, H * W), lambda b: (b, 0, 0)),
        scratch_shapes=[pltpu.VMEM((H + 2, W + 2, Cin), jnp.bfloat16),
                        pltpu.VMEM((H + 2, W + 2, C), jnp.bfloat16)],
        compiler_params=pltpu.CompilerParams(
            dimension_semantics=("parallel",),
            vmem_limit_bytes=32 * 1024 * 1024),
    )(*inputs)

    return out_cf.reshape(B, C, H, W)       # already channels-first: free reshape only


# ---------------------------------------------------------------------------
# Deterministic synthetic parameters (shapes per the PyTorch __init__)
# ---------------------------------------------------------------------------
def init_params(key, in_dim, out_dim, ratio=4):
    qk = out_dim // ratio
    ks = jax.random.split(key, 16)
    nrm = lambda k, shape, s=0.2: (s * jax.random.normal(k, shape)).astype(jnp.float32)
    return dict(
        pre_w=nrm(ks[0], (3, 3, in_dim, out_dim)),        # HWIO, bias folded into BN
        pre_bn_gamma=1.0 + nrm(ks[1], (out_dim,), 0.1),
        pre_bn_beta=nrm(ks[2], (out_dim,), 0.1),
        pre_bn_mean=nrm(ks[3], (out_dim,), 0.1),
        pre_bn_var=1.0 + jnp.abs(nrm(ks[4], (out_dim,), 0.1)),
        wq=nrm(ks[5], (out_dim, qk)), bq=nrm(ks[6], (qk,)),
        wk=nrm(ks[7], (out_dim, qk)), bk=nrm(ks[8], (qk,)),
        wv=nrm(ks[9], (out_dim, out_dim)), bv=nrm(ks[10], (out_dim,)),
        final_w=nrm(ks[11], (3, 3, out_dim, out_dim)),
        final_bn_gamma=1.0 + nrm(ks[12], (out_dim,), 0.1),
        final_bn_beta=nrm(ks[13], (out_dim,), 0.1),
        final_bn_mean=nrm(ks[14], (out_dim,), 0.1),
        final_bn_var=1.0 + jnp.abs(nrm(ks[15], (out_dim,), 0.1)),
        # PyTorch initializes gamma to 0; use a nonzero value so the attention
        # path actually contributes in this synthetic test.
        gamma=jnp.array(0.5, jnp.float32),
    )


# ---------------------------------------------------------------------------
# Pure-JAX reference (same bf16-at-the-dot / f32-accumulate policy as the kernel)
# ---------------------------------------------------------------------------
def ref_forward(x_nchw, raw, pos_nchw=None):
    f32, bf16 = jnp.float32, jnp.bfloat16

    def conv_bn_relu(x_nhwc, w_hwio, g, b, m, v):
        y = lax.conv_general_dilated(
            x_nhwc.astype(bf16), w_hwio.astype(bf16), (1, 1), ((1, 1), (1, 1)),
            dimension_numbers=("NHWC", "HWIO", "NHWC"),
            preferred_element_type=f32)
        scale = g / jnp.sqrt(v + 1e-5)
        shift = b - m * scale
        y = y * scale.reshape(1, 1, 1, -1) + shift.reshape(1, 1, 1, -1)
        return jnp.maximum(y, 0.0)

    x = jnp.transpose(x_nchw, (0, 2, 3, 1)).astype(f32)
    x = conv_bn_relu(x, raw["pre_w"], raw["pre_bn_gamma"], raw["pre_bn_beta"],
                     raw["pre_bn_mean"], raw["pre_bn_var"])
    if pos_nchw is not None:
        x = x + jnp.transpose(pos_nchw, (0, 2, 3, 1)).astype(f32)
    B, H, W, C = x.shape
    xf = x.reshape(B, H * W, C)
    xb = xf.astype(bf16)
    q = jnp.einsum("bic,cd->bid", xb, raw["wq"].astype(bf16),
                   preferred_element_type=f32) + raw["bq"]
    k = jnp.einsum("bic,cd->bid", xb, raw["wk"].astype(bf16),
                   preferred_element_type=f32) + raw["bk"]
    v = jnp.einsum("bic,cd->bid", xb, raw["wv"].astype(bf16),
                   preferred_element_type=f32) + raw["bv"]
    energy = jnp.einsum("bid,bjd->bij", q.astype(bf16), k.astype(bf16),
                        preferred_element_type=f32)
    attn = jax.nn.softmax(energy, axis=-1)
    out = jnp.einsum("bij,bjc->bic", attn.astype(bf16), v.astype(bf16),
                     preferred_element_type=f32)
    feat = (raw["gamma"] * out + xf).reshape(B, H, W, C)
    y = conv_bn_relu(feat, raw["final_w"], raw["final_bn_gamma"],
                     raw["final_bn_beta"], raw["final_bn_mean"],
                     raw["final_bn_var"])
    return jnp.transpose(y, (0, 3, 1, 2))


if __name__ == "__main__":
    key = jax.random.PRNGKey(0)
    kx, kp, kpos = jax.random.split(key, 3)

    B, in_dim, H, W = 2, 4, 16, 16
    out_dim, ratio = 32, 4

    x = jax.random.normal(kx, (B, in_dim, H, W), jnp.float32)     # NCHW (PyTorch)
    raw = init_params(kp, in_dim, out_dim, ratio)
    packed = pack_params(raw)

    def check(y, y_ref, tag):
        assert y.shape == y_ref.shape, (tag, y.shape, y_ref.shape)
        # normalized max error; slack covers approx-reciprocal + bf16 rounding
        err = float(jnp.max(jnp.abs(y - y_ref)) / (jnp.max(jnp.abs(y_ref)) + 1e-6))
        assert err < 2e-2, (tag, err)

    # without positional encoding
    y = jax.block_until_ready(attention_layer_forward(x, packed))
    assert y.shape == (B, out_dim, H, W), y.shape
    check(y, ref_forward(x, raw), "no_pos")

    # with positional encoding (pos supplied in NCHW, exactly like the PyTorch layer)
    pos = 0.1 * jax.random.normal(kpos, (B, out_dim, H, W), jnp.float32)
    y_pos = jax.block_until_ready(attention_layer_forward(x, packed, pos))
    check(y_pos, ref_forward(x, raw, pos), "pos")

    print("KERNEL_OK")
</pallas_src>

<mosaic_0001>
module attributes {stable_mosaic.version = 11 : i64} {
  func.func @_fused_attention_layer_kernel(%arg0: i32, %arg1: memref<1x16x16x4xf32, #tpu.memory_space<vmem>>, %arg2: memref<9x4x32xbf16, #tpu.memory_space<vmem>>, %arg3: memref<1x32xf32, #tpu.memory_space<vmem>>, %arg4: memref<1x32xf32, #tpu.memory_space<vmem>>, %arg5: memref<32x288xbf16, #tpu.memory_space<vmem>>, %arg6: memref<1x288xf32, #tpu.memory_space<vmem>>, %arg7: memref<1x1xf32, #tpu.memory_space<smem>>, %arg8: memref<9x32x32xbf16, #tpu.memory_space<vmem>>, %arg9: memref<32x1xf32, #tpu.memory_space<vmem>>, %arg10: memref<32x1xf32, #tpu.memory_space<vmem>>, %arg11: memref<1x32x256xf32, #tpu.memory_space<vmem>>, %arg12: memref<18x18x4xbf16, #tpu.memory_space<vmem>>, %arg13: memref<18x18x32xbf16, #tpu.memory_space<vmem>>) attributes {dimension_semantics = [#tpu.dimension_semantics<parallel>], iteration_bounds = array<i64: 2>, scalar_prefetch = 0 : i64, scratch_operands = 2 : i64, tpu.core_type = #tpu.core_type<tc>, window_params = [{transform_indices = @transform_0, window_bounds = array<i64: 1, 16, 16, 4>}, {pipeline_mode = #tpu.pipeline_mode<synchronous>, transform_indices = @transform_1, window_bounds = array<i64: 9, 4, 32>}, {pipeline_mode = #tpu.pipeline_mode<synchronous>, transform_indices = @transform_2, window_bounds = array<i64: 1, 32>}, {pipeline_mode = #tpu.pipeline_mode<synchronous>, transform_indices = @transform_3, window_bounds = array<i64: 1, 32>}, {pipeline_mode = #tpu.pipeline_mode<synchronous>, transform_indices = @transform_4, window_bounds = array<i64: 32, 288>}, {pipeline_mode = #tpu.pipeline_mode<synchronous>, transform_indices = @transform_5, window_bounds = array<i64: 1, 288>}, {transform_indices = @transform_6, window_bounds = array<i64: 1, 1>}, {pipeline_mode = #tpu.pipeline_mode<synchronous>, transform_indices = @transform_7, window_bounds = array<i64: 9, 32, 32>}, {pipeline_mode = #tpu.pipeline_mode<synchronous>, transform_indices = @transform_8, window_bounds = array<i64: 32, 1>}, {pipeline_mode = #tpu.pipeline_mode<synchronous>, transform_indices = @transform_9, window_bounds = array<i64: 32, 1>}, {transform_indices = @transform_10, window_bounds = array<i64: 1, 32, 256>}]} {
    %c0 = arith.constant 0 : index
    %c0_0 = arith.constant 0 : index
    %c0_1 = arith.constant 0 : index
    %c0_2 = arith.constant 0 : index
    %0 = vector.load %arg1[%c0, %c0_0, %c0_1, %c0_2] : memref<1x16x16x4xf32, #tpu.memory_space<vmem>>, vector<1x16x16x4xf32>
    %1 = vector.shape_cast %0 : vector<1x16x16x4xf32> to vector<16x16x4xf32>
    %2 = arith.truncf %1 : vector<16x16x4xf32> to vector<16x16x4xbf16>
    %cst = arith.constant 0.000000e+00 : bf16
    %3 = vector.broadcast %cst : bf16 to vector<1x18x4xbf16>
    %c0_3 = arith.constant 0 : index
    %c0_4 = arith.constant 0 : index
    %c0_5 = arith.constant 0 : index
    %4 = vector.load %arg12[%c0_3, %c0_4, %c0_5] : memref<18x18x4xbf16, #tpu.memory_space<vmem>>, vector<1x18x4xbf16>
    tpu.vector_store %arg12[%c0_3, %c0_4, %c0_5], %3 {strides = array<i32>} : memref<18x18x4xbf16, #tpu.memory_space<vmem>>, vector<1x18x4xbf16>,
    %cst_6 = arith.constant 0.000000e+00 : bf16
    %5 = vector.broadcast %cst_6 : bf16 to vector<1x18x4xbf16>
    %c17 = arith.constant 17 : index
    %c0_7 = arith.constant 0 : index
    %c0_8 = arith.constant 0 : index
    %6 = vector.load %arg12[%c17, %c0_7, %c0_8] : memref<18x18x4xbf16, #tpu.memory_space<vmem>>, vector<1x18x4xbf16>
    tpu.vector_store %arg12[%c17, %c0_7, %c0_8], %5 {strides = array<i32>} : memref<18x18x4xbf16, #tpu.memory_space<vmem>>, vector<1x18x4xbf16>,
    %cst_9 = arith.constant 0.000000e+00 : bf16
    %7 = vector.broadcast %cst_9 : bf16 to vector<18x1x4xbf16>
    %c0_10 = arith.constant 0 : index
    %c0_11 = arith.constant 0 : index
    %c0_12 = arith.constant 0 : index
    %8 = vector.load %arg12[%c0_10, %c0_11, %c0_12] : memref<18x18x4xbf16, #tpu.memory_space<vmem>>, vector<18x1x4xbf16>
    tpu.vector_store %arg12[%c0_10, %c0_11, %c0_12], %7 {strides = array<i32>} : memref<18x18x4xbf16, #tpu.memory_space<vmem>>, vector<18x1x4xbf16>,
    %cst_13 = arith.constant 0.000000e+00 : bf16
    %9 = vector.broadcast %cst_13 : bf16 to vector<18x1x4xbf16>
    %c0_14 = arith.constant 0 : index
    %c17_15 = arith.constant 17 : index
    %c0_16 = arith.constant 0 : index
    %10 = vector.load %arg12[%c0_14, %c17_15, %c0_16] : memref<18x18x4xbf16, #tpu.memory_space<vmem>>, vector<18x1x4xbf16>
    tpu.vector_store %arg12[%c0_14, %c17_15, %c0_16], %9 {strides = array<i32>} : memref<18x18x4xbf16, #tpu.memory_space<vmem>>, vector<18x1x4xbf16>,
    %c1 = arith.constant 1 : index
    %c1_17 = arith.constant 1 : index
    %c0_18 = arith.constant 0 : index
    %11 = vector.load %arg12[%c1, %c1_17, %c0_18] : memref<18x18x4xbf16, #tpu.memory_space<vmem>>, vector<16x16x4xbf16>
    tpu.vector_store %arg12[%c1, %c1_17, %c0_18], %2 {strides = array<i32>} : memref<18x18x4xbf16, #tpu.memory_space<vmem>>, vector<16x16x4xbf16>,
    %cst_19 = arith.constant 0.000000e+00 : f32
    %12 = vector.broadcast %cst_19 : f32 to vector<256x32xf32>
    %c0_20 = arith.constant 0 : index
    %c0_21 = arith.constant 0 : index
    %c0_22 = arith.constant 0 : index
    %13 = vector.load %arg12[%c0_20, %c0_21, %c0_22] : memref<18x18x4xbf16, #tpu.memory_space<vmem>>, vector<16x16x4xbf16>
    %14 = vector.shape_cast %13 : vector<16x16x4xbf16> to vector<256x4xbf16>
    %c0_23 = arith.constant 0 : index
    %c0_24 = arith.constant 0 : index
    %c0_25 = arith.constant 0 : index
    %15 = vector.load %arg2[%c0_23, %c0_24, %c0_25] : memref<9x4x32xbf16, #tpu.memory_space<vmem>>, vector<1x4x32xbf16>
    %16 = vector.shape_cast %15 : vector<1x4x32xbf16> to vector<4x32xbf16>
    %cst_26 = arith.constant dense<0.000000e+00> : vector<256x32xf32>
    %17 = tpu.matmul %14, %16, %cst_26 {dimension_numbers = #tpu.dot_dimension_numbers<[1], [0], [0], [1], [0, 0, 1, 1], [], []>} : vector<256x4xbf16>, vector<4x32xbf16>, vector<256x32xf32> -> vector<256x32xf32>
    %18 = arith.addf %12, %17 : vector<256x32xf32>
    %c0_27 = arith.constant 0 : index
    %c1_28 = arith.constant 1 : index
    %c0_29 = arith.constant 0 : index
    %19 = vector.load %arg12[%c0_27, %c1_28, %c0_29] : memref<18x18x4xbf16, #tpu.memory_space<vmem>>, vector<16x16x4xbf16>
    %20 = vector.shape_cast %19 : vector<16x16x4xbf16> to vector<256x4xbf16>
    %c1_30 = arith.constant 1 : index
    %c0_31 = arith.constant 0 : index
    %c0_32 = arith.constant 0 : index
    %21 = vector.load %arg2[%c1_30, %c0_31, %c0_32] : memref<9x4x32xbf16, #tpu.memory_space<vmem>>, vector<1x4x32xbf16>
    %22 = vector.shape_cast %21 : vector<1x4x32xbf16> to vector<4x32xbf16>
    %cst_33 = arith.constant dense<0.000000e+00> : vector<256x32xf32>
    %23 = tpu.matmul %20, %22, %cst_33 {dimension_numbers = #tpu.dot_dimension_numbers<[1], [0], [0], [1], [0, 0, 1, 1], [], []>} : vector<256x4xbf16>, vector<4x32xbf16>, vector<256x32xf32> -> vector<256x32xf32>
    %24 = arith.addf %18, %23 : vector<256x32xf32>
    %c0_34 = arith.constant 0 : index
    %c2 = arith.constant 2 : index
    %c0_35 = arith.constant 0 : index
    %25 = vector.load %arg12[%c0_34, %c2, %c0_35] : memref<18x18x4xbf16, #tpu.memory_space<vmem>>, vector<16x16x4xbf16>
    %26 = vector.shape_cast %25 : vector<16x16x4xbf16> to vector<256x4xbf16>
    %c2_36 = arith.constant 2 : index
    %c0_37 = arith.constant 0 : index
    %c0_38 = arith.constant 0 : index
    %27 = vector.load %arg2[%c2_36, %c0_37, %c0_38] : memref<9x4x32xbf16, #tpu.memory_space<vmem>>, vector<1x4x32xbf16>
    %28 = vector.shape_cast %27 : vector<1x4x32xbf16> to vector<4x32xbf16>
    %cst_39 = arith.constant dense<0.000000e+00> : vector<256x32xf32>
    %29 = tpu.matmul %26, %28, %cst_39 {dimension_numbers = #tpu.dot_dimension_numbers<[1], [0], [0], [1], [0, 0, 1, 1], [], []>} : vector<256x4xbf16>, vector<4x32xbf16>, vector<256x32xf32> -> vector<256x32xf32>
    %30 = arith.addf %24, %29 : vector<256x32xf32>
    %c1_40 = arith.constant 1 : index
    %c0_41 = arith.constant 0 : index
    %c0_42 = arith.constant 0 : index
    %31 = vector.load %arg12[%c1_40, %c0_41, %c0_42] : memref<18x18x4xbf16, #tpu.memory_space<vmem>>, vector<16x16x4xbf16>
    %32 = vector.shape_cast %31 : vector<16x16x4xbf16> to vector<256x4xbf16>
    %c3 = arith.constant 3 : index
    %c0_43 = arith.constant 0 : index
    %c0_44 = arith.constant 0 : index
    %33 = vector.load %arg2[%c3, %c0_43, %c0_44] : memref<9x4x32xbf16, #tpu.memory_space<vmem>>, vector<1x4x32xbf16>
    %34 = vector.shape_cast %33 : vector<1x4x32xbf16> to vector<4x32xbf16>
    %cst_45 = arith.constant dense<0.000000e+00> : vector<256x32xf32>
    %35 = tpu.matmul %32, %34, %cst_45 {dimension_numbers = #tpu.dot_dimension_numbers<[1], [0], [0], [1], [0, 0, 1, 1], [], []>} : vector<256x4xbf16>, vector<4x32xbf16>, vector<256x32xf32> -> vector<256x32xf32>
    %36 = arith.addf %30, %35 : vector<256x32xf32>
    %c1_46 = arith.constant 1 : index
    %c1_47 = arith.constant 1 : index
    %c0_48 = arith.constant 0 : index
    %37 = vector.load %arg12[%c1_46, %c1_47, %c0_48] : memref<18x18x4xbf16, #tpu.memory_space<vmem>>, vector<16x16x4xbf16>
    %38 = vector.shape_cast %37 : vector<16x16x4xbf16> to vector<256x4xbf16>
    %c4 = arith.constant 4 : index
    %c0_49 = arith.constant 0 : index
    %c0_50 = arith.constant 0 : index
    %39 = vector.load %arg2[%c4, %c0_49, %c0_50] : memref<9x4x32xbf16, #tpu.memory_space<vmem>>, vector<1x4x32xbf16>
    %40 = vector.shape_cast %39 : vector<1x4x32xbf16> to vector<4x32xbf16>
    %cst_51 = arith.constant dense<0.000000e+00> : vector<256x32xf32>
    %41 = tpu.matmul %38, %40, %cst_51 {dimension_numbers = #tpu.dot_dimension_numbers<[1], [0], [0], [1], [0, 0, 1, 1], [], []>} : vector<256x4xbf16>, vector<4x32xbf16>, vector<256x32xf32> -> vector<256x32xf32>
    %42 = arith.addf %36, %41 : vector<256x32xf32>
    %c1_52 = arith.constant 1 : index
    %c2_53 = arith.constant 2 : index
    %c0_54 = arith.constant 0 : index
    %43 = vector.load %arg12[%c1_52, %c2_53, %c0_54] : memref<18x18x4xbf16, #tpu.memory_space<vmem>>, vector<16x16x4xbf16>
    %44 = vector.shape_cast %43 : vector<16x16x4xbf16> to vector<256x4xbf16>
    %c5 = arith.constant 5 : index
    %c0_55 = arith.constant 0 : index
    %c0_56 = arith.constant 0 : index
    %45 = vector.load %arg2[%c5, %c0_55, %c0_56] : memref<9x4x32xbf16, #tpu.memory_space<vmem>>, vector<1x4x32xbf16>
    %46 = vector.shape_cast %45 : vector<1x4x32xbf16> to vector<4x32xbf16>
    %cst_57 = arith.constant dense<0.000000e+00> : vector<256x32xf32>
    %47 = tpu.matmul %44, %46, %cst_57 {dimension_numbers = #tpu.dot_dimension_numbers<[1], [0], [0], [1], [0, 0, 1, 1], [], []>} : vector<256x4xbf16>, vector<4x32xbf16>, vector<256x32xf32> -> vector<256x32xf32>
    %48 = arith.addf %42, %47 : vector<256x32xf32>
    %c2_58 = arith.constant 2 : index
    %c0_59 = arith.constant 0 : index
    %c0_60 = arith.constant 0 : index
    %49 = vector.load %arg12[%c2_58, %c0_59, %c0_60] : memref<18x18x4xbf16, #tpu.memory_space<vmem>>, vector<16x16x4xbf16>
    %50 = vector.shape_cast %49 : vector<16x16x4xbf16> to vector<256x4xbf16>
    %c6 = arith.constant 6 : index
    %c0_61 = arith.constant 0 : index
    %c0_62 = arith.constant 0 : index
    %51 = vector.load %arg2[%c6, %c0_61, %c0_62] : memref<9x4x32xbf16, #tpu.memory_space<vmem>>, vector<1x4x32xbf16>
    %52 = vector.shape_cast %51 : vector<1x4x32xbf16> to vector<4x32xbf16>
    %cst_63 = arith.constant dense<0.000000e+00> : vector<256x32xf32>
    %53 = tpu.matmul %50, %52, %cst_63 {dimension_numbers = #tpu.dot_dimension_numbers<[1], [0], [0], [1], [0, 0, 1, 1], [], []>} : vector<256x4xbf16>, vector<4x32xbf16>, vector<256x32xf32> -> vector<256x32xf32>
    %54 = arith.addf %48, %53 : vector<256x32xf32>
    %c2_64 = arith.constant 2 : index
    %c1_65 = arith.constant 1 : index
    %c0_66 = arith.constant 0 : index
    %55 = vector.load %arg12[%c2_64, %c1_65, %c0_66] : memref<18x18x4xbf16, #tpu.memory_space<vmem>>, vector<16x16x4xbf16>
    %56 = vector.shape_cast %55 : vector<16x16x4xbf16> to vector<256x4xbf16>
    %c7 = arith.constant 7 : index
    %c0_67 = arith.constant 0 : index
    %c0_68 = arith.constant 0 : index
    %57 = vector.load %arg2[%c7, %c0_67, %c0_68] : memref<9x4x32xbf16, #tpu.memory_space<vmem>>, vector<1x4x32xbf16>
    %58 = vector.shape_cast %57 : vector<1x4x32xbf16> to vector<4x32xbf16>
    %cst_69 = arith.constant dense<0.000000e+00> : vector<256x32xf32>
    %59 = tpu.matmul %56, %58, %cst_69 {dimension_numbers = #tpu.dot_dimension_numbers<[1], [0], [0], [1], [0, 0, 1, 1], [], []>} : vector<256x4xbf16>, vector<4x32xbf16>, vector<256x32xf32> -> vector<256x32xf32>
    %60 = arith.addf %54, %59 : vector<256x32xf32>
    %c2_70 = arith.constant 2 : index
    %c2_71 = arith.constant 2 : index
    %c0_72 = arith.constant 0 : index
    %61 = vector.load %arg12[%c2_70, %c2_71, %c0_72] : memref<18x18x4xbf16, #tpu.memory_space<vmem>>, vector<16x16x4xbf16>
    %62 = vector.shape_cast %61 : vector<16x16x4xbf16> to vector<256x4xbf16>
    %c8 = arith.constant 8 : index
    %c0_73 = arith.constant 0 : index
    %c0_74 = arith.constant 0 : index
    %63 = vector.load %arg2[%c8, %c0_73, %c0_74] : memref<9x4x32xbf16, #tpu.memory_space<vmem>>, vector<1x4x32xbf16>
    %64 = vector.shape_cast %63 : vector<1x4x32xbf16> to vector<4x32xbf16>
    %cst_75 = arith.constant dense<0.000000e+00> : vector<256x32xf32>
    %65 = tpu.matmul %62, %64, %cst_75 {dimension_numbers = #tpu.dot_dimension_numbers<[1], [0], [0], [1], [0, 0, 1, 1], [], []>} : vector<256x4xbf16>, vector<4x32xbf16>, vector<256x32xf32> -> vector<256x32xf32>
    %66 = arith.addf %60, %65 : vector<256x32xf32>
    %c0_76 = arith.constant 0 : index
    %c0_77 = arith.constant 0 : index
    %67 = vector.load %arg3[%c0_76, %c0_77] : memref<1x32xf32, #tpu.memory_space<vmem>>, vector<1x32xf32>
    %68 = vector.broadcast %67 : vector<1x32xf32> to vector<256x32xf32>
    %69 = arith.mulf %66, %68 : vector<256x32xf32>
    %c0_78 = arith.constant 0 : index
    %c0_79 = arith.constant 0 : index
    %70 = vector.load %arg4[%c0_78, %c0_79] : memref<1x32xf32, #tpu.memory_space<vmem>>, vector<1x32xf32>
    %71 = vector.broadcast %70 : vector<1x32xf32> to vector<256x32xf32>
    %72 = arith.addf %69, %71 : vector<256x32xf32>
    %cst_80 = arith.constant 0.000000e+00 : f32
    %73 = vector.broadcast %cst_80 : f32 to vector<256x32xf32>
    %74 = arith.maximumf %72, %73 : vector<256x32xf32>
    %75 = arith.truncf %74 : vector<256x32xf32> to vector<256x32xbf16>
    %c0_81 = arith.constant 0 : index
    %c0_82 = arith.constant 0 : index
    %76 = vector.load %arg5[%c0_81, %c0_82] : memref<32x288xbf16, #tpu.memory_space<vmem>>, vector<32x288xbf16>
    %cst_83 = arith.constant dense<0.000000e+00> : vector<256x288xf32>
    %77 = tpu.matmul %75, %76, %cst_83 {dimension_numbers = #tpu.dot_dimension_numbers<[1], [0], [0], [1], [0, 0, 1, 1], [], []>} : vector<256x32xbf16>, vector<32x288xbf16>, vector<256x288xf32> -> vector<256x288xf32>
    %c0_84 = arith.constant 0 : index
    %c0_85 = arith.constant 0 : index
    %78 = vector.load %arg6[%c0_84, %c0_85] : memref<1x288xf32, #tpu.memory_space<vmem>>, vector<1x288xf32>
    %79 = vector.broadcast %78 : vector<1x288xf32> to vector<256x288xf32>
    %80 = arith.addf %77, %79 : vector<256x288xf32>
    %81 = vector.extract_strided_slice %80 {offsets = [0, 0], sizes = [256, 128], strides = [1, 1]} : vector<256x288xf32> to vector<256x128xf32>
    %82 = vector.extract_strided_slice %80 {offsets = [0, 128], sizes = [256, 128], strides = [1, 1]} : vector<256x288xf32> to vector<256x128xf32>
    %83 = vector.extract_strided_slice %80 {offsets = [0, 256], sizes = [256, 32], strides = [1, 1]} : vector<256x288xf32> to vector<256x32xf32>
    %84 = arith.truncf %81 : vector<256x128xf32> to vector<256x128xbf16>
    %85 = arith.truncf %82 : vector<256x128xf32> to vector<256x128xbf16>
    %cst_86 = arith.constant dense<0.000000e+00> : vector<256x256xf32>
    %86 = tpu.matmul %84, %85, %cst_86 {dimension_numbers = #tpu.dot_dimension_numbers<[1], [1], [0], [0], [0, 0, 1, 0], [], []>} : vector<256x128xbf16>, vector<256x128xbf16>, vector<256x256xf32> -> vector<256x256xf32>
    %cst_87 = arith.constant dense<0xFF800000> : vector<256xf32>
    %87 = vector.multi_reduction <maximumf>, %86, %cst_87 [1] : vector<256x256xf32> to vector<256xf32>
    %88 = vector.shape_cast %87 : vector<256xf32> to vector<256x1xf32>
    %89 = vector.broadcast %88 : vector<256x1xf32> to vector<256x256xf32>
    %90 = arith.subf %86, %89 : vector<256x256xf32>
    %91 = math.exp %90 : vector<256x256xf32>
    %cst_88 = arith.constant dense<0.000000e+00> : vector<256xf32>
    %92 = vector.multi_reduction <add>, %91, %cst_88 [1] : vector<256x256xf32> to vector<256xf32>
    %93 = vector.shape_cast %92 : vector<256xf32> to vector<256x1xf32>
    %94 = tpu.reciprocal %93 {approx = true} : vector<256x1xf32> -> vector<256x1xf32>
    %95 = vector.broadcast %94 : vector<256x1xf32> to vector<256x256xf32>
    %96 = arith.mulf %91, %95 : vector<256x256xf32>
    %97 = arith.truncf %96 : vector<256x256xf32> to vector<256x256xbf16>
    %98 = arith.truncf %83 : vector<256x32xf32> to vector<256x32xbf16>
    %cst_89 = arith.constant dense<0.000000e+00> : vector<256x32xf32>
    %99 = tpu.matmul %97, %98, %cst_89 {dimension_numbers = #tpu.dot_dimension_numbers<[1], [0], [0], [1], [0, 0, 1, 1], [], []>} : vector<256x256xbf16>, vector<256x32xbf16>, vector<256x32xf32> -> vector<256x32xf32>
    %c0_90 = arith.constant 0 : index
    %c0_91 = arith.constant 0 : index
    %100 = memref.load %arg7[%c0_90, %c0_91] : memref<1x1xf32, #tpu.memory_space<smem>>
    %101 = vector.broadcast %100 : f32 to vector<256x32xf32>
    %102 = arith.mulf %101, %99 : vector<256x32xf32>
    %103 = arith.addf %102, %74 : vector<256x32xf32>
    %104 = vector.shape_cast %103 : vector<256x32xf32> to vector<16x16x32xf32>
    %105 = arith.truncf %104 : vector<16x16x32xf32> to vector<16x16x32xbf16>
    %cst_92 = arith.constant 0.000000e+00 : bf16
    %106 = vector.broadcast %cst_92 : bf16 to vector<1x18x32xbf16>
    %c0_93 = arith.constant 0 : index
    %c0_94 = arith.constant 0 : index
    %c0_95 = arith.constant 0 : index
    %107 = vector.load %arg13[%c0_93, %c0_94, %c0_95] : memref<18x18x32xbf16, #tpu.memory_space<vmem>>, vector<1x18x32xbf16>
    tpu.vector_store %arg13[%c0_93, %c0_94, %c0_95], %106 {strides = array<i32>} : memref<18x18x32xbf16, #tpu.memory_space<vmem>>, vector<1x18x32xbf16>,
    %cst_96 = arith.constant 0.000000e+00 : bf16
    %108 = vector.broadcast %cst_96 : bf16 to vector<1x18x32xbf16>
    %c17_97 = arith.constant 17 : index
    %c0_98 = arith.constant 0 : index
    %c0_99 = arith.constant 0 : index
    %109 = vector.load %arg13[%c17_97, %c0_98, %c0_99] : memref<18x18x32xbf16, #tpu.memory_space<vmem>>, vector<1x18x32xbf16>
    tpu.vector_store %arg13[%c17_97, %c0_98, %c0_99], %108 {strides = array<i32>} : memref<18x18x32xbf16, #tpu.memory_space<vmem>>, vector<1x18x32xbf16>,
    %cst_100 = arith.constant 0.000000e+00 : bf16
    %110 = vector.broadcast %cst_100 : bf16 to vector<18x1x32xbf16>
    %c0_101 = arith.constant 0 : index
    %c0_102 = arith.constant 0 : index
    %c0_103 = arith.constant 0 : index
    %111 = vector.load %arg13[%c0_101, %c0_102, %c0_103] : memref<18x18x32xbf16, #tpu.memory_space<vmem>>, vector<18x1x32xbf16>
    tpu.vector_store %arg13[%c0_101, %c0_102, %c0_103], %110 {strides = array<i32>} : memref<18x18x32xbf16, #tpu.memory_space<vmem>>, vector<18x1x32xbf16>,
    %cst_104 = arith.constant 0.000000e+00 : bf16
    %112 = vector.broadcast %cst_104 : bf16 to vector<18x1x32xbf16>
    %c0_105 = arith.constant 0 : index
    %c17_106 = arith.constant 17 : index
    %c0_107 = arith.constant 0 : index
    %113 = vector.load %arg13[%c0_105, %c17_106, %c0_107] : memref<18x18x32xbf16, #tpu.memory_space<vmem>>, vector<18x1x32xbf16>
    tpu.vector_store %arg13[%c0_105, %c17_106, %c0_107], %112 {strides = array<i32>} : memref<18x18x32xbf16, #tpu.memory_space<vmem>>, vector<18x1x32xbf16>,
    %c1_108 = arith.constant 1 : index
    %c1_109 = arith.constant 1 : index
    %c0_110 = arith.constant 0 : index
    %114 = vector.load %arg13[%c1_108, %c1_109, %c0_110] : memref<18x18x32xbf16, #tpu.memory_space<vmem>>, vector<16x16x32xbf16>
    tpu.vector_store %arg13[%c1_108, %c1_109, %c0_110], %105 {strides = array<i32>} : memref<18x18x32xbf16, #tpu.memory_space<vmem>>, vector<16x16x32xbf16>,
    %cst_111 = arith.constant 0.000000e+00 : f32
    %115 = vector.broadcast %cst_111 : f32 to vector<32x256xf32>
    %c0_112 = arith.constant 0 : index
    %c0_113 = arith.constant 0 : index
    %c0_114 = arith.constant 0 : index
    %116 = vector.load %arg13[%c0_112, %c0_113, %c0_114] : memref<18x18x32xbf16, #tpu.memory_space<vmem>>, vector<16x16x32xbf16>
    %117 = vector.shape_cast %116 : vector<16x16x32xbf16> to vector<256x32xbf16>
    %c0_115 = arith.constant 0 : index
    %c0_116 = arith.constant 0 : index
    %c0_117 = arith.constant 0 : index
    %118 = vector.load %arg8[%c0_115, %c0_116, %c0_117] : memref<9x32x32xbf16, #tpu.memory_space<vmem>>, vector<1x32x32xbf16>
    %119 = vector.shape_cast %118 : vector<1x32x32xbf16> to vector<32x32xbf16>
    %cst_118 = arith.constant dense<0.000000e+00> : vector<32x256xf32>
    %120 = tpu.matmul %119, %117, %cst_118 {dimension_numbers = #tpu.dot_dimension_numbers<[1], [1], [0], [0], [0, 0, 1, 0], [], []>} : vector<32x32xbf16>, vector<256x32xbf16>, vector<32x256xf32> -> vector<32x256xf32>
    %121 = arith.addf %115, %120 : vector<32x256xf32>
    %c0_119 = arith.constant 0 : index
    %c1_120 = arith.constant 1 : index
    %c0_121 = arith.constant 0 : index
    %122 = vector.load %arg13[%c0_119, %c1_120, %c0_121] : memref<18x18x32xbf16, #tpu.memory_space<vmem>>, vector<16x16x32xbf16>
    %123 = vector.shape_cast %122 : vector<16x16x32xbf16> to vector<256x32xbf16>
    %c1_122 = arith.constant 1 : index
    %c0_123 = arith.constant 0 : index
    %c0_124 = arith.constant 0 : index
    %124 = vector.load %arg8[%c1_122, %c0_123, %c0_124] : memref<9x32x32xbf16, #tpu.memory_space<vmem>>, vector<1x32x32xbf16>
    %125 = vector.shape_cast %124 : vector<1x32x32xbf16> to vector<32x32xbf16>
    %cst_125 = arith.constant dense<0.000000e+00> : vector<32x256xf32>
    %126 = tpu.matmul %125, %123, %cst_125 {dimension_numbers = #tpu.dot_dimension_numbers<[1], [1], [0], [0], [0, 0, 1, 0], [], []>} : vector<32x32xbf16>, vector<256x32xbf16>, vector<32x256xf32> -> vector<32x256xf32>
    %127 = arith.addf %121, %126 : vector<32x256xf32>
    %c0_126 = arith.constant 0 : index
    %c2_127 = arith.constant 2 : index
    %c0_128 = arith.constant 0 : index
    %128 = vector.load %arg13[%c0_126, %c2_127, %c0_128] : memref<18x18x32xbf16, #tpu.memory_space<vmem>>, vector<16x16x32xbf16>
    %129 = vector.shape_cast %128 : vector<16x16x32xbf16> to vector<256x32xbf16>
    %c2_129 = arith.constant 2 : index
    %c0_130 = arith.constant 0 : index
    %c0_131 = arith.constant 0 : index
    %130 = vector.load %arg8[%c2_129, %c0_130, %c0_131] : memref<9x32x32xbf16, #tpu.memory_space<vmem>>, vector<1x32x32xbf16>
    %131 = vector.shape_cast %130 : vector<1x32x32xbf16> to vector<32x32xbf16>
    %cst_132 = arith.constant dense<0.000000e+00> : vector<32x256xf32>
    %132 = tpu.matmul %131, %129, %cst_132 {dimension_numbers = #tpu.dot_dimension_numbers<[1], [1], [0], [0], [0, 0, 1, 0], [], []>} : vector<32x32xbf16>, vector<256x32xbf16>, vector<32x256xf32> -> vector<32x256xf32>
    %133 = arith.addf %127, %132 : vector<32x256xf32>
    %c1_133 = arith.constant 1 : index
    %c0_134 = arith.constant 0 : index
    %c0_135 = arith.constant 0 : index
    %134 = vector.load %arg13[%c1_133, %c0_134, %c0_135] : memref<18x18x32xbf16, #tpu.memory_space<vmem>>, vector<16x16x32xbf16>
    %135 = vector.shape_cast %134 : vector<16x16x32xbf16> to vector<256x32xbf16>
    %c3_136 = arith.constant 3 : index
    %c0_137 = arith.constant 0 : index
    %c0_138 = arith.constant 0 : index
    %136 = vector.load %arg8[%c3_136, %c0_137, %c0_138] : memref<9x32x32xbf16, #tpu.memory_space<vmem>>, vector<1x32x32xbf16>
    %137 = vector.shape_cast %136 : vector<1x32x32xbf16> to vector<32x32xbf16>
    %cst_139 = arith.constant dense<0.000000e+00> : vector<32x256xf32>
    %138 = tpu.matmul %137, %135, %cst_139 {dimension_numbers = #tpu.dot_dimension_numbers<[1], [1], [0], [0], [0, 0, 1, 0], [], []>} : vector<32x32xbf16>, vector<256x32xbf16>, vector<32x256xf32> -> vector<32x256xf32>
    %139 = arith.addf %133, %138 : vector<32x256xf32>
    %c1_140 = arith.constant 1 : index
    %c1_141 = arith.constant 1 : index
    %c0_142 = arith.constant 0 : index
    %140 = vector.load %arg13[%c1_140, %c1_141, %c0_142] : memref<18x18x32xbf16, #tpu.memory_space<vmem>>, vector<16x16x32xbf16>
    %141 = vector.shape_cast %140 : vector<16x16x32xbf16> to vector<256x32xbf16>
    %c4_143 = arith.constant 4 : index
    %c0_144 = arith.constant 0 : index
    %c0_145 = arith.constant 0 : index
    %142 = vector.load %arg8[%c4_143, %c0_144, %c0_145] : memref<9x32x32xbf16, #tpu.memory_space<vmem>>, vector<1x32x32xbf16>
    %143 = vector.shape_cast %142 : vector<1x32x32xbf16> to vector<32x32xbf16>
    %cst_146 = arith.constant dense<0.000000e+00> : vector<32x256xf32>
    %144 = tpu.matmul %143, %141, %cst_146 {dimension_numbers = #tpu.dot_dimension_numbers<[1], [1], [0], [0], [0, 0, 1, 0], [], []>} : vector<32x32xbf16>, vector<256x32xbf16>, vector<32x256xf32> -> vector<32x256xf32>
    %145 = arith.addf %139, %144 : vector<32x256xf32>
    %c1_147 = arith.constant 1 : index
    %c2_148 = arith.constant 2 : index
    %c0_149 = arith.constant 0 : index
    %146 = vector.load %arg13[%c1_147, %c2_148, %c0_149] : memref<18x18x32xbf16, #tpu.memory_space<vmem>>, vector<16x16x32xbf16>
    %147 = vector.shape_cast %146 : vector<16x16x32xbf16> to vector<256x32xbf16>
    %c5_150 = arith.constant 5 : index
    %c0_151 = arith.constant 0 : index
    %c0_152 = arith.constant 0 : index
    %148 = vector.load %arg8[%c5_150, %c0_151, %c0_152] : memref<9x32x32xbf16, #tpu.memory_space<vmem>>, vector<1x32x32xbf16>
    %149 = vector.shape_cast %148 : vector<1x32x32xbf16> to vector<32x32xbf16>
    %cst_153 = arith.constant dense<0.000000e+00> : vector<32x256xf32>
    %150 = tpu.matmul %149, %147, %cst_153 {dimension_numbers = #tpu.dot_dimension_numbers<[1], [1], [0], [0], [0, 0, 1, 0], [], []>} : vector<32x32xbf16>, vector<256x32xbf16>, vector<32x256xf32> -> vector<32x256xf32>
    %151 = arith.addf %145, %150 : vector<32x256xf32>
    %c2_154 = arith.constant 2 : index
    %c0_155 = arith.constant 0 : index
    %c0_156 = arith.constant 0 : index
    %152 = vector.load %arg13[%c2_154, %c0_155, %c0_156] : memref<18x18x32xbf16, #tpu.memory_space<vmem>>, vector<16x16x32xbf16>
    %153 = vector.shape_cast %152 : vector<16x16x32xbf16> to vector<256x32xbf16>
    %c6_157 = arith.constant 6 : index
    %c0_158 = arith.constant 0 : index
    %c0_159 = arith.constant 0 : index
    %154 = vector.load %arg8[%c6_157, %c0_158, %c0_159] : memref<9x32x32xbf16, #tpu.memory_space<vmem>>, vector<1x32x32xbf16>
    %155 = vector.shape_cast %154 : vector<1x32x32xbf16> to vector<32x32xbf16>
    %cst_160 = arith.constant dense<0.000000e+00> : vector<32x256xf32>
    %156 = tpu.matmul %155, %153, %cst_160 {dimension_numbers = #tpu.dot_dimension_numbers<[1], [1], [0], [0], [0, 0, 1, 0], [], []>} : vector<32x32xbf16>, vector<256x32xbf16>, vector<32x256xf32> -> vector<32x256xf32>
    %157 = arith.addf %151, %156 : vector<32x256xf32>
    %c2_161 = arith.constant 2 : index
    %c1_162 = arith.constant 1 : index
    %c0_163 = arith.constant 0 : index
    %158 = vector.load %arg13[%c2_161, %c1_162, %c0_163] : memref<18x18x32xbf16, #tpu.memory_space<vmem>>, vector<16x16x32xbf16>
    %159 = vector.shape_cast %158 : vector<16x16x32xbf16> to vector<256x32xbf16>
    %c7_164 = arith.constant 7 : index
    %c0_165 = arith.constant 0 : index
    %c0_166 = arith.constant 0 : index
    %160 = vector.load %arg8[%c7_164, %c0_165, %c0_166] : memref<9x32x32xbf16, #tpu.memory_space<vmem>>, vector<1x32x32xbf16>
    %161 = vector.shape_cast %160 : vector<1x32x32xbf16> to vector<32x32xbf16>
    %cst_167 = arith.constant dense<0.000000e+00> : vector<32x256xf32>
    %162 = tpu.matmul %161, %159, %cst_167 {dimension_numbers = #tpu.dot_dimension_numbers<[1], [1], [0], [0], [0, 0, 1, 0], [], []>} : vector<32x32xbf16>, vector<256x32xbf16>, vector<32x256xf32> -> vector<32x256xf32>
    %163 = arith.addf %157, %162 : vector<32x256xf32>
    %c2_168 = arith.constant 2 : index
    %c2_169 = arith.constant 2 : index
    %c0_170 = arith.constant 0 : index
    %164 = vector.load %arg13[%c2_168, %c2_169, %c0_170] : memref<18x18x32xbf16, #tpu.memory_space<vmem>>, vector<16x16x32xbf16>
    %165 = vector.shape_cast %164 : vector<16x16x32xbf16> to vector<256x32xbf16>
    %c8_171 = arith.constant 8 : index
    %c0_172 = arith.constant 0 : index
    %c0_173 = arith.constant 0 : index
    %166 = vector.load %arg8[%c8_171, %c0_172, %c0_173] : memref<9x32x32xbf16, #tpu.memory_space<vmem>>, vector<1x32x32xbf16>
    %167 = vector.shape_cast %166 : vector<1x32x32xbf16> to vector<32x32xbf16>
    %cst_174 = arith.constant dense<0.000000e+00> : vector<32x256xf32>
    %168 = tpu.matmul %167, %165, %cst_174 {dimension_numbers = #tpu.dot_dimension_numbers<[1], [1], [0], [0], [0, 0, 1, 0], [], []>} : vector<32x32xbf16>, vector<256x32xbf16>, vector<32x256xf32> -> vector<32x256xf32>
    %169 = arith.addf %163, %168 : vector<32x256xf32>
    %c0_175 = arith.constant 0 : index
    %c0_176 = arith.constant 0 : index
    %170 = vector.load %arg9[%c0_175, %c0_176] : memref<32x1xf32, #tpu.memory_space<vmem>>, vector<32x1xf32>
    %171 = vector.broadcast %170 : vector<32x1xf32> to vector<32x256xf32>
    %172 = arith.mulf %169, %171 : vector<32x256xf32>
    %c0_177 = arith.constant 0 : index
    %c0_178 = arith.constant 0 : index
    %173 = vector.load %arg10[%c0_177, %c0_178] : memref<32x1xf32, #tpu.memory_space<vmem>>, vector<32x1xf32>
    %174 = vector.broadcast %173 : vector<32x1xf32> to vector<32x256xf32>
    %175 = arith.addf %172, %174 : vector<32x256xf32>
    %cst_179 = arith.constant 0.000000e+00 : f32
    %176 = vector.broadcast %cst_179 : f32 to vector<32x256xf32>
    %177 = arith.maximumf %175, %176 : vector<32x256xf32>
    %c0_180 = arith.constant 0 : index
    %c0_181 = arith.constant 0 : index
    %c0_182 = arith.constant 0 : index
    %178 = vector.load %arg11[%c0_180, %c0_181, %c0_182] : memref<1x32x256xf32, #tpu.memory_space<vmem>>, vector<1x32x256xf32>
    %179 = vector.shape_cast %178 : vector<1x32x256xf32> to vector<32x256xf32>
    %180 = vector.shape_cast %177 : vector<32x256xf32> to vector<1x32x256xf32>
    tpu.vector_store %arg11[%c0_180, %c0_181, %c0_182], %180 {strides = array<i32>} : memref<1x32x256xf32, #tpu.memory_space<vmem>>, vector<1x32x256xf32>,
    return
  }
  func.func @transform_0(%arg0: i32) -> (i32, i32, i32, i32) {
    %c0_i32 = arith.constant 0 : i32
    %c0_i32_0 = arith.constant 0 : i32
    %c0_i32_1 = arith.constant 0 : i32
    %c0_i32_2 = arith.constant 0 : i32
    return %arg0, %c0_i32, %c0_i32_0, %c0_i32_1 : i32, i32, i32, i32
  }
  func.func @transform_1(%arg0: i32) -> (i32, i32, i32) {
    %c0_i32 = arith.constant 0 : i32
    %c0_i32_0 = arith.constant 0 : i32
    %c0_i32_1 = arith.constant 0 : i32
    %c0_i32_2 = arith.constant 0 : i32
    return %c0_i32, %c0_i32_0, %c0_i32_1 : i32, i32, i32
  }
  func.func @transform_2(%arg0: i32) -> (i32, i32) {
    %c0_i32 = arith.constant 0 : i32
    %c0_i32_0 = arith.constant 0 : i32
    %c0_i32_1 = arith.constant 0 : i32
    return %c0_i32, %c0_i32_0 : i32, i32
  }
  func.func @transform_3(%arg0: i32) -> (i32, i32) {
    %c0_i32 = arith.constant 0 : i32
    %c0_i32_0 = arith.constant 0 : i32
    %c0_i32_1 = arith.constant 0 : i32
    return %c0_i32, %c0_i32_0 : i32, i32
  }
  func.func @transform_4(%arg0: i32) -> (i32, i32) {
    %c0_i32 = arith.constant 0 : i32
    %c0_i32_0 = arith.constant 0 : i32
    %c0_i32_1 = arith.constant 0 : i32
    return %c0_i32, %c0_i32_0 : i32, i32
  }
  func.func @transform_5(%arg0: i32) -> (i32, i32) {
    %c0_i32 = arith.constant 0 : i32
    %c0_i32_0 = arith.constant 0 : i32
    %c0_i32_1 = arith.constant 0 : i32
    return %c0_i32, %c0_i32_0 : i32, i32
  }
  func.func @transform_6(%arg0: i32) -> (i32, i32) {
    %c0_i32 = arith.constant 0 : i32
    %c0_i32_0 = arith.constant 0 : i32
    %c0_i32_1 = arith.constant 0 : i32
    return %c0_i32, %c0_i32_0 : i32, i32
  }
  func.func @transform_7(%arg0: i32) -> (i32, i32, i32) {
    %c0_i32 = arith.constant 0 : i32
    %c0_i32_0 = arith.constant 0 : i32
    %c0_i32_1 = arith.constant 0 : i32
    %c0_i32_2 = arith.constant 0 : i32
    return %c0_i32, %c0_i32_0, %c0_i32_1 : i32, i32, i32
  }
  func.func @transform_8(%arg0: i32) -> (i32, i32) {
    %c0_i32 = arith.constant 0 : i32
    %c0_i32_0 = arith.constant 0 : i32
    %c0_i32_1 = arith.constant 0 : i32
    return %c0_i32, %c0_i32_0 : i32, i32
  }
  func.func @transform_9(%arg0: i32) -> (i32, i32) {
    %c0_i32 = arith.constant 0 : i32
    %c0_i32_0 = arith.constant 0 : i32
    %c0_i32_1 = arith.constant 0 : i32
    return %c0_i32, %c0_i32_0 : i32, i32
  }
  func.func @transform_10(%arg0: i32) -> (i32, i32, i32) {
    %c0_i32 = arith.constant 0 : i32
    %c0_i32_0 = arith.constant 0 : i32
    %c0_i32_1 = arith.constant 0 : i32
    return %arg0, %c0_i32, %c0_i32_0 : i32, i32, i32
  }
}

</mosaic_0001>

<llo_original>
// kernel: tpu_custom_call.1
$region0: #{tpu_custom_call.1}
  #allocation0 [shape = 'u32[]', space=smem, size = 0x4, offset = 0x4, fixed_abs, tag = 'smem constant byte address 0x4 - core index']
  #allocation1 [shape = 'u32[144,128]{1,0:T(1,128)}', space=vmem, size = 0x12000, scoped, tag = 'internal scratch']
  #allocation2 [shape = 'bf16[18,18,4]{2,1,0:T(8,128)(2,1)}', space=vmem, size = 0x1b000, scoped, tag = 'scratch operand']
  #allocation3 [shape = 'bf16[18,18,32]{2,1,0:T(8,128)(2,1)}', space=vmem, size = 0x1b000, scoped, tag = 'scratch operand']
  #allocation4 [shape = 'f32[1,1]{1,0:T(1,128)S(6)}', space=smem, size = 0x200, scoped, tag = 'scoped memory for tpu_custom_call.1']
  %s0 = inlined_call_operand.vmem [shape: f32[2,16,16,4], index: 0, kind: input, shape index: {}]
  %s1 = inlined_call_operand.vmem [shape: bf16[9,4,32], index: 1, kind: input, shape index: {}]
  %s2 = inlined_call_operand.vmem [shape: f32[1,32], index: 2, kind: input, shape index: {}]
  %s3 = inlined_call_operand.vmem [shape: f32[1,32], index: 3, kind: input, shape index: {}]
  %s4 = inlined_call_operand.vmem [shape: bf16[32,288], index: 4, kind: input, shape index: {}]
  %s5 = inlined_call_operand.vmem [shape: f32[1,288], index: 5, kind: input, shape index: {}]
  %s6 = inlined_call_operand.<no memory space> [shape: f32[1,1], index: 6, kind: input, shape index: {}]
  %s7 = inlined_call_operand.vmem [shape: bf16[9,32,32], index: 7, kind: input, shape index: {}]
  %s8 = inlined_call_operand.vmem [shape: f32[32,1], index: 8, kind: input, shape index: {}]
  %s9 = inlined_call_operand.vmem [shape: f32[32,1], index: 9, kind: input, shape index: {}]
  %s10 = inlined_call_operand.hbm [shape: f32[2,32,256], index: 10, kind: output, shape index: {}]
  %s11 = sld [smem:[#allocation0]]
  $region73: #{tpu_custom_call.1} parent=0
    _
  %s13 = ssub.s32 1, %s11
  %s14 = scalar_select 0, %s13, %s11
  %15 = sst [smem:[#allocation4]] %s6
  $region1: #{tpu_custom_call.1} parent=0
    #allocation5 [shape = 'u8[65536]{0}', space=vmem, size = 0x10000, scoped, tag = 'output window, operand 0']
    #allocation6 [shape = 's32[2]{0}', space=sflag, size = 0x8, scoped, tag = 'scoped memory for tpu_custom_call.1']
    %16 = vsyncpa [#allocation6], 0
    %s17 = scalar_lea.sflag [#allocation6], 1
    %18 = vsyncpa %s17, 0
    loop: start=0, step=1, limit=4
    $region2: #{tpu_custom_call.1} parent=1 // loop_pre_header
      _
    $region3: #{tpu_custom_call.1} parent=1 // loop_header
      %s20 = sphi 0, %s24
      %p21 = scmp.ge.s32.totalorder %s20, 4
      %s30 = sphi 0, %s32
      %s33 = sphi 0, %s30
      %s34 = sphi 0, %s33
      %s50 = sphi 0, %s34
      %s54 = sphi 0, %s54
      %s56 = sphi 0, %s54
      %s57 = sphi 0, %s56
      %s71 = sphi 0, %s57
      %s75 = sphi 0, %s75
      %s77 = sphi 0, %s75
      %s78 = sphi 0, %s77
      %s92 = sphi 0, %s78
      %s96 = sphi 0, %s96
      %s98 = sphi 0, %s96
      %s99 = sphi 0, %s98
      %s113 = sphi 0, %s99
      %s117 = sphi 0, %s117
      %s119 = sphi 0, %s117
      %s120 = sphi 0, %s119
      %s134 = sphi 0, %s120
      %s138 = sphi 0, %s138
      %s140 = sphi 0, %s138
      %s141 = sphi 0, %s140
      %s155 = sphi 0, %s141
      %s159 = sphi 0, %s159
      %s161 = sphi 0, %s159
      %s162 = sphi 0, %s161
      %s176 = sphi 0, %s162
      %s180 = sphi 0, %s180
      %s182 = sphi 0, %s180
      %s183 = sphi 0, %s182
      %s197 = sphi 0, %s183
      %s201 = sphi 0, %s201
      %s203 = sphi 0, %s201
      %s204 = sphi 0, %s203
      %s218 = sphi 0, %s204
      %s222 = sphi 0, %s222
      %s224 = sphi 0, %s222
      %s225 = sphi 0, %s224
      %s239 = sphi 0, %s225
      %s245 = sphi 0, %s247
      %s248 = sphi 0, %s245
      %s249 = sphi 0, %s248
      %s265 = sphi 0, %s249
    $region4: #{tpu_custom_call.1} parent=1 // loop_header_branch
      %23 = sbr.rel (%p21) target = $region8
    $region5: #{tpu_custom_call.1} parent=1 // loop_body
      %s25 = ssub.s32 %s20, 1
      %s26 = ssub.s32 %s20, 2
      %s27 = sadd.s32 %s20, 1
      %s28 = ssub.s32 %s20, %s27
      %p29 = scmp.eq.s32.totalorder %s28, 0
      %s31 = sadd.s32 %s30, 1
      %s32 = scalar_select %p29, %s30, %s31
      %p35 = pneg %p29
      %p36 = scmp.eq.s32.totalorder %s20, 1
      %p37 = por %p35, %p36
      %p38 = scmp.ne.s32.totalorder %s30, %s33
      %p39 = scmp.eq.s32.totalorder %s20, 0
      %p40 = por %p38, %p39
      %p41 = scmp.ne.s32.totalorder %s30, %s33
      %p42 = scmp.eq.s32.totalorder %s25, 1
      %p43 = por %p41, %p42
      %p44 = scmp.ne.s32.totalorder %s33, %s34
      %p45 = scmp.eq.s32.totalorder %s25, 0
      %p46 = por %p44, %p45
      %p47 = scmp.ne.s32.totalorder %s33, %s34
      %p48 = scmp.eq.s32.totalorder %s26, 1
      %p49 = por %p47, %p48
      %p51 = scmp.ne.s32.totalorder %s34, %s50
      %p52 = scmp.eq.s32.totalorder %s26, 0
      %p53 = por %p51, %p52
      %s55 = sadd.s32 %s54, 1
      %p58 = scmp.eq.s32.totalorder %s20, 1
      %p59 = scmp.ne.s32.totalorder %s54, %s56
      %p60 = scmp.eq.s32.totalorder %s20, 0
      %p61 = por %p59, %p60
      %p62 = scmp.ne.s32.totalorder %s54, %s56
      %p63 = scmp.eq.s32.totalorder %s25, 1
      %p64 = por %p62, %p63
      %p65 = scmp.ne.s32.totalorder %s56, %s57
      %p66 = scmp.eq.s32.totalorder %s25, 0
      %p67 = por %p65, %p66
      %p68 = scmp.ne.s32.totalorder %s56, %s57
      %p69 = scmp.eq.s32.totalorder %s26, 1
      %p70 = por %p68, %p69
      %p72 = scmp.ne.s32.totalorder %s57, %s71
      %p73 = scmp.eq.s32.totalorder %s26, 0
      %p74 = por %p72, %p73
      %s76 = sadd.s32 %s75, 1
      %p79 = scmp.eq.s32.totalorder %s20, 1
      %p80 = scmp.ne.s32.totalorder %s75, %s77
      %p81 = scmp.eq.s32.totalorder %s20, 0
      %p82 = por %p80, %p81
      %p83 = scmp.ne.s32.totalorder %s75, %s77
      %p84 = scmp.eq.s32.totalorder %s25, 1
      %p85 = por %p83, %p84
      %p86 = scmp.ne.s32.totalorder %s77, %s78
      %p87 = scmp.eq.s32.totalorder %s25, 0
      %p88 = por %p86, %p87
      %p89 = scmp.ne.s32.totalorder %s77, %s78
      %p90 = scmp.eq.s32.totalorder %s26, 1
      %p91 = por %p89, %p90
      %p93 = scmp.ne.s32.totalorder %s78, %s92
      %p94 = scmp.eq.s32.totalorder %s26, 0
      %p95 = por %p93, %p94
      %s97 = sadd.s32 %s96, 1
      %p100 = scmp.eq.s32.totalorder %s20, 1
      %p101 = scmp.ne.s32.totalorder %s96, %s98
      %p102 = scmp.eq.s32.totalorder %s20, 0
      %p103 = por %p101, %p102
      %p104 = scmp.ne.s32.totalorder %s96, %s98
      %p105 = scmp.eq.s32.totalorder %s25, 1
      %p106 = por %p104, %p105
      %p107 = scmp.ne.s32.totalorder %s98, %s99
      %p108 = scmp.eq.s32.totalorder %s25, 0
      %p109 = por %p107, %p108
      %p110 = scmp.ne.s32.totalorder %s98, %s99
      %p111 = scmp.eq.s32.totalorder %s26, 1
      %p112 = por %p110, %p111
      %p114 = scmp.ne.s32.totalorder %s99, %s113
      %p115 = scmp.eq.s32.totalorder %s26, 0
      %p116 = por %p114, %p115
      %s118 = sadd.s32 %s117, 1
      %p121 = scmp.eq.s32.totalorder %s20, 1
      %p122 = scmp.ne.s32.totalorder %s117, %s119
      %p123 = scmp.eq.s32.totalorder %s20, 0
      %p124 = por %p122, %p123
      %p125 = scmp.ne.s32.totalorder %s117, %s119
      %p126 = scmp.eq.s32.totalorder %s25, 1
      %p127 = por %p125, %p126
      %p128 = scmp.ne.s32.totalorder %s119, %s120
      %p129 = scmp.eq.s32.totalorder %s25, 0
      %p130 = por %p128, %p129
      %p131 = scmp.ne.s32.totalorder %s119, %s120
      %p132 = scmp.eq.s32.totalorder %s26, 1
      %p133 = por %p131, %p132
      %p135 = scmp.ne.s32.totalorder %s120, %s134
      %p136 = scmp.eq.s32.totalorder %s26, 0
      %p137 = por %p135, %p136
      %s139 = sadd.s32 %s138, 1
      %p142 = scmp.eq.s32.totalorder %s20, 1
      %p143 = scmp.ne.s32.totalorder %s138, %s140
      %p144 = scmp.eq.s32.totalorder %s20, 0
      %p145 = por %p143, %p144
      %p146 = scmp.ne.s32.totalorder %s138, %s140
      %p147 = scmp.eq.s32.totalorder %s25, 1
      %p148 = por %p146, %p147
      %p149 = scmp.ne.s32.totalorder %s140, %s141
      %p150 = scmp.eq.s32.totalorder %s25, 0
      %p151 = por %p149, %p150
      %p152 = scmp.ne.s32.totalorder %s140, %s141
      %p153 = scmp.eq.s32.totalorder %s26, 1
      %p154 = por %p152, %p153
      %p156 = scmp.ne.s32.totalorder %s141, %s155
      %p157 = scmp.eq.s32.totalorder %s26, 0
      %p158 = por %p156, %p157
      %s160 = sadd.s32 %s159, 1
      %p163 = scmp.eq.s32.totalorder %s20, 1
      %p164 = scmp.ne.s32.totalorder %s159, %s161
      %p165 = scmp.eq.s32.totalorder %s20, 0
      %p166 = por %p164, %p165
      %p167 = scmp.ne.s32.totalorder %s159, %s161
      %p168 = scmp.eq.s32.totalorder %s25, 1
      %p169 = por %p167, %p168
      %p170 = scmp.ne.s32.totalorder %s161, %s162
      %p171 = scmp.eq.s32.totalorder %s25, 0
      %p172 = por %p170, %p171
      %p173 = scmp.ne.s32.totalorder %s161, %s162
      %p174 = scmp.eq.s32.totalorder %s26, 1
      %p175 = por %p173, %p174
      %p177 = scmp.ne.s32.totalorder %s162, %s176
      %p178 = scmp.eq.s32.totalorder %s26, 0
      %p179 = por %p177, %p178
      %s181 = sadd.s32 %s180, 1
      %p184 = scmp.eq.s32.totalorder %s20, 1
      %p185 = scmp.ne.s32.totalorder %s180, %s182
      %p186 = scmp.eq.s32.totalorder %s20, 0
      %p187 = por %p185, %p186
      %p188 = scmp.ne.s32.totalorder %s180, %s182
      %p189 = scmp.eq.s32.totalorder %s25, 1
      %p190 = por %p188, %p189
      %p191 = scmp.ne.s32.totalorder %s182, %s183
      %p192 = scmp.eq.s32.totalorder %s25, 0
      %p193 = por %p191, %p192
      %p194 = scmp.ne.s32.totalorder %s182, %s183
      %p195 = scmp.eq.s32.totalorder %s26, 1
      %p196 = por %p194, %p195
      %p198 = scmp.ne.s32.totalorder %s183, %s197
      %p199 = scmp.eq.s32.totalorder %s26, 0
      %p200 = por %p198, %p199
      %s202 = sadd.s32 %s201, 1
      %p205 = scmp.eq.s32.totalorder %s20, 1
      %p206 = scmp.ne.s32.totalorder %s201, %s203
      %p207 = scmp.eq.s32.totalorder %s20, 0
      %p208 = por %p206, %p207
      %p209 = scmp.ne.s32.totalorder %s201, %s203
      %p210 = scmp.eq.s32.totalorder %s25, 1
      %p211 = por %p209, %p210
      %p212 = scmp.ne.s32.totalorder %s203, %s204
      %p213 = scmp.eq.s32.totalorder %s25, 0
      %p214 = por %p212, %p213
      %p215 = scmp.ne.s32.totalorder %s203, %s204
      %p216 = scmp.eq.s32.totalorder %s26, 1
      %p217 = por %p215, %p216
      %p219 = scmp.ne.s32.totalorder %s204, %s218
      %p220 = scmp.eq.s32.totalorder %s26, 0
      %p221 = por %p219, %p220
      %s223 = sadd.s32 %s222, 1
      %p226 = scmp.eq.s32.totalorder %s20, 1
      %p227 = scmp.ne.s32.totalorder %s222, %s224
      %p228 = scmp.eq.s32.totalorder %s20, 0
      %p229 = por %p227, %p228
      %p230 = scmp.ne.s32.totalorder %s222, %s224
      %p231 = scmp.eq.s32.totalorder %s25, 1
      %p232 = por %p230, %p231
      %p233 = scmp.ne.s32.totalorder %s224, %s225
      %p234 = scmp.eq.s32.totalorder %s25, 0
      %p235 = por %p233, %p234
      %p236 = scmp.ne.s32.totalorder %s224, %s225
      %p237 = scmp.eq.s32.totalorder %s26, 1
      %p238 = por %p236, %p237
      %p240 = scmp.ne.s32.totalorder %s225, %s239
      %p241 = scmp.eq.s32.totalorder %s26, 0
      %p242 = por %p240, %p241
      %s243 = ssub.s32 %s20, %s27
      %p244 = scmp.eq.s32.totalorder %s243, 0
      %s246 = sadd.s32 %s245, 1
      %s247 = scalar_select %p244, %s245, %s246
      %p250 = pneg %p244
      %p251 = scmp.eq.s32.totalorder %s20, 1
      %p252 = por %p250, %p251
      %p253 = scmp.ne.s32.totalorder %s245, %s248
      %p254 = scmp.eq.s32.totalorder %s20, 0
      %p255 = por %p253, %p254
      %p256 = scmp.ne.s32.totalorder %s245, %s248
      %p257 = scmp.eq.s32.totalorder %s25, 1
      %p258 = por %p256, %p257
      %p259 = scmp.ne.s32.totalorder %s248, %s249
      %p260 = scmp.eq.s32.totalorder %s25, 0
      %p261 = por %p259, %p260
      %p262 = scmp.ne.s32.totalorder %s248, %s249
      %p263 = scmp.eq.s32.totalorder %s26, 1
      %p264 = por %p262, %p263
      %p266 = scmp.ne.s32.totalorder %s249, %s265
      %p267 = scmp.eq.s32.totalorder %s26, 0
      %p268 = por %p266, %p267
      %p269 = scmp.le.s32.totalorder 1, %s20
      %p270 = scmp.lt.s32.totalorder %s20, 3
      %p271 = pnand %p269, %p270
      %p272 = pneg %p271
      // Predicated region
      $region9: #{tpu_custom_call.1} parent=5 // pred_check
        _
      $region10: #{tpu_custom_call.1} parent=5 // pred_check_branch
        %274 = sbr.rel (%p271) target = $region12
      $region11: #{tpu_custom_call.1} parent=5 // pred_region
        %s275 = ssub.s32 %s20, 1
        // Predicated region
        $region13: #{tpu_custom_call.1} parent=11 // pred_check
          %p276 = pneg %p67
        $region14: #{tpu_custom_call.1} parent=11 // pred_check_branch
          %278 = sbr.rel (%p276) target = $region16
        $region15: #{tpu_custom_call.1} parent=11 // pred_region
          _
        $region16: #{tpu_custom_call.1} parent=11 // pred_fallthru
          _
        // Predicated region
        $region17: #{tpu_custom_call.1} parent=11 // pred_check
          %p279 = pneg %p88
        $region18: #{tpu_custom_call.1} parent=11 // pred_check_branch
          %281 = sbr.rel (%p279) target = $region20
        $region19: #{tpu_custom_call.1} parent=11 // pred_region
          _
        $region20: #{tpu_custom_call.1} parent=11 // pred_fallthru
          _
        // Predicated region
        $region21: #{tpu_custom_call.1} parent=11 // pred_check
          %p282 = pneg %p109
        $region22: #{tpu_custom_call.1} parent=11 // pred_check_branch
          %284 = sbr.rel (%p282) target = $region24
        $region23: #{tpu_custom_call.1} parent=11 // pred_region
          _
        $region24: #{tpu_custom_call.1} parent=11 // pred_fallthru
          _
        // Predicated region
        $region25: #{tpu_custom_call.1} parent=11 // pred_check
          %p285 = pneg %p130
        $region26: #{tpu_custom_call.1} parent=11 // pred_check_branch
          %287 = sbr.rel (%p285) target = $region28
        $region27: #{tpu_custom_call.1} parent=11 // pred_region
          _
        $region28: #{tpu_custom_call.1} parent=11 // pred_fallthru
          _
        // Predicated region
        $region29: #{tpu_custom_call.1} parent=11 // pred_check
          %p288 = pneg %p151
        $region30: #{tpu_custom_call.1} parent=11 // pred_check_branch
          %290 = sbr.rel (%p288) target = $region32
        $region31: #{tpu_custom_call.1} parent=11 // pred_region
          _
        $region32: #{tpu_custom_call.1} parent=11 // pred_fallthru
          _
        // Predicated region
        $region33: #{tpu_custom_call.1} parent=11 // pred_check
          %p291 = pneg %p172
        $region34: #{tpu_custom_call.1} parent=11 // pred_check_branch
          %293 = sbr.rel (%p291) target = $region36
        $region35: #{tpu_custom_call.1} parent=11 // pred_region
          _
        $region36: #{tpu_custom_call.1} parent=11 // pred_fallthru
          _
        // Predicated region
        $region37: #{tpu_custom_call.1} parent=11 // pred_check
          %p294 = pneg %p193
        $region38: #{tpu_custom_call.1} parent=11 // pred_check_branch
          %296 = sbr.rel (%p294) target = $region40
        $region39: #{tpu_custom_call.1} parent=11 // pred_region
          _
        $region40: #{tpu_custom_call.1} parent=11 // pred_fallthru
          _
        // Predicated region
        $region41: #{tpu_custom_call.1} parent=11 // pred_check
          %p297 = pneg %p214
        $region42: #{tpu_custom_call.1} parent=11 // pred_check_branch
          %299 = sbr.rel (%p297) target = $region44
        $region43: #{tpu_custom_call.1} parent=11 // pred_region
          _
        $region44: #{tpu_custom_call.1} parent=11 // pred_fallthru
          _
        // Predicated region
        $region45: #{tpu_custom_call.1} parent=11 // pred_check
          %p300 = pneg %p235
        $region46: #{tpu_custom_call.1} parent=11 // pred_check_branch
          %302 = sbr.rel (%p300) target = $region48
        $region47: #{tpu_custom_call.1} parent=11 // pred_region
          _
        $region48: #{tpu_custom_call.1} parent=11 // pred_fallthru
          _
      $region12: #{tpu_custom_call.1} parent=5 // pred_fallthru
        _
      %p303 = scmp.lt.s32.totalorder %s20, 2
      // Predicated region
      $region49: #{tpu_custom_call.1} parent=5 // pred_check
        %p304 = pneg %p303
      $region50: #{tpu_custom_call.1} parent=5 // pred_check_branch
        %306 = sbr.rel (%p304) target = $region52
      $region51: #{tpu_custom_call.1} parent=5 // pred_region
        // Predicated region
        $region53: #{tpu_custom_call.1} parent=51 // pred_check
          %p307 = pneg %p40
        $region54: #{tpu_custom_call.1} parent=51 // pred_check_branch
          %309 = sbr.rel (%p307) target = $region56
        $region55: #{tpu_custom_call.1} parent=51 // pred_region
          %p310 = scmp.lt.s32.totalorder %s20, 1
          %s311 = scalar_select %p310, %s20, 1
          %s312 = smul.addr %s311, 32
          %s313 = smul.addr %s312, 8
          %s314 = scalar_lea.vmem %s0, %s313
        $region56: #{tpu_custom_call.1} parent=51 // pred_fallthru
          _
      $region52: #{tpu_custom_call.1} parent=5 // pred_fallthru
        _
      %p315 = scmp.le.s32.totalorder 1, %s20
      %p316 = scmp.lt.s32.totalorder %s20, 3
      %p317 = pnand %p315, %p316
      %p318 = pneg %p317
      // Predicated region
      $region57: #{tpu_custom_call.1} parent=5 // pred_check
        _
      $region58: #{tpu_custom_call.1} parent=5 // pred_check_branch
        %320 = sbr.rel (%p317) target = $region60
      $region59: #{tpu_custom_call.1} parent=5 // pred_region
        %s321 = ssub.s32 %s20, 1
        %p322 = scmp.lt.s32.totalorder %s25, 1
        %s323 = scalar_select %p322, %s25, 1
        %s324 = smul.addr %s323, 32
        %s325 = smul.addr %s324, 8
        %s326 = scalar_lea.vmem %s0, %s325
        %p327 = pneg %p46
        %p328 = pneg %p43
        %p329 = pneg %p67
        %p330 = pneg %p64
        %p331 = pneg %p88
        %p332 = pneg %p85
        %p333 = pneg %p109
        %p334 = pneg %p106
        %p335 = pneg %p130
        %p336 = pneg %p127
        %p337 = pneg %p151
        %p338 = pneg %p148
        %p339 = pneg %p172
        %p340 = pneg %p169
        %p341 = pneg %p193
        %p342 = pneg %p190
        %p343 = pneg %p214
        %p344 = pneg %p211
        %p345 = pneg %p235
        %p346 = pneg %p232
        %p347 = pneg %p261
        %p348 = pneg %p258
        %s349 = sand.u32 %s248, 1
        %s350 = scalar_lea.sflag [#allocation6], %s349
        %s351 = sand.u32 %s248, 1
        %s352 = smul.addr %s351, 64
        %s353 = scalar_lea.vmem [#allocation5], %s352
        %p354 = scmp.lt.s32.totalorder %s25, 1
        %s355 = scalar_select %p354, %s25, 1
        %s356 = smul.addr %s355, 32
        %s357 = smul.addr %s356, 8
        %s358 = scalar_lea.vmem %s0, %s357
        %v360 = vld [vmem:[%s358] sm:$0xff]
        %v361 = vld [vmem:[%s358 + $0x8] sm:$0xff]
        %v362 = vld [vmem:[%s358 + $0x10] sm:$0xff]
        %v363 = vld [vmem:[%s358 + $0x18] sm:$0xff]
        %v364 = vld [vmem:[%s358 + $0x20] sm:$0xff]
        %v365 = vld [vmem:[%s358 + $0x28] sm:$0xff]
        %v366 = vld [vmem:[%s358 + $0x30] sm:$0xff]
        %v367 = vld [vmem:[%s358 + $0x38] sm:$0xff]
        %v368 = vld [vmem:[%s358 + $0x40] sm:$0xff]
        %v369 = vld [vmem:[%s358 + $0x48] sm:$0xff]
        %v370 = vld [vmem:[%s358 + $0x50] sm:$0xff]
        %v371 = vld [vmem:[%s358 + $0x58] sm:$0xff]
        %v372 = vld [vmem:[%s358 + $0x60] sm:$0xff]
        %v373 = vld [vmem:[%s358 + $0x68] sm:$0xff]
        %v374 = vld [vmem:[%s358 + $0x70] sm:$0xff]
        %v375 = vld [vmem:[%s358 + $0x78] sm:$0xff]
        %v376 = vld [vmem:[%s358 + $0x80] sm:$0xff]
        %v377 = vld [vmem:[%s358 + $0x88] sm:$0xff]
        %v378 = vld [vmem:[%s358 + $0x90] sm:$0xff]
        %v379 = vld [vmem:[%s358 + $0x98] sm:$0xff]
        %v380 = vld [vmem:[%s358 + $0xa0] sm:$0xff]
        %v381 = vld [vmem:[%s358 + $0xa8] sm:$0xff]
        %v382 = vld [vmem:[%s358 + $0xb0] sm:$0xff]
        %v383 = vld [vmem:[%s358 + $0xb8] sm:$0xff]
        %v384 = vld [vmem:[%s358 + $0xc0] sm:$0xff]
        %v385 = vld [vmem:[%s358 + $0xc8] sm:$0xff]
        %v386 = vld [vmem:[%s358 + $0xd0] sm:$0xff]
        %v387 = vld [vmem:[%s358 + $0xd8] sm:$0xff]
        %v388 = vld [vmem:[%s358 + $0xe0] sm:$0xff]
        %v389 = vld [vmem:[%s358 + $0xe8] sm:$0xff]
        %v390 = vld [vmem:[%s358 + $0xf0] sm:$0xff]
        %v391 = vld [vmem:[%s358 + $0xf8] sm:$0xff]
        %v392 = vpack.c.bf16 %v361, %v360
        %v393 = vpack.c.bf16 %v363, %v362
        %v394 = vpack.c.bf16 %v365, %v364
        %v395 = vpack.c.bf16 %v367, %v366
        %v396 = vpack.c.bf16 %v369, %v368
        %v397 = vpack.c.bf16 %v371, %v370
        %v398 = vpack.c.bf16 %v373, %v372
        %v399 = vpack.c.bf16 %v375, %v374
        %v400 = vpack.c.bf16 %v377, %v376
        %v401 = vpack.c.bf16 %v379, %v378
        %v402 = vpack.c.bf16 %v381, %v380
        %v403 = vpack.c.bf16 %v383, %v382
        %v404 = vpack.c.bf16 %v385, %v384
        %v405 = vpack.c.bf16 %v387, %v386
        %v406 = vpack.c.bf16 %v389, %v388
        %v407 = vpack.c.bf16 %v391, %v390
        %vm408 = vcmask 27648
        %409 = vst.msk [vmem:[#allocation2] sm:$0xf] %vm408, 0
        %410 = vst.msk [vmem:[#allocation2 + $0x4] sm:$0xf] %vm408, 0
        %vm411 = vcmask 24576
        %412 = vst.msk [vmem:[#allocation2 + $0x8] sm:$0x1] %vm411, 0
        %s413 = scalar_lea.vmem [#allocation2], 204
        %414 = vst.msk [vmem:[%s413] sm:$0xf] %vm408, 0
        %415 = vst.msk [vmem:[%s413 + $0x4] sm:$0xf] %vm408, 0
        %416 = vst.msk [vmem:[%s413 + $0x8] sm:$0x1] %vm411, 0
        %vm417 = vcmask 24576
        %vm418 = vsmask.f32 256
        %vm419 = vmand %vm417, %vm418
        %v420 = vld [vmem:[#allocation2] sm:$0x1]
        %v421 = vsel %vm419, 0, %v420
        %422 = vst [vmem:[#allocation2] sm:$0x1] %v421
        %v423 = vld [vmem:[#allocation2 + $0xc] sm:$0x1]
        %v424 = vsel %vm419, 0, %v423
        %425 = vst [vmem:[#allocation2 + $0xc] sm:$0x1] %v424
        %v426 = vld [vmem:[#allocation2 + $0x18] sm:$0x1]
        %v427 = vsel %vm419, 0, %v426
        %428 = vst [vmem:[#allocation2 + $0x18] sm:$0x1] %v427
        %v429 = vld [vmem:[#allocation2 + $0x24] sm:$0x1]
        %v430 = vsel %vm419, 0, %v429
        %431 = vst [vmem:[#allocation2 + $0x24] sm:$0x1] %v430
        %v432 = vld [vmem:[#allocation2 + $0x30] sm:$0x1]
        %v433 = vsel %vm419, 0, %v432
        %434 = vst [vmem:[#allocation2 + $0x30] sm:$0x1] %v433
        %v435 = vld [vmem:[#allocation2 + $0x3c] sm:$0x1]
        %v436 = vsel %vm419, 0, %v435
        %437 = vst [vmem:[#allocation2 + $0x3c] sm:$0x1] %v436
        %v438 = vld [vmem:[#allocation2 + $0x48] sm:$0x1]
        %v439 = vsel %vm419, 0, %v438
        %440 = vst [vmem:[#allocation2 + $0x48] sm:$0x1] %v439
        %v441 = vld [vmem:[#allocation2 + $0x54] sm:$0x1]
        %v442 = vsel %vm419, 0, %v441
        %443 = vst [vmem:[#allocation2 + $0x54] sm:$0x1] %v442
        %v444 = vld [vmem:[#allocation2 + $0x60] sm:$0x1]
        %v445 = vsel %vm419, 0, %v444
        %446 = vst [vmem:[#allocation2 + $0x60] sm:$0x1] %v445
        %v447 = vld [vmem:[#allocation2 + $0x6c] sm:$0x1]
        %v448 = vsel %vm419, 0, %v447
        %449 = vst [vmem:[#allocation2 + $0x6c] sm:$0x1] %v448
        %v450 = vld [vmem:[#allocation2 + $0x78] sm:$0x1]
        %v451 = vsel %vm419, 0, %v450
        %452 = vst [vmem:[#allocation2 + $0x78] sm:$0x1] %v451
        %v453 = vld [vmem:[#allocation2 + $0x84] sm:$0x1]
        %v454 = vsel %vm419, 0, %v453
        %455 = vst [vmem:[#allocation2 + $0x84] sm:$0x1] %v454
        %v456 = vld [vmem:[#allocation2 + $0x90] sm:$0x1]
        %v457 = vsel %vm419, 0, %v456
        %458 = vst [vmem:[#allocation2 + $0x90] sm:$0x1] %v457
        %v459 = vld [vmem:[#allocation2 + $0x9c] sm:$0x1]
        %v460 = vsel %vm419, 0, %v459
        %461 = vst [vmem:[#allocation2 + $0x9c] sm:$0x1] %v460
        %v462 = vld [vmem:[#allocation2 + $0xa8] sm:$0x1]
        %v463 = vsel %vm419, 0, %v462
        %464 = vst [vmem:[#allocation2 + $0xa8] sm:$0x1] %v463
        %v465 = vld [vmem:[#allocation2 + $0xb4] sm:$0x1]
        %v466 = vsel %vm419, 0, %v465
        %467 = vst [vmem:[#allocation2 + $0xb4] sm:$0x1] %v466
        %v468 = vld [vmem:[#allocation2 + $0xc0] sm:$0x1]
        %v469 = vsel %vm419, 0, %v468
        %470 = vst [vmem:[#allocation2 + $0xc0] sm:$0x1] %v469
        %v471 = vld [vmem:[#allocation2 + $0xcc] sm:$0x1]
        %v472 = vsel %vm419, 0, %v471
        %473 = vst [vmem:[#allocation2 + $0xcc] sm:$0x1] %v472
        %vm474 = vsmask.f32 7938
        %vm475 = vmand %vm417, %vm474
        %v476 = vld [vmem:[#allocation2 + $0x8] sm:$0x1]
        %v477 = vsel %vm475, 0, %v476
        %478 = vst [vmem:[#allocation2 + $0x8] sm:$0x1] %v477
        %v479 = vld [vmem:[#allocation2 + $0x14] sm:$0x1]
        %v480 = vsel %vm475, 0, %v479
        %481 = vst [vmem:[#allocation2 + $0x14] sm:$0x1] %v480
        %v482 = vld [vmem:[#allocation2 + $0x20] sm:$0x1]
        %v483 = vsel %vm475, 0, %v482
        %484 = vst [vmem:[#allocation2 + $0x20] sm:$0x1] %v483
        %v485 = vld [vmem:[#allocation2 + $0x2c] sm:$0x1]
        %v486 = vsel %vm475, 0, %v485
        %487 = vst [vmem:[#allocation2 + $0x2c] sm:$0x1] %v486
        %v488 = vld [vmem:[#allocation2 + $0x38] sm:$0x1]
        %v489 = vsel %vm475, 0, %v488
        %490 = vst [vmem:[#allocation2 + $0x38] sm:$0x1] %v489
        %v491 = vld [vmem:[#allocation2 + $0x44] sm:$0x1]
        %v492 = vsel %vm475, 0, %v491
        %493 = vst [vmem:[#allocation2 + $0x44] sm:$0x1] %v492
        %v494 = vld [vmem:[#allocation2 + $0x50] sm:$0x1]
        %v495 = vsel %vm475, 0, %v494
        %496 = vst [vmem:[#allocation2 + $0x50] sm:$0x1] %v495
        %v497 = vld [vmem:[#allocation2 + $0x5c] sm:$0x1]
        %v498 = vsel %vm475, 0, %v497
        %499 = vst [vmem:[#allocation2 + $0x5c] sm:$0x1] %v498
        %v500 = vld [vmem:[#allocation2 + $0x68] sm:$0x1]
        %v501 = vsel %vm475, 0, %v500
        %502 = vst [vmem:[#allocation2 + $0x68] sm:$0x1] %v501
        %v503 = vld [vmem:[#allocation2 + $0x74] sm:$0x1]
        %v504 = vsel %vm475, 0, %v503
        %505 = vst [vmem:[#allocation2 + $0x74] sm:$0x1] %v504
        %v506 = vld [vmem:[#allocation2 + $0x80] sm:$0x1]
        %v507 = vsel %vm475, 0, %v506
        %508 = vst [vmem:[#allocation2 + $0x80] sm:$0x1] %v507
        %v509 = vld [vmem:[#allocation2 + $0x8c] sm:$0x1]
        %v510 = vsel %vm475, 0, %v509
        %511 = vst [vmem:[#allocation2 + $0x8c] sm:$0x1] %v510
        %v512 = vld [vmem:[#allocation2 + $0x98] sm:$0x1]
        %v513 = vsel %vm475, 0, %v512
        %514 = vst [vmem:[#allocation2 + $0x98] sm:$0x1] %v513
        %v515 = vld [vmem:[#allocation2 + $0xa4] sm:$0x1]
        %v516 = vsel %vm475, 0, %v515
        %517 = vst [vmem:[#allocation2 + $0xa4] sm:$0x1] %v516
        %v518 = vld [vmem:[#allocation2 + $0xb0] sm:$0x1]
        %v519 = vsel %vm475, 0, %v518
        %520 = vst [vmem:[#allocation2 + $0xb0] sm:$0x1] %v519
        %v521 = vld [vmem:[#allocation2 + $0xbc] sm:$0x1]
        %v522 = vsel %vm475, 0, %v521
        %523 = vst [vmem:[#allocation2 + $0xbc] sm:$0x1] %v522
        %v524 = vld [vmem:[#allocation2 + $0xc8] sm:$0x1]
        %v525 = vsel %vm475, 0, %v524
        %526 = vst [vmem:[#allocation2 + $0xc8] sm:$0x1] %v525
        %v527 = vld [vmem:[#allocation2 + $0xd4] sm:$0x1]
        %v528 = vsel %vm475, 0, %v527
        %529 = vst [vmem:[#allocation2 + $0xd4] sm:$0x1] %v528
        %v546 = vunpack.c.l.b16 %v392
        %v547 = vunpack.c.h.b16 %v392
        %v548 = vunpack.c.l.b16 %v393
        %v549 = vunpack.c.h.b16 %v393
        %v550 = vunpack.c.l.b16 %v394
        %v551 = vunpack.c.h.b16 %v394
        %v552 = vunpack.c.l.b16 %v395
        %v553 = vunpack.c.h.b16 %v395
        %v554 = vunpack.c.l.b16 %v396
        %v555 = vunpack.c.h.b16 %v396
        %v556 = vunpack.c.l.b16 %v397
        %v557 = vunpack.c.h.b16 %v397
        %v558 = vunpack.c.l.b16 %v398
        %v559 = vunpack.c.h.b16 %v398
        %v560 = vunpack.c.l.b16 %v399
        %v561 = vunpack.c.h.b16 %v399
        %v562 = vunpack.c.l.b16 %v400
        %v563 = vunpack.c.h.b16 %v400
        %v564 = vunpack.c.l.b16 %v401
        %v565 = vunpack.c.h.b16 %v401
        %v566 = vunpack.c.l.b16 %v402
        %v567 = vunpack.c.h.b16 %v402
        %v568 = vunpack.c.l.b16 %v403
        %v569 = vunpack.c.h.b16 %v403
        %v570 = vunpack.c.l.b16 %v404
        %v571 = vunpack.c.h.b16 %v404
        %v572 = vunpack.c.l.b16 %v405
        %v573 = vunpack.c.h.b16 %v405
        %v574 = vunpack.c.l.b16 %v406
        %v575 = vunpack.c.h.b16 %v406
        %v576 = vunpack.c.l.b16 %v407
        %v577 = vunpack.c.h.b16 %v407
        %v578 = vpack.c.b16 %v546, %v546
        %v579 = vpack.c.b16 %v547, %v547
        %v580 = vpack.c.b16 %v548, %v548
        %v581 = vpack.c.b16 %v549, %v549
        %v582 = vpack.c.b16 %v550, %v550
        %v583 = vpack.c.b16 %v551, %v551
        %v584 = vpack.c.b16 %v552, %v552
        %v585 = vpack.c.b16 %v553, %v553
        %v586 = vpack.c.b16 %v554, %v554
        %v587 = vpack.c.b16 %v555, %v555
        %v588 = vpack.c.b16 %v556, %v556
        %v589 = vpack.c.b16 %v557, %v557
        %v590 = vpack.c.b16 %v558, %v558
        %v591 = vpack.c.b16 %v559, %v559
        %v592 = vpack.c.b16 %v560, %v560
        %v593 = vpack.c.b16 %v561, %v561
        %v594 = vpack.c.b16 %v562, %v562
        %v595 = vpack.c.b16 %v563, %v563
        %v596 = vpack.c.b16 %v564, %v564
        %v597 = vpack.c.b16 %v565, %v565
        %v598 = vpack.c.b16 %v566, %v566
        %v599 = vpack.c.b16 %v567, %v567
        %v600 = vpack.c.b16 %v568, %v568
        %v601 = vpack.c.b16 %v569, %v569
        %v602 = vpack.c.b16 %v570, %v570
        %v603 = vpack.c.b16 %v571, %v571
        %v604 = vpack.c.b16 %v572, %v572
        %v605 = vpack.c.b16 %v573, %v573
        %v606 = vpack.c.b16 %v574, %v574
        %v607 = vpack.c.b16 %v575, %v575
        %v608 = vpack.c.b16 %v576, %v576
        %v609 = vpack.c.b16 %v577, %v577
        %vm610 = vsmask.f32 4368
        %vm611 = vmor %vm418, %vm610
        %v613 = vshrl.u32 %v578, 16
        %v615 = vrot.slane %v613, 7
        %v616 = vshll.u32 %v578, 16
        %v618 = vor.u32 %v615, %v616
        %v619 = vrot.slane %v615, 4
        %v621 = vshrl.u32 %v579, 16
        %v623 = vrot.slane %v621, 7
        %v624 = vshll.u32 %v579, 16
        %v626 = vor.u32 %v623, %v624
        %v627 = vsel %vm611, %v619, %v626
        %v628 = vrot.slane %v623, 4
        %v630 = vshrl.u32 %v580, 16
        %v632 = vrot.slane %v630, 7
        %v633 = vshll.u32 %v580, 16
        %v635 = vor.u32 %v632, %v633
        %v636 = vrot.slane %v632, 4
        %v638 = vshrl.u32 %v581, 16
        %v640 = vrot.slane %v638, 7
        %v641 = vshll.u32 %v581, 16
        %v643 = vor.u32 %v640, %v641
        %v644 = vsel %vm611, %v636, %v643
        %v645 = vrot.slane %v640, 4
        %v647 = vshrl.u32 %v582, 16
        %v649 = vrot.slane %v647, 7
        %v650 = vshll.u32 %v582, 16
        %v652 = vor.u32 %v649, %v650
        %v653 = vrot.slane %v649, 4
        %v655 = vshrl.u32 %v583, 16
        %v657 = vrot.slane %v655, 7
        %v658 = vshll.u32 %v583, 16
        %v660 = vor.u32 %v657, %v658
        %v661 = vsel %vm611, %v653, %v660
        %v662 = vrot.slane %v657, 4
        %v664 = vshrl.u32 %v584, 16
        %v666 = vrot.slane %v664, 7
        %v667 = vshll.u32 %v584, 16
        %v669 = vor.u32 %v666, %v667
        %v670 = vrot.slane %v666, 4
        %v672 = vshrl.u32 %v585, 16
        %v674 = vrot.slane %v672, 7
        %v675 = vshll.u32 %v585, 16
        %v677 = vor.u32 %v674, %v675
        %v678 = vsel %vm611, %v670, %v677
        %v679 = vrot.slane %v674, 4
        %v681 = vshrl.u32 %v586, 16
        %v683 = vrot.slane %v681, 7
        %v684 = vshll.u32 %v586, 16
        %v686 = vor.u32 %v683, %v684
        %v687 = vrot.slane %v683, 4
        %v689 = vshrl.u32 %v587, 16
        %v691 = vrot.slane %v689, 7
        %v692 = vshll.u32 %v587, 16
        %v694 = vor.u32 %v691, %v692
        %v695 = vsel %vm611, %v687, %v694
        %v696 = vrot.slane %v691, 4
        %v698 = vshrl.u32 %v588, 16
        %v700 = vrot.slane %v698, 7
        %v701 = vshll.u32 %v588, 16
        %v703 = vor.u32 %v700, %v701
        %v704 = vrot.slane %v700, 4
        %v706 = vshrl.u32 %v589, 16
        %v708 = vrot.slane %v706, 7
        %v709 = vshll.u32 %v589, 16
        %v711 = vor.u32 %v708, %v709
        %v712 = vsel %vm611, %v704, %v711
        %v713 = vrot.slane %v708, 4
        %v715 = vshrl.u32 %v590, 16
        %v717 = vrot.slane %v715, 7
        %v718 = vshll.u32 %v590, 16
        %v720 = vor.u32 %v717, %v718
        %v721 = vrot.slane %v717, 4
        %v723 = vshrl.u32 %v591, 16
        %v725 = vrot.slane %v723, 7
        %v726 = vshll.u32 %v591, 16
        %v728 = vor.u32 %v725, %v726
        %v729 = vsel %vm611, %v721, %v728
        %v730 = vrot.slane %v725, 4
        %v732 = vshrl.u32 %v592, 16
        %v734 = vrot.slane %v732, 7
        %v735 = vshll.u32 %v592, 16
        %v737 = vor.u32 %v734, %v735
        %v738 = vrot.slane %v734, 4
        %v740 = vshrl.u32 %v593, 16
        %v742 = vrot.slane %v740, 7
        %v743 = vshll.u32 %v593, 16
        %v745 = vor.u32 %v742, %v743
        %v746 = vsel %vm611, %v738, %v745
        %v747 = vrot.slane %v742, 4
        %v749 = vshrl.u32 %v594, 16
        %v751 = vrot.slane %v749, 7
        %v752 = vshll.u32 %v594, 16
        %v754 = vor.u32 %v751, %v752
        %v755 = vrot.slane %v751, 4
        %v757 = vshrl.u32 %v595, 16
        %v759 = vrot.slane %v757, 7
        %v760 = vshll.u32 %v595, 16
        %v762 = vor.u32 %v759, %v760
        %v763 = vsel %vm611, %v755, %v762
        %v764 = vrot.slane %v759, 4
        %v766 = vshrl.u32 %v596, 16
        %v768 = vrot.slane %v766, 7
        %v769 = vshll.u32 %v596, 16
        %v771 = vor.u32 %v768, %v769
        %v772 = vrot.slane %v768, 4
        %v774 = vshrl.u32 %v597, 16
        %v776 = vrot.slane %v774, 7
        %v777 = vshll.u32 %v597, 16
        %v779 = vor.u32 %v776, %v777
        %v780 = vsel %vm611, %v772, %v779
        %v781 = vrot.slane %v776, 4
        %v783 = vshrl.u32 %v598, 16
        %v785 = vrot.slane %v783, 7
        %v786 = vshll.u32 %v598, 16
        %v788 = vor.u32 %v785, %v786
        %v789 = vrot.slane %v785, 4
        %v791 = vshrl.u32 %v599, 16
        %v793 = vrot.slane %v791, 7
        %v794 = vshll.u32 %v599, 16
        %v796 = vor.u32 %v793, %v794
        %v797 = vsel %vm611, %v789, %v796
        %v798 = vrot.slane %v793, 4
        %v800 = vshrl.u32 %v600, 16
        %v802 = vrot.slane %v800, 7
        %v803 = vshll.u32 %v600, 16
        %v805 = vor.u32 %v802, %v803
        %v806 = vrot.slane %v802, 4
        %v808 = vshrl.u32 %v601, 16
        %v810 = vrot.slane %v808, 7
        %v811 = vshll.u32 %v601, 16
        %v813 = vor.u32 %v810, %v811
        %v814 = vsel %vm611, %v806, %v813
        %v815 = vrot.slane %v810, 4
        %v817 = vshrl.u32 %v602, 16
        %v819 = vrot.slane %v817, 7
        %v820 = vshll.u32 %v602, 16
        %v822 = vor.u32 %v819, %v820
        %v823 = vrot.slane %v819, 4
        %v825 = vshrl.u32 %v603, 16
        %v827 = vrot.slane %v825, 7
        %v828 = vshll.u32 %v603, 16
        %v830 = vor.u32 %v827, %v828
        %v831 = vsel %vm611, %v823, %v830
        %v832 = vrot.slane %v827, 4
        %v834 = vshrl.u32 %v604, 16
        %v836 = vrot.slane %v834, 7
        %v837 = vshll.u32 %v604, 16
        %v839 = vor.u32 %v836, %v837
        %v840 = vrot.slane %v836, 4
        %v842 = vshrl.u32 %v605, 16
        %v844 = vrot.slane %v842, 7
        %v845 = vshll.u32 %v605, 16
        %v847 = vor.u32 %v844, %v845
        %v848 = vsel %vm611, %v840, %v847
        %v849 = vrot.slane %v844, 4
        %v851 = vshrl.u32 %v606, 16
        %v853 = vrot.slane %v851, 7
        %v854 = vshll.u32 %v606, 16
        %v856 = vor.u32 %v853, %v854
        %v857 = vrot.slane %v853, 4
        %v859 = vshrl.u32 %v607, 16
        %v861 = vrot.slane %v859, 7
        %v862 = vshll.u32 %v607, 16
        %v864 = vor.u32 %v861, %v862
        %v865 = vsel %vm611, %v857, %v864
        %v866 = vrot.slane %v861, 4
        %v868 = vshrl.u32 %v608, 16
        %v870 = vrot.slane %v868, 7
        %v871 = vshll.u32 %v608, 16
        %v873 = vor.u32 %v870, %v871
        %v874 = vrot.slane %v870, 4
        %v876 = vshrl.u32 %v609, 16
        %v878 = vrot.slane %v876, 7
        %v879 = vshll.u32 %v609, 16
        %v881 = vor.u32 %v878, %v879
        %v882 = vsel %vm611, %v874, %v881
        %v883 = vrot.slane %v878, 4
        %s932 = scalar_lea.vmem [#allocation2], 12
        %vm933 = vcmask 27648
        %vm934 = vmand %vm933, %vm474
        %v935 = vld [vmem:[%s932] sm:$0xf]
        %v936 = vsel %vm934, %v618, %v935
        %937 = vst [vmem:[%s932] sm:$0xf] %v936
        %938 = vst.msk [vmem:[%s932 + $0x4] sm:$0xf] %vm408, %v627
        %v939 = vld [vmem:[%s932 + $0x8] sm:$0x1]
        %v940 = vsel %vm419, %v628, %v939
        %941 = vst [vmem:[%s932 + $0x8] sm:$0x1] %v940
        %v942 = vld [vmem:[%s932 + $0xc] sm:$0xf]
        %v943 = vsel %vm934, %v635, %v942
        %944 = vst [vmem:[%s932 + $0xc] sm:$0xf] %v943
        %945 = vst.msk [vmem:[%s932 + $0x10] sm:$0xf] %vm408, %v644
        %v946 = vld [vmem:[%s932 + $0x14] sm:$0x1]
        %v947 = vsel %vm419, %v645, %v946
        %948 = vst [vmem:[%s932 + $0x14] sm:$0x1] %v947
        %v949 = vld [vmem:[%s932 + $0x18] sm:$0xf]
        %v950 = vsel %vm934, %v652, %v949
        %951 = vst [vmem:[%s932 + $0x18] sm:$0xf] %v950
        %952 = vst.msk [vmem:[%s932 + $0x1c] sm:$0xf] %vm408, %v661
        %v953 = vld [vmem:[%s932 + $0x20] sm:$0x1]
        %v954 = vsel %vm419, %v662, %v953
        %955 = vst [vmem:[%s932 + $0x20] sm:$0x1] %v954
        %v956 = vld [vmem:[%s932 + $0x24] sm:$0xf]
        %v957 = vsel %vm934, %v669, %v956
        %958 = vst [vmem:[%s932 + $0x24] sm:$0xf] %v957
        %959 = vst.msk [vmem:[%s932 + $0x28] sm:$0xf] %vm408, %v678
        %v960 = vld [vmem:[%s932 + $0x2c] sm:$0x1]
        %v961 = vsel %vm419, %v679, %v960
        %962 = vst [vmem:[%s932 + $0x2c] sm:$0x1] %v961
        %v963 = vld [vmem:[%s932 + $0x30] sm:$0xf]
        %v964 = vsel %vm934, %v686, %v963
        %965 = vst [vmem:[%s932 + $0x30] sm:$0xf] %v964
        %966 = vst.msk [vmem:[%s932 + $0x34] sm:$0xf] %vm408, %v695
        %v967 = vld [vmem:[%s932 + $0x38] sm:$0x1]
        %v968 = vsel %vm419, %v696, %v967
        %969 = vst [vmem:[%s932 + $0x38] sm:$0x1] %v968
        %v970 = vld [vmem:[%s932 + $0x3c] sm:$0xf]
        %v971 = vsel %vm934, %v703, %v970
        %972 = vst [vmem:[%s932 + $0x3c] sm:$0xf] %v971
        %973 = vst.msk [vmem:[%s932 + $0x40] sm:$0xf] %vm408, %v712
        %v974 = vld [vmem:[%s932 + $0x44] sm:$0x1]
        %v975 = vsel %vm419, %v713, %v974
        %976 = vst [vmem:[%s932 + $0x44] sm:$0x1] %v975
        %v977 = vld [vmem:[%s932 + $0x48] sm:$0xf]
        %v978 = vsel %vm934, %v720, %v977
        %979 = vst [vmem:[%s932 + $0x48] sm:$0xf] %v978
        %980 = vst.msk [vmem:[%s932 + $0x4c] sm:$0xf] %vm408, %v729
        %v981 = vld [vmem:[%s932 + $0x50] sm:$0x1]
        %v982 = vsel %vm419, %v730, %v981
        %983 = vst [vmem:[%s932 + $0x50] sm:$0x1] %v982
        %v984 = vld [vmem:[%s932 + $0x54] sm:$0xf]
        %v985 = vsel %vm934, %v737, %v984
        %986 = vst [vmem:[%s932 + $0x54] sm:$0xf] %v985
        %987 = vst.msk [vmem:[%s932 + $0x58] sm:$0xf] %vm408, %v746
        %v988 = vld [vmem:[%s932 + $0x5c] sm:$0x1]
        %v989 = vsel %vm419, %v747, %v988
        %990 = vst [vmem:[%s932 + $0x5c] sm:$0x1] %v989
        %v991 = vld [vmem:[%s932 + $0x60] sm:$0xf]
        %v992 = vsel %vm934, %v754, %v991
        %993 = vst [vmem:[%s932 + $0x60] sm:$0xf] %v992
        %994 = vst.msk [vmem:[%s932 + $0x64] sm:$0xf] %vm408, %v763
        %v995 = vld [vmem:[%s932 + $0x68] sm:$0x1]
        %v996 = vsel %vm419, %v764, %v995
        %997 = vst [vmem:[%s932 + $0x68] sm:$0x1] %v996
        %v998 = vld [vmem:[%s932 + $0x6c] sm:$0xf]
        %v999 = vsel %vm934, %v771, %v998
        %1000 = vst [vmem:[%s932 + $0x6c] sm:$0xf] %v999
        %1001 = vst.msk [vmem:[%s932 + $0x70] sm:$0xf] %vm408, %v780
        %v1002 = vld [vmem:[%s932 + $0x74] sm:$0x1]
        %v1003 = vsel %vm419, %v781, %v1002
        %1004 = vst [vmem:[%s932 + $0x74] sm:$0x1] %v1003
        %v1005 = vld [vmem:[%s932 + $0x78] sm:$0xf]
        %v1006 = vsel %vm934, %v788, %v1005
        %1007 = vst [vmem:[%s932 + $0x78] sm:$0xf] %v1006
        %1008 = vst.msk [vmem:[%s932 + $0x7c] sm:$0xf] %vm408, %v797
        %v1009 = vld [vmem:[%s932 + $0x80] sm:$0x1]
        %v1010 = vsel %vm419, %v798, %v1009
        %1011 = vst [vmem:[%s932 + $0x80] sm:$0x1] %v1010
        %v1012 = vld [vmem:[%s932 + $0x84] sm:$0xf]
        %v1013 = vsel %vm934, %v805, %v1012
        %1014 = vst [vmem:[%s932 + $0x84] sm:$0xf] %v1013
        %1015 = vst.msk [vmem:[%s932 + $0x88] sm:$0xf] %vm408, %v814
        %v1016 = vld [vmem:[%s932 + $0x8c] sm:$0x1]
        %v1017 = vsel %vm419, %v815, %v1016
        %1018 = vst [vmem:[%s932 + $0x8c] sm:$0x1] %v1017
        %v1019 = vld [vmem:[%s932 + $0x90] sm:$0xf]
        %v1020 = vsel %vm934, %v822, %v1019
        %1021 = vst [vmem:[%s932 + $0x90] sm:$0xf] %v1020
        %1022 = vst.msk [vmem:[%s932 + $0x94] sm:$0xf] %vm408, %v831
        %v1023 = vld [vmem:[%s932 + $0x98] sm:$0x1]
        %v1024 = vsel %vm419, %v832, %v1023
        %1025 = vst [vmem:[%s932 + $0x98] sm:$0x1] %v1024
        %v1026 = vld [vmem:[%s932 + $0x9c] sm:$0xf]
        %v1027 = vsel %vm934, %v839, %v1026
        %1028 = vst [vmem:[%s932 + $0x9c] sm:$0xf] %v1027
        %1029 = vst.msk [vmem:[%s932 + $0xa0] sm:$0xf] %vm408, %v848
        %v1030 = vld [vmem:[%s932 + $0xa4] sm:$0x1]
        %v1031 = vsel %vm419, %v849, %v1030
        %1032 = vst [vmem:[%s932 + $0xa4] sm:$0x1] %v1031
        %v1033 = vld [vmem:[%s932 + $0xa8] sm:$0xf]
        %v1034 = vsel %vm934, %v856, %v1033
        %1035 = vst [vmem:[%s932 + $0xa8] sm:$0xf] %v1034
        %1036 = vst.msk [vmem:[%s932 + $0xac] sm:$0xf] %vm408, %v865
        %v1037 = vld [vmem:[%s932 + $0xb0] sm:$0x1]
        %v1038 = vsel %vm419, %v866, %v1037
        %1039 = vst [vmem:[%s932 + $0xb0] sm:$0x1] %v1038
        %v1040 = vld [vmem:[%s932 + $0xb4] sm:$0xf]
        %v1041 = vsel %vm934, %v873, %v1040
        %1042 = vst [vmem:[%s932 + $0xb4] sm:$0xf] %v1041
        %1043 = vst.msk [vmem:[%s932 + $0xb8] sm:$0xf] %vm408, %v882
        %v1044 = vld [vmem:[%s932 + $0xbc] sm:$0x1]
        %v1045 = vsel %vm419, %v883, %v1044
        %1046 = vst [vmem:[%s932 + $0xbc] sm:$0x1] %v1045
        %v1047 = vld [vmem:[#allocation2] sm:$0xf]
        %v1048 = vld [vmem:[#allocation2 + $0x4] sm:$0xf]
        %v1049 = vld [vmem:[#allocation2 + $0xc] sm:$0xf]
        %v1050 = vld [vmem:[#allocation2 + $0x10] sm:$0xf]
        %v1051 = vld [vmem:[#allocation2 + $0x18] sm:$0xf]
        %v1052 = vld [vmem:[#allocation2 + $0x1c] sm:$0xf]
        %v1053 = vld [vmem:[#allocation2 + $0x24] sm:$0xf]
        %v1054 = vld [vmem:[#allocation2 + $0x28] sm:$0xf]
        %v1055 = vld [vmem:[#allocation2 + $0x30] sm:$0xf]
        %v1056 = vld [vmem:[#allocation2 + $0x34] sm:$0xf]
        %v1057 = vld [vmem:[#allocation2 + $0x3c] sm:$0xf]
        %v1058 = vld [vmem:[#allocation2 + $0x40] sm:$0xf]
        %v1059 = vld [vmem:[#allocation2 + $0x48] sm:$0xf]
        %v1060 = vld [vmem:[#allocation2 + $0x4c] sm:$0xf]
        %v1061 = vld [vmem:[#allocation2 + $0x54] sm:$0xf]
        %v1062 = vld [vmem:[#allocation2 + $0x58] sm:$0xf]
        %v1063 = vld [vmem:[#allocation2 + $0x60] sm:$0xf]
        %v1064 = vld [vmem:[#allocation2 + $0x64] sm:$0xf]
        %v1065 = vld [vmem:[#allocation2 + $0x6c] sm:$0xf]
        %v1066 = vld [vmem:[#allocation2 + $0x70] sm:$0xf]
        %v1067 = vld [vmem:[#allocation2 + $0x78] sm:$0xf]
        %v1068 = vld [vmem:[#allocation2 + $0x7c] sm:$0xf]
        %v1069 = vld [vmem:[#allocation2 + $0x84] sm:$0xf]
        %v1070 = vld [vmem:[#allocation2 + $0x88] sm:$0xf]
        %v1071 = vld [vmem:[#allocation2 + $0x90] sm:$0xf]
        %v1072 = vld [vmem:[#allocation2 + $0x94] sm:$0xf]
        %v1073 = vld [vmem:[#allocation2 + $0x9c] sm:$0xf]
        %v1074 = vld [vmem:[#allocation2 + $0xa0] sm:$0xf]
        %v1075 = vld [vmem:[#allocation2 + $0xa8] sm:$0xf]
        %v1076 = vld [vmem:[#allocation2 + $0xac] sm:$0xf]
        %v1077 = vld [vmem:[#allocation2 + $0xb4] sm:$0xf]
        %v1078 = vld [vmem:[#allocation2 + $0xb8] sm:$0xf]
        %v1079 = vld [vmem:[%s1] sm:$0x3]
        %v1080 = vld [vmem:[#allocation2 + $0x8] sm:$0x1]
        %v1081 = vld [vmem:[#allocation2 + $0x14] sm:$0x1]
        %v1082 = vld [vmem:[#allocation2 + $0x20] sm:$0x1]
        %v1083 = vld [vmem:[#allocation2 + $0x2c] sm:$0x1]
        %v1084 = vld [vmem:[#allocation2 + $0x38] sm:$0x1]
        %v1085 = vld [vmem:[#allocation2 + $0x44] sm:$0x1]
        %v1086 = vld [vmem:[#allocation2 + $0x50] sm:$0x1]
        %v1087 = vld [vmem:[#allocation2 + $0x5c] sm:$0x1]
        %v1088 = vld [vmem:[#allocation2 + $0x68] sm:$0x1]
        %v1089 = vld [vmem:[#allocation2 + $0x74] sm:$0x1]
        %v1090 = vld [vmem:[#allocation2 + $0x80] sm:$0x1]
        %v1091 = vld [vmem:[#allocation2 + $0x8c] sm:$0x1]
        %v1092 = vld [vmem:[#allocation2 + $0x98] sm:$0x1]
        %v1093 = vld [vmem:[#allocation2 + $0xa4] sm:$0x1]
        %v1094 = vld [vmem:[#allocation2 + $0xb0] sm:$0x1]
        %v1095 = vld [vmem:[#allocation2 + $0xbc] sm:$0x1]
        %vm1096 = vsmask.f32 3328
        %vm1097 = vsmask.f32 7440
        %vm1098 = vmor %vm1096, %vm1097
        %v1100 = vshrl.u32 %v1047, 16
        %v1102 = vrot.slane %v1100, 4
        %v1103 = vshll.u32 %v1047, 16
        %v1105 = vrot.slane %v1103, 5
        %v1106 = vor.u32 %v1102, %v1105
        %v1107 = vrot.slane %v1106, 4
        %v1109 = vshll.u32 %v1048, 16
        %v1111 = vrot.slane %v1109, 5
        %v1112 = vsel %vm1098, %v1107, %v1111
        %v1113 = vshrl.u32 %v1048, 16
        %v1115 = vrot.slane %v1113, 4
        %v1116 = vor.u32 %v1115, %v1111
        %v1117 = vrot.slane %v1116, 4
        %v1119 = vshll.u32 %v1080, 16
        %v1121 = vrot.slane %v1119, 5
        %v1122 = vsel %vm1098, %v1117, %v1121
        %v1124 = vshrl.u32 %v1049, 16
        %v1126 = vrot.slane %v1124, 4
        %v1127 = vshll.u32 %v1049, 16
        %v1129 = vrot.slane %v1127, 5
        %v1130 = vor.u32 %v1126, %v1129
        %v1131 = vrot.slane %v1130, 4
        %v1133 = vshll.u32 %v1050, 16
        %v1135 = vrot.slane %v1133, 5
        %v1136 = vsel %vm1098, %v1131, %v1135
        %v1137 = vshrl.u32 %v1050, 16
        %v1139 = vrot.slane %v1137, 4
        %v1140 = vor.u32 %v1139, %v1135
        %v1141 = vrot.slane %v1140, 4
        %v1143 = vshll.u32 %v1081, 16
        %v1145 = vrot.slane %v1143, 5
        %v1146 = vsel %vm1098, %v1141, %v1145
        %v1148 = vshrl.u32 %v1051, 16
        %v1150 = vrot.slane %v1148, 4
        %v1151 = vshll.u32 %v1051, 16
        %v1153 = vrot.slane %v1151, 5
        %v1154 = vor.u32 %v1150, %v1153
        %v1155 = vrot.slane %v1154, 4
        %v1157 = vshll.u32 %v1052, 16
        %v1159 = vrot.slane %v1157, 5
        %v1160 = vsel %vm1098, %v1155, %v1159
        %v1161 = vshrl.u32 %v1052, 16
        %v1163 = vrot.slane %v1161, 4
        %v1164 = vor.u32 %v1163, %v1159
        %v1165 = vrot.slane %v1164, 4
        %v1167 = vshll.u32 %v1082, 16
        %v1169 = vrot.slane %v1167, 5
        %v1170 = vsel %vm1098, %v1165, %v1169
        %v1172 = vshrl.u32 %v1053, 16
        %v1174 = vrot.slane %v1172, 4
        %v1175 = vshll.u32 %v1053, 16
        %v1177 = vrot.slane %v1175, 5
        %v1178 = vor.u32 %v1174, %v1177
        %v1179 = vrot.slane %v1178, 4
        %v1181 = vshll.u32 %v1054, 16
        %v1183 = vrot.slane %v1181, 5
        %v1184 = vsel %vm1098, %v1179, %v1183
        %v1185 = vshrl.u32 %v1054, 16
        %v1187 = vrot.slane %v1185, 4
        %v1188 = vor.u32 %v1187, %v1183
        %v1189 = vrot.slane %v1188, 4
        %v1191 = vshll.u32 %v1083, 16
        %v1193 = vrot.slane %v1191, 5
        %v1194 = vsel %vm1098, %v1189, %v1193
        %v1196 = vshrl.u32 %v1055, 16
        %v1198 = vrot.slane %v1196, 4
        %v1199 = vshll.u32 %v1055, 16
        %v1201 = vrot.slane %v1199, 5
        %v1202 = vor.u32 %v1198, %v1201
        %v1203 = vrot.slane %v1202, 4
        %v1205 = vshll.u32 %v1056, 16
        %v1207 = vrot.slane %v1205, 5
        %v1208 = vsel %vm1098, %v1203, %v1207
        %v1209 = vshrl.u32 %v1056, 16
        %v1211 = vrot.slane %v1209, 4
        %v1212 = vor.u32 %v1211, %v1207
        %v1213 = vrot.slane %v1212, 4
        %v1215 = vshll.u32 %v1084, 16
        %v1217 = vrot.slane %v1215, 5
        %v1218 = vsel %vm1098, %v1213, %v1217
        %v1220 = vshrl.u32 %v1057, 16
        %v1222 = vrot.slane %v1220, 4
        %v1223 = vshll.u32 %v1057, 16
        %v1225 = vrot.slane %v1223, 5
        %v1226 = vor.u32 %v1222, %v1225
        %v1227 = vrot.slane %v1226, 4
        %v1229 = vshll.u32 %v1058, 16
        %v1231 = vrot.slane %v1229, 5
        %v1232 = vsel %vm1098, %v1227, %v1231
        %v1233 = vshrl.u32 %v1058, 16
        %v1235 = vrot.slane %v1233, 4
        %v1236 = vor.u32 %v1235, %v1231
        %v1237 = vrot.slane %v1236, 4
        %v1239 = vshll.u32 %v1085, 16
        %v1241 = vrot.slane %v1239, 5
        %v1242 = vsel %vm1098, %v1237, %v1241
        %v1244 = vshrl.u32 %v1059, 16
        %v1246 = vrot.slane %v1244, 4
        %v1247 = vshll.u32 %v1059, 16
        %v1249 = vrot.slane %v1247, 5
        %v1250 = vor.u32 %v1246, %v1249
        %v1251 = vrot.slane %v1250, 4
        %v1253 = vshll.u32 %v1060, 16
        %v1255 = vrot.slane %v1253, 5
        %v1256 = vsel %vm1098, %v1251, %v1255
        %v1257 = vshrl.u32 %v1060, 16
        %v1259 = vrot.slane %v1257, 4
        %v1260 = vor.u32 %v1259, %v1255
        %v1261 = vrot.slane %v1260, 4
        %v1263 = vshll.u32 %v1086, 16
        %v1265 = vrot.slane %v1263, 5
        %v1266 = vsel %vm1098, %v1261, %v1265
        %v1268 = vshrl.u32 %v1061, 16
        %v1270 = vrot.slane %v1268, 4
        %v1271 = vshll.u32 %v1061, 16
        %v1273 = vrot.slane %v1271, 5
        %v1274 = vor.u32 %v1270, %v1273
        %v1275 = vrot.slane %v1274, 4
        %v1277 = vshll.u32 %v1062, 16
        %v1279 = vrot.slane %v1277, 5
        %v1280 = vsel %vm1098, %v1275, %v1279
        %v1281 = vshrl.u32 %v1062, 16
        %v1283 = vrot.slane %v1281, 4
        %v1284 = vor.u32 %v1283, %v1279
        %v1285 = vrot.slane %v1284, 4
        %v1287 = vshll.u32 %v1087, 16
        %v1289 = vrot.slane %v1287, 5
        %v1290 = vsel %vm1098, %v1285, %v1289
        %v1292 = vshrl.u32 %v1063, 16
        %v1294 = vrot.slane %v1292, 4
        %v1295 = vshll.u32 %v1063, 16
        %v1297 = vrot.slane %v1295, 5
        %v1298 = vor.u32 %v1294, %v1297
        %v1299 = vrot.slane %v1298, 4
        %v1301 = vshll.u32 %v1064, 16
        %v1303 = vrot.slane %v1301, 5
        %v1304 = vsel %vm1098, %v1299, %v1303
        %v1305 = vshrl.u32 %v1064, 16
        %v1307 = vrot.slane %v1305, 4
        %v1308 = vor.u32 %v1307, %v1303
        %v1309 = vrot.slane %v1308, 4
        %v1311 = vshll.u32 %v1088, 16
        %v1313 = vrot.slane %v1311, 5
        %v1314 = vsel %vm1098, %v1309, %v1313
        %v1316 = vshrl.u32 %v1065, 16
        %v1318 = vrot.slane %v1316, 4
        %v1319 = vshll.u32 %v1065, 16
        %v1321 = vrot.slane %v1319, 5
        %v1322 = vor.u32 %v1318, %v1321
        %v1323 = vrot.slane %v1322, 4
        %v1325 = vshll.u32 %v1066, 16
        %v1327 = vrot.slane %v1325, 5
        %v1328 = vsel %vm1098, %v1323, %v1327
        %v1329 = vshrl.u32 %v1066, 16
        %v1331 = vrot.slane %v1329, 4
        %v1332 = vor.u32 %v1331, %v1327
        %v1333 = vrot.slane %v1332, 4
        %v1335 = vshll.u32 %v1089, 16
        %v1337 = vrot.slane %v1335, 5
        %v1338 = vsel %vm1098, %v1333, %v1337
        %v1340 = vshrl.u32 %v1067, 16
        %v1342 = vrot.slane %v1340, 4
        %v1343 = vshll.u32 %v1067, 16
        %v1345 = vrot.slane %v1343, 5
        %v1346 = vor.u32 %v1342, %v1345
        %v1347 = vrot.slane %v1346, 4
        %v1349 = vshll.u32 %v1068, 16
        %v1351 = vrot.slane %v1349, 5
        %v1352 = vsel %vm1098, %v1347, %v1351
        %v1353 = vshrl.u32 %v1068, 16
        %v1355 = vrot.slane %v1353, 4
        %v1356 = vor.u32 %v1355, %v1351
        %v1357 = vrot.slane %v1356, 4
        %v1359 = vshll.u32 %v1090, 16
        %v1361 = vrot.slane %v1359, 5
        %v1362 = vsel %vm1098, %v1357, %v1361
        %v1364 = vshrl.u32 %v1069, 16
        %v1366 = vrot.slane %v1364, 4
        %v1367 = vshll.u32 %v1069, 16
        %v1369 = vrot.slane %v1367, 5
        %v1370 = vor.u32 %v1366, %v1369
        %v1371 = vrot.slane %v1370, 4
        %v1373 = vshll.u32 %v1070, 16
        %v1375 = vrot.slane %v1373, 5
        %v1376 = vsel %vm1098, %v1371, %v1375
        %v1377 = vshrl.u32 %v1070, 16
        %v1379 = vrot.slane %v1377, 4
        %v1380 = vor.u32 %v1379, %v1375
        %v1381 = vrot.slane %v1380, 4
        %v1383 = vshll.u32 %v1091, 16
        %v1385 = vrot.slane %v1383, 5
        %v1386 = vsel %vm1098, %v1381, %v1385
        %v1388 = vshrl.u32 %v1071, 16
        %v1390 = vrot.slane %v1388, 4
        %v1391 = vshll.u32 %v1071, 16
        %v1393 = vrot.slane %v1391, 5
        %v1394 = vor.u32 %v1390, %v1393
        %v1395 = vrot.slane %v1394, 4
        %v1397 = vshll.u32 %v1072, 16
        %v1399 = vrot.slane %v1397, 5
        %v1400 = vsel %vm1098, %v1395, %v1399
        %v1401 = vshrl.u32 %v1072, 16
        %v1403 = vrot.slane %v1401, 4
        %v1404 = vor.u32 %v1403, %v1399
        %v1405 = vrot.slane %v1404, 4
        %v1407 = vshll.u32 %v1092, 16
        %v1409 = vrot.slane %v1407, 5
        %v1410 = vsel %vm1098, %v1405, %v1409
        %v1412 = vshrl.u32 %v1073, 16
        %v1414 = vrot.slane %v1412, 4
        %v1415 = vshll.u32 %v1073, 16
        %v1417 = vrot.slane %v1415, 5
        %v1418 = vor.u32 %v1414, %v1417
        %v1419 = vrot.slane %v1418, 4
        %v1421 = vshll.u32 %v1074, 16
        %v1423 = vrot.slane %v1421, 5
        %v1424 = vsel %vm1098, %v1419, %v1423
        %v1425 = vshrl.u32 %v1074, 16
        %v1427 = vrot.slane %v1425, 4
        %v1428 = vor.u32 %v1427, %v1423
        %v1429 = vrot.slane %v1428, 4
        %v1431 = vshll.u32 %v1093, 16
        %v1433 = vrot.slane %v1431, 5
        %v1434 = vsel %vm1098, %v1429, %v1433
        %v1436 = vshrl.u32 %v1075, 16
        %v1438 = vrot.slane %v1436, 4
        %v1439 = vshll.u32 %v1075, 16
        %v1441 = vrot.slane %v1439, 5
        %v1442 = vor.u32 %v1438, %v1441
        %v1443 = vrot.slane %v1442, 4
        %v1445 = vshll.u32 %v1076, 16
        %v1447 = vrot.slane %v1445, 5
        %v1448 = vsel %vm1098, %v1443, %v1447
        %v1449 = vshrl.u32 %v1076, 16
        %v1451 = vrot.slane %v1449, 4
        %v1452 = vor.u32 %v1451, %v1447
        %v1453 = vrot.slane %v1452, 4
        %v1455 = vshll.u32 %v1094, 16
        %v1457 = vrot.slane %v1455, 5
        %v1458 = vsel %vm1098, %v1453, %v1457
        %v1460 = vshrl.u32 %v1077, 16
        %v1462 = vrot.slane %v1460, 4
        %v1463 = vshll.u32 %v1077, 16
        %v1465 = vrot.slane %v1463, 5
        %v1466 = vor.u32 %v1462, %v1465
        %v1467 = vrot.slane %v1466, 4
        %v1469 = vshll.u32 %v1078, 16
        %v1471 = vrot.slane %v1469, 5
        %v1472 = vsel %vm1098, %v1467, %v1471
        %v1473 = vshrl.u32 %v1078, 16
        %v1475 = vrot.slane %v1473, 4
        %v1476 = vor.u32 %v1475, %v1471
        %v1477 = vrot.slane %v1476, 4
        %v1479 = vshll.u32 %v1095, 16
        %v1481 = vrot.slane %v1479, 5
        %v1482 = vsel %vm1098, %v1477, %v1481
        %s1483 = scalar_lea.vmem %s1, 2
        %v1484 = vld [vmem:[%s1483] sm:$0x3]
        %v1485 = vunpack.c.l.b16 %v1112
        %v1486 = vunpack.c.l.b16 %v1122
        %v1487 = vunpack.c.l.b16 %v1136
        %v1488 = vunpack.c.l.b16 %v1146
        %v1489 = vunpack.c.l.b16 %v1160
        %v1490 = vunpack.c.l.b16 %v1170
        %v1491 = vunpack.c.l.b16 %v1184
        %v1492 = vunpack.c.l.b16 %v1194
        %v1493 = vunpack.c.l.b16 %v1208
        %v1494 = vunpack.c.l.b16 %v1218
        %v1495 = vunpack.c.l.b16 %v1232
        %v1496 = vunpack.c.l.b16 %v1242
        %v1497 = vunpack.c.l.b16 %v1256
        %v1498 = vunpack.c.l.b16 %v1266
        %v1499 = vunpack.c.l.b16 %v1280
        %v1500 = vunpack.c.l.b16 %v1290
        %v1501 = vunpack.c.l.b16 %v1304
        %v1502 = vunpack.c.l.b16 %v1314
        %v1503 = vunpack.c.l.b16 %v1328
        %v1504 = vunpack.c.l.b16 %v1338
        %v1505 = vunpack.c.l.b16 %v1352
        %v1506 = vunpack.c.l.b16 %v1362
        %v1507 = vunpack.c.l.b16 %v1376
        %v1508 = vunpack.c.l.b16 %v1386
        %v1509 = vunpack.c.l.b16 %v1400
        %v1510 = vunpack.c.l.b16 %v1410
        %v1511 = vunpack.c.l.b16 %v1424
        %v1512 = vunpack.c.l.b16 %v1434
        %v1513 = vunpack.c.l.b16 %v1448
        %v1514 = vunpack.c.l.b16 %v1458
        %v1515 = vunpack.c.l.b16 %v1472
        %v1516 = vunpack.c.l.b16 %v1482
        %v1517 = vpack.c.b16 %v1486, %v1485
        %v1518 = vpack.c.b16 %v1488, %v1487
        %v1519 = vpack.c.b16 %v1490, %v1489
        %v1520 = vpack.c.b16 %v1492, %v1491
        %v1521 = vpack.c.b16 %v1494, %v1493
        %v1522 = vpack.c.b16 %v1496, %v1495
        %v1523 = vpack.c.b16 %v1498, %v1497
        %v1524 = vpack.c.b16 %v1500, %v1499
        %v1525 = vpack.c.b16 %v1502, %v1501
        %v1526 = vpack.c.b16 %v1504, %v1503
        %v1527 = vpack.c.b16 %v1506, %v1505
        %v1528 = vpack.c.b16 %v1508, %v1507
        %v1529 = vpack.c.b16 %v1510, %v1509
        %v1530 = vpack.c.b16 %v1512, %v1511
        %v1531 = vpack.c.b16 %v1514, %v1513
        %v1532 = vpack.c.b16 %v1516, %v1515
        %vm1533 = vcmask 31744
        %v1535 = vsel %vm1533, %v1517, 0
        %v1538 = vsel %vm1533, %v1518, 0
        %v1541 = vsel %vm1533, %v1519, 0
        %v1544 = vsel %vm1533, %v1520, 0
        %v1547 = vsel %vm1533, %v1521, 0
        %v1550 = vsel %vm1533, %v1522, 0
        %v1553 = vsel %vm1533, %v1523, 0
        %v1556 = vsel %vm1533, %v1524, 0
        %v1559 = vsel %vm1533, %v1525, 0
        %v1562 = vsel %vm1533, %v1526, 0
        %v1565 = vsel %vm1533, %v1527, 0
        %v1568 = vsel %vm1533, %v1528, 0
        %v1571 = vsel %vm1533, %v1529, 0
        %v1574 = vsel %vm1533, %v1530, 0
        %v1577 = vsel %vm1533, %v1531, 0
        %v1580 = vsel %vm1533, %v1532, 0
        %vm1582 = vcmask 1041408
        %v1584 = vsel %vm1582, %v1484, 0
        %1586 = vmatprep.subr.bf16.mxu0 0
        %1587 = vmatpush1.bf16.msra.mxu0 %v1584
        %1588 = vmatprep.subr.bf16.mxu0 0
        %1589 = vmatpush1.bf16.msra.mxu0 0
        %1590 = vmatprep.subr.bf16.mxu0 0
        %1591 = vmatpush1.bf16.msra.mxu0 0
        %1592 = vmatprep.subr.bf16.mxu0 0
        %1593 = vmatpush1.bf16.msra.mxu0 0
        %1594 = vmatprep.subr.bf16.mxu0 0
        %1595 = vmatpush1.bf16.msra.mxu0 0
        %1596 = vmatprep.subr.bf16.mxu0 0
        %1597 = vmatpush1.bf16.msra.mxu0 0
        %1598 = vmatprep.subr.bf16.mxu0 0
        %1599 = vmatpush1.bf16.msra.mxu0 0
        %1600 = vmatprep.subr.bf16.mxu0 0
        %1601 = vmatpush1.bf16.msra.mxu0 0
        %1602 = vmatprep.subr.bf16.mxu0 0
        %1603 = vmatpush1.bf16.msra.mxu0 0
        %1604 = vmatprep.subr.bf16.mxu0 0
        %1605 = vmatpush1.bf16.msra.mxu0 0
        %1606 = vmatprep.subr.bf16.mxu0 0
        %1607 = vmatpush1.bf16.msra.mxu0 0
        %1608 = vmatprep.subr.bf16.mxu0 0
        %1609 = vmatpush1.bf16.msra.mxu0 0
        %1610 = vmatprep.subr.bf16.mxu0 0
        %1611 = vmatpush1.bf16.msra.mxu0 0
        %1612 = vmatprep.subr.bf16.mxu0 0
        %1613 = vmatpush1.bf16.msra.mxu0 0
        %1614 = vmatprep.subr.bf16.mxu0 0
        %1615 = vmatpush1.bf16.msra.mxu0 0
        %1616 = vmatprep.subr.bf16.mxu0 0
        %1617 = vmatpush1.bf16.msra.mxu0 0
        %1618 = vmatprep.mubr.bf16.mxu0 0
        %1619 = vmatmul.mubr.bf16.gmra.mrb[0].mxu0 %v1535
        %v1620 = vpop.f32.mrb[0].mxu0
        %v1621 = vadd.f32 0.0, %v1620
        %v1622 = vpop.f32.mrb[0].mxu0
        %v1623 = vpop.f32.mrb[0].mxu0
        %v1624 = vadd.f32 0.0, %v1623
        %v1625 = vpop.f32.mrb[0].mxu0
        %1626 = vmatprep.mubr.bf16.mxu0 0
        %1627 = vmatmul.mubr.bf16.gmra.mrb[0].mxu0 %v1538
        %v1628 = vpop.f32.mrb[0].mxu0
        %v1629 = vadd.f32 0.0, %v1628
        %v1630 = vpop.f32.mrb[0].mxu0
        %v1631 = vpop.f32.mrb[0].mxu0
        %v1632 = vadd.f32 0.0, %v1631
        %v1633 = vpop.f32.mrb[0].mxu0
        %1634 = vmatprep.mubr.bf16.mxu0 0
        %1635 = vmatmul.mubr.bf16.gmra.mrb[0].mxu0 %v1541
        %v1636 = vpop.f32.mrb[0].mxu0
        %v1637 = vadd.f32 0.0, %v1636
        %v1638 = vpop.f32.mrb[0].mxu0
        %v1639 = vpop.f32.mrb[0].mxu0
        %v1640 = vadd.f32 0.0, %v1639
        %v1641 = vpop.f32.mrb[0].mxu0
        %1642 = vmatprep.mubr.bf16.mxu0 0
        %1643 = vmatmul.mubr.bf16.gmra.mrb[0].mxu0 %v1544
        %v1644 = vpop.f32.mrb[0].mxu0
        %v1645 = vadd.f32 0.0, %v1644
        %v1646 = vpop.f32.mrb[0].mxu0
        %v1647 = vpop.f32.mrb[0].mxu0
        %v1648 = vadd.f32 0.0, %v1647
        %v1649 = vpop.f32.mrb[0].mxu0
        %1650 = vmatprep.mubr.bf16.mxu0 0
        %1651 = vmatmul.mubr.bf16.gmra.mrb[0].mxu0 %v1547
        %v1652 = vpop.f32.mrb[0].mxu0
        %v1653 = vadd.f32 0.0, %v1652
        %v1654 = vpop.f32.mrb[0].mxu0
        %v1655 = vpop.f32.mrb[0].mxu0
        %v1656 = vadd.f32 0.0, %v1655
        %v1657 = vpop.f32.mrb[0].mxu0
        %1658 = vmatprep.mubr.bf16.mxu0 0
        %1659 = vmatmul.mubr.bf16.gmra.mrb[0].mxu0 %v1550
        %v1660 = vpop.f32.mrb[0].mxu0
        %v1661 = vadd.f32 0.0, %v1660
        %v1662 = vpop.f32.mrb[0].mxu0
        %v1663 = vpop.f32.mrb[0].mxu0
        %v1664 = vadd.f32 0.0, %v1663
        %v1665 = vpop.f32.mrb[0].mxu0
        %1666 = vmatprep.mubr.bf16.mxu0 0
        %1667 = vmatmul.mubr.bf16.gmra.mrb[0].mxu0 %v1553
        %v1668 = vpop.f32.mrb[0].mxu0
        %v1669 = vadd.f32 0.0, %v1668
        %v1670 = vpop.f32.mrb[0].mxu0
        %v1671 = vpop.f32.mrb[0].mxu0
        %v1672 = vadd.f32 0.0, %v1671
        %v1673 = vpop.f32.mrb[0].mxu0
        %1674 = vmatprep.mubr.bf16.mxu0 0
        %1675 = vmatmul.mubr.bf16.gmra.mrb[0].mxu0 %v1556
        %v1676 = vpop.f32.mrb[0].mxu0
        %v1677 = vadd.f32 0.0, %v1676
        %v1678 = vpop.f32.mrb[0].mxu0
        %v1679 = vpop.f32.mrb[0].mxu0
        %v1680 = vadd.f32 0.0, %v1679
        %v1681 = vpop.f32.mrb[0].mxu0
        %1682 = vmatprep.mubr.bf16.mxu0 0
        %1683 = vmatmul.mubr.bf16.gmra.mrb[0].mxu0 %v1559
        %v1684 = vpop.f32.mrb[0].mxu0
        %v1685 = vadd.f32 0.0, %v1684
        %v1686 = vpop.f32.mrb[0].mxu0
        %v1687 = vpop.f32.mrb[0].mxu0
        %v1688 = vadd.f32 0.0, %v1687
        %v1689 = vpop.f32.mrb[0].mxu0
        %1690 = vmatprep.mubr.bf16.mxu0 0
        %1691 = vmatmul.mubr.bf16.gmra.mrb[0].mxu0 %v1562
        %v1692 = vpop.f32.mrb[0].mxu0
        %v1693 = vadd.f32 0.0, %v1692
        %v1694 = vpop.f32.mrb[0].mxu0
        %v1695 = vpop.f32.mrb[0].mxu0
        %v1696 = vadd.f32 0.0, %v1695
        %v1697 = vpop.f32.mrb[0].mxu0
        %1698 = vmatprep.mubr.bf16.mxu0 0
        %1699 = vmatmul.mubr.bf16.gmra.mrb[0].mxu0 %v1565
        %v1700 = vpop.f32.mrb[0].mxu0
        %v1701 = vadd.f32 0.0, %v1700
        %v1702 = vpop.f32.mrb[0].mxu0
        %v1703 = vpop.f32.mrb[0].mxu0
        %v1704 = vadd.f32 0.0, %v1703
        %v1705 = vpop.f32.mrb[0].mxu0
        %1706 = vmatprep.mubr.bf16.mxu0 0
        %1707 = vmatmul.mubr.bf16.gmra.mrb[0].mxu0 %v1568
        %v1708 = vpop.f32.mrb[0].mxu0
        %v1709 = vadd.f32 0.0, %v1708
        %v1710 = vpop.f32.mrb[0].mxu0
        %v1711 = vpop.f32.mrb[0].mxu0
        %v1712 = vadd.f32 0.0, %v1711
        %v1713 = vpop.f32.mrb[0].mxu0
        %1714 = vmatprep.mubr.bf16.mxu0 0
        %1715 = vmatmul.mubr.bf16.gmra.mrb[0].mxu0 %v1571
        %v1716 = vpop.f32.mrb[0].mxu0
        %v1717 = vadd.f32 0.0, %v1716
        %v1718 = vpop.f32.mrb[0].mxu0
        %v1719 = vpop.f32.mrb[0].mxu0
        %v1720 = vadd.f32 0.0, %v1719
        %v1721 = vpop.f32.mrb[0].mxu0
        %1722 = vmatprep.mubr.bf16.mxu0 0
        %1723 = vmatmul.mubr.bf16.gmra.mrb[0].mxu0 %v1574
        %v1724 = vpop.f32.mrb[0].mxu0
        %v1725 = vadd.f32 0.0, %v1724
        %v1726 = vpop.f32.mrb[0].mxu0
        %v1727 = vpop.f32.mrb[0].mxu0
        %v1728 = vadd.f32 0.0, %v1727
        %v1729 = vpop.f32.mrb[0].mxu0
        %1730 = vmatprep.mubr.bf16.mxu0 0
        %1731 = vmatmul.mubr.bf16.gmra.mrb[0].mxu0 %v1577
        %v1732 = vpop.f32.mrb[0].mxu0
        %v1733 = vadd.f32 0.0, %v1732
        %v1734 = vpop.f32.mrb[0].mxu0
        %v1735 = vpop.f32.mrb[0].mxu0
        %v1736 = vadd.f32 0.0, %v1735
        %v1737 = vpop.f32.mrb[0].mxu0
        %1738 = vmatprep.mubr.bf16.mxu0 0
        %1739 = vmatmul.mubr.bf16.gmra.mrb[0].mxu0 %v1580
        %v1740 = vpop.f32.mrb[0].mxu0
        %v1741 = vadd.f32 0.0, %v1740
        %v1742 = vpop.f32.mrb[0].mxu0
        %v1743 = vpop.f32.mrb[0].mxu0
        %v1744 = vadd.f32 0.0, %v1743
        %v1745 = vpop.f32.mrb[0].mxu0
        %1746 = vdwg.mxu0
        %v1779 = vunpack.c.l.b16 %v1047
        %v1780 = vunpack.c.l.b16 %v1048
        %v1781 = vunpack.c.l.b16 %v1049
        %v1782 = vunpack.c.l.b16 %v1050
        %v1783 = vunpack.c.l.b16 %v1051
        %v1784 = vunpack.c.l.b16 %v1052
        %v1785 = vunpack.c.l.b16 %v1053
        %v1786 = vunpack.c.l.b16 %v1054
        %v1787 = vunpack.c.l.b16 %v1055
        %v1788 = vunpack.c.l.b16 %v1056
        %v1789 = vunpack.c.l.b16 %v1057
        %v1790 = vunpack.c.l.b16 %v1058
        %v1791 = vunpack.c.l.b16 %v1059
        %v1792 = vunpack.c.l.b16 %v1060
        %v1793 = vunpack.c.l.b16 %v1061
        %v1794 = vunpack.c.l.b16 %v1062
        %v1795 = vunpack.c.l.b16 %v1063
        %v1796 = vunpack.c.l.b16 %v1064
        %v1797 = vunpack.c.l.b16 %v1065
        %v1798 = vunpack.c.l.b16 %v1066
        %v1799 = vunpack.c.l.b16 %v1067
        %v1800 = vunpack.c.l.b16 %v1068
        %v1801 = vunpack.c.l.b16 %v1069
        %v1802 = vunpack.c.l.b16 %v1070
        %v1803 = vunpack.c.l.b16 %v1071
        %v1804 = vunpack.c.l.b16 %v1072
        %v1805 = vunpack.c.l.b16 %v1073
        %v1806 = vunpack.c.l.b16 %v1074
        %v1807 = vunpack.c.l.b16 %v1075
        %v1808 = vunpack.c.l.b16 %v1076
        %v1809 = vunpack.c.l.b16 %v1077
        %v1810 = vunpack.c.l.b16 %v1078
        %v1811 = vpack.c.b16 %v1780, %v1779
        %v1812 = vpack.c.b16 %v1782, %v1781
        %v1813 = vpack.c.b16 %v1784, %v1783
        %v1814 = vpack.c.b16 %v1786, %v1785
        %v1815 = vpack.c.b16 %v1788, %v1787
        %v1816 = vpack.c.b16 %v1790, %v1789
        %v1817 = vpack.c.b16 %v1792, %v1791
        %v1818 = vpack.c.b16 %v1794, %v1793
        %v1819 = vpack.c.b16 %v1796, %v1795
        %v1820 = vpack.c.b16 %v1798, %v1797
        %v1821 = vpack.c.b16 %v1800, %v1799
        %v1822 = vpack.c.b16 %v1802, %v1801
        %v1823 = vpack.c.b16 %v1804, %v1803
        %v1824 = vpack.c.b16 %v1806, %v1805
        %v1825 = vpack.c.b16 %v1808, %v1807
        %v1826 = vpack.c.b16 %v1810, %v1809
        %v1828 = vsel %vm1533, %v1811, 0
        %v1831 = vsel %vm1533, %v1812, 0
        %v1834 = vsel %vm1533, %v1813, 0
        %v1837 = vsel %vm1533, %v1814, 0
        %v1840 = vsel %vm1533, %v1815, 0
        %v1843 = vsel %vm1533, %v1816, 0
        %v1846 = vsel %vm1533, %v1817, 0
        %v1849 = vsel %vm1533, %v1818, 0
        %v1852 = vsel %vm1533, %v1819, 0
        %v1855 = vsel %vm1533, %v1820, 0
        %v1858 = vsel %vm1533, %v1821, 0
        %v1861 = vsel %vm1533, %v1822, 0
        %v1864 = vsel %vm1533, %v1823, 0
        %v1867 = vsel %vm1533, %v1824, 0
        %v1870 = vsel %vm1533, %v1825, 0
        %v1873 = vsel %vm1533, %v1826, 0
        %v1876 = vsel %vm1582, %v1079, 0
        %1878 = vmatprep.subr.bf16.mxu0 0
        %1879 = vmatpush1.bf16.msra.mxu0 %v1876
        %1880 = vmatprep.subr.bf16.mxu0 0
        %1881 = vmatpush1.bf16.msra.mxu0 0
        %1882 = vmatprep.subr.bf16.mxu0 0
        %1883 = vmatpush1.bf16.msra.mxu0 0
        %1884 = vmatprep.subr.bf16.mxu0 0
        %1885 = vmatpush1.bf16.msra.mxu0 0
        %1886 = vmatprep.subr.bf16.mxu0 0
        %1887 = vmatpush1.bf16.msra.mxu0 0
        %1888 = vmatprep.subr.bf16.mxu0 0
        %1889 = vmatpush1.bf16.msra.mxu0 0
        %1890 = vmatprep.subr.bf16.mxu0 0
        %1891 = vmatpush1.bf16.msra.mxu0 0
        %1892 = vmatprep.subr.bf16.mxu0 0
        %1893 = vmatpush1.bf16.msra.mxu0 0
        %1894 = vmatprep.subr.bf16.mxu0 0
        %1895 = vmatpush1.bf16.msra.mxu0 0
        %1896 = vmatprep.subr.bf16.mxu0 0
        %1897 = vmatpush1.bf16.msra.mxu0 0
        %1898 = vmatprep.subr.bf16.mxu0 0
        %1899 = vmatpush1.bf16.msra.mxu0 0
        %1900 = vmatprep.subr.bf16.mxu0 0
        %1901 = vmatpush1.bf16.msra.mxu0 0
        %1902 = vmatprep.subr.bf16.mxu0 0
        %1903 = vmatpush1.bf16.msra.mxu0 0
        %1904 = vmatprep.subr.bf16.mxu0 0
        %1905 = vmatpush1.bf16.msra.mxu0 0
        %1906 = vmatprep.subr.bf16.mxu0 0
        %1907 = vmatpush1.bf16.msra.mxu0 0
        %1908 = vmatprep.subr.bf16.mxu0 0
        %1909 = vmatpush1.bf16.msra.mxu0 0
        %1910 = vmatprep.mubr.bf16.mxu0 0
        %1911 = vmatmul.mubr.bf16.gmra.mrb[0].mxu0 %v1828
        %v1912 = vpop.f32.mrb[0].mxu0
        %v1913 = vadd.f32 %v1621, %v1912
        %v1914 = vpop.f32.mrb[0].mxu0
        %v1915 = vpop.f32.mrb[0].mxu0
        %v1916 = vadd.f32 %v1624, %v1915
        %v1917 = vpop.f32.mrb[0].mxu0
        %1918 = vmatprep.mubr.bf16.mxu0 0
        %1919 = vmatmul.mubr.bf16.gmra.mrb[0].mxu0 %v1831
        %v1920 = vpop.f32.mrb[0].mxu0
        %v1921 = vadd.f32 %v1629, %v1920
        %v1922 = vpop.f32.mrb[0].mxu0
        %v1923 = vpop.f32.mrb[0].mxu0
        %v1924 = vadd.f32 %v1632, %v1923
        %v1925 = vpop.f32.mrb[0].mxu0
        %1926 = vmatprep.mubr.bf16.mxu0 0
        %1927 = vmatmul.mubr.bf16.gmra.mrb[0].mxu0 %v1834
        %v1928 = vpop.f32.mrb[0].mxu0
        %v1929 = vadd.f32 %v1637, %v1928
        %v1930 = vpop.f32.mrb[0].mxu0
        %v1931 = vpop.f32.mrb[0].mxu0
        %v1932 = vadd.f32 %v1640, %v1931
        %v1933 = vpop.f32.mrb[0].mxu0
        %1934 = vmatprep.mubr.bf16.mxu0 0
        %1935 = vmatmul.mubr.bf16.gmra.mrb[0].mxu0 %v1837
        %v1936 = vpop.f32.mrb[0].mxu0
        %v1937 = vadd.f32 %v1645, %v1936
        %v1938 = vpop.f32.mrb[0].mxu0
        %v1939 = vpop.f32.mrb[0].mxu0
        %v1940 = vadd.f32 %v1648, %v1939
        %v1941 = vpop.f32.mrb[0].mxu0
        %1942 = vmatprep.mubr.bf16.mxu0 0
        %1943 = vmatmul.mubr.bf16.gmra.mrb[0].mxu0 %v1840
        %v1944 = vpop.f32.mrb[0].mxu0
        %v1945 = vadd.f32 %v1653, %v1944
        %v1946 = vpop.f32.mrb[0].mxu0
        %v1947 = vpop.f32.mrb[0].mxu0
        %v1948 = vadd.f32 %v1656, %v1947
        %v1949 = vpop.f32.mrb[0].mxu0
        %1950 = vmatprep.mubr.bf16.mxu0 0
        %1951 = vmatmul.mubr.bf16.gmra.mrb[0].mxu0 %v1843
        %v1952 = vpop.f32.mrb[0].mxu0
        %v1953 = vadd.f32 %v1661, %v1952
        %v1954 = vpop.f32.mrb[0].mxu0
        %v1955 = vpop.f32.mrb[0].mxu0
        %v1956 = vadd.f32 %v1664, %v1955
        %v1957 = vpop.f32.mrb[0].mxu0
        %1958 = vmatprep.mubr.bf16.mxu0 0
        %1959 = vmatmul.mubr.bf16.gmra.mrb[0].mxu0 %v1846
        %v1960 = vpop.f32.mrb[0].mxu0
        %v1961 = vadd.f32 %v1669, %v1960
        %v1962 = vpop.f32.mrb[0].mxu0
        %v1963 = vpop.f32.mrb[0].mxu0
        %v1964 = vadd.f32 %v1672, %v1963
        %v1965 = vpop.f32.mrb[0].mxu0
        %1966 = vmatprep.mubr.bf16.mxu0 0
        %1967 = vmatmul.mubr.bf16.gmra.mrb[0].mxu0 %v1849
        %v1968 = vpop.f32.mrb[0].mxu0
        %v1969 = vadd.f32 %v1677, %v1968
        %v1970 = vpop.f32.mrb[0].mxu0
        %v1971 = vpop.f32.mrb[0].mxu0
        %v1972 = vadd.f32 %v1680, %v1971
        %v1973 = vpop.f32.mrb[0].mxu0
        %1974 = vmatprep.mubr.bf16.mxu0 0
        %1975 = vmatmul.mubr.bf16.gmra.mrb[0].mxu0 %v1852
        %v1976 = vpop.f32.mrb[0].mxu0
        %v1977 = vadd.f32 %v1685, %v1976
        %v1978 = vpop.f32.mrb[0].mxu0
        %v1979 = vpop.f32.mrb[0].mxu0
        %v1980 = vadd.f32 %v1688, %v1979
        %v1981 = vpop.f32.mrb[0].mxu0
        %1982 = vmatprep.mubr.bf16.mxu0 0
        %1983 = vmatmul.mubr.bf16.gmra.mrb[0].mxu0 %v1855
        %v1984 = vpop.f32.mrb[0].mxu0
        %v1985 = vadd.f32 %v1693, %v1984
        %v1986 = vpop.f32.mrb[0].mxu0
        %v1987 = vpop.f32.mrb[0].mxu0
        %v1988 = vadd.f32 %v1696, %v1987
        %v1989 = vpop.f32.mrb[0].mxu0
        %1990 = vmatprep.mubr.bf16.mxu0 0
        %1991 = vmatmul.mubr.bf16.gmra.mrb[0].mxu0 %v1858
        %v1992 = vpop.f32.mrb[0].mxu0
        %v1993 = vadd.f32 %v1701, %v1992
        %v1994 = vpop.f32.mrb[0].mxu0
        %v1995 = vpop.f32.mrb[0].mxu0
        %v1996 = vadd.f32 %v1704, %v1995
        %v1997 = vpop.f32.mrb[0].mxu0
        %1998 = vmatprep.mubr.bf16.mxu0 0
        %1999 = vmatmul.mubr.bf16.gmra.mrb[0].mxu0 %v1861
        %v2000 = vpop.f32.mrb[0].mxu0
        %v2001 = vadd.f32 %v1709, %v2000
        %v2002 = vpop.f32.mrb[0].mxu0
        %v2003 = vpop.f32.mrb[0].mxu0
        %v2004 = vadd.f32 %v1712, %v2003
        %v2005 = vpop.f32.mrb[0].mxu0
        %2006 = vmatprep.mubr.bf16.mxu0 0
        %2007 = vmatmul.mubr.bf16.gmra.mrb[0].mxu0 %v1864
        %v2008 = vpop.f32.mrb[0].mxu0
        %v2009 = vadd.f32 %v1717, %v2008
        %v2010 = vpop.f32.mrb[0].mxu0
        %v2011 = vpop.f32.mrb[0].mxu0
        %v2012 = vadd.f32 %v1720, %v2011
        %v2013 = vpop.f32.mrb[0].mxu0
        %2014 = vmatprep.mubr.bf16.mxu0 0
        %2015 = vmatmul.mubr.bf16.gmra.mrb[0].mxu0 %v1867
        %v2016 = vpop.f32.mrb[0].mxu0
        %v2017 = vadd.f32 %v1725, %v2016
        %v2018 = vpop.f32.mrb[0].mxu0
        %v2019 = vpop.f32.mrb[0].mxu0
        %v2020 = vadd.f32 %v1728, %v2019
        %v2021 = vpop.f32.mrb[0].mxu0
        %2022 = vmatprep.mubr.bf16.mxu0 0
        %2023 = vmatmul.mubr.bf16.gmra.mrb[0].mxu0 %v1870
        %v2024 = vpop.f32.mrb[0].mxu0
        %v2025 = vadd.f32 %v1733, %v2024
        %v2026 = vpop.f32.mrb[0].mxu0
        %v2027 = vpop.f32.mrb[0].mxu0
        %v2028 = vadd.f32 %v1736, %v2027
        %v2029 = vpop.f32.mrb[0].mxu0
        %2030 = vmatprep.mubr.bf16.mxu0 0
        %2031 = vmatmul.mubr.bf16.gmra.mrb[0].mxu0 %v1873
        %v2032 = vpop.f32.mrb[0].mxu0
        %v2033 = vadd.f32 %v1741, %v2032
        %v2034 = vpop.f32.mrb[0].mxu0
        %v2035 = vpop.f32.mrb[0].mxu0
        %v2036 = vadd.f32 %v1744, %v2035
        %v2037 = vpop.f32.mrb[0].mxu0
        %2038 = vdwg.mxu0
        %v2039 = vld [vmem:[#allocation2] sm:$0xe]
        %v2040 = vld [vmem:[#allocation2 + $0xc] sm:$0xe]
        %v2041 = vld [vmem:[#allocation2 + $0x18] sm:$0xe]
        %v2042 = vld [vmem:[#allocation2 + $0x24] sm:$0xe]
        %v2043 = vld [vmem:[#allocation2 + $0x30] sm:$0xe]
        %v2044 = vld [vmem:[#allocation2 + $0x3c] sm:$0xe]
        %v2045 = vld [vmem:[#allocation2 + $0x48] sm:$0xe]
        %v2046 = vld [vmem:[#allocation2 + $0x54] sm:$0xe]
        %v2047 = vld [vmem:[#allocation2 + $0x60] sm:$0xe]
        %v2048 = vld [vmem:[#allocation2 + $0x6c] sm:$0xe]
        %v2049 = vld [vmem:[#allocation2 + $0x78] sm:$0xe]
        %v2050 = vld [vmem:[#allocation2 + $0x84] sm:$0xe]
        %v2051 = vld [vmem:[#allocation2 + $0x90] sm:$0xe]
        %v2052 = vld [vmem:[#allocation2 + $0x9c] sm:$0xe]
        %v2053 = vld [vmem:[#allocation2 + $0xa8] sm:$0xe]
        %v2054 = vld [vmem:[#allocation2 + $0xb4] sm:$0xe]
        %vm2087 = vcmask 1042432
        %vm2088 = vcmask 1046532
        %vm2089 = vmor %vm2087, %vm2088
        %v2090 = vrot.slane %v2039, 5
        %v2091 = vrot.slane %v2090, 4
        %v2092 = vrot.slane %v1048, 5
        %v2093 = vsel %vm2089, %v2091, %v2092
        %v2094 = vrot.slane %v2092, 4
        %v2095 = vrot.slane %v1080, 5
        %v2096 = vsel %vm2089, %v2094, %v2095
        %v2097 = vrot.slane %v2040, 5
        %v2098 = vrot.slane %v2097, 4
        %v2099 = vrot.slane %v1050, 5
        %v2100 = vsel %vm2089, %v2098, %v2099
        %v2101 = vrot.slane %v2099, 4
        %v2102 = vrot.slane %v1081, 5
        %v2103 = vsel %vm2089, %v2101, %v2102
        %v2104 = vrot.slane %v2041, 5
        %v2105 = vrot.slane %v2104, 4
        %v2106 = vrot.slane %v1052, 5
        %v2107 = vsel %vm2089, %v2105, %v2106
        %v2108 = vrot.slane %v2106, 4
        %v2109 = vrot.slane %v1082, 5
        %v2110 = vsel %vm2089, %v2108, %v2109
        %v2111 = vrot.slane %v2042, 5
        %v2112 = vrot.slane %v2111, 4
        %v2113 = vrot.slane %v1054, 5
        %v2114 = vsel %vm2089, %v2112, %v2113
        %v2115 = vrot.slane %v2113, 4
        %v2116 = vrot.slane %v1083, 5
        %v2117 = vsel %vm2089, %v2115, %v2116
        %v2118 = vrot.slane %v2043, 5
        %v2119 = vrot.slane %v2118, 4
        %v2120 = vrot.slane %v1056, 5
        %v2121 = vsel %vm2089, %v2119, %v2120
        %v2122 = vrot.slane %v2120, 4
        %v2123 = vrot.slane %v1084, 5
        %v2124 = vsel %vm2089, %v2122, %v2123
        %v2125 = vrot.slane %v2044, 5
        %v2126 = vrot.slane %v2125, 4
        %v2127 = vrot.slane %v1058, 5
        %v2128 = vsel %vm2089, %v2126, %v2127
        %v2129 = vrot.slane %v2127, 4
        %v2130 = vrot.slane %v1085, 5
        %v2131 = vsel %vm2089, %v2129, %v2130
        %v2132 = vrot.slane %v2045, 5
        %v2133 = vrot.slane %v2132, 4
        %v2134 = vrot.slane %v1060, 5
        %v2135 = vsel %vm2089, %v2133, %v2134
        %v2136 = vrot.slane %v2134, 4
        %v2137 = vrot.slane %v1086, 5
        %v2138 = vsel %vm2089, %v2136, %v2137
        %v2139 = vrot.slane %v2046, 5
        %v2140 = vrot.slane %v2139, 4
        %v2141 = vrot.slane %v1062, 5
        %v2142 = vsel %vm2089, %v2140, %v2141
        %v2143 = vrot.slane %v2141, 4
        %v2144 = vrot.slane %v1087, 5
        %v2145 = vsel %vm2089, %v2143, %v2144
        %v2146 = vrot.slane %v2047, 5
        %v2147 = vrot.slane %v2146, 4
        %v2148 = vrot.slane %v1064, 5
        %v2149 = vsel %vm2089, %v2147, %v2148
        %v2150 = vrot.slane %v2148, 4
        %v2151 = vrot.slane %v1088, 5
        %v2152 = vsel %vm2089, %v2150, %v2151
        %v2153 = vrot.slane %v2048, 5
        %v2154 = vrot.slane %v2153, 4
        %v2155 = vrot.slane %v1066, 5
        %v2156 = vsel %vm2089, %v2154, %v2155
        %v2157 = vrot.slane %v2155, 4
        %v2158 = vrot.slane %v1089, 5
        %v2159 = vsel %vm2089, %v2157, %v2158
        %v2160 = vrot.slane %v2049, 5
        %v2161 = vrot.slane %v2160, 4
        %v2162 = vrot.slane %v1068, 5
        %v2163 = vsel %vm2089, %v2161, %v2162
        %v2164 = vrot.slane %v2162, 4
        %v2165 = vrot.slane %v1090, 5
        %v2166 = vsel %vm2089, %v2164, %v2165
        %v2167 = vrot.slane %v2050, 5
        %v2168 = vrot.slane %v2167, 4
        %v2169 = vrot.slane %v1070, 5
        %v2170 = vsel %vm2089, %v2168, %v2169
        %v2171 = vrot.slane %v2169, 4
        %v2172 = vrot.slane %v1091, 5
        %v2173 = vsel %vm2089, %v2171, %v2172
        %v2174 = vrot.slane %v2051, 5
        %v2175 = vrot.slane %v2174, 4
        %v2176 = vrot.slane %v1072, 5
        %v2177 = vsel %vm2089, %v2175, %v2176
        %v2178 = vrot.slane %v2176, 4
        %v2179 = vrot.slane %v1092, 5
        %v2180 = vsel %vm2089, %v2178, %v2179
        %v2181 = vrot.slane %v2052, 5
        %v2182 = vrot.slane %v2181, 4
        %v2183 = vrot.slane %v1074, 5
        %v2184 = vsel %vm2089, %v2182, %v2183
        %v2185 = vrot.slane %v2183, 4
        %v2186 = vrot.slane %v1093, 5
        %v2187 = vsel %vm2089, %v2185, %v2186
        %v2188 = vrot.slane %v2053, 5
        %v2189 = vrot.slane %v2188, 4
        %v2190 = vrot.slane %v1076, 5
        %v2191 = vsel %vm2089, %v2189, %v2190
        %v2192 = vrot.slane %v2190, 4
        %v2193 = vrot.slane %v1094, 5
        %v2194 = vsel %vm2089, %v2192, %v2193
        %v2195 = vrot.slane %v2054, 5
        %v2196 = vrot.slane %v2195, 4
        %v2197 = vrot.slane %v1078, 5
        %v2198 = vsel %vm2089, %v2196, %v2197
        %v2199 = vrot.slane %v2197, 4
        %v2200 = vrot.slane %v1095, 5
        %v2201 = vsel %vm2089, %v2199, %v2200
        %s2202 = scalar_lea.vmem %s1, 4
        %v2203 = vld [vmem:[%s2202] sm:$0x3]
        %v2204 = vunpack.c.l.b16 %v2093
        %v2205 = vunpack.c.l.b16 %v2096
        %v2206 = vunpack.c.l.b16 %v2100
        %v2207 = vunpack.c.l.b16 %v2103
        %v2208 = vunpack.c.l.b16 %v2107
        %v2209 = vunpack.c.l.b16 %v2110
        %v2210 = vunpack.c.l.b16 %v2114
        %v2211 = vunpack.c.l.b16 %v2117
        %v2212 = vunpack.c.l.b16 %v2121
        %v2213 = vunpack.c.l.b16 %v2124
        %v2214 = vunpack.c.l.b16 %v2128
        %v2215 = vunpack.c.l.b16 %v2131
        %v2216 = vunpack.c.l.b16 %v2135
        %v2217 = vunpack.c.l.b16 %v2138
        %v2218 = vunpack.c.l.b16 %v2142
        %v2219 = vunpack.c.l.b16 %v2145
        %v2220 = vunpack.c.l.b16 %v2149
        %v2221 = vunpack.c.l.b16 %v2152
        %v2222 = vunpack.c.l.b16 %v2156
        %v2223 = vunpack.c.l.b16 %v2159
        %v2224 = vunpack.c.l.b16 %v2163
        %v2225 = vunpack.c.l.b16 %v2166
        %v2226 = vunpack.c.l.b16 %v2170
        %v2227 = vunpack.c.l.b16 %v2173
        %v2228 = vunpack.c.l.b16 %v2177
        %v2229 = vunpack.c.l.b16 %v2180
        %v2230 = vunpack.c.l.b16 %v2184
        %v2231 = vunpack.c.l.b16 %v2187
        %v2232 = vunpack.c.l.b16 %v2191
        %v2233 = vunpack.c.l.b16 %v2194
        %v2234 = vunpack.c.l.b16 %v2198
        %v2235 = vunpack.c.l.b16 %v2201
        %v2236 = vpack.c.b16 %v2205, %v2204
        %v2237 = vpack.c.b16 %v2207, %v2206
        %v2238 = vpack.c.b16 %v2209, %v2208
        %v2239 = vpack.c.b16 %v2211, %v2210
        %v2240 = vpack.c.b16 %v2213, %v2212
        %v2241 = vpack.c.b16 %v2215, %v2214
        %v2242 = vpack.c.b16 %v2217, %v2216
        %v2243 = vpack.c.b16 %v2219, %v2218
        %v2244 = vpack.c.b16 %v2221, %v2220
        %v2245 = vpack.c.b16 %v2223, %v2222
        %v2246 = vpack.c.b16 %v2225, %v2224
        %v2247 = vpack.c.b16 %v2227, %v2226
        %v2248 = vpack.c.b16 %v2229, %v2228
        %v2249 = vpack.c.b16 %v2231, %v2230
        %v2250 = vpack.c.b16 %v2233, %v2232
        %v2251 = vpack.c.b16 %v2235, %v2234
        %v2253 = vsel %vm1533, %v2236, 0
        %v2256 = vsel %vm1533, %v2237, 0
        %v2259 = vsel %vm1533, %v2238, 0
        %v2262 = vsel %vm1533, %v2239, 0
        %v2265 = vsel %vm1533, %v2240, 0
        %v2268 = vsel %vm1533, %v2241, 0
        %v2271 = vsel %vm1533, %v2242, 0
        %v2274 = vsel %vm1533, %v2243, 0
        %v2277 = vsel %vm1533, %v2244, 0
        %v2280 = vsel %vm1533, %v2245, 0
        %v2283 = vsel %vm1533, %v2246, 0
        %v2286 = vsel %vm1533, %v2247, 0
        %v2289 = vsel %vm1533, %v2248, 0
        %v2292 = vsel %vm1533, %v2249, 0
        %v2295 = vsel %vm1533, %v2250, 0
        %v2298 = vsel %vm1533, %v2251, 0
        %v2301 = vsel %vm1582, %v2203, 0
        %2303 = vmatprep.subr.bf16.mxu0 0
        %2304 = vmatpush1.bf16.msra.mxu0 %v2301
        %2305 = vmatprep.subr.bf16.mxu0 0
        %2306 = vmatpush1.bf16.msra.mxu0 0
        %2307 = vmatprep.subr.bf16.mxu0 0
        %2308 = vmatpush1.bf16.msra.mxu0 0
        %2309 = vmatprep.subr.bf16.mxu0 0
        %2310 = vmatpush1.bf16.msra.mxu0 0
        %2311 = vmatprep.subr.bf16.mxu0 0
        %2312 = vmatpush1.bf16.msra.mxu0 0
        %2313 = vmatprep.subr.bf16.mxu0 0
        %2314 = vmatpush1.bf16.msra.mxu0 0
        %2315 = vmatprep.subr.bf16.mxu0 0
        %2316 = vmatpush1.bf16.msra.mxu0 0
        %2317 = vmatprep.subr.bf16.mxu0 0
        %2318 = vmatpush1.bf16.msra.mxu0 0
        %2319 = vmatprep.subr.bf16.mxu0 0
        %2320 = vmatpush1.bf16.msra.mxu0 0
        %2321 = vmatprep.subr.bf16.mxu0 0
        %2322 = vmatpush1.bf16.msra.mxu0 0
        %2323 = vmatprep.subr.bf16.mxu0 0
        %2324 = vmatpush1.bf16.msra.mxu0 0
        %2325 = vmatprep.subr.bf16.mxu0 0
        %2326 = vmatpush1.bf16.msra.mxu0 0
        %2327 = vmatprep.subr.bf16.mxu0 0
        %2328 = vmatpush1.bf16.msra.mxu0 0
        %2329 = vmatprep.subr.bf16.mxu0 0
        %2330 = vmatpush1.bf16.msra.mxu0 0
        %2331 = vmatprep.subr.bf16.mxu0 0
        %2332 = vmatpush1.bf16.msra.mxu0 0
        %2333 = vmatprep.subr.bf16.mxu0 0
        %2334 = vmatpush1.bf16.msra.mxu0 0
        %2335 = vmatprep.mubr.bf16.mxu0 0
        %2336 = vmatmul.mubr.bf16.gmra.mrb[0].mxu0 %v2253
        %v2337 = vpop.f32.mrb[0].mxu0
        %v2338 = vadd.f32 0.0, %v2337
        %v2339 = vpop.f32.mrb[0].mxu0
        %v2340 = vpop.f32.mrb[0].mxu0
        %v2341 = vadd.f32 0.0, %v2340
        %v2342 = vpop.f32.mrb[0].mxu0
        %2343 = vmatprep.mubr.bf16.mxu0 0
        %2344 = vmatmul.mubr.bf16.gmra.mrb[0].mxu0 %v2256
        %v2345 = vpop.f32.mrb[0].mxu0
        %v2346 = vadd.f32 0.0, %v2345
        %v2347 = vpop.f32.mrb[0].mxu0
        %v2348 = vpop.f32.mrb[0].mxu0
        %v2349 = vadd.f32 0.0, %v2348
        %v2350 = vpop.f32.mrb[0].mxu0
        %2351 = vmatprep.mubr.bf16.mxu0 0
        %2352 = vmatmul.mubr.bf16.gmra.mrb[0].mxu0 %v2259
        %v2353 = vpop.f32.mrb[0].mxu0
        %v2354 = vadd.f32 0.0, %v2353
        %v2355 = vpop.f32.mrb[0].mxu0
        %v2356 = vpop.f32.mrb[0].mxu0
        %v2357 = vadd.f32 0.0, %v2356
        %v2358 = vpop.f32.mrb[0].mxu0
        %2359 = vmatprep.mubr.bf16.mxu0 0
        %2360 = vmatmul.mubr.bf16.gmra.mrb[0].mxu0 %v2262
        %v2361 = vpop.f32.mrb[0].mxu0
        %v2362 = vadd.f32 0.0, %v2361
        %v2363 = vpop.f32.mrb[0].mxu0
        %v2364 = vpop.f32.mrb[0].mxu0
        %v2365 = vadd.f32 0.0, %v2364
        %v2366 = vpop.f32.mrb[0].mxu0
        %2367 = vmatprep.mubr.bf16.mxu0 0
        %2368 = vmatmul.mubr.bf16.gmra.mrb[0].mxu0 %v2265
        %v2369 = vpop.f32.mrb[0].mxu0
        %v2370 = vadd.f32 0.0, %v2369
        %v2371 = vpop.f32.mrb[0].mxu0
        %v2372 = vpop.f32.mrb[0].mxu0
        %v2373 = vadd.f32 0.0, %v2372
        %v2374 = vpop.f32.mrb[0].mxu0
        %2375 = vmatprep.mubr.bf16.mxu0 0
        %2376 = vmatmul.mubr.bf16.gmra.mrb[0].mxu0 %v2268
        %v2377 = vpop.f32.mrb[0].mxu0
        %v2378 = vadd.f32 0.0, %v2377
        %v2379 = vpop.f32.mrb[0].mxu0
        %v2380 = vpop.f32.mrb[0].mxu0
        %v2381 = vadd.f32 0.0, %v2380
        %v2382 = vpop.f32.mrb[0].mxu0
        %2383 = vmatprep.mubr.bf16.mxu0 0
        %2384 = vmatmul.mubr.bf16.gmra.mrb[0].mxu0 %v2271
        %v2385 = vpop.f32.mrb[0].mxu0
        %v2386 = vadd.f32 0.0, %v2385
        %v2387 = vpop.f32.mrb[0].mxu0
        %v2388 = vpop.f32.mrb[0].mxu0
        %v2389 = vadd.f32 0.0, %v2388
        %v2390 = vpop.f32.mrb[0].mxu0
        %2391 = vmatprep.mubr.bf16.mxu0 0
        %2392 = vmatmul.mubr.bf16.gmra.mrb[0].mxu0 %v2274
        %v2393 = vpop.f32.mrb[0].mxu0
        %v2394 = vadd.f32 0.0, %v2393
        %v2395 = vpop.f32.mrb[0].mxu0
        %v2396 = vpop.f32.mrb[0].mxu0
        %v2397 = vadd.f32 0.0, %v2396
        %v2398 = vpop.f32.mrb[0].mxu0
        %2399 = vmatprep.mubr.bf16.mxu0 0
        %2400 = vmatmul.mubr.bf16.gmra.mrb[0].mxu0 %v2277
        %v2401 = vpop.f32.mrb[0].mxu0
        %v2402 = vadd.f32 0.0, %v2401
        %v2403 = vpop.f32.mrb[0].mxu0
        %v2404 = vpop.f32.mrb[0].mxu0
        %v2405 = vadd.f32 0.0, %v2404
        %v2406 = vpop.f32.mrb[0].mxu0
        %2407 = vmatprep.mubr.bf16.mxu0 0
        %2408 = vmatmul.mubr.bf16.gmra.mrb[0].mxu0 %v2280
        %v2409 = vpop.f32.mrb[0].mxu0
        %v2410 = vadd.f32 0.0, %v2409
        %v2411 = vpop.f32.mrb[0].mxu0
        %v2412 = vpop.f32.mrb[0].mxu0
        %v2413 = vadd.f32 0.0, %v2412
        %v2414 = vpop.f32.mrb[0].mxu0
        %2415 = vmatprep.mubr.bf16.mxu0 0
        %2416 = vmatmul.mubr.bf16.gmra.mrb[0].mxu0 %v2283
        %v2417 = vpop.f32.mrb[0].mxu0
        %v2418 = vadd.f32 0.0, %v2417
        %v2419 = vpop.f32.mrb[0].mxu0
        %v2420 = vpop.f32.mrb[0].mxu0
        %v2421 = vadd.f32 0.0, %v2420
        %v2422 = vpop.f32.mrb[0].mxu0
        %2423 = vmatprep.mubr.bf16.mxu0 0
        %2424 = vmatmul.mubr.bf16.gmra.mrb[0].mxu0 %v2286
        %v2425 = vpop.f32.mrb[0].mxu0
        %v2426 = vadd.f32 0.0, %v2425
        %v2427 = vpop.f32.mrb[0].mxu0
        %v2428 = vpop.f32.mrb[0].mxu0
        %v2429 = vadd.f32 0.0, %v2428
        %v2430 = vpop.f32.mrb[0].mxu0
        %2431 = vmatprep.mubr.bf16.mxu0 0
        %2432 = vmatmul.mubr.bf16.gmra.mrb[0].mxu0 %v2289
        %v2433 = vpop.f32.mrb[0].mxu0
        %v2434 = vadd.f32 0.0, %v2433
        %v2435 = vpop.f32.mrb[0].mxu0
        %v2436 = vpop.f32.mrb[0].mxu0
        %v2437 = vadd.f32 0.0, %v2436
        %v2438 = vpop.f32.mrb[0].mxu0
        %2439 = vmatprep.mubr.bf16.mxu0 0
        %2440 = vmatmul.mubr.bf16.gmra.mrb[0].mxu0 %v2292
        %v2441 = vpop.f32.mrb[0].mxu0
        %v2442 = vadd.f32 0.0, %v2441
        %v2443 = vpop.f32.mrb[0].mxu0
        %v2444 = vpop.f32.mrb[0].mxu0
        %v2445 = vadd.f32 0.0, %v2444
        %v2446 = vpop.f32.mrb[0].mxu0
        %2447 = vmatprep.mubr.bf16.mxu0 0
        %2448 = vmatmul.mubr.bf16.gmra.mrb[0].mxu0 %v2295
        %v2449 = vpop.f32.mrb[0].mxu0
        %v2450 = vadd.f32 0.0, %v2449
        %v2451 = vpop.f32.mrb[0].mxu0
        %v2452 = vpop.f32.mrb[0].mxu0
        %v2453 = vadd.f32 0.0, %v2452
        %v2454 = vpop.f32.mrb[0].mxu0
        %2455 = vmatprep.mubr.bf16.mxu0 0
        %2456 = vmatmul.mubr.bf16.gmra.mrb[0].mxu0 %v2298
        %v2457 = vpop.f32.mrb[0].mxu0
        %v2458 = vadd.f32 0.0, %v2457
        %v2459 = vpop.f32.mrb[0].mxu0
        %v2460 = vpop.f32.mrb[0].mxu0
        %v2461 = vadd.f32 0.0, %v2460
        %v2462 = vpop.f32.mrb[0].mxu0
        %2463 = vdwg.mxu0
        %v2464 = vadd.f32 %v1913, %v2338
        %v2465 = vadd.f32 %v1916, %v2341
        %v2466 = vadd.f32 %v1921, %v2346
        %v2467 = vadd.f32 %v1924, %v2349
        %v2468 = vadd.f32 %v1929, %v2354
        %v2469 = vadd.f32 %v1932, %v2357
        %v2470 = vadd.f32 %v1937, %v2362
        %v2471 = vadd.f32 %v1940, %v2365
        %v2472 = vadd.f32 %v1945, %v2370
        %v2473 = vadd.f32 %v1948, %v2373
        %v2474 = vadd.f32 %v1953, %v2378
        %v2475 = vadd.f32 %v1956, %v2381
        %v2476 = vadd.f32 %v1961, %v2386
        %v2477 = vadd.f32 %v1964, %v2389
        %v2478 = vadd.f32 %v1969, %v2394
        %v2479 = vadd.f32 %v1972, %v2397
        %v2480 = vadd.f32 %v1977, %v2402
        %v2481 = vadd.f32 %v1980, %v2405
        %v2482 = vadd.f32 %v1985, %v2410
        %v2483 = vadd.f32 %v1988, %v2413
        %v2484 = vadd.f32 %v1993, %v2418
        %v2485 = vadd.f32 %v1996, %v2421
        %v2486 = vadd.f32 %v2001, %v2426
        %v2487 = vadd.f32 %v2004, %v2429
        %v2488 = vadd.f32 %v2009, %v2434
        %v2489 = vadd.f32 %v2012, %v2437
        %v2490 = vadd.f32 %v2017, %v2442
        %v2491 = vadd.f32 %v2020, %v2445
        %v2492 = vadd.f32 %v2025, %v2450
        %v2493 = vadd.f32 %v2028, %v2453
        %v2494 = vadd.f32 %v2033, %v2458
        %v2495 = vadd.f32 %v2036, %v2461
        %v2496 = vld [vmem:[%s932] sm:$0xf]
        %v2497 = vld [vmem:[%s932 + $0x4] sm:$0xf]
        %v2498 = vld [vmem:[%s932 + $0xc] sm:$0xf]
        %v2499 = vld [vmem:[%s932 + $0x10] sm:$0xf]
        %v2500 = vld [vmem:[%s932 + $0x18] sm:$0xf]
        %v2501 = vld [vmem:[%s932 + $0x1c] sm:$0xf]
        %v2502 = vld [vmem:[%s932 + $0x24] sm:$0xf]
        %v2503 = vld [vmem:[%s932 + $0x28] sm:$0xf]
        %v2504 = vld [vmem:[%s932 + $0x30] sm:$0xf]
        %v2505 = vld [vmem:[%s932 + $0x34] sm:$0xf]
        %v2506 = vld [vmem:[%s932 + $0x3c] sm:$0xf]
        %v2507 = vld [vmem:[%s932 + $0x40] sm:$0xf]
        %v2508 = vld [vmem:[%s932 + $0x48] sm:$0xf]
        %v2509 = vld [vmem:[%s932 + $0x4c] sm:$0xf]
        %v2510 = vld [vmem:[%s932 + $0x54] sm:$0xf]
        %v2511 = vld [vmem:[%s932 + $0x58] sm:$0xf]
        %v2512 = vld [vmem:[%s932 + $0x60] sm:$0xf]
        %v2513 = vld [vmem:[%s932 + $0x64] sm:$0xf]
        %v2514 = vld [vmem:[%s932 + $0x6c] sm:$0xf]
        %v2515 = vld [vmem:[%s932 + $0x70] sm:$0xf]
        %v2516 = vld [vmem:[%s932 + $0x78] sm:$0xf]
        %v2517 = vld [vmem:[%s932 + $0x7c] sm:$0xf]
        %v2518 = vld [vmem:[%s932 + $0x84] sm:$0xf]
        %v2519 = vld [vmem:[%s932 + $0x88] sm:$0xf]
        %v2520 = vld [vmem:[%s932 + $0x90] sm:$0xf]
        %v2521 = vld [vmem:[%s932 + $0x94] sm:$0xf]
        %v2522 = vld [vmem:[%s932 + $0x9c] sm:$0xf]
        %v2523 = vld [vmem:[%s932 + $0xa0] sm:$0xf]
        %v2524 = vld [vmem:[%s932 + $0xa8] sm:$0xf]
        %v2525 = vld [vmem:[%s932 + $0xac] sm:$0xf]
        %v2526 = vld [vmem:[%s932 + $0xb4] sm:$0xf]
        %v2527 = vld [vmem:[%s932 + $0xb8] sm:$0xf]
        %s2528 = scalar_lea.vmem %s1, 6
        %v2529 = vld [vmem:[%s2528] sm:$0x3]
        %v2562 = vunpack.c.l.b16 %v2496
        %v2563 = vunpack.c.l.b16 %v2497
        %v2564 = vunpack.c.l.b16 %v2498
        %v2565 = vunpack.c.l.b16 %v2499
        %v2566 = vunpack.c.l.b16 %v2500
        %v2567 = vunpack.c.l.b16 %v2501
        %v2568 = vunpack.c.l.b16 %v2502
        %v2569 = vunpack.c.l.b16 %v2503
        %v2570 = vunpack.c.l.b16 %v2504
        %v2571 = vunpack.c.l.b16 %v2505
        %v2572 = vunpack.c.l.b16 %v2506
        %v2573 = vunpack.c.l.b16 %v2507
        %v2574 = vunpack.c.l.b16 %v2508
        %v2575 = vunpack.c.l.b16 %v2509
        %v2576 = vunpack.c.l.b16 %v2510
        %v2577 = vunpack.c.l.b16 %v2511
        %v2578 = vunpack.c.l.b16 %v2512
        %v2579 = vunpack.c.l.b16 %v2513
        %v2580 = vunpack.c.l.b16 %v2514
        %v2581 = vunpack.c.l.b16 %v2515
        %v2582 = vunpack.c.l.b16 %v2516
        %v2583 = vunpack.c.l.b16 %v2517
        %v2584 = vunpack.c.l.b16 %v2518
        %v2585 = vunpack.c.l.b16 %v2519
        %v2586 = vunpack.c.l.b16 %v2520
        %v2587 = vunpack.c.l.b16 %v2521
        %v2588 = vunpack.c.l.b16 %v2522
        %v2589 = vunpack.c.l.b16 %v2523
        %v2590 = vunpack.c.l.b16 %v2524
        %v2591 = vunpack.c.l.b16 %v2525
        %v2592 = vunpack.c.l.b16 %v2526
        %v2593 = vunpack.c.l.b16 %v2527
        %v2594 = vpack.c.b16 %v2563, %v2562
        %v2595 = vpack.c.b16 %v2565, %v2564
        %v2596 = vpack.c.b16 %v2567, %v2566
        %v2597 = vpack.c.b16 %v2569, %v2568
        %v2598 = vpack.c.b16 %v2571, %v2570
        %v2599 = vpack.c.b16 %v2573, %v2572
        %v2600 = vpack.c.b16 %v2575, %v2574
        %v2601 = vpack.c.b16 %v2577, %v2576
        %v2602 = vpack.c.b16 %v2579, %v2578
        %v2603 = vpack.c.b16 %v2581, %v2580
        %v2604 = vpack.c.b16 %v2583, %v2582
        %v2605 = vpack.c.b16 %v2585, %v2584
        %v2606 = vpack.c.b16 %v2587, %v2586
        %v2607 = vpack.c.b16 %v2589, %v2588
        %v2608 = vpack.c.b16 %v2591, %v2590
        %v2609 = vpack.c.b16 %v2593, %v2592
        %v2611 = vsel %vm1533, %v2594, 0
        %v2614 = vsel %vm1533, %v2595, 0
        %v2617 = vsel %vm1533, %v2596, 0
        %v2620 = vsel %vm1533, %v2597, 0
        %v2623 = vsel %vm1533, %v2598, 0
        %v2626 = vsel %vm1533, %v2599, 0
        %v2629 = vsel %vm1533, %v2600, 0
        %v2632 = vsel %vm1533, %v2601, 0
        %v2635 = vsel %vm1533, %v2602, 0
        %v2638 = vsel %vm1533, %v2603, 0
        %v2641 = vsel %vm1533, %v2604, 0
        %v2644 = vsel %vm1533, %v2605, 0
        %v2647 = vsel %vm1533, %v2606, 0
        %v2650 = vsel %vm1533, %v2607, 0
        %v2653 = vsel %vm1533, %v2608, 0
        %v2656 = vsel %vm1533, %v2609, 0
        %v2659 = vsel %vm1582, %v2529, 0
        %2661 = vmatprep.subr.bf16.mxu0 0
        %2662 = vmatpush1.bf16.msra.mxu0 %v2659
        %2663 = vmatprep.subr.bf16.mxu0 0
        %2664 = vmatpush1.bf16.msra.mxu0 0
        %2665 = vmatprep.subr.bf16.mxu0 0
        %2666 = vmatpush1.bf16.msra.mxu0 0
        %2667 = vmatprep.subr.bf16.mxu0 0
        %2668 = vmatpush1.bf16.msra.mxu0 0
        %2669 = vmatprep.subr.bf16.mxu0 0
        %2670 = vmatpush1.bf16.msra.mxu0 0
        %2671 = vmatprep.subr.bf16.mxu0 0
        %2672 = vmatpush1.bf16.msra.mxu0 0
        %2673 = vmatprep.subr.bf16.mxu0 0
        %2674 = vmatpush1.bf16.msra.mxu0 0
        %2675 = vmatprep.subr.bf16.mxu0 0
        %2676 = vmatpush1.bf16.msra.mxu0 0
        %2677 = vmatprep.subr.bf16.mxu0 0
        %2678 = vmatpush1.bf16.msra.mxu0 0
        %2679 = vmatprep.subr.bf16.mxu0 0
        %2680 = vmatpush1.bf16.msra.mxu0 0
        %2681 = vmatprep.subr.bf16.mxu0 0
        %2682 = vmatpush1.bf16.msra.mxu0 0
        %2683 = vmatprep.subr.bf16.mxu0 0
        %2684 = vmatpush1.bf16.msra.mxu0 0
        %2685 = vmatprep.subr.bf16.mxu0 0
        %2686 = vmatpush1.bf16.msra.mxu0 0
        %2687 = vmatprep.subr.bf16.mxu0 0
        %2688 = vmatpush1.bf16.msra.mxu0 0
        %2689 = vmatprep.subr.bf16.mxu0 0
        %2690 = vmatpush1.bf16.msra.mxu0 0
        %2691 = vmatprep.subr.bf16.mxu0 0
        %2692 = vmatpush1.bf16.msra.mxu0 0
        %2693 = vmatprep.mubr.bf16.mxu0 0
        %2694 = vmatmul.mubr.bf16.gmra.mrb[0].mxu0 %v2611
        %v2695 = vpop.f32.mrb[0].mxu0
        %v2696 = vadd.f32 0.0, %v2695
        %v2697 = vpop.f32.mrb[0].mxu0
        %v2698 = vpop.f32.mrb[0].mxu0
        %v2699 = vadd.f32 0.0, %v2698
        %v2700 = vpop.f32.mrb[0].mxu0
        %2701 = vmatprep.mubr.bf16.mxu0 0
        %2702 = vmatmul.mubr.bf16.gmra.mrb[0].mxu0 %v2614
        %v2703 = vpop.f32.mrb[0].mxu0
        %v2704 = vadd.f32 0.0, %v2703
        %v2705 = vpop.f32.mrb[0].mxu0
        %v2706 = vpop.f32.mrb[0].mxu0
        %v2707 = vadd.f32 0.0, %v2706
        %v2708 = vpop.f32.mrb[0].mxu0
        %2709 = vmatprep.mubr.bf16.mxu0 0
        %2710 = vmatmul.mubr.bf16.gmra.mrb[0].mxu0 %v2617
        %v2711 = vpop.f32.mrb[0].mxu0
        %v2712 = vadd.f32 0.0, %v2711
        %v2713 = vpop.f32.mrb[0].mxu0
        %v2714 = vpop.f32.mrb[0].mxu0
        %v2715 = vadd.f32 0.0, %v2714
        %v2716 = vpop.f32.mrb[0].mxu0
        %2717 = vmatprep.mubr.bf16.mxu0 0
        %2718 = vmatmul.mubr.bf16.gmra.mrb[0].mxu0 %v2620
        %v2719 = vpop.f32.mrb[0].mxu0
        %v2720 = vadd.f32 0.0, %v2719
        %v2721 = vpop.f32.mrb[0].mxu0
        %v2722 = vpop.f32.mrb[0].mxu0
        %v2723 = vadd.f32 0.0, %v2722
        %v2724 = vpop.f32.mrb[0].mxu0
        %2725 = vmatprep.mubr.bf16.mxu0 0
        %2726 = vmatmul.mubr.bf16.gmra.mrb[0].mxu0 %v2623
        %v2727 = vpop.f32.mrb[0].mxu0
        %v2728 = vadd.f32 0.0, %v2727
        %v2729 = vpop.f32.mrb[0].mxu0
        %v2730 = vpop.f32.mrb[0].mxu0
        %v2731 = vadd.f32 0.0, %v2730
        %v2732 = vpop.f32.mrb[0].mxu0
        %2733 = vmatprep.mubr.bf16.mxu0 0
        %2734 = vmatmul.mubr.bf16.gmra.mrb[0].mxu0 %v2626
        %v2735 = vpop.f32.mrb[0].mxu0
        %v2736 = vadd.f32 0.0, %v2735
        %v2737 = vpop.f32.mrb[0].mxu0
        %v2738 = vpop.f32.mrb[0].mxu0
        %v2739 = vadd.f32 0.0, %v2738
        %v2740 = vpop.f32.mrb[0].mxu0
        %2741 = vmatprep.mubr.bf16.mxu0 0
        %2742 = vmatmul.mubr.bf16.gmra.mrb[0].mxu0 %v2629
        %v2743 = vpop.f32.mrb[0].mxu0
        %v2744 = vadd.f32 0.0, %v2743
        %v2745 = vpop.f32.mrb[0].mxu0
        %v2746 = vpop.f32.mrb[0].mxu0
        %v2747 = vadd.f32 0.0, %v2746
        %v2748 = vpop.f32.mrb[0].mxu0
        %2749 = vmatprep.mubr.bf16.mxu0 0
        %2750 = vmatmul.mubr.bf16.gmra.mrb[0].mxu0 %v2632
        %v2751 = vpop.f32.mrb[0].mxu0
        %v2752 = vadd.f32 0.0, %v2751
        %v2753 = vpop.f32.mrb[0].mxu0
        %v2754 = vpop.f32.mrb[0].mxu0
        %v2755 = vadd.f32 0.0, %v2754
        %v2756 = vpop.f32.mrb[0].mxu0
        %2757 = vmatprep.mubr.bf16.mxu0 0
        %2758 = vmatmul.mubr.bf16.gmra.mrb[0].mxu0 %v2635
        %v2759 = vpop.f32.mrb[0].mxu0
        %v2760 = vadd.f32 0.0, %v2759
        %v2761 = vpop.f32.mrb[0].mxu0
        %v2762 = vpop.f32.mrb[0].mxu0
        %v2763 = vadd.f32 0.0, %v2762
        %v2764 = vpop.f32.mrb[0].mxu0
        %2765 = vmatprep.mubr.bf16.mxu0 0
        %2766 = vmatmul.mubr.bf16.gmra.mrb[0].mxu0 %v2638
        %v2767 = vpop.f32.mrb[0].mxu0
        %v2768 = vadd.f32 0.0, %v2767
        %v2769 = vpop.f32.mrb[0].mxu0
        %v2770 = vpop.f32.mrb[0].mxu0
        %v2771 = vadd.f32 0.0, %v2770
        %v2772 = vpop.f32.mrb[0].mxu0
        %2773 = vmatprep.mubr.bf16.mxu0 0
        %2774 = vmatmul.mubr.bf16.gmra.mrb[0].mxu0 %v2641
        %v2775 = vpop.f32.mrb[0].mxu0
        %v2776 = vadd.f32 0.0, %v2775
        %v2777 = vpop.f32.mrb[0].mxu0
        %v2778 = vpop.f32.mrb[0].mxu0
        %v2779 = vadd.f32 0.0, %v2778
        %v2780 = vpop.f32.mrb[0].mxu0
        %2781 = vmatprep.mubr.bf16.mxu0 0
        %2782 = vmatmul.mubr.bf16.gmra.mrb[0].mxu0 %v2644
        %v2783 = vpop.f32.mrb[0].mxu0
        %v2784 = vadd.f32 0.0, %v2783
        %v2785 = vpop.f32.mrb[0].mxu0
        %v2786 = vpop.f32.mrb[0].mxu0
        %v2787 = vadd.f32 0.0, %v2786
        %v2788 = vpop.f32.mrb[0].mxu0
        %2789 = vmatprep.mubr.bf16.mxu0 0
        %2790 = vmatmul.mubr.bf16.gmra.mrb[0].mxu0 %v2647
        %v2791 = vpop.f32.mrb[0].mxu0
        %v2792 = vadd.f32 0.0, %v2791
        %v2793 = vpop.f32.mrb[0].mxu0
        %v2794 = vpop.f32.mrb[0].mxu0
        %v2795 = vadd.f32 0.0, %v2794
        %v2796 = vpop.f32.mrb[0].mxu0
        %2797 = vmatprep.mubr.bf16.mxu0 0
        %2798 = vmatmul.mubr.bf16.gmra.mrb[0].mxu0 %v2650
        %v2799 = vpop.f32.mrb[0].mxu0
        %v2800 = vadd.f32 0.0, %v2799
        %v2801 = vpop.f32.mrb[0].mxu0
        %v2802 = vpop.f32.mrb[0].mxu0
        %v2803 = vadd.f32 0.0, %v2802
        %v2804 = vpop.f32.mrb[0].mxu0
        %2805 = vmatprep.mubr.bf16.mxu0 0
        %2806 = vmatmul.mubr.bf16.gmra.mrb[0].mxu0 %v2653
        %v2807 = vpop.f32.mrb[0].mxu0
        %v2808 = vadd.f32 0.0, %v2807
        %v2809 = vpop.f32.mrb[0].mxu0
        %v2810 = vpop.f32.mrb[0].mxu0
        %v2811 = vadd.f32 0.0, %v2810
        %v2812 = vpop.f32.mrb[0].mxu0
        %2813 = vmatprep.mubr.bf16.mxu0 0
        %2814 = vmatmul.mubr.bf16.gmra.mrb[0].mxu0 %v2656
        %v2815 = vpop.f32.mrb[0].mxu0
        %v2816 = vadd.f32 0.0, %v2815
        %v2817 = vpop.f32.mrb[0].mxu0
        %v2818 = vpop.f32.mrb[0].mxu0
        %v2819 = vadd.f32 0.0, %v2818
        %v2820 = vpop.f32.mrb[0].mxu0
        %2821 = vdwg.mxu0
        %v2822 = vadd.f32 %v2464, %v2696
        %v2823 = vadd.f32 %v2465, %v2699
        %v2824 = vadd.f32 %v2466, %v2704
        %v2825 = vadd.f32 %v2467, %v2707
        %v2826 = vadd.f32 %v2468, %v2712
        %v2827 = vadd.f32 %v2469, %v2715
        %v2828 = vadd.f32 %v2470, %v2720
        %v2829 = vadd.f32 %v2471, %v2723
        %v2830 = vadd.f32 %v2472, %v2728
        %v2831 = vadd.f32 %v2473, %v2731
        %v2832 = vadd.f32 %v2474, %v2736
        %v2833 = vadd.f32 %v2475, %v2739
        %v2834 = vadd.f32 %v2476, %v2744
        %v2835 = vadd.f32 %v2477, %v2747
        %v2836 = vadd.f32 %v2478, %v2752
        %v2837 = vadd.f32 %v2479, %v2755
        %v2838 = vadd.f32 %v2480, %v2760
        %v2839 = vadd.f32 %v2481, %v2763
        %v2840 = vadd.f32 %v2482, %v2768
        %v2841 = vadd.f32 %v2483, %v2771
        %v2842 = vadd.f32 %v2484, %v2776
        %v2843 = vadd.f32 %v2485, %v2779
        %v2844 = vadd.f32 %v2486, %v2784
        %v2845 = vadd.f32 %v2487, %v2787
        %v2846 = vadd.f32 %v2488, %v2792
        %v2847 = vadd.f32 %v2489, %v2795
        %v2848 = vadd.f32 %v2490, %v2800
        %v2849 = vadd.f32 %v2491, %v2803
        %v2850 = vadd.f32 %v2492, %v2808
        %v2851 = vadd.f32 %v2493, %v2811
        %v2852 = vadd.f32 %v2494, %v2816
        %v2853 = vadd.f32 %v2495, %v2819
        %v2854 = vld [vmem:[%s932] sm:$0xf]
        %v2855 = vld [vmem:[%s932 + $0x4] sm:$0xf]
        %v2856 = vld [vmem:[%s932 + $0x8] sm:$0x1]
        %v2857 = vld [vmem:[%s932 + $0xc] sm:$0xf]
        %v2858 = vld [vmem:[%s932 + $0x10] sm:$0xf]
        %v2859 = vld [vmem:[%s932 + $0x14] sm:$0x1]
        %v2860 = vld [vmem:[%s932 + $0x18] sm:$0xf]
        %v2861 = vld [vmem:[%s932 + $0x1c] sm:$0xf]
        %v2862 = vld [vmem:[%s932 + $0x20] sm:$0x1]
        %v2863 = vld [vmem:[%s932 + $0x24] sm:$0xf]
        %v2864 = vld [vmem:[%s932 + $0x28] sm:$0xf]
        %v2865 = vld [vmem:[%s932 + $0x2c] sm:$0x1]
        %v2866 = vld [vmem:[%s932 + $0x30] sm:$0xf]
        %v2867 = vld [vmem:[%s932 + $0x34] sm:$0xf]
        %v2868 = vld [vmem:[%s932 + $0x38] sm:$0x1]
        %v2869 = vld [vmem:[%s932 + $0x3c] sm:$0xf]
        %v2870 = vld [vmem:[%s932 + $0x40] sm:$0xf]
        %v2871 = vld [vmem:[%s932 + $0x44] sm:$0x1]
        %v2872 = vld [vmem:[%s932 + $0x48] sm:$0xf]
        %v2873 = vld [vmem:[%s932 + $0x4c] sm:$0xf]
        %v2874 = vld [vmem:[%s932 + $0x50] sm:$0x1]
        %v2875 = vld [vmem:[%s932 + $0x54] sm:$0xf]
        %v2876 = vld [vmem:[%s932 + $0x58] sm:$0xf]
        %v2877 = vld [vmem:[%s932 + $0x5c] sm:$0x1]
        %v2878 = vld [vmem:[%s932 + $0x60] sm:$0xf]
        %v2879 = vld [vmem:[%s932 + $0x64] sm:$0xf]
        %v2880 = vld [vmem:[%s932 + $0x68] sm:$0x1]
        %v2881 = vld [vmem:[%s932 + $0x6c] sm:$0xf]
        %v2882 = vld [vmem:[%s932 + $0x70] sm:$0xf]
        %v2883 = vld [vmem:[%s932 + $0x74] sm:$0x1]
        %v2884 = vld [vmem:[%s932 + $0x78] sm:$0xf]
        %v2885 = vld [vmem:[%s932 + $0x7c] sm:$0xf]
        %v2886 = vld [vmem:[%s932 + $0x80] sm:$0x1]
        %v2887 = vld [vmem:[%s932 + $0x84] sm:$0xf]
        %v2888 = vld [vmem:[%s932 + $0x88] sm:$0xf]
        %v2889 = vld [vmem:[%s932 + $0x8c] sm:$0x1]
        %v2890 = vld [vmem:[%s932 + $0x90] sm:$0xf]
        %v2891 = vld [vmem:[%s932 + $0x94] sm:$0xf]
        %v2892 = vld [vmem:[%s932 + $0x98] sm:$0x1]
        %v2893 = vld [vmem:[%s932 + $0x9c] sm:$0xf]
        %v2894 = vld [vmem:[%s932 + $0xa0] sm:$0xf]
        %v2895 = vld [vmem:[%s932 + $0xa4] sm:$0x1]
        %v2896 = vld [vmem:[%s932 + $0xa8] sm:$0xf]
        %v2897 = vld [vmem:[%s932 + $0xac] sm:$0xf]
        %v2898 = vld [vmem:[%s932 + $0xb0] sm:$0x1]
        %v2899 = vld [vmem:[%s932 + $0xb4] sm:$0xf]
        %v2900 = vld [vmem:[%s932 + $0xb8] sm:$0xf]
        %v2901 = vld [vmem:[%s932 + $0xbc] sm:$0x1]
        %v2903 = vshrl.u32 %v2854, 16
        %v2905 = vrot.slane %v2903, 4
        %v2906 = vshll.u32 %v2854, 16
        %v2908 = vrot.slane %v2906, 5
        %v2909 = vor.u32 %v2905, %v2908
        %v2910 = vrot.slane %v2909, 4
        %v2912 = vshll.u32 %v2855, 16
        %v2914 = vrot.slane %v2912, 5
        %v2915 = vsel %vm1098, %v2910, %v2914
        %v2916 = vshrl.u32 %v2855, 16
        %v2918 = vrot.slane %v2916, 4
        %v2919 = vor.u32 %v2918, %v2914
        %v2920 = vrot.slane %v2919, 4
        %v2922 = vshll.u32 %v2856, 16
        %v2924 = vrot.slane %v2922, 5
        %v2925 = vsel %vm1098, %v2920, %v2924
        %v2927 = vshrl.u32 %v2857, 16
        %v2929 = vrot.slane %v2927, 4
        %v2930 = vshll.u32 %v2857, 16
        %v2932 = vrot.slane %v2930, 5
        %v2933 = vor.u32 %v2929, %v2932
        %v2934 = vrot.slane %v2933, 4
        %v2936 = vshll.u32 %v2858, 16
        %v2938 = vrot.slane %v2936, 5
        %v2939 = vsel %vm1098, %v2934, %v2938
        %v2940 = vshrl.u32 %v2858, 16
        %v2942 = vrot.slane %v2940, 4
        %v2943 = vor.u32 %v2942, %v2938
        %v2944 = vrot.slane %v2943, 4
        %v2946 = vshll.u32 %v2859, 16
        %v2948 = vrot.slane %v2946, 5
        %v2949 = vsel %vm1098, %v2944, %v2948
        %v2951 = vshrl.u32 %v2860, 16
        %v2953 = vrot.slane %v2951, 4
        %v2954 = vshll.u32 %v2860, 16
        %v2956 = vrot.slane %v2954, 5
        %v2957 = vor.u32 %v2953, %v2956
        %v2958 = vrot.slane %v2957, 4
        %v2960 = vshll.u32 %v2861, 16
        %v2962 = vrot.slane %v2960, 5
        %v2963 = vsel %vm1098, %v2958, %v2962
        %v2964 = vshrl.u32 %v2861, 16
        %v2966 = vrot.slane %v2964, 4
        %v2967 = vor.u32 %v2966, %v2962
        %v2968 = vrot.slane %v2967, 4
        %v2970 = vshll.u32 %v2862, 16
        %v2972 = vrot.slane %v2970, 5
        %v2973 = vsel %vm1098, %v2968, %v2972
        %v2975 = vshrl.u32 %v2863, 16
        %v2977 = vrot.slane %v2975, 4
        %v2978 = vshll.u32 %v2863, 16
        %v2980 = vrot.slane %v2978, 5
        %v2981 = vor.u32 %v2977, %v2980
        %v2982 = vrot.slane %v2981, 4
        %v2984 = vshll.u32 %v2864, 16
        %v2986 = vrot.slane %v2984, 5
        %v2987 = vsel %vm1098, %v2982, %v2986
        %v2988 = vshrl.u32 %v2864, 16
        %v2990 = vrot.slane %v2988, 4
        %v2991 = vor.u32 %v2990, %v2986
        %v2992 = vrot.slane %v2991, 4
        %v2994 = vshll.u32 %v2865, 16
        %v2996 = vrot.slane %v2994, 5
        %v2997 = vsel %vm1098, %v2992, %v2996
        %v2999 = vshrl.u32 %v2866, 16
        %v3001 = vrot.slane %v2999, 4
        %v3002 = vshll.u32 %v2866, 16
        %v3004 = vrot.slane %v3002, 5
        %v3005 = vor.u32 %v3001, %v3004
        %v3006 = vrot.slane %v3005, 4
        %v3008 = vshll.u32 %v2867, 16
        %v3010 = vrot.slane %v3008, 5
        %v3011 = vsel %vm1098, %v3006, %v3010
        %v3012 = vshrl.u32 %v2867, 16
        %v3014 = vrot.slane %v3012, 4
        %v3015 = vor.u32 %v3014, %v3010
        %v3016 = vrot.slane %v3015, 4
        %v3018 = vshll.u32 %v2868, 16
        %v3020 = vrot.slane %v3018, 5
        %v3021 = vsel %vm1098, %v3016, %v3020
        %v3023 = vshrl.u32 %v2869, 16
        %v3025 = vrot.slane %v3023, 4
        %v3026 = vshll.u32 %v2869, 16
        %v3028 = vrot.slane %v3026, 5
        %v3029 = vor.u32 %v3025, %v3028
        %v3030 = vrot.slane %v3029, 4
        %v3032 = vshll.u32 %v2870, 16
        %v3034 = vrot.slane %v3032, 5
        %v3035 = vsel %vm1098, %v3030, %v3034
        %v3036 = vshrl.u32 %v2870, 16
        %v3038 = vrot.slane %v3036, 4
        %v3039 = vor.u32 %v3038, %v3034
        %v3040 = vrot.slane %v3039, 4
        %v3042 = vshll.u32 %v2871, 16
        %v3044 = vrot.slane %v3042, 5
        %v3045 = vsel %vm1098, %v3040, %v3044
        %v3047 = vshrl.u32 %v2872, 16
        %v3049 = vrot.slane %v3047, 4
        %v3050 = vshll.u32 %v2872, 16
        %v3052 = vrot.slane %v3050, 5
        %v3053 = vor.u32 %v3049, %v3052
        %v3054 = vrot.slane %v3053, 4
        %v3056 = vshll.u32 %v2873, 16
        %v3058 = vrot.slane %v3056, 5
        %v3059 = vsel %vm1098, %v3054, %v3058
        %v3060 = vshrl.u32 %v2873, 16
        %v3062 = vrot.slane %v3060, 4
        %v3063 = vor.u32 %v3062, %v3058
        %v3064 = vrot.slane %v3063, 4
        %v3066 = vshll.u32 %v2874, 16
        %v3068 = vrot.slane %v3066, 5
        %v3069 = vsel %vm1098, %v3064, %v3068
        %v3071 = vshrl.u32 %v2875, 16
        %v3073 = vrot.slane %v3071, 4
        %v3074 = vshll.u32 %v2875, 16
        %v3076 = vrot.slane %v3074, 5
        %v3077 = vor.u32 %v3073, %v3076
        %v3078 = vrot.slane %v3077, 4
        %v3080 = vshll.u32 %v2876, 16
        %v3082 = vrot.slane %v3080, 5
        %v3083 = vsel %vm1098, %v3078, %v3082
        %v3084 = vshrl.u32 %v2876, 16
        %v3086 = vrot.slane %v3084, 4
        %v3087 = vor.u32 %v3086, %v3082
        %v3088 = vrot.slane %v3087, 4
        %v3090 = vshll.u32 %v2877, 16
        %v3092 = vrot.slane %v3090, 5
        %v3093 = vsel %vm1098, %v3088, %v3092
        %v3095 = vshrl.u32 %v2878, 16
        %v3097 = vrot.slane %v3095, 4
        %v3098 = vshll.u32 %v2878, 16
        %v3100 = vrot.slane %v3098, 5
        %v3101 = vor.u32 %v3097, %v3100
        %v3102 = vrot.slane %v3101, 4
        %v3104 = vshll.u32 %v2879, 16
        %v3106 = vrot.slane %v3104, 5
        %v3107 = vsel %vm1098, %v3102, %v3106
        %v3108 = vshrl.u32 %v2879, 16
        %v3110 = vrot.slane %v3108, 4
        %v3111 = vor.u32 %v3110, %v3106
        %v3112 = vrot.slane %v3111, 4
        %v3114 = vshll.u32 %v2880, 16
        %v3116 = vrot.slane %v3114, 5
        %v3117 = vsel %vm1098, %v3112, %v3116
        %v3119 = vshrl.u32 %v2881, 16
        %v3121 = vrot.slane %v3119, 4
        %v3122 = vshll.u32 %v2881, 16
        %v3124 = vrot.slane %v3122, 5
        %v3125 = vor.u32 %v3121, %v3124
        %v3126 = vrot.slane %v3125, 4
        %v3128 = vshll.u32 %v2882, 16
        %v3130 = vrot.slane %v3128, 5
        %v3131 = vsel %vm1098, %v3126, %v3130
        %v3132 = vshrl.u32 %v2882, 16
        %v3134 = vrot.slane %v3132, 4
        %v3135 = vor.u32 %v3134, %v3130
        %v3136 = vrot.slane %v3135, 4
        %v3138 = vshll.u32 %v2883, 16
        %v3140 = vrot.slane %v3138, 5
        %v3141 = vsel %vm1098, %v3136, %v3140
        %v3143 = vshrl.u32 %v2884, 16
        %v3145 = vrot.slane %v3143, 4
        %v3146 = vshll.u32 %v2884, 16
        %v3148 = vrot.slane %v3146, 5
        %v3149 = vor.u32 %v3145, %v3148
        %v3150 = vrot.slane %v3149, 4
        %v3152 = vshll.u32 %v2885, 16
        %v3154 = vrot.slane %v3152, 5
        %v3155 = vsel %vm1098, %v3150, %v3154
        %v3156 = vshrl.u32 %v2885, 16
        %v3158 = vrot.slane %v3156, 4
        %v3159 = vor.u32 %v3158, %v3154
        %v3160 = vrot.slane %v3159, 4
        %v3162 = vshll.u32 %v2886, 16
        %v3164 = vrot.slane %v3162, 5
        %v3165 = vsel %vm1098, %v3160, %v3164
        %v3167 = vshrl.u32 %v2887, 16
        %v3169 = vrot.slane %v3167, 4
        %v3170 = vshll.u32 %v2887, 16
        %v3172 = vrot.slane %v3170, 5
        %v3173 = vor.u32 %v3169, %v3172
        %v3174 = vrot.slane %v3173, 4
        %v3176 = vshll.u32 %v2888, 16
        %v3178 = vrot.slane %v3176, 5
        %v3179 = vsel %vm1098, %v3174, %v3178
        %v3180 = vshrl.u32 %v2888, 16
        %v3182 = vrot.slane %v3180, 4
        %v3183 = vor.u32 %v3182, %v3178
        %v3184 = vrot.slane %v3183, 4
        %v3186 = vshll.u32 %v2889, 16
        %v3188 = vrot.slane %v3186, 5
        %v3189 = vsel %vm1098, %v3184, %v3188
        %v3191 = vshrl.u32 %v2890, 16
        %v3193 = vrot.slane %v3191, 4
        %v3194 = vshll.u32 %v2890, 16
        %v3196 = vrot.slane %v3194, 5
        %v3197 = vor.u32 %v3193, %v3196
        %v3198 = vrot.slane %v3197, 4
        %v3200 = vshll.u32 %v2891, 16
        %v3202 = vrot.slane %v3200, 5
        %v3203 = vsel %vm1098, %v3198, %v3202
        %v3204 = vshrl.u32 %v2891, 16
        %v3206 = vrot.slane %v3204, 4
        %v3207 = vor.u32 %v3206, %v3202
        %v3208 = vrot.slane %v3207, 4
        %v3210 = vshll.u32 %v2892, 16
        %v3212 = vrot.slane %v3210, 5
        %v3213 = vsel %vm1098, %v3208, %v3212
        %v3215 = vshrl.u32 %v2893, 16
        %v3217 = vrot.slane %v3215, 4
        %v3218 = vshll.u32 %v2893, 16
        %v3220 = vrot.slane %v3218, 5
        %v3221 = vor.u32 %v3217, %v3220
        %v3222 = vrot.slane %v3221, 4
        %v3224 = vshll.u32 %v2894, 16
        %v3226 = vrot.slane %v3224, 5
        %v3227 = vsel %vm1098, %v3222, %v3226
        %v3228 = vshrl.u32 %v2894, 16
        %v3230 = vrot.slane %v3228, 4
        %v3231 = vor.u32 %v3230, %v3226
        %v3232 = vrot.slane %v3231, 4
        %v3234 = vshll.u32 %v2895, 16
        %v3236 = vrot.slane %v3234, 5
        %v3237 = vsel %vm1098, %v3232, %v3236
        %v3239 = vshrl.u32 %v2896, 16
        %v3241 = vrot.slane %v3239, 4
        %v3242 = vshll.u32 %v2896, 16
        %v3244 = vrot.slane %v3242, 5
        %v3245 = vor.u32 %v3241, %v3244
        %v3246 = vrot.slane %v3245, 4
        %v3248 = vshll.u32 %v2897, 16
        %v3250 = vrot.slane %v3248, 5
        %v3251 = vsel %vm1098, %v3246, %v3250
        %v3252 = vshrl.u32 %v2897, 16
        %v3254 = vrot.slane %v3252, 4
        %v3255 = vor.u32 %v3254, %v3250
        %v3256 = vrot.slane %v3255, 4
        %v3258 = vshll.u32 %v2898, 16
        %v3260 = vrot.slane %v3258, 5
        %v3261 = vsel %vm1098, %v3256, %v3260
        %v3263 = vshrl.u32 %v2899, 16
        %v3265 = vrot.slane %v3263, 4
        %v3266 = vshll.u32 %v2899, 16
        %v3268 = vrot.slane %v3266, 5
        %v3269 = vor.u32 %v3265, %v3268
        %v3270 = vrot.slane %v3269, 4
        %v3272 = vshll.u32 %v2900, 16
        %v3274 = vrot.slane %v3272, 5
        %v3275 = vsel %vm1098, %v3270, %v3274
        %v3276 = vshrl.u32 %v2900, 16
        %v3278 = vrot.slane %v3276, 4
        %v3279 = vor.u32 %v3278, %v3274
        %v3280 = vrot.slane %v3279, 4
        %v3282 = vshll.u32 %v2901, 16
        %v3284 = vrot.slane %v3282, 5
        %v3285 = vsel %vm1098, %v3280, %v3284
        %s3286 = scalar_lea.vmem %s1, 8
        %v3287 = vld [vmem:[%s3286] sm:$0x3]
        %v3288 = vunpack.c.l.b16 %v2915
        %v3289 = vunpack.c.l.b16 %v2925
        %v3290 = vunpack.c.l.b16 %v2939
        %v3291 = vunpack.c.l.b16 %v2949
        %v3292 = vunpack.c.l.b16 %v2963
        %v3293 = vunpack.c.l.b16 %v2973
        %v3294 = vunpack.c.l.b16 %v2987
        %v3295 = vunpack.c.l.b16 %v2997
        %v3296 = vunpack.c.l.b16 %v3011
        %v3297 = vunpack.c.l.b16 %v3021
        %v3298 = vunpack.c.l.b16 %v3035
        %v3299 = vunpack.c.l.b16 %v3045
        %v3300 = vunpack.c.l.b16 %v3059
        %v3301 = vunpack.c.l.b16 %v3069
        %v3302 = vunpack.c.l.b16 %v3083
        %v3303 = vunpack.c.l.b16 %v3093
        %v3304 = vunpack.c.l.b16 %v3107
        %v3305 = vunpack.c.l.b16 %v3117
        %v3306 = vunpack.c.l.b16 %v3131
        %v3307 = vunpack.c.l.b16 %v3141
        %v3308 = vunpack.c.l.b16 %v3155
        %v3309 = vunpack.c.l.b16 %v3165
        %v3310 = vunpack.c.l.b16 %v3179
        %v3311 = vunpack.c.l.b16 %v3189
        %v3312 = vunpack.c.l.b16 %v3203
        %v3313 = vunpack.c.l.b16 %v3213
        %v3314 = vunpack.c.l.b16 %v3227
        %v3315 = vunpack.c.l.b16 %v3237
        %v3316 = vunpack.c.l.b16 %v3251
        %v3317 = vunpack.c.l.b16 %v3261
        %v3318 = vunpack.c.l.b16 %v3275
        %v3319 = vunpack.c.l.b16 %v3285
        %v3320 = vpack.c.b16 %v3289, %v3288
        %v3321 = vpack.c.b16 %v3291, %v3290
        %v3322 = vpack.c.b16 %v3293, %v3292
        %v3323 = vpack.c.b16 %v3295, %v3294
        %v3324 = vpack.c.b16 %v3297, %v3296
        %v3325 = vpack.c.b16 %v3299, %v3298
        %v3326 = vpack.c.b16 %v3301, %v3300
        %v3327 = vpack.c.b16 %v3303, %v3302
        %v3328 = vpack.c.b16 %v3305, %v3304
        %v3329 = vpack.c.b16 %v3307, %v3306
        %v3330 = vpack.c.b16 %v3309, %v3308
        %v3331 = vpack.c.b16 %v3311, %v3310
        %v3332 = vpack.c.b16 %v3313, %v3312
        %v3333 = vpack.c.b16 %v3315, %v3314
        %v3334 = vpack.c.b16 %v3317, %v3316
        %v3335 = vpack.c.b16 %v3319, %v3318
        %v3337 = vsel %vm1533, %v3320, 0
        %v3340 = vsel %vm1533, %v3321, 0
        %v3343 = vsel %vm1533, %v3322, 0
        %v3346 = vsel %vm1533, %v3323, 0
        %v3349 = vsel %vm1533, %v3324, 0
        %v3352 = vsel %vm1533, %v3325, 0
        %v3355 = vsel %vm1533, %v3326, 0
        %v3358 = vsel %vm1533, %v3327, 0
        %v3361 = vsel %vm1533, %v3328, 0
        %v3364 = vsel %vm1533, %v3329, 0
        %v3367 = vsel %vm1533, %v3330, 0
        %v3370 = vsel %vm1533, %v3331, 0
        %v3373 = vsel %vm1533, %v3332, 0
        %v3376 = vsel %vm1533, %v3333, 0
        %v3379 = vsel %vm1533, %v3334, 0
        %v3382 = vsel %vm1533, %v3335, 0
        %v3385 = vsel %vm1582, %v3287, 0
        %3387 = vmatprep.subr.bf16.mxu0 0
        %3388 = vmatpush1.bf16.msra.mxu0 %v3385
        %3389 = vmatprep.subr.bf16.mxu0 0
        %3390 = vmatpush1.bf16.msra.mxu0 0
        %3391 = vmatprep.subr.bf16.mxu0 0
        %3392 = vmatpush1.bf16.msra.mxu0 0
        %3393 = vmatprep.subr.bf16.mxu0 0
        %3394 = vmatpush1.bf16.msra.mxu0 0
        %3395 = vmatprep.subr.bf16.mxu0 0
        %3396 = vmatpush1.bf16.msra.mxu0 0
        %3397 = vmatprep.subr.bf16.mxu0 0
        %3398 = vmatpush1.bf16.msra.mxu0 0
        %3399 = vmatprep.subr.bf16.mxu0 0
        %3400 = vmatpush1.bf16.msra.mxu0 0
        %3401 = vmatprep.subr.bf16.mxu0 0
        %3402 = vmatpush1.bf16.msra.mxu0 0
        %3403 = vmatprep.subr.bf16.mxu0 0
        %3404 = vmatpush1.bf16.msra.mxu0 0
        %3405 = vmatprep.subr.bf16.mxu0 0
        %3406 = vmatpush1.bf16.msra.mxu0 0
        %3407 = vmatprep.subr.bf16.mxu0 0
        %3408 = vmatpush1.bf16.msra.mxu0 0
        %3409 = vmatprep.subr.bf16.mxu0 0
        %3410 = vmatpush1.bf16.msra.mxu0 0
        %3411 = vmatprep.subr.bf16.mxu0 0
        %3412 = vmatpush1.bf16.msra.mxu0 0
        %3413 = vmatprep.subr.bf16.mxu0 0
        %3414 = vmatpush1.bf16.msra.mxu0 0
        %3415 = vmatprep.subr.bf16.mxu0 0
        %3416 = vmatpush1.bf16.msra.mxu0 0
        %3417 = vmatprep.subr.bf16.mxu0 0
        %3418 = vmatpush1.bf16.msra.mxu0 0
        %3419 = vmatprep.mubr.bf16.mxu0 0
        %3420 = vmatmul.mubr.bf16.gmra.mrb[0].mxu0 %v3337
        %v3421 = vpop.f32.mrb[0].mxu0
        %v3422 = vadd.f32 0.0, %v3421
        %v3423 = vpop.f32.mrb[0].mxu0
        %v3424 = vpop.f32.mrb[0].mxu0
        %v3425 = vadd.f32 0.0, %v3424
        %v3426 = vpop.f32.mrb[0].mxu0
        %3427 = vmatprep.mubr.bf16.mxu0 0
        %3428 = vmatmul.mubr.bf16.gmra.mrb[0].mxu0 %v3340
        %v3429 = vpop.f32.mrb[0].mxu0
        %v3430 = vadd.f32 0.0, %v3429
        %v3431 = vpop.f32.mrb[0].mxu0
        %v3432 = vpop.f32.mrb[0].mxu0
        %v3433 = vadd.f32 0.0, %v3432
        %v3434 = vpop.f32.mrb[0].mxu0
        %3435 = vmatprep.mubr.bf16.mxu0 0
        %3436 = vmatmul.mubr.bf16.gmra.mrb[0].mxu0 %v3343
        %v3437 = vpop.f32.mrb[0].mxu0
        %v3438 = vadd.f32 0.0, %v3437
        %v3439 = vpop.f32.mrb[0].mxu0
        %v3440 = vpop.f32.mrb[0].mxu0
        %v3441 = vadd.f32 0.0, %v3440
        %v3442 = vpop.f32.mrb[0].mxu0
        %3443 = vmatprep.mubr.bf16.mxu0 0
        %3444 = vmatmul.mubr.bf16.gmra.mrb[0].mxu0 %v3346
        %v3445 = vpop.f32.mrb[0].mxu0
        %v3446 = vadd.f32 0.0, %v3445
        %v3447 = vpop.f32.mrb[0].mxu0
        %v3448 = vpop.f32.mrb[0].mxu0
        %v3449 = vadd.f32 0.0, %v3448
        %v3450 = vpop.f32.mrb[0].mxu0
        %3451 = vmatprep.mubr.bf16.mxu0 0
        %3452 = vmatmul.mubr.bf16.gmra.mrb[0].mxu0 %v3349
        %v3453 = vpop.f32.mrb[0].mxu0
        %v3454 = vadd.f32 0.0, %v3453
        %v3455 = vpop.f32.mrb[0].mxu0
        %v3456 = vpop.f32.mrb[0].mxu0
        %v3457 = vadd.f32 0.0, %v3456
        %v3458 = vpop.f32.mrb[0].mxu0
        %3459 = vmatprep.mubr.bf16.mxu0 0
        %3460 = vmatmul.mubr.bf16.gmra.mrb[0].mxu0 %v3352
        %v3461 = vpop.f32.mrb[0].mxu0
        %v3462 = vadd.f32 0.0, %v3461
        %v3463 = vpop.f32.mrb[0].mxu0
        %v3464 = vpop.f32.mrb[0].mxu0
        %v3465 = vadd.f32 0.0, %v3464
        %v3466 = vpop.f32.mrb[0].mxu0
        %3467 = vmatprep.mubr.bf16.mxu0 0
        %3468 = vmatmul.mubr.bf16.gmra.mrb[0].mxu0 %v3355
        %v3469 = vpop.f32.mrb[0].mxu0
        %v3470 = vadd.f32 0.0, %v3469
        %v3471 = vpop.f32.mrb[0].mxu0
        %v3472 = vpop.f32.mrb[0].mxu0
        %v3473 = vadd.f32 0.0, %v3472
        %v3474 = vpop.f32.mrb[0].mxu0
        %3475 = vmatprep.mubr.bf16.mxu0 0
        %3476 = vmatmul.mubr.bf16.gmra.mrb[0].mxu0 %v3358
        %v3477 = vpop.f32.mrb[0].mxu0
        %v3478 = vadd.f32 0.0, %v3477
        %v3479 = vpop.f32.mrb[0].mxu0
        %v3480 = vpop.f32.mrb[0].mxu0
        %v3481 = vadd.f32 0.0, %v3480
        %v3482 = vpop.f32.mrb[0].mxu0
        %3483 = vmatprep.mubr.bf16.mxu0 0
        %3484 = vmatmul.mubr.bf16.gmra.mrb[0].mxu0 %v3361
        %v3485 = vpop.f32.mrb[0].mxu0
        %v3486 = vadd.f32 0.0, %v3485
        %v3487 = vpop.f32.mrb[0].mxu0
        %v3488 = vpop.f32.mrb[0].mxu0
        %v3489 = vadd.f32 0.0, %v3488
        %v3490 = vpop.f32.mrb[0].mxu0
        %3491 = vmatprep.mubr.bf16.mxu0 0
        %3492 = vmatmul.mubr.bf16.gmra.mrb[0].mxu0 %v3364
        %v3493 = vpop.f32.mrb[0].mxu0
        %v3494 = vadd.f32 0.0, %v3493
        %v3495 = vpop.f32.mrb[0].mxu0
        %v3496 = vpop.f32.mrb[0].mxu0
        %v3497 = vadd.f32 0.0, %v3496
        %v3498 = vpop.f32.mrb[0].mxu0
        %3499 = vmatprep.mubr.bf16.mxu0 0
        %3500 = vmatmul.mubr.bf16.gmra.mrb[0].mxu0 %v3367
        %v3501 = vpop.f32.mrb[0].mxu0
        %v3502 = vadd.f32 0.0, %v3501
        %v3503 = vpop.f32.mrb[0].mxu0
        %v3504 = vpop.f32.mrb[0].mxu0
        %v3505 = vadd.f32 0.0, %v3504
        %v3506 = vpop.f32.mrb[0].mxu0
        %3507 = vmatprep.mubr.bf16.mxu0 0
        %3508 = vmatmul.mubr.bf16.gmra.mrb[0].mxu0 %v3370
        %v3509 = vpop.f32.mrb[0].mxu0
        %v3510 = vadd.f32 0.0, %v3509
        %v3511 = vpop.f32.mrb[0].mxu0
        %v3512 = vpop.f32.mrb[0].mxu0
        %v3513 = vadd.f32 0.0, %v3512
        %v3514 = vpop.f32.mrb[0].mxu0
        %3515 = vmatprep.mubr.bf16.mxu0 0
        %3516 = vmatmul.mubr.bf16.gmra.mrb[0].mxu0 %v3373
        %v3517 = vpop.f32.mrb[0].mxu0
        %v3518 = vadd.f32 0.0, %v3517
        %v3519 = vpop.f32.mrb[0].mxu0
        %v3520 = vpop.f32.mrb[0].mxu0
        %v3521 = vadd.f32 0.0, %v3520
        %v3522 = vpop.f32.mrb[0].mxu0
        %3523 = vmatprep.mubr.bf16.mxu0 0
        %3524 = vmatmul.mubr.bf16.gmra.mrb[0].mxu0 %v3376
        %v3525 = vpop.f32.mrb[0].mxu0
        %v3526 = vadd.f32 0.0, %v3525
        %v3527 = vpop.f32.mrb[0].mxu0
        %v3528 = vpop.f32.mrb[0].mxu0
        %v3529 = vadd.f32 0.0, %v3528
        %v3530 = vpop.f32.mrb[0].mxu0
        %3531 = vmatprep.mubr.bf16.mxu0 0
        %3532 = vmatmul.mubr.bf16.gmra.mrb[0].mxu0 %v3379
        %v3533 = vpop.f32.mrb[0].mxu0
        %v3534 = vadd.f32 0.0, %v3533
        %v3535 = vpop.f32.mrb[0].mxu0
        %v3536 = vpop.f32.mrb[0].mxu0
        %v3537 = vadd.f32 0.0, %v3536
        %v3538 = vpop.f32.mrb[0].mxu0
        %3539 = vmatprep.mubr.bf16.mxu0 0
        %3540 = vmatmul.mubr.bf16.gmra.mrb[0].mxu0 %v3382
        %v3541 = vpop.f32.mrb[0].mxu0
        %v3542 = vadd.f32 0.0, %v3541
        %v3543 = vpop.f32.mrb[0].mxu0
        %v3544 = vpop.f32.mrb[0].mxu0
        %v3545 = vadd.f32 0.0, %v3544
        %v3546 = vpop.f32.mrb[0].mxu0
        %3547 = vdwg.mxu0
        %v3548 = vadd.f32 %v2822, %v3422
        %v3549 = vadd.f32 %v2823, %v3425
        %v3550 = vadd.f32 %v2824, %v3430
        %v3551 = vadd.f32 %v2825, %v3433
        %v3552 = vadd.f32 %v2826, %v3438
        %v3553 = vadd.f32 %v2827, %v3441
        %v3554 = vadd.f32 %v2828, %v3446
        %v3555 = vadd.f32 %v2829, %v3449
        %v3556 = vadd.f32 %v2830, %v3454
        %v3557 = vadd.f32 %v2831, %v3457
        %v3558 = vadd.f32 %v2832, %v3462
        %v3559 = vadd.f32 %v2833, %v3465
        %v3560 = vadd.f32 %v2834, %v3470
        %v3561 = vadd.f32 %v2835, %v3473
        %v3562 = vadd.f32 %v2836, %v3478
        %v3563 = vadd.f32 %v2837, %v3481
        %v3564 = vadd.f32 %v2838, %v3486
        %v3565 = vadd.f32 %v2839, %v3489
        %v3566 = vadd.f32 %v2840, %v3494
        %v3567 = vadd.f32 %v2841, %v3497
        %v3568 = vadd.f32 %v2842, %v3502
        %v3569 = vadd.f32 %v2843, %v3505
        %v3570 = vadd.f32 %v2844, %v3510
        %v3571 = vadd.f32 %v2845, %v3513
        %v3572 = vadd.f32 %v2846, %v3518
        %v3573 = vadd.f32 %v2847, %v3521
        %v3574 = vadd.f32 %v2848, %v3526
        %v3575 = vadd.f32 %v2849, %v3529
        %v3576 = vadd.f32 %v2850, %v3534
        %v3577 = vadd.f32 %v2851, %v3537
        %v3578 = vadd.f32 %v2852, %v3542
        %v3579 = vadd.f32 %v2853, %v3545
        %v3580 = vld [vmem:[%s932] sm:$0xe]
        %v3581 = vld [vmem:[%s932 + $0xc] sm:$0xe]
        %v3582 = vld [vmem:[%s932 + $0x18] sm:$0xe]
        %v3583 = vld [vmem:[%s932 + $0x24] sm:$0xe]
        %v3584 = vld [vmem:[%s932 + $0x30] sm:$0xe]
        %v3585 = vld [vmem:[%s932 + $0x3c] sm:$0xe]
        %v3586 = vld [vmem:[%s932 + $0x48] sm:$0xe]
        %v3587 = vld [vmem:[%s932 + $0x54] sm:$0xe]
        %v3588 = vld [vmem:[%s932 + $0x60] sm:$0xe]
        %v3589 = vld [vmem:[%s932 + $0x6c] sm:$0xe]
        %v3590 = vld [vmem:[%s932 + $0x78] sm:$0xe]
        %v3591 = vld [vmem:[%s932 + $0x84] sm:$0xe]
        %v3592 = vld [vmem:[%s932 + $0x90] sm:$0xe]
        %v3593 = vld [vmem:[%s932 + $0x9c] sm:$0xe]
        %v3594 = vld [vmem:[%s932 + $0xa8] sm:$0xe]
        %v3595 = vld [vmem:[%s932 + $0xb4] sm:$0xe]
        %v3644 = vrot.slane %v3580, 5
        %v3645 = vrot.slane %v3644, 4
        %v3646 = vrot.slane %v2855, 5
        %v3647 = vsel %vm2089, %v3645, %v3646
        %v3648 = vrot.slane %v3646, 4
        %v3649 = vrot.slane %v2856, 5
        %v3650 = vsel %vm2089, %v3648, %v3649
        %v3651 = vrot.slane %v3581, 5
        %v3652 = vrot.slane %v3651, 4
        %v3653 = vrot.slane %v2858, 5
        %v3654 = vsel %vm2089, %v3652, %v3653
        %v3655 = vrot.slane %v3653, 4
        %v3656 = vrot.slane %v2859, 5
        %v3657 = vsel %vm2089, %v3655, %v3656
        %v3658 = vrot.slane %v3582, 5
        %v3659 = vrot.slane %v3658, 4
        %v3660 = vrot.slane %v2861, 5
        %v3661 = vsel %vm2089, %v3659, %v3660
        %v3662 = vrot.slane %v3660, 4
        %v3663 = vrot.slane %v2862, 5
        %v3664 = vsel %vm2089, %v3662, %v3663
        %v3665 = vrot.slane %v3583, 5
        %v3666 = vrot.slane %v3665, 4
        %v3667 = vrot.slane %v2864, 5
        %v3668 = vsel %vm2089, %v3666, %v3667
        %v3669 = vrot.slane %v3667, 4
        %v3670 = vrot.slane %v2865, 5
        %v3671 = vsel %vm2089, %v3669, %v3670
        %v3672 = vrot.slane %v3584, 5
        %v3673 = vrot.slane %v3672, 4
        %v3674 = vrot.slane %v2867, 5
        %v3675 = vsel %vm2089, %v3673, %v3674
        %v3676 = vrot.slane %v3674, 4
        %v3677 = vrot.slane %v2868, 5
        %v3678 = vsel %vm2089, %v3676, %v3677
        %v3679 = vrot.slane %v3585, 5
        %v3680 = vrot.slane %v3679, 4
        %v3681 = vrot.slane %v2870, 5
        %v3682 = vsel %vm2089, %v3680, %v3681
        %v3683 = vrot.slane %v3681, 4
        %v3684 = vrot.slane %v2871, 5
        %v3685 = vsel %vm2089, %v3683, %v3684
        %v3686 = vrot.slane %v3586, 5
        %v3687 = vrot.slane %v3686, 4
        %v3688 = vrot.slane %v2873, 5
        %v3689 = vsel %vm2089, %v3687, %v3688
        %v3690 = vrot.slane %v3688, 4
        %v3691 = vrot.slane %v2874, 5
        %v3692 = vsel %vm2089, %v3690, %v3691
        %v3693 = vrot.slane %v3587, 5
        %v3694 = vrot.slane %v3693, 4
        %v3695 = vrot.slane %v2876, 5
        %v3696 = vsel %vm2089, %v3694, %v3695
        %v3697 = vrot.slane %v3695, 4
        %v3698 = vrot.slane %v2877, 5
        %v3699 = vsel %vm2089, %v3697, %v3698
        %v3700 = vrot.slane %v3588, 5
        %v3701 = vrot.slane %v3700, 4
        %v3702 = vrot.slane %v2879, 5
        %v3703 = vsel %vm2089, %v3701, %v3702
        %v3704 = vrot.slane %v3702, 4
        %v3705 = vrot.slane %v2880, 5
        %v3706 = vsel %vm2089, %v3704, %v3705
        %v3707 = vrot.slane %v3589, 5
        %v3708 = vrot.slane %v3707, 4
        %v3709 = vrot.slane %v2882, 5
        %v3710 = vsel %vm2089, %v3708, %v3709
        %v3711 = vrot.slane %v3709, 4
        %v3712 = vrot.slane %v2883, 5
        %v3713 = vsel %vm2089, %v3711, %v3712
        %v3714 = vrot.slane %v3590, 5
        %v3715 = vrot.slane %v3714, 4
        %v3716 = vrot.slane %v2885, 5
        %v3717 = vsel %vm2089, %v3715, %v3716
        %v3718 = vrot.slane %v3716, 4
        %v3719 = vrot.slane %v2886, 5
        %v3720 = vsel %vm2089, %v3718, %v3719
        %v3721 = vrot.slane %v3591, 5
        %v3722 = vrot.slane %v3721, 4
        %v3723 = vrot.slane %v2888, 5
        %v3724 = vsel %vm2089, %v3722, %v3723
        %v3725 = vrot.slane %v3723, 4
        %v3726 = vrot.slane %v2889, 5
        %v3727 = vsel %vm2089, %v3725, %v3726
        %v3728 = vrot.slane %v3592, 5
        %v3729 = vrot.slane %v3728, 4
        %v3730 = vrot.slane %v2891, 5
        %v3731 = vsel %vm2089, %v3729, %v3730
        %v3732 = vrot.slane %v3730, 4
        %v3733 = vrot.slane %v2892, 5
        %v3734 = vsel %vm2089, %v3732, %v3733
        %v3735 = vrot.slane %v3593, 5
        %v3736 = vrot.slane %v3735, 4
        %v3737 = vrot.slane %v2894, 5
        %v3738 = vsel %vm2089, %v3736, %v3737
        %v3739 = vrot.slane %v3737, 4
        %v3740 = vrot.slane %v2895, 5
        %v3741 = vsel %vm2089, %v3739, %v3740
        %v3742 = vrot.slane %v3594, 5
        %v3743 = vrot.slane %v3742, 4
        %v3744 = vrot.slane %v2897, 5
        %v3745 = vsel %vm2089, %v3743, %v3744
        %v3746 = vrot.slane %v3744, 4
        %v3747 = vrot.slane %v2898, 5
        %v3748 = vsel %vm2089, %v3746, %v3747
        %v3749 = vrot.slane %v3595, 5
        %v3750 = vrot.slane %v3749, 4
        %v3751 = vrot.slane %v2900, 5
        %v3752 = vsel %vm2089, %v3750, %v3751
        %v3753 = vrot.slane %v3751, 4
        %v3754 = vrot.slane %v2901, 5
        %v3755 = vsel %vm2089, %v3753, %v3754
        %s3756 = scalar_lea.vmem %s1, 10
        %v3757 = vld [vmem:[%s3756] sm:$0x3]
        %v3758 = vunpack.c.l.b16 %v3647
        %v3759 = vunpack.c.l.b16 %v3650
        %v3760 = vunpack.c.l.b16 %v3654
        %v3761 = vunpack.c.l.b16 %v3657
        %v3762 = vunpack.c.l.b16 %v3661
        %v3763 = vunpack.c.l.b16 %v3664
        %v3764 = vunpack.c.l.b16 %v3668
        %v3765 = vunpack.c.l.b16 %v3671
        %v3766 = vunpack.c.l.b16 %v3675
        %v3767 = vunpack.c.l.b16 %v3678
        %v3768 = vunpack.c.l.b16 %v3682
        %v3769 = vunpack.c.l.b16 %v3685
        %v3770 = vunpack.c.l.b16 %v3689
        %v3771 = vunpack.c.l.b16 %v3692
        %v3772 = vunpack.c.l.b16 %v3696
        %v3773 = vunpack.c.l.b16 %v3699
        %v3774 = vunpack.c.l.b16 %v3703
        %v3775 = vunpack.c.l.b16 %v3706
        %v3776 = vunpack.c.l.b16 %v3710
        %v3777 = vunpack.c.l.b16 %v3713
        %v3778 = vunpack.c.l.b16 %v3717
        %v3779 = vunpack.c.l.b16 %v3720
        %v3780 = vunpack.c.l.b16 %v3724
        %v3781 = vunpack.c.l.b16 %v3727
        %v3782 = vunpack.c.l.b16 %v3731
        %v3783 = vunpack.c.l.b16 %v3734
        %v3784 = vunpack.c.l.b16 %v3738
        %v3785 = vunpack.c.l.b16 %v3741
        %v3786 = vunpack.c.l.b16 %v3745
        %v3787 = vunpack.c.l.b16 %v3748
        %v3788 = vunpack.c.l.b16 %v3752
        %v3789 = vunpack.c.l.b16 %v3755
        %v3790 = vpack.c.b16 %v3759, %v3758
        %v3791 = vpack.c.b16 %v3761, %v3760
        %v3792 = vpack.c.b16 %v3763, %v3762
        %v3793 = vpack.c.b16 %v3765, %v3764
        %v3794 = vpack.c.b16 %v3767, %v3766
        %v3795 = vpack.c.b16 %v3769, %v3768
        %v3796 = vpack.c.b16 %v3771, %v3770
        %v3797 = vpack.c.b16 %v3773, %v3772
        %v3798 = vpack.c.b16 %v3775, %v3774
        %v3799 = vpack.c.b16 %v3777, %v3776
        %v3800 = vpack.c.b16 %v3779, %v3778
        %v3801 = vpack.c.b16 %v3781, %v3780
        %v3802 = vpack.c.b16 %v3783, %v3782
        %v3803 = vpack.c.b16 %v3785, %v3784
        %v3804 = vpack.c.b16 %v3787, %v3786
        %v3805 = vpack.c.b16 %v3789, %v3788
        %v3807 = vsel %vm1533, %v3790, 0
        %v3810 = vsel %vm1533, %v3791, 0
        %v3813 = vsel %vm1533, %v3792, 0
        %v3816 = vsel %vm1533, %v3793, 0
        %v3819 = vsel %vm1533, %v3794, 0
        %v3822 = vsel %vm1533, %v3795, 0
        %v3825 = vsel %vm1533, %v3796, 0
        %v3828 = vsel %vm1533, %v3797, 0
        %v3831 = vsel %vm1533, %v3798, 0
        %v3834 = vsel %vm1533, %v3799, 0
        %v3837 = vsel %vm1533, %v3800, 0
        %v3840 = vsel %vm1533, %v3801, 0
        %v3843 = vsel %vm1533, %v3802, 0
        %v3846 = vsel %vm1533, %v3803, 0
        %v3849 = vsel %vm1533, %v3804, 0
        %v3852 = vsel %vm1533, %v3805, 0
        %v3855 = vsel %vm1582, %v3757, 0
        %3857 = vmatprep.subr.bf16.mxu0 0
        %3858 = vmatpush1.bf16.msra.mxu0 %v3855
        %3859 = vmatprep.subr.bf16.mxu0 0
        %3860 = vmatpush1.bf16.msra.mxu0 0
        %3861 = vmatprep.subr.bf16.mxu0 0
        %3862 = vmatpush1.bf16.msra.mxu0 0
        %3863 = vmatprep.subr.bf16.mxu0 0
        %3864 = vmatpush1.bf16.msra.mxu0 0
        %3865 = vmatprep.subr.bf16.mxu0 0
        %3866 = vmatpush1.bf16.msra.mxu0 0
        %3867 = vmatprep.subr.bf16.mxu0 0
        %3868 = vmatpush1.bf16.msra.mxu0 0
        %3869 = vmatprep.subr.bf16.mxu0 0
        %3870 = vmatpush1.bf16.msra.mxu0 0
        %3871 = vmatprep.subr.bf16.mxu0 0
        %3872 = vmatpush1.bf16.msra.mxu0 0
        %3873 = vmatprep.subr.bf16.mxu0 0
        %3874 = vmatpush1.bf16.msra.mxu0 0
        %3875 = vmatprep.subr.bf16.mxu0 0
        %3876 = vmatpush1.bf16.msra.mxu0 0
        %3877 = vmatprep.subr.bf16.mxu0 0
        %3878 = vmatpush1.bf16.msra.mxu0 0
        %3879 = vmatprep.subr.bf16.mxu0 0
        %3880 = vmatpush1.bf16.msra.mxu0 0
        %3881 = vmatprep.subr.bf16.mxu0 0
        %3882 = vmatpush1.bf16.msra.mxu0 0
        %3883 = vmatprep.subr.bf16.mxu0 0
        %3884 = vmatpush1.bf16.msra.mxu0 0
        %3885 = vmatprep.subr.bf16.mxu0 0
        %3886 = vmatpush1.bf16.msra.mxu0 0
        %3887 = vmatprep.subr.bf16.mxu0 0
        %3888 = vmatpush1.bf16.msra.mxu0 0
        %3889 = vmatprep.mubr.bf16.mxu0 0
        %3890 = vmatmul.mubr.bf16.gmra.mrb[0].mxu0 %v3807
        %v3891 = vpop.f32.mrb[0].mxu0
        %v3892 = vadd.f32 0.0, %v3891
        %v3893 = vpop.f32.mrb[0].mxu0
        %v3894 = vpop.f32.mrb[0].mxu0
        %v3895 = vadd.f32 0.0, %v3894
        %v3896 = vpop.f32.mrb[0].mxu0
        %3897 = vmatprep.mubr.bf16.mxu0 0
        %3898 = vmatmul.mubr.bf16.gmra.mrb[0].mxu0 %v3810
        %v3899 = vpop.f32.mrb[0].mxu0
        %v3900 = vadd.f32 0.0, %v3899
        %v3901 = vpop.f32.mrb[0].mxu0
        %v3902 = vpop.f32.mrb[0].mxu0
        %v3903 = vadd.f32 0.0, %v3902
        %v3904 = vpop.f32.mrb[0].mxu0
        %3905 = vmatprep.mubr.bf16.mxu0 0
        %3906 = vmatmul.mubr.bf16.gmra.mrb[0].mxu0 %v3813
        %v3907 = vpop.f32.mrb[0].mxu0
        %v3908 = vadd.f32 0.0, %v3907
        %v3909 = vpop.f32.mrb[0].mxu0
        %v3910 = vpop.f32.mrb[0].mxu0
        %v3911 = vadd.f32 0.0, %v3910
        %v3912 = vpop.f32.mrb[0].mxu0
        %3913 = vmatprep.mubr.bf16.mxu0 0
        %3914 = vmatmul.mubr.bf16.gmra.mrb[0].mxu0 %v3816
        %v3915 = vpop.f32.mrb[0].mxu0
        %v3916 = vadd.f32 0.0, %v3915
        %v3917 = vpop.f32.mrb[0].mxu0
        %v3918 = vpop.f32.mrb[0].mxu0
        %v3919 = vadd.f32 0.0, %v3918
        %v3920 = vpop.f32.mrb[0].mxu0
        %3921 = vmatprep.mubr.bf16.mxu0 0
        %3922 = vmatmul.mubr.bf16.gmra.mrb[0].mxu0 %v3819
        %v3923 = vpop.f32.mrb[0].mxu0
        %v3924 = vadd.f32 0.0, %v3923
        %v3925 = vpop.f32.mrb[0].mxu0
        %v3926 = vpop.f32.mrb[0].mxu0
        %v3927 = vadd.f32 0.0, %v3926
        %v3928 = vpop.f32.mrb[0].mxu0
        %3929 = vmatprep.mubr.bf16.mxu0 0
        %3930 = vmatmul.mubr.bf16.gmra.mrb[0].mxu0 %v3822
        %v3931 = vpop.f32.mrb[0].mxu0
        %v3932 = vadd.f32 0.0, %v3931
        %v3933 = vpop.f32.mrb[0].mxu0
        %v3934 = vpop.f32.mrb[0].mxu0
        %v3935 = vadd.f32 0.0, %v3934
        %v3936 = vpop.f32.mrb[0].mxu0
        %3937 = vmatprep.mubr.bf16.mxu0 0
        %3938 = vmatmul.mubr.bf16.gmra.mrb[0].mxu0 %v3825
        %v3939 = vpop.f32.mrb[0].mxu0
        %v3940 = vadd.f32 0.0, %v3939
        %v3941 = vpop.f32.mrb[0].mxu0
        %v3942 = vpop.f32.mrb[0].mxu0
        %v3943 = vadd.f32 0.0, %v3942
        %v3944 = vpop.f32.mrb[0].mxu0
        %3945 = vmatprep.mubr.bf16.mxu0 0
        %3946 = vmatmul.mubr.bf16.gmra.mrb[0].mxu0 %v3828
        %v3947 = vpop.f32.mrb[0].mxu0
        %v3948 = vadd.f32 0.0, %v3947
        %v3949 = vpop.f32.mrb[0].mxu0
        %v3950 = vpop.f32.mrb[0].mxu0
        %v3951 = vadd.f32 0.0, %v3950
        %v3952 = vpop.f32.mrb[0].mxu0
        %3953 = vmatprep.mubr.bf16.mxu0 0
        %3954 = vmatmul.mubr.bf16.gmra.mrb[0].mxu0 %v3831
        %v3955 = vpop.f32.mrb[0].mxu0
        %v3956 = vadd.f32 0.0, %v3955
        %v3957 = vpop.f32.mrb[0].mxu0
        %v3958 = vpop.f32.mrb[0].mxu0
        %v3959 = vadd.f32 0.0, %v3958
        %v3960 = vpop.f32.mrb[0].mxu0
        %3961 = vmatprep.mubr.bf16.mxu0 0
        %3962 = vmatmul.mubr.bf16.gmra.mrb[0].mxu0 %v3834
        %v3963 = vpop.f32.mrb[0].mxu0
        %v3964 = vadd.f32 0.0, %v3963
        %v3965 = vpop.f32.mrb[0].mxu0
        %v3966 = vpop.f32.mrb[0].mxu0
        %v3967 = vadd.f32 0.0, %v3966
        %v3968 = vpop.f32.mrb[0].mxu0
        %3969 = vmatprep.mubr.bf16.mxu0 0
        %3970 = vmatmul.mubr.bf16.gmra.mrb[0].mxu0 %v3837
        %v3971 = vpop.f32.mrb[0].mxu0
        %v3972 = vadd.f32 0.0, %v3971
        %v3973 = vpop.f32.mrb[0].mxu0
        %v3974 = vpop.f32.mrb[0].mxu0
        %v3975 = vadd.f32 0.0, %v3974
        %v3976 = vpop.f32.mrb[0].mxu0
        %3977 = vmatprep.mubr.bf16.mxu0 0
        %3978 = vmatmul.mubr.bf16.gmra.mrb[0].mxu0 %v3840
        %v3979 = vpop.f32.mrb[0].mxu0
        %v3980 = vadd.f32 0.0, %v3979
        %v3981 = vpop.f32.mrb[0].mxu0
        %v3982 = vpop.f32.mrb[0].mxu0
        %v3983 = vadd.f32 0.0, %v3982
        %v3984 = vpop.f32.mrb[0].mxu0
        %3985 = vmatprep.mubr.bf16.mxu0 0
        %3986 = vmatmul.mubr.bf16.gmra.mrb[0].mxu0 %v3843
        %v3987 = vpop.f32.mrb[0].mxu0
        %v3988 = vadd.f32 0.0, %v3987
        %v3989 = vpop.f32.mrb[0].mxu0
        %v3990 = vpop.f32.mrb[0].mxu0
        %v3991 = vadd.f32 0.0, %v3990
        %v3992 = vpop.f32.mrb[0].mxu0
        %3993 = vmatprep.mubr.bf16.mxu0 0
        %3994 = vmatmul.mubr.bf16.gmra.mrb[0].mxu0 %v3846
        %v3995 = vpop.f32.mrb[0].mxu0
        %v3996 = vadd.f32 0.0, %v3995
        %v3997 = vpop.f32.mrb[0].mxu0
        %v3998 = vpop.f32.mrb[0].mxu0
        %v3999 = vadd.f32 0.0, %v3998
        %v4000 = vpop.f32.mrb[0].mxu0
        %4001 = vmatprep.mubr.bf16.mxu0 0
        %4002 = vmatmul.mubr.bf16.gmra.mrb[0].mxu0 %v3849
        %v4003 = vpop.f32.mrb[0].mxu0
        %v4004 = vadd.f32 0.0, %v4003
        %v4005 = vpop.f32.mrb[0].mxu0
        %v4006 = vpop.f32.mrb[0].mxu0
        %v4007 = vadd.f32 0.0, %v4006
        %v4008 = vpop.f32.mrb[0].mxu0
        %4009 = vmatprep.mubr.bf16.mxu0 0
        %4010 = vmatmul.mubr.bf16.gmra.mrb[0].mxu0 %v3852
        %v4011 = vpop.f32.mrb[0].mxu0
        %v4012 = vadd.f32 0.0, %v4011
        %v4013 = vpop.f32.mrb[0].mxu0
        %v4014 = vpop.f32.mrb[0].mxu0
        %v4015 = vadd.f32 0.0, %v4014
        %v4016 = vpop.f32.mrb[0].mxu0
        %4017 = vdwg.mxu0
        %v4018 = vadd.f32 %v3548, %v3892
        %v4019 = vadd.f32 %v3549, %v3895
        %v4020 = vadd.f32 %v3550, %v3900
        %v4021 = vadd.f32 %v3551, %v3903
        %v4022 = vadd.f32 %v3552, %v3908
        %v4023 = vadd.f32 %v3553, %v3911
        %v4024 = vadd.f32 %v3554, %v3916
        %v4025 = vadd.f32 %v3555, %v3919
        %v4026 = vadd.f32 %v3556, %v3924
        %v4027 = vadd.f32 %v3557, %v3927
        %v4028 = vadd.f32 %v3558, %v3932
        %v4029 = vadd.f32 %v3559, %v3935
        %v4030 = vadd.f32 %v3560, %v3940
        %v4031 = vadd.f32 %v3561, %v3943
        %v4032 = vadd.f32 %v3562, %v3948
        %v4033 = vadd.f32 %v3563, %v3951
        %v4034 = vadd.f32 %v3564, %v3956
        %v4035 = vadd.f32 %v3565, %v3959
        %v4036 = vadd.f32 %v3566, %v3964
        %v4037 = vadd.f32 %v3567, %v3967
        %v4038 = vadd.f32 %v3568, %v3972
        %v4039 = vadd.f32 %v3569, %v3975
        %v4040 = vadd.f32 %v3570, %v3980
        %v4041 = vadd.f32 %v3571, %v3983
        %v4042 = vadd.f32 %v3572, %v3988
        %v4043 = vadd.f32 %v3573, %v3991
        %v4044 = vadd.f32 %v3574, %v3996
        %v4045 = vadd.f32 %v3575, %v3999
        %v4046 = vadd.f32 %v3576, %v4004
        %v4047 = vadd.f32 %v3577, %v4007
        %v4048 = vadd.f32 %v3578, %v4012
        %v4049 = vadd.f32 %v3579, %v4015
        %s4050 = scalar_lea.vmem [#allocation2], 24
        %v4051 = vld [vmem:[%s4050] sm:$0xf]
        %v4052 = vld [vmem:[%s4050 + $0x4] sm:$0xf]
        %v4053 = vld [vmem:[%s4050 + $0xc] sm:$0xf]
        %v4054 = vld [vmem:[%s4050 + $0x10] sm:$0xf]
        %v4055 = vld [vmem:[%s4050 + $0x18] sm:$0xf]
        %v4056 = vld [vmem:[%s4050 + $0x1c] sm:$0xf]
        %v4057 = vld [vmem:[%s4050 + $0x24] sm:$0xf]
        %v4058 = vld [vmem:[%s4050 + $0x28] sm:$0xf]
        %v4059 = vld [vmem:[%s4050 + $0x30] sm:$0xf]
        %v4060 = vld [vmem:[%s4050 + $0x34] sm:$0xf]
        %v4061 = vld [vmem:[%s4050 + $0x3c] sm:$0xf]
        %v4062 = vld [vmem:[%s4050 + $0x40] sm:$0xf]
        %v4063 = vld [vmem:[%s4050 + $0x48] sm:$0xf]
        %v4064 = vld [vmem:[%s4050 + $0x4c] sm:$0xf]
        %v4065 = vld [vmem:[%s4050 + $0x54] sm:$0xf]
        %v4066 = vld [vmem:[%s4050 + $0x58] sm:$0xf]
        %v4067 = vld [vmem:[%s4050 + $0x60] sm:$0xf]
        %v4068 = vld [vmem:[%s4050 + $0x64] sm:$0xf]
        %v4069 = vld [vmem:[%s4050 + $0x6c] sm:$0xf]
        %v4070 = vld [vmem:[%s4050 + $0x70] sm:$0xf]
        %v4071 = vld [vmem:[%s4050 + $0x78] sm:$0xf]
        %v4072 = vld [vmem:[%s4050 + $0x7c] sm:$0xf]
        %v4073 = vld [vmem:[%s4050 + $0x84] sm:$0xf]
        %v4074 = vld [vmem:[%s4050 + $0x88] sm:$0xf]
        %v4075 = vld [vmem:[%s4050 + $0x90] sm:$0xf]
        %v4076 = vld [vmem:[%s4050 + $0x94] sm:$0xf]
        %v4077 = vld [vmem:[%s4050 + $0x9c] sm:$0xf]
        %v4078 = vld [vmem:[%s4050 + $0xa0] sm:$0xf]
        %v4079 = vld [vmem:[%s4050 + $0xa8] sm:$0xf]
        %v4080 = vld [vmem:[%s4050 + $0xac] sm:$0xf]
        %v4081 = vld [vmem:[%s4050 + $0xb4] sm:$0xf]
        %v4082 = vld [vmem:[%s4050 + $0xb8] sm:$0xf]
        %s4083 = scalar_lea.vmem %s1, 12
        %v4084 = vld [vmem:[%s4083] sm:$0x3]
        %v4117 = vunpack.c.l.b16 %v4051
        %v4118 = vunpack.c.l.b16 %v4052
        %v4119 = vunpack.c.l.b16 %v4053
        %v4120 = vunpack.c.l.b16 %v4054
        %v4121 = vunpack.c.l.b16 %v4055
        %v4122 = vunpack.c.l.b16 %v4056
        %v4123 = vunpack.c.l.b16 %v4057
        %v4124 = vunpack.c.l.b16 %v4058
        %v4125 = vunpack.c.l.b16 %v4059
        %v4126 = vunpack.c.l.b16 %v4060
        %v4127 = vunpack.c.l.b16 %v4061
        %v4128 = vunpack.c.l.b16 %v4062
        %v4129 = vunpack.c.l.b16 %v4063
        %v4130 = vunpack.c.l.b16 %v4064
        %v4131 = vunpack.c.l.b16 %v4065
        %v4132 = vunpack.c.l.b16 %v4066
        %v4133 = vunpack.c.l.b16 %v4067
        %v4134 = vunpack.c.l.b16 %v4068
        %v4135 = vunpack.c.l.b16 %v4069
        %v4136 = vunpack.c.l.b16 %v4070
        %v4137 = vunpack.c.l.b16 %v4071
        %v4138 = vunpack.c.l.b16 %v4072
        %v4139 = vunpack.c.l.b16 %v4073
        %v4140 = vunpack.c.l.b16 %v4074
        %v4141 = vunpack.c.l.b16 %v4075
        %v4142 = vunpack.c.l.b16 %v4076
        %v4143 = vunpack.c.l.b16 %v4077
        %v4144 = vunpack.c.l.b16 %v4078
        %v4145 = vunpack.c.l.b16 %v4079
        %v4146 = vunpack.c.l.b16 %v4080
        %v4147 = vunpack.c.l.b16 %v4081
        %v4148 = vunpack.c.l.b16 %v4082
        %v4149 = vpack.c.b16 %v4118, %v4117
        %v4150 = vpack.c.b16 %v4120, %v4119
        %v4151 = vpack.c.b16 %v4122, %v4121
        %v4152 = vpack.c.b16 %v4124, %v4123
        %v4153 = vpack.c.b16 %v4126, %v4125
        %v4154 = vpack.c.b16 %v4128, %v4127
        %v4155 = vpack.c.b16 %v4130, %v4129
        %v4156 = vpack.c.b16 %v4132, %v4131
        %v4157 = vpack.c.b16 %v4134, %v4133
        %v4158 = vpack.c.b16 %v4136, %v4135
        %v4159 = vpack.c.b16 %v4138, %v4137
        %v4160 = vpack.c.b16 %v4140, %v4139
        %v4161 = vpack.c.b16 %v4142, %v4141
        %v4162 = vpack.c.b16 %v4144, %v4143
        %v4163 = vpack.c.b16 %v4146, %v4145
        %v4164 = vpack.c.b16 %v4148, %v4147
        %v4166 = vsel %vm1533, %v4149, 0
        %v4169 = vsel %vm1533, %v4150, 0
        %v4172 = vsel %vm1533, %v4151, 0
        %v4175 = vsel %vm1533, %v4152, 0
        %v4178 = vsel %vm1533, %v4153, 0
        %v4181 = vsel %vm1533, %v4154, 0
        %v4184 = vsel %vm1533, %v4155, 0
        %v4187 = vsel %vm1533, %v4156, 0
        %v4190 = vsel %vm1533, %v4157, 0
        %v4193 = vsel %vm1533, %v4158, 0
        %v4196 = vsel %vm1533, %v4159, 0
        %v4199 = vsel %vm1533, %v4160, 0
        %v4202 = vsel %vm1533, %v4161, 0
        %v4205 = vsel %vm1533, %v4162, 0
        %v4208 = vsel %vm1533, %v4163, 0
        %v4211 = vsel %vm1533, %v4164, 0
        %v4214 = vsel %vm1582, %v4084, 0
        %4216 = vmatprep.subr.bf16.mxu0 0
        %4217 = vmatpush1.bf16.msra.mxu0 %v4214
        %4218 = vmatprep.subr.bf16.mxu0 0
        %4219 = vmatpush1.bf16.msra.mxu0 0
        %4220 = vmatprep.subr.bf16.mxu0 0
        %4221 = vmatpush1.bf16.msra.mxu0 0
        %4222 = vmatprep.subr.bf16.mxu0 0
        %4223 = vmatpush1.bf16.msra.mxu0 0
        %4224 = vmatprep.subr.bf16.mxu0 0
        %4225 = vmatpush1.bf16.msra.mxu0 0
        %4226 = vmatprep.subr.bf16.mxu0 0
        %4227 = vmatpush1.bf16.msra.mxu0 0
        %4228 = vmatprep.subr.bf16.mxu0 0
        %4229 = vmatpush1.bf16.msra.mxu0 0
        %4230 = vmatprep.subr.bf16.mxu0 0
        %4231 = vmatpush1.bf16.msra.mxu0 0
        %4232 = vmatprep.subr.bf16.mxu0 0
        %4233 = vmatpush1.bf16.msra.mxu0 0
        %4234 = vmatprep.subr.bf16.mxu0 0
        %4235 = vmatpush1.bf16.msra.mxu0 0
        %4236 = vmatprep.subr.bf16.mxu0 0
        %4237 = vmatpush1.bf16.msra.mxu0 0
        %4238 = vmatprep.subr.bf16.mxu0 0
        %4239 = vmatpush1.bf16.msra.mxu0 0
        %4240 = vmatprep.subr.bf16.mxu0 0
        %4241 = vmatpush1.bf16.msra.mxu0 0
        %4242 = vmatprep.subr.bf16.mxu0 0
        %4243 = vmatpush1.bf16.msra.mxu0 0
        %4244 = vmatprep.subr.bf16.mxu0 0
        %4245 = vmatpush1.bf16.msra.mxu0 0
        %4246 = vmatprep.subr.bf16.mxu0 0
        %4247 = vmatpush1.bf16.msra.mxu0 0
        %4248 = vmatprep.mubr.bf16.mxu0 0
        %4249 = vmatmul.mubr.bf16.gmra.mrb[0].mxu0 %v4166
        %v4250 = vpop.f32.mrb[0].mxu0
        %v4251 = vadd.f32 0.0, %v4250
        %v4252 = vpop.f32.mrb[0].mxu0
        %v4253 = vpop.f32.mrb[0].mxu0
        %v4254 = vadd.f32 0.0, %v4253
        %v4255 = vpop.f32.mrb[0].mxu0
        %4256 = vmatprep.mubr.bf16.mxu0 0
        %4257 = vmatmul.mubr.bf16.gmra.mrb[0].mxu0 %v4169
        %v4258 = vpop.f32.mrb[0].mxu0
        %v4259 = vadd.f32 0.0, %v4258
        %v4260 = vpop.f32.mrb[0].mxu0
        %v4261 = vpop.f32.mrb[0].mxu0
        %v4262 = vadd.f32 0.0, %v4261
        %v4263 = vpop.f32.mrb[0].mxu0
        %4264 = vmatprep.mubr.bf16.mxu0 0
        %4265 = vmatmul.mubr.bf16.gmra.mrb[0].mxu0 %v4172
        %v4266 = vpop.f32.mrb[0].mxu0
        %v4267 = vadd.f32 0.0, %v4266
        %v4268 = vpop.f32.mrb[0].mxu0
        %v4269 = vpop.f32.mrb[0].mxu0
        %v4270 = vadd.f32 0.0, %v4269
        %v4271 = vpop.f32.mrb[0].mxu0
        %4272 = vmatprep.mubr.bf16.mxu0 0
        %4273 = vmatmul.mubr.bf16.gmra.mrb[0].mxu0 %v4175
        %v4274 = vpop.f32.mrb[0].mxu0
        %v4275 = vadd.f32 0.0, %v4274
        %v4276 = vpop.f32.mrb[0].mxu0
        %v4277 = vpop.f32.mrb[0].mxu0
        %v4278 = vadd.f32 0.0, %v4277
        %v4279 = vpop.f32.mrb[0].mxu0
        %4280 = vmatprep.mubr.bf16.mxu0 0
        %4281 = vmatmul.mubr.bf16.gmra.mrb[0].mxu0 %v4178
        %v4282 = vpop.f32.mrb[0].mxu0
        %v4283 = vadd.f32 0.0, %v4282
        %v4284 = vpop.f32.mrb[0].mxu0
        %v4285 = vpop.f32.mrb[0].mxu0
        %v4286 = vadd.f32 0.0, %v4285
        %v4287 = vpop.f32.mrb[0].mxu0
        %4288 = vmatprep.mubr.bf16.mxu0 0
        %4289 = vmatmul.mubr.bf16.gmra.mrb[0].mxu0 %v4181
        %v4290 = vpop.f32.mrb[0].mxu0
        %v4291 = vadd.f32 0.0, %v4290
        %v4292 = vpop.f32.mrb[0].mxu0
        %v4293 = vpop.f32.mrb[0].mxu0
        %v4294 = vadd.f32 0.0, %v4293
        %v4295 = vpop.f32.mrb[0].mxu0
        %4296 = vmatprep.mubr.bf16.mxu0 0
        %4297 = vmatmul.mubr.bf16.gmra.mrb[0].mxu0 %v4184
        %v4298 = vpop.f32.mrb[0].mxu0
        %v4299 = vadd.f32 0.0, %v4298
        %v4300 = vpop.f32.mrb[0].mxu0
        %v4301 = vpop.f32.mrb[0].mxu0
        %v4302 = vadd.f32 0.0, %v4301
        %v4303 = vpop.f32.mrb[0].mxu0
        %4304 = vmatprep.mubr.bf16.mxu0 0
        %4305 = vmatmul.mubr.bf16.gmra.mrb[0].mxu0 %v4187
        %v4306 = vpop.f32.mrb[0].mxu0
        %v4307 = vadd.f32 0.0, %v4306
        %v4308 = vpop.f32.mrb[0].mxu0
        %v4309 = vpop.f32.mrb[0].mxu0
        %v4310 = vadd.f32 0.0, %v4309
        %v4311 = vpop.f32.mrb[0].mxu0
        %4312 = vmatprep.mubr.bf16.mxu0 0
        %4313 = vmatmul.mubr.bf16.gmra.mrb[0].mxu0 %v4190
        %v4314 = vpop.f32.mrb[0].mxu0
        %v4315 = vadd.f32 0.0, %v4314
        %v4316 = vpop.f32.mrb[0].mxu0
        %v4317 = vpop.f32.mrb[0].mxu0
        %v4318 = vadd.f32 0.0, %v4317
        %v4319 = vpop.f32.mrb[0].mxu0
        %4320 = vmatprep.mubr.bf16.mxu0 0
        %4321 = vmatmul.mubr.bf16.gmra.mrb[0].mxu0 %v4193
        %v4322 = vpop.f32.mrb[0].mxu0
        %v4323 = vadd.f32 0.0, %v4322
        %v4324 = vpop.f32.mrb[0].mxu0
        %v4325 = vpop.f32.mrb[0].mxu0
        %v4326 = vadd.f32 0.0, %v4325
        %v4327 = vpop.f32.mrb[0].mxu0
        %4328 = vmatprep.mubr.bf16.mxu0 0
        %4329 = vmatmul.mubr.bf16.gmra.mrb[0].mxu0 %v4196
        %v4330 = vpop.f32.mrb[0].mxu0
        %v4331 = vadd.f32 0.0, %v4330
        %v4332 = vpop.f32.mrb[0].mxu0
        %v4333 = vpop.f32.mrb[0].mxu0
        %v4334 = vadd.f32 0.0, %v4333
        %v4335 = vpop.f32.mrb[0].mxu0
        %4336 = vmatprep.mubr.bf16.mxu0 0
        %4337 = vmatmul.mubr.bf16.gmra.mrb[0].mxu0 %v4199
        %v4338 = vpop.f32.mrb[0].mxu0
        %v4339 = vadd.f32 0.0, %v4338
        %v4340 = vpop.f32.mrb[0].mxu0
        %v4341 = vpop.f32.mrb[0].mxu0
        %v4342 = vadd.f32 0.0, %v4341
        %v4343 = vpop.f32.mrb[0].mxu0
        %4344 = vmatprep.mubr.bf16.mxu0 0
        %4345 = vmatmul.mubr.bf16.gmra.mrb[0].mxu0 %v4202
        %v4346 = vpop.f32.mrb[0].mxu0
        %v4347 = vadd.f32 0.0, %v4346
        %v4348 = vpop.f32.mrb[0].mxu0
        %v4349 = vpop.f32.mrb[0].mxu0
        %v4350 = vadd.f32 0.0, %v4349
        %v4351 = vpop.f32.mrb[0].mxu0
        %4352 = vmatprep.mubr.bf16.mxu0 0
        %4353 = vmatmul.mubr.bf16.gmra.mrb[0].mxu0 %v4205
        %v4354 = vpop.f32.mrb[0].mxu0
        %v4355 = vadd.f32 0.0, %v4354
        %v4356 = vpop.f32.mrb[0].mxu0
        %v4357 = vpop.f32.mrb[0].mxu0
        %v4358 = vadd.f32 0.0, %v4357
        %v4359 = vpop.f32.mrb[0].mxu0
        %4360 = vmatprep.mubr.bf16.mxu0 0
        %4361 = vmatmul.mubr.bf16.gmra.mrb[0].mxu0 %v4208
        %v4362 = vpop.f32.mrb[0].mxu0
        %v4363 = vadd.f32 0.0, %v4362
        %v4364 = vpop.f32.mrb[0].mxu0
        %v4365 = vpop.f32.mrb[0].mxu0
        %v4366 = vadd.f32 0.0, %v4365
        %v4367 = vpop.f32.mrb[0].mxu0
        %4368 = vmatprep.mubr.bf16.mxu0 0
        %4369 = vmatmul.mubr.bf16.gmra.mrb[0].mxu0 %v4211
        %v4370 = vpop.f32.mrb[0].mxu0
        %v4371 = vadd.f32 0.0, %v4370
        %v4372 = vpop.f32.mrb[0].mxu0
        %v4373 = vpop.f32.mrb[0].mxu0
        %v4374 = vadd.f32 0.0, %v4373
        %v4375 = vpop.f32.mrb[0].mxu0
        %4376 = vdwg.mxu0
        %v4377 = vadd.f32 %v4018, %v4251
        %v4378 = vadd.f32 %v4019, %v4254
        %v4379 = vadd.f32 %v4020, %v4259
        %v4380 = vadd.f32 %v4021, %v4262
        %v4381 = vadd.f32 %v4022, %v4267
        %v4382 = vadd.f32 %v4023, %v4270
        %v4383 = vadd.f32 %v4024, %v4275
        %v4384 = vadd.f32 %v4025, %v4278
        %v4385 = vadd.f32 %v4026, %v4283
        %v4386 = vadd.f32 %v4027, %v4286
        %v4387 = vadd.f32 %v4028, %v4291
        %v4388 = vadd.f32 %v4029, %v4294
        %v4389 = vadd.f32 %v4030, %v4299
        %v4390 = vadd.f32 %v4031, %v4302
        %v4391 = vadd.f32 %v4032, %v4307
        %v4392 = vadd.f32 %v4033, %v4310
        %v4393 = vadd.f32 %v4034, %v4315
        %v4394 = vadd.f32 %v4035, %v4318
        %v4395 = vadd.f32 %v4036, %v4323
        %v4396 = vadd.f32 %v4037, %v4326
        %v4397 = vadd.f32 %v4038, %v4331
        %v4398 = vadd.f32 %v4039, %v4334
        %v4399 = vadd.f32 %v4040, %v4339
        %v4400 = vadd.f32 %v4041, %v4342
        %v4401 = vadd.f32 %v4042, %v4347
        %v4402 = vadd.f32 %v4043, %v4350
        %v4403 = vadd.f32 %v4044, %v4355
        %v4404 = vadd.f32 %v4045, %v4358
        %v4405 = vadd.f32 %v4046, %v4363
        %v4406 = vadd.f32 %v4047, %v4366
        %v4407 = vadd.f32 %v4048, %v4371
        %v4408 = vadd.f32 %v4049, %v4374
        %v4409 = vld [vmem:[%s4050] sm:$0xf]
        %v4410 = vld [vmem:[%s4050 + $0x4] sm:$0xf]
        %v4411 = vld [vmem:[%s4050 + $0x8] sm:$0x1]
        %v4412 = vld [vmem:[%s4050 + $0xc] sm:$0xf]
        %v4413 = vld [vmem:[%s4050 + $0x10] sm:$0xf]
        %v4414 = vld [vmem:[%s4050 + $0x14] sm:$0x1]
        %v4415 = vld [vmem:[%s4050 + $0x18] sm:$0xf]
        %v4416 = vld [vmem:[%s4050 + $0x1c] sm:$0xf]
        %v4417 = vld [vmem:[%s4050 + $0x20] sm:$0x1]
        %v4418 = vld [vmem:[%s4050 + $0x24] sm:$0xf]
        %v4419 = vld [vmem:[%s4050 + $0x28] sm:$0xf]
        %v4420 = vld [vmem:[%s4050 + $0x2c] sm:$0x1]
        %v4421 = vld [vmem:[%s4050 + $0x30] sm:$0xf]
        %v4422 = vld [vmem:[%s4050 + $0x34] sm:$0xf]
        %v4423 = vld [vmem:[%s4050 + $0x38] sm:$0x1]
        %v4424 = vld [vmem:[%s4050 + $0x3c] sm:$0xf]
        %v4425 = vld [vmem:[%s4050 + $0x40] sm:$0xf]
        %v4426 = vld [vmem:[%s4050 + $0x44] sm:$0x1]
        %v4427 = vld [vmem:[%s4050 + $0x48] sm:$0xf]
        %v4428 = vld [vmem:[%s4050 + $0x4c] sm:$0xf]
        %v4429 = vld [vmem:[%s4050 + $0x50] sm:$0x1]
        %v4430 = vld [vmem:[%s4050 + $0x54] sm:$0xf]
        %v4431 = vld [vmem:[%s4050 + $0x58] sm:$0xf]
        %v4432 = vld [vmem:[%s4050 + $0x5c] sm:$0x1]
        %v4433 = vld [vmem:[%s4050 + $0x60] sm:$0xf]
        %v4434 = vld [vmem:[%s4050 + $0x64] sm:$0xf]
        %v4435 = vld [vmem:[%s4050 + $0x68] sm:$0x1]
        %v4436 = vld [vmem:[%s4050 + $0x6c] sm:$0xf]
        %v4437 = vld [vmem:[%s4050 + $0x70] sm:$0xf]
        %v4438 = vld [vmem:[%s4050 + $0x74] sm:$0x1]
        %v4439 = vld [vmem:[%s4050 + $0x78] sm:$0xf]
        %v4440 = vld [vmem:[%s4050 + $0x7c] sm:$0xf]
        %v4441 = vld [vmem:[%s4050 + $0x80] sm:$0x1]
        %v4442 = vld [vmem:[%s4050 + $0x84] sm:$0xf]
        %v4443 = vld [vmem:[%s4050 + $0x88] sm:$0xf]
        %v4444 = vld [vmem:[%s4050 + $0x8c] sm:$0x1]
        %v4445 = vld [vmem:[%s4050 + $0x90] sm:$0xf]
        %v4446 = vld [vmem:[%s4050 + $0x94] sm:$0xf]
        %v4447 = vld [vmem:[%s4050 + $0x98] sm:$0x1]
        %v4448 = vld [vmem:[%s4050 + $0x9c] sm:$0xf]
        %v4449 = vld [vmem:[%s4050 + $0xa0] sm:$0xf]
        %v4450 = vld [vmem:[%s4050 + $0xa4] sm:$0x1]
        %v4451 = vld [vmem:[%s4050 + $0xa8] sm:$0xf]
        %v4452 = vld [vmem:[%s4050 + $0xac] sm:$0xf]
        %v4453 = vld [vmem:[%s4050 + $0xb0] sm:$0x1]
        %v4454 = vld [vmem:[%s4050 + $0xb4] sm:$0xf]
        %v4455 = vld [vmem:[%s4050 + $0xb8] sm:$0xf]
        %v4456 = vld [vmem:[%s4050 + $0xbc] sm:$0x1]
        %v4458 = vshrl.u32 %v4409, 16
        %v4460 = vrot.slane %v4458, 4
        %v4461 = vshll.u32 %v4409, 16
        %v4463 = vrot.slane %v4461, 5
        %v4464 = vor.u32 %v4460, %v4463
        %v4465 = vrot.slane %v4464, 4
        %v4467 = vshll.u32 %v4410, 16
        %v4469 = vrot.slane %v4467, 5
        %v4470 = vsel %vm1098, %v4465, %v4469
        %v4471 = vshrl.u32 %v4410, 16
        %v4473 = vrot.slane %v4471, 4
        %v4474 = vor.u32 %v4473, %v4469
        %v4475 = vrot.slane %v4474, 4
        %v4477 = vshll.u32 %v4411, 16
        %v4479 = vrot.slane %v4477, 5
        %v4480 = vsel %vm1098, %v4475, %v4479
        %v4482 = vshrl.u32 %v4412, 16
        %v4484 = vrot.slane %v4482, 4
        %v4485 = vshll.u32 %v4412, 16
        %v4487 = vrot.slane %v4485, 5
        %v4488 = vor.u32 %v4484, %v4487
        %v4489 = vrot.slane %v4488, 4
        %v4491 = vshll.u32 %v4413, 16
        %v4493 = vrot.slane %v4491, 5
        %v4494 = vsel %vm1098, %v4489, %v4493
        %v4495 = vshrl.u32 %v4413, 16
        %v4497 = vrot.slane %v4495, 4
        %v4498 = vor.u32 %v4497, %v4493
        %v4499 = vrot.slane %v4498, 4
        %v4501 = vshll.u32 %v4414, 16
        %v4503 = vrot.slane %v4501, 5
        %v4504 = vsel %vm1098, %v4499, %v4503
        %v4506 = vshrl.u32 %v4415, 16
        %v4508 = vrot.slane %v4506, 4
        %v4509 = vshll.u32 %v4415, 16
        %v4511 = vrot.slane %v4509, 5
        %v4512 = vor.u32 %v4508, %v4511
        %v4513 = vrot.slane %v4512, 4
        %v4515 = vshll.u32 %v4416, 16
        %v4517 = vrot.slane %v4515, 5
        %v4518 = vsel %vm1098, %v4513, %v4517
        %v4519 = vshrl.u32 %v4416, 16
        %v4521 = vrot.slane %v4519, 4
        %v4522 = vor.u32 %v4521, %v4517
        %v4523 = vrot.slane %v4522, 4
        %v4525 = vshll.u32 %v4417, 16
        %v4527 = vrot.slane %v4525, 5
        %v4528 = vsel %vm1098, %v4523, %v4527
        %v4530 = vshrl.u32 %v4418, 16
        %v4532 = vrot.slane %v4530, 4
        %v4533 = vshll.u32 %v4418, 16
        %v4535 = vrot.slane %v4533, 5
        %v4536 = vor.u32 %v4532, %v4535
        %v4537 = vrot.slane %v4536, 4
        %v4539 = vshll.u32 %v4419, 16
        %v4541 = vrot.slane %v4539, 5
        %v4542 = vsel %vm1098, %v4537, %v4541
        %v4543 = vshrl.u32 %v4419, 16
        %v4545 = vrot.slane %v4543, 4
        %v4546 = vor.u32 %v4545, %v4541
        %v4547 = vrot.slane %v4546, 4
        %v4549 = vshll.u32 %v4420, 16
        %v4551 = vrot.slane %v4549, 5
        %v4552 = vsel %vm1098, %v4547, %v4551
        %v4554 = vshrl.u32 %v4421, 16
        %v4556 = vrot.slane %v4554, 4
        %v4557 = vshll.u32 %v4421, 16
        %v4559 = vrot.slane %v4557, 5
        %v4560 = vor.u32 %v4556, %v4559
        %v4561 = vrot.slane %v4560, 4
        %v4563 = vshll.u32 %v4422, 16
        %v4565 = vrot.slane %v4563, 5
        %v4566 = vsel %vm1098, %v4561, %v4565
        %v4567 = vshrl.u32 %v4422, 16
        %v4569 = vrot.slane %v4567, 4
        %v4570 = vor.u32 %v4569, %v4565
        %v4571 = vrot.slane %v4570, 4
        %v4573 = vshll.u32 %v4423, 16
        %v4575 = vrot.slane %v4573, 5
        %v4576 = vsel %vm1098, %v4571, %v4575
        %v4578 = vshrl.u32 %v4424, 16
        %v4580 = vrot.slane %v4578, 4
        %v4581 = vshll.u32 %v4424, 16
        %v4583 = vrot.slane %v4581, 5
        %v4584 = vor.u32 %v4580, %v4583
        %v4585 = vrot.slane %v4584, 4
        %v4587 = vshll.u32 %v4425, 16
        %v4589 = vrot.slane %v4587, 5
        %v4590 = vsel %vm1098, %v4585, %v4589
        %v4591 = vshrl.u32 %v4425, 16
        %v4593 = vrot.slane %v4591, 4
        %v4594 = vor.u32 %v4593, %v4589
        %v4595 = vrot.slane %v4594, 4
        %v4597 = vshll.u32 %v4426, 16
        %v4599 = vrot.slane %v4597, 5
        %v4600 = vsel %vm1098, %v4595, %v4599
        %v4602 = vshrl.u32 %v4427, 16
        %v4604 = vrot.slane %v4602, 4
        %v4605 = vshll.u32 %v4427, 16
        %v4607 = vrot.slane %v4605, 5
        %v4608 = vor.u32 %v4604, %v4607
        %v4609 = vrot.slane %v4608, 4
        %v4611 = vshll.u32 %v4428, 16
        %v4613 = vrot.slane %v4611, 5
        %v4614 = vsel %vm1098, %v4609, %v4613
        %v4615 = vshrl.u32 %v4428, 16
        %v4617 = vrot.slane %v4615, 4
        %v4618 = vor.u32 %v4617, %v4613
        %v4619 = vrot.slane %v4618, 4
        %v4621 = vshll.u32 %v4429, 16
        %v4623 = vrot.slane %v4621, 5
        %v4624 = vsel %vm1098, %v4619, %v4623
        %v4626 = vshrl.u32 %v4430, 16
        %v4628 = vrot.slane %v4626, 4
        %v4629 = vshll.u32 %v4430, 16
        %v4631 = vrot.slane %v4629, 5
        %v4632 = vor.u32 %v4628, %v4631
        %v4633 = vrot.slane %v4632, 4
        %v4635 = vshll.u32 %v4431, 16
        %v4637 = vrot.slane %v4635, 5
        %v4638 = vsel %vm1098, %v4633, %v4637
        %v4639 = vshrl.u32 %v4431, 16
        %v4641 = vrot.slane %v4639, 4
        %v4642 = vor.u32 %v4641, %v4637
        %v4643 = vrot.slane %v4642, 4
        %v4645 = vshll.u32 %v4432, 16
        %v4647 = vrot.slane %v4645, 5
        %v4648 = vsel %vm1098, %v4643, %v4647
        %v4650 = vshrl.u32 %v4433, 16
        %v4652 = vrot.slane %v4650, 4
        %v4653 = vshll.u32 %v4433, 16
        %v4655 = vrot.slane %v4653, 5
        %v4656 = vor.u32 %v4652, %v4655
        %v4657 = vrot.slane %v4656, 4
        %v4659 = vshll.u32 %v4434, 16
        %v4661 = vrot.slane %v4659, 5
        %v4662 = vsel %vm1098, %v4657, %v4661
        %v4663 = vshrl.u32 %v4434, 16
        %v4665 = vrot.slane %v4663, 4
        %v4666 = vor.u32 %v4665, %v4661
        %v4667 = vrot.slane %v4666, 4
        %v4669 = vshll.u32 %v4435, 16
        %v4671 = vrot.slane %v4669, 5
        %v4672 = vsel %vm1098, %v4667, %v4671
        %v4674 = vshrl.u32 %v4436, 16
        %v4676 = vrot.slane %v4674, 4
        %v4677 = vshll.u32 %v4436, 16
        %v4679 = vrot.slane %v4677, 5
        %v4680 = vor.u32 %v4676, %v4679
        %v4681 = vrot.slane %v4680, 4
        %v4683 = vshll.u32 %v4437, 16
        %v4685 = vrot.slane %v4683, 5
        %v4686 = vsel %vm1098, %v4681, %v4685
        %v4687 = vshrl.u32 %v4437, 16
        %v4689 = vrot.slane %v4687, 4
        %v4690 = vor.u32 %v4689, %v4685
        %v4691 = vrot.slane %v4690, 4
        %v4693 = vshll.u32 %v4438, 16
        %v4695 = vrot.slane %v4693, 5
        %v4696 = vsel %vm1098, %v4691, %v4695
        %v4698 = vshrl.u32 %v4439, 16
        %v4700 = vrot.slane %v4698, 4
        %v4701 = vshll.u32 %v4439, 16
        %v4703 = vrot.slane %v4701, 5
        %v4704 = vor.u32 %v4700, %v4703
        %v4705 = vrot.slane %v4704, 4
        %v4707 = vshll.u32 %v4440, 16
        %v4709 = vrot.slane %v4707, 5
        %v4710 = vsel %vm1098, %v4705, %v4709
        %v4711 = vshrl.u32 %v4440, 16
        %v4713 = vrot.slane %v4711, 4
        %v4714 = vor.u32 %v4713, %v4709
        %v4715 = vrot.slane %v4714, 4
        %v4717 = vshll.u32 %v4441, 16
        %v4719 = vrot.slane %v4717, 5
        %v4720 = vsel %vm1098, %v4715, %v4719
        %v4722 = vshrl.u32 %v4442, 16
        %v4724 = vrot.slane %v4722, 4
        %v4725 = vshll.u32 %v4442, 16
        %v4727 = vrot.slane %v4725, 5
        %v4728 = vor.u32 %v4724, %v4727
        %v4729 = vrot.slane %v4728, 4
        %v4731 = vshll.u32 %v4443, 16
        %v4733 = vrot.slane %v4731, 5
        %v4734 = vsel %vm1098, %v4729, %v4733
        %v4735 = vshrl.u32 %v4443, 16
        %v4737 = vrot.slane %v4735, 4
        %v4738 = vor.u32 %v4737, %v4733
        %v4739 = vrot.slane %v4738, 4
        %v4741 = vshll.u32 %v4444, 16
        %v4743 = vrot.slane %v4741, 5
        %v4744 = vsel %vm1098, %v4739, %v4743
        %v4746 = vshrl.u32 %v4445, 16
        %v4748 = vrot.slane %v4746, 4
        %v4749 = vshll.u32 %v4445, 16
        %v4751 = vrot.slane %v4749, 5
        %v4752 = vor.u32 %v4748, %v4751
        %v4753 = vrot.slane %v4752, 4
        %v4755 = vshll.u32 %v4446, 16
        %v4757 = vrot.slane %v4755, 5
        %v4758 = vsel %vm1098, %v4753, %v4757
        %v4759 = vshrl.u32 %v4446, 16
        %v4761 = vrot.slane %v4759, 4
        %v4762 = vor.u32 %v4761, %v4757
        %v4763 = vrot.slane %v4762, 4
        %v4765 = vshll.u32 %v4447, 16
        %v4767 = vrot.slane %v4765, 5
        %v4768 = vsel %vm1098, %v4763, %v4767
        %v4770 = vshrl.u32 %v4448, 16
        %v4772 = vrot.slane %v4770, 4
        %v4773 = vshll.u32 %v4448, 16
        %v4775 = vrot.slane %v4773, 5
        %v4776 = vor.u32 %v4772, %v4775
        %v4777 = vrot.slane %v4776, 4
        %v4779 = vshll.u32 %v4449, 16
        %v4781 = vrot.slane %v4779, 5
        %v4782 = vsel %vm1098, %v4777, %v4781
        %v4783 = vshrl.u32 %v4449, 16
        %v4785 = vrot.slane %v4783, 4
        %v4786 = vor.u32 %v4785, %v4781
        %v4787 = vrot.slane %v4786, 4
        %v4789 = vshll.u32 %v4450, 16
        %v4791 = vrot.slane %v4789, 5
        %v4792 = vsel %vm1098, %v4787, %v4791
        %v4794 = vshrl.u32 %v4451, 16
        %v4796 = vrot.slane %v4794, 4
        %v4797 = vshll.u32 %v4451, 16
        %v4799 = vrot.slane %v4797, 5
        %v4800 = vor.u32 %v4796, %v4799
        %v4801 = vrot.slane %v4800, 4
        %v4803 = vshll.u32 %v4452, 16
        %v4805 = vrot.slane %v4803, 5
        %v4806 = vsel %vm1098, %v4801, %v4805
        %v4807 = vshrl.u32 %v4452, 16
        %v4809 = vrot.slane %v4807, 4
        %v4810 = vor.u32 %v4809, %v4805
        %v4811 = vrot.slane %v4810, 4
        %v4813 = vshll.u32 %v4453, 16
        %v4815 = vrot.slane %v4813, 5
        %v4816 = vsel %vm1098, %v4811, %v4815
        %v4818 = vshrl.u32 %v4454, 16
        %v4820 = vrot.slane %v4818, 4
        %v4821 = vshll.u32 %v4454, 16
        %v4823 = vrot.slane %v4821, 5
        %v4824 = vor.u32 %v4820, %v4823
        %v4825 = vrot.slane %v4824, 4
        %v4827 = vshll.u32 %v4455, 16
        %v4829 = vrot.slane %v4827, 5
        %v4830 = vsel %vm1098, %v4825, %v4829
        %v4831 = vshrl.u32 %v4455, 16
        %v4833 = vrot.slane %v4831, 4
        %v4834 = vor.u32 %v4833, %v4829
        %v4835 = vrot.slane %v4834, 4
        %v4837 = vshll.u32 %v4456, 16
        %v4839 = vrot.slane %v4837, 5
        %v4840 = vsel %vm1098, %v4835, %v4839
        %s4841 = scalar_lea.vmem %s1, 14
        %v4842 = vld [vmem:[%s4841] sm:$0x3]
        %v4843 = vunpack.c.l.b16 %v4470
        %v4844 = vunpack.c.l.b16 %v4480
        %v4845 = vunpack.c.l.b16 %v4494
        %v4846 = vunpack.c.l.b16 %v4504
        %v4847 = vunpack.c.l.b16 %v4518
        %v4848 = vunpack.c.l.b16 %v4528
        %v4849 = vunpack.c.l.b16 %v4542
        %v4850 = vunpack.c.l.b16 %v4552
        %v4851 = vunpack.c.l.b16 %v4566
        %v4852 = vunpack.c.l.b16 %v4576
        %v4853 = vunpack.c.l.b16 %v4590
        %v4854 = vunpack.c.l.b16 %v4600
        %v4855 = vunpack.c.l.b16 %v4614
        %v4856 = vunpack.c.l.b16 %v4624
        %v4857 = vunpack.c.l.b16 %v4638
        %v4858 = vunpack.c.l.b16 %v4648
        %v4859 = vunpack.c.l.b16 %v4662
        %v4860 = vunpack.c.l.b16 %v4672
        %v4861 = vunpack.c.l.b16 %v4686
        %v4862 = vunpack.c.l.b16 %v4696
        %v4863 = vunpack.c.l.b16 %v4710
        %v4864 = vunpack.c.l.b16 %v4720
        %v4865 = vunpack.c.l.b16 %v4734
        %v4866 = vunpack.c.l.b16 %v4744
        %v4867 = vunpack.c.l.b16 %v4758
        %v4868 = vunpack.c.l.b16 %v4768
        %v4869 = vunpack.c.l.b16 %v4782
        %v4870 = vunpack.c.l.b16 %v4792
        %v4871 = vunpack.c.l.b16 %v4806
        %v4872 = vunpack.c.l.b16 %v4816
        %v4873 = vunpack.c.l.b16 %v4830
        %v4874 = vunpack.c.l.b16 %v4840
        %v4875 = vpack.c.b16 %v4844, %v4843
        %v4876 = vpack.c.b16 %v4846, %v4845
        %v4877 = vpack.c.b16 %v4848, %v4847
        %v4878 = vpack.c.b16 %v4850, %v4849
        %v4879 = vpack.c.b16 %v4852, %v4851
        %v4880 = vpack.c.b16 %v4854, %v4853
        %v4881 = vpack.c.b16 %v4856, %v4855
        %v4882 = vpack.c.b16 %v4858, %v4857
        %v4883 = vpack.c.b16 %v4860, %v4859
        %v4884 = vpack.c.b16 %v4862, %v4861
        %v4885 = vpack.c.b16 %v4864, %v4863
        %v4886 = vpack.c.b16 %v4866, %v4865
        %v4887 = vpack.c.b16 %v4868, %v4867
        %v4888 = vpack.c.b16 %v4870, %v4869
        %v4889 = vpack.c.b16 %v4872, %v4871
        %v4890 = vpack.c.b16 %v4874, %v4873
        %v4892 = vsel %vm1533, %v4875, 0
        %v4895 = vsel %vm1533, %v4876, 0
        %v4898 = vsel %vm1533, %v4877, 0
        %v4901 = vsel %vm1533, %v4878, 0
        %v4904 = vsel %vm1533, %v4879, 0
        %v4907 = vsel %vm1533, %v4880, 0
        %v4910 = vsel %vm1533, %v4881, 0
        %v4913 = vsel %vm1533, %v4882, 0
        %v4916 = vsel %vm1533, %v4883, 0
        %v4919 = vsel %vm1533, %v4884, 0
        %v4922 = vsel %vm1533, %v4885, 0
        %v4925 = vsel %vm1533, %v4886, 0
        %v4928 = vsel %vm1533, %v4887, 0
        %v4931 = vsel %vm1533, %v4888, 0
        %v4934 = vsel %vm1533, %v4889, 0
        %v4937 = vsel %vm1533, %v4890, 0
        %v4940 = vsel %vm1582, %v4842, 0
        %4942 = vmatprep.subr.bf16.mxu0 0
        %4943 = vmatpush1.bf16.msra.mxu0 %v4940
        %4944 = vmatprep.subr.bf16.mxu0 0
        %4945 = vmatpush1.bf16.msra.mxu0 0
        %4946 = vmatprep.subr.bf16.mxu0 0
        %4947 = vmatpush1.bf16.msra.mxu0 0
        %4948 = vmatprep.subr.bf16.mxu0 0
        %4949 = vmatpush1.bf16.msra.mxu0 0
        %4950 = vmatprep.subr.bf16.mxu0 0
        %4951 = vmatpush1.bf16.msra.mxu0 0
        %4952 = vmatprep.subr.bf16.mxu0 0
        %4953 = vmatpush1.bf16.msra.mxu0 0
        %4954 = vmatprep.subr.bf16.mxu0 0
        %4955 = vmatpush1.bf16.msra.mxu0 0
        %4956 = vmatprep.subr.bf16.mxu0 0
        %4957 = vmatpush1.bf16.msra.mxu0 0
        %4958 = vmatprep.subr.bf16.mxu0 0
        %4959 = vmatpush1.bf16.msra.mxu0 0
        %4960 = vmatprep.subr.bf16.mxu0 0
        %4961 = vmatpush1.bf16.msra.mxu0 0
        %4962 = vmatprep.subr.bf16.mxu0 0
        %4963 = vmatpush1.bf16.msra.mxu0 0
        %4964 = vmatprep.subr.bf16.mxu0 0
        %4965 = vmatpush1.bf16.msra.mxu0 0
        %4966 = vmatprep.subr.bf16.mxu0 0
        %4967 = vmatpush1.bf16.msra.mxu0 0
        %4968 = vmatprep.subr.bf16.mxu0 0
        %4969 = vmatpush1.bf16.msra.mxu0 0
        %4970 = vmatprep.subr.bf16.mxu0 0
        %4971 = vmatpush1.bf16.msra.mxu0 0
        %4972 = vmatprep.subr.bf16.mxu0 0
        %4973 = vmatpush1.bf16.msra.mxu0 0
        %4974 = vmatprep.mubr.bf16.mxu0 0
        %4975 = vmatmul.mubr.bf16.gmra.mrb[0].mxu0 %v4892
        %v4976 = vpop.f32.mrb[0].mxu0
        %v4977 = vadd.f32 0.0, %v4976
        %v4978 = vpop.f32.mrb[0].mxu0
        %v4979 = vpop.f32.mrb[0].mxu0
        %v4980 = vadd.f32 0.0, %v4979
        %v4981 = vpop.f32.mrb[0].mxu0
        %4982 = vmatprep.mubr.bf16.mxu0 0
        %4983 = vmatmul.mubr.bf16.gmra.mrb[0].mxu0 %v4895
        %v4984 = vpop.f32.mrb[0].mxu0
        %v4985 = vadd.f32 0.0, %v4984
        %v4986 = vpop.f32.mrb[0].mxu0
        %v4987 = vpop.f32.mrb[0].mxu0
        %v4988 = vadd.f32 0.0, %v4987
        %v4989 = vpop.f32.mrb[0].mxu0
        %4990 = vmatprep.mubr.bf16.mxu0 0
        %4991 = vmatmul.mubr.bf16.gmra.mrb[0].mxu0 %v4898
        %v4992 = vpop.f32.mrb[0].mxu0
        %v4993 = vadd.f32 0.0, %v4992
        %v4994 = vpop.f32.mrb[0].mxu0
        %v4995 = vpop.f32.mrb[0].mxu0
        %v4996 = vadd.f32 0.0, %v4995
        %v4997 = vpop.f32.mrb[0].mxu0
        %4998 = vmatprep.mubr.bf16.mxu0 0
        %4999 = vmatmul.mubr.bf16.gmra.mrb[0].mxu0 %v4901
        %v5000 = vpop.f32.mrb[0].mxu0
        %v5001 = vadd.f32 0.0, %v5000
        %v5002 = vpop.f32.mrb[0].mxu0
        %v5003 = vpop.f32.mrb[0].mxu0
        %v5004 = vadd.f32 0.0, %v5003
        %v5005 = vpop.f32.mrb[0].mxu0
        %5006 = vmatprep.mubr.bf16.mxu0 0
        %5007 = vmatmul.mubr.bf16.gmra.mrb[0].mxu0 %v4904
        %v5008 = vpop.f32.mrb[0].mxu0
        %v5009 = vadd.f32 0.0, %v5008
        %v5010 = vpop.f32.mrb[0].mxu0
        %v5011 = vpop.f32.mrb[0].mxu0
        %v5012 = vadd.f32 0.0, %v5011
        %v5013 = vpop.f32.mrb[0].mxu0
        %5014 = vmatprep.mubr.bf16.mxu0 0
        %5015 = vmatmul.mubr.bf16.gmra.mrb[0].mxu0 %v4907
        %v5016 = vpop.f32.mrb[0].mxu0
        %v5017 = vadd.f32 0.0, %v5016
        %v5018 = vpop.f32.mrb[0].mxu0
        %v5019 = vpop.f32.mrb[0].mxu0
        %v5020 = vadd.f32 0.0, %v5019
        %v5021 = vpop.f32.mrb[0].mxu0
        %5022 = vmatprep.mubr.bf16.mxu0 0
        %5023 = vmatmul.mubr.bf16.gmra.mrb[0].mxu0 %v4910
        %v5024 = vpop.f32.mrb[0].mxu0
        %v5025 = vadd.f32 0.0, %v5024
        %v5026 = vpop.f32.mrb[0].mxu0
        %v5027 = vpop.f32.mrb[0].mxu0
        %v5028 = vadd.f32 0.0, %v5027
        %v5029 = vpop.f32.mrb[0].mxu0
        %5030 = vmatprep.mubr.bf16.mxu0 0
        %5031 = vmatmul.mubr.bf16.gmra.mrb[0].mxu0 %v4913
        %v5032 = vpop.f32.mrb[0].mxu0
        %v5033 = vadd.f32 0.0, %v5032
        %v5034 = vpop.f32.mrb[0].mxu0
        %v5035 = vpop.f32.mrb[0].mxu0
        %v5036 = vadd.f32 0.0, %v5035
        %v5037 = vpop.f32.mrb[0].mxu0
        %5038 = vmatprep.mubr.bf16.mxu0 0
        %5039 = vmatmul.mubr.bf16.gmra.mrb[0].mxu0 %v4916
        %v5040 = vpop.f32.mrb[0].mxu0
        %v5041 = vadd.f32 0.0, %v5040
        %v5042 = vpop.f32.mrb[0].mxu0
        %v5043 = vpop.f32.mrb[0].mxu0
        %v5044 = vadd.f32 0.0, %v5043
        %v5045 = vpop.f32.mrb[0].mxu0
        %5046 = vmatprep.mubr.bf16.mxu0 0
        %5047 = vmatmul.mubr.bf16.gmra.mrb[0].mxu0 %v4919
        %v5048 = vpop.f32.mrb[0].mxu0
        %v5049 = vadd.f32 0.0, %v5048
        %v5050 = vpop.f32.mrb[0].mxu0
        %v5051 = vpop.f32.mrb[0].mxu0
        %v5052 = vadd.f32 0.0, %v5051
        %v5053 = vpop.f32.mrb[0].mxu0
        %5054 = vmatprep.mubr.bf16.mxu0 0
        %5055 = vmatmul.mubr.bf16.gmra.mrb[0].mxu0 %v4922
        %v5056 = vpop.f32.mrb[0].mxu0
        %v5057 = vadd.f32 0.0, %v5056
        %v5058 = vpop.f32.mrb[0].mxu0
        %v5059 = vpop.f32.mrb[0].mxu0
        %v5060 = vadd.f32 0.0, %v5059
        %v5061 = vpop.f32.mrb[0].mxu0
        %5062 = vmatprep.mubr.bf16.mxu0 0
        %5063 = vmatmul.mubr.bf16.gmra.mrb[0].mxu0 %v4925
        %v5064 = vpop.f32.mrb[0].mxu0
        %v5065 = vadd.f32 0.0, %v5064
        %v5066 = vpop.f32.mrb[0].mxu0
        %v5067 = vpop.f32.mrb[0].mxu0
        %v5068 = vadd.f32 0.0, %v5067
        %v5069 = vpop.f32.mrb[0].mxu0
        %5070 = vmatprep.mubr.bf16.mxu0 0
        %5071 = vmatmul.mubr.bf16.gmra.mrb[0].mxu0 %v4928
        %v5072 = vpop.f32.mrb[0].mxu0
        %v5073 = vadd.f32 0.0, %v5072
        %v5074 = vpop.f32.mrb[0].mxu0
        %v5075 = vpop.f32.mrb[0].mxu0
        %v5076 = vadd.f32 0.0, %v5075
        %v5077 = vpop.f32.mrb[0].mxu0
        %5078 = vmatprep.mubr.bf16.mxu0 0
        %5079 = vmatmul.mubr.bf16.gmra.mrb[0].mxu0 %v4931
        %v5080 = vpop.f32.mrb[0].mxu0
        %v5081 = vadd.f32 0.0, %v5080
        %v5082 = vpop.f32.mrb[0].mxu0
        %v5083 = vpop.f32.mrb[0].mxu0
        %v5084 = vadd.f32 0.0, %v5083
        %v5085 = vpop.f32.mrb[0].mxu0
        %5086 = vmatprep.mubr.bf16.mxu0 0
        %5087 = vmatmul.mubr.bf16.gmra.mrb[0].mxu0 %v4934
        %v5088 = vpop.f32.mrb[0].mxu0
        %v5089 = vadd.f32 0.0, %v5088
        %v5090 = vpop.f32.mrb[0].mxu0
        %v5091 = vpop.f32.mrb[0].mxu0
        %v5092 = vadd.f32 0.0, %v5091
        %v5093 = vpop.f32.mrb[0].mxu0
        %5094 = vmatprep.mubr.bf16.mxu0 0
        %5095 = vmatmul.mubr.bf16.gmra.mrb[0].mxu0 %v4937
        %v5096 = vpop.f32.mrb[0].mxu0
        %v5097 = vadd.f32 0.0, %v5096
        %v5098 = vpop.f32.mrb[0].mxu0
        %v5099 = vpop.f32.mrb[0].mxu0
        %v5100 = vadd.f32 0.0, %v5099
        %v5101 = vpop.f32.mrb[0].mxu0
        %5102 = vdwg.mxu0
        %v5103 = vadd.f32 %v4377, %v4977
        %v5104 = vadd.f32 %v4378, %v4980
        %v5105 = vadd.f32 %v4379, %v4985
        %v5106 = vadd.f32 %v4380, %v4988
        %v5107 = vadd.f32 %v4381, %v4993
        %v5108 = vadd.f32 %v4382, %v4996
        %v5109 = vadd.f32 %v4383, %v5001
        %v5110 = vadd.f32 %v4384, %v5004
        %v5111 = vadd.f32 %v4385, %v5009
        %v5112 = vadd.f32 %v4386, %v5012
        %v5113 = vadd.f32 %v4387, %v5017
        %v5114 = vadd.f32 %v4388, %v5020
        %v5115 = vadd.f32 %v4389, %v5025
        %v5116 = vadd.f32 %v4390, %v5028
        %v5117 = vadd.f32 %v4391, %v5033
        %v5118 = vadd.f32 %v4392, %v5036
        %v5119 = vadd.f32 %v4393, %v5041
        %v5120 = vadd.f32 %v4394, %v5044
        %v5121 = vadd.f32 %v4395, %v5049
        %v5122 = vadd.f32 %v4396, %v5052
        %v5123 = vadd.f32 %v4397, %v5057
        %v5124 = vadd.f32 %v4398, %v5060
        %v5125 = vadd.f32 %v4399, %v5065
        %v5126 = vadd.f32 %v4400, %v5068
        %v5127 = vadd.f32 %v4401, %v5073
        %v5128 = vadd.f32 %v4402, %v5076
        %v5129 = vadd.f32 %v4403, %v5081
        %v5130 = vadd.f32 %v4404, %v5084
        %v5131 = vadd.f32 %v4405, %v5089
        %v5132 = vadd.f32 %v4406, %v5092
        %v5133 = vadd.f32 %v4407, %v5097
        %v5134 = vadd.f32 %v4408, %v5100
        %v5135 = vld [vmem:[%s4050] sm:$0xe]
        %v5136 = vld [vmem:[%s4050 + $0xc] sm:$0xe]
        %v5137 = vld [vmem:[%s4050 + $0x18] sm:$0xe]
        %v5138 = vld [vmem:[%s4050 + $0x24] sm:$0xe]
        %v5139 = vld [vmem:[%s4050 + $0x30] sm:$0xe]
        %v5140 = vld [vmem:[%s4050 + $0x3c] sm:$0xe]
        %v5141 = vld [vmem:[%s4050 + $0x48] sm:$0xe]
        %v5142 = vld [vmem:[%s4050 + $0x54] sm:$0xe]
        %v5143 = vld [vmem:[%s4050 + $0x60] sm:$0xe]
        %v5144 = vld [vmem:[%s4050 + $0x6c] sm:$0xe]
        %v5145 = vld [vmem:[%s4050 + $0x78] sm:$0xe]
        %v5146 = vld [vmem:[%s4050 + $0x84] sm:$0xe]
        %v5147 = vld [vmem:[%s4050 + $0x90] sm:$0xe]
        %v5148 = vld [vmem:[%s4050 + $0x9c] sm:$0xe]
        %v5149 = vld [vmem:[%s4050 + $0xa8] sm:$0xe]
        %v5150 = vld [vmem:[%s4050 + $0xb4] sm:$0xe]
        %v5199 = vrot.slane %v5135, 5
        %v5200 = vrot.slane %v5199, 4
        %v5201 = vrot.slane %v4410, 5
        %v5202 = vsel %vm2089, %v5200, %v5201
        %v5203 = vrot.slane %v5201, 4
        %v5204 = vrot.slane %v4411, 5
        %v5205 = vsel %vm2089, %v5203, %v5204
        %v5206 = vrot.slane %v5136, 5
        %v5207 = vrot.slane %v5206, 4
        %v5208 = vrot.slane %v4413, 5
        %v5209 = vsel %vm2089, %v5207, %v5208
        %v5210 = vrot.slane %v5208, 4
        %v5211 = vrot.slane %v4414, 5
        %v5212 = vsel %vm2089, %v5210, %v5211
        %v5213 = vrot.slane %v5137, 5
        %v5214 = vrot.slane %v5213, 4
        %v5215 = vrot.slane %v4416, 5
        %v5216 = vsel %vm2089, %v5214, %v5215
        %v5217 = vrot.slane %v5215, 4
        %v5218 = vrot.slane %v4417, 5
        %v5219 = vsel %vm2089, %v5217, %v5218
        %v5220 = vrot.slane %v5138, 5
        %v5221 = vrot.slane %v5220, 4
        %v5222 = vrot.slane %v4419, 5
        %v5223 = vsel %vm2089, %v5221, %v5222
        %v5224 = vrot.slane %v5222, 4
        %v5225 = vrot.slane %v4420, 5
        %v5226 = vsel %vm2089, %v5224, %v5225
        %v5227 = vrot.slane %v5139, 5
        %v5228 = vrot.slane %v5227, 4
        %v5229 = vrot.slane %v4422, 5
        %v5230 = vsel %vm2089, %v5228, %v5229
        %v5231 = vrot.slane %v5229, 4
        %v5232 = vrot.slane %v4423, 5
        %v5233 = vsel %vm2089, %v5231, %v5232
        %v5234 = vrot.slane %v5140, 5
        %v5235 = vrot.slane %v5234, 4
        %v5236 = vrot.slane %v4425, 5
        %v5237 = vsel %vm2089, %v5235, %v5236
        %v5238 = vrot.slane %v5236, 4
        %v5239 = vrot.slane %v4426, 5
        %v5240 = vsel %vm2089, %v5238, %v5239
        %v5241 = vrot.slane %v5141, 5
        %v5242 = vrot.slane %v5241, 4
        %v5243 = vrot.slane %v4428, 5
        %v5244 = vsel %vm2089, %v5242, %v5243
        %v5245 = vrot.slane %v5243, 4
        %v5246 = vrot.slane %v4429, 5
        %v5247 = vsel %vm2089, %v5245, %v5246
        %v5248 = vrot.slane %v5142, 5
        %v5249 = vrot.slane %v5248, 4
        %v5250 = vrot.slane %v4431, 5
        %v5251 = vsel %vm2089, %v5249, %v5250
        %v5252 = vrot.slane %v5250, 4
        %v5253 = vrot.slane %v4432, 5
        %v5254 = vsel %vm2089, %v5252, %v5253
        %v5255 = vrot.slane %v5143, 5
        %v5256 = vrot.slane %v5255, 4
        %v5257 = vrot.slane %v4434, 5
        %v5258 = vsel %vm2089, %v5256, %v5257
        %v5259 = vrot.slane %v5257, 4
        %v5260 = vrot.slane %v4435, 5
        %v5261 = vsel %vm2089, %v5259, %v5260
        %v5262 = vrot.slane %v5144, 5
        %v5263 = vrot.slane %v5262, 4
        %v5264 = vrot.slane %v4437, 5
        %v5265 = vsel %vm2089, %v5263, %v5264
        %v5266 = vrot.slane %v5264, 4
        %v5267 = vrot.slane %v4438, 5
        %v5268 = vsel %vm2089, %v5266, %v5267
        %v5269 = vrot.slane %v5145, 5
        %v5270 = vrot.slane %v5269, 4
        %v5271 = vrot.slane %v4440, 5
        %v5272 = vsel %vm2089, %v5270, %v5271
        %v5273 = vrot.slane %v5271, 4
        %v5274 = vrot.slane %v4441, 5
        %v5275 = vsel %vm2089, %v5273, %v5274
        %v5276 = vrot.slane %v5146, 5
        %v5277 = vrot.slane %v5276, 4
        %v5278 = vrot.slane %v4443, 5
        %v5279 = vsel %vm2089, %v5277, %v5278
        %v5280 = vrot.slane %v5278, 4
        %v5281 = vrot.slane %v4444, 5
        %v5282 = vsel %vm2089, %v5280, %v5281
        %v5283 = vrot.slane %v5147, 5
        %v5284 = vrot.slane %v5283, 4
        %v5285 = vrot.slane %v4446, 5
        %v5286 = vsel %vm2089, %v5284, %v5285
        %v5287 = vrot.slane %v5285, 4
        %v5288 = vrot.slane %v4447, 5
        %v5289 = vsel %vm2089, %v5287, %v5288
        %v5290 = vrot.slane %v5148, 5
        %v5291 = vrot.slane %v5290, 4
        %v5292 = vrot.slane %v4449, 5
        %v5293 = vsel %vm2089, %v5291, %v5292
        %v5294 = vrot.slane %v5292, 4
        %v5295 = vrot.slane %v4450, 5
        %v5296 = vsel %vm2089, %v5294, %v5295
        %v5297 = vrot.slane %v5149, 5
        %v5298 = vrot.slane %v5297, 4
        %v5299 = vrot.slane %v4452, 5
        %v5300 = vsel %vm2089, %v5298, %v5299
        %v5301 = vrot.slane %v5299, 4
        %v5302 = vrot.slane %v4453, 5
        %v5303 = vsel %vm2089, %v5301, %v5302
        %v5304 = vrot.slane %v5150, 5
        %v5305 = vrot.slane %v5304, 4
        %v5306 = vrot.slane %v4455, 5
        %v5307 = vsel %vm2089, %v5305, %v5306
        %v5308 = vrot.slane %v5306, 4
        %v5309 = vrot.slane %v4456, 5
        %v5310 = vsel %vm2089, %v5308, %v5309
        %s5311 = scalar_lea.vmem %s1, 16
        %v5312 = vld [vmem:[%s5311] sm:$0x3]
        %v5313 = vunpack.c.l.b16 %v5202
        %v5314 = vunpack.c.l.b16 %v5205
        %v5315 = vunpack.c.l.b16 %v5209
        %v5316 = vunpack.c.l.b16 %v5212
        %v5317 = vunpack.c.l.b16 %v5216
        %v5318 = vunpack.c.l.b16 %v5219
        %v5319 = vunpack.c.l.b16 %v5223
        %v5320 = vunpack.c.l.b16 %v5226
        %v5321 = vunpack.c.l.b16 %v5230
        %v5322 = vunpack.c.l.b16 %v5233
        %v5323 = vunpack.c.l.b16 %v5237
        %v5324 = vunpack.c.l.b16 %v5240
        %v5325 = vunpack.c.l.b16 %v5244
        %v5326 = vunpack.c.l.b16 %v5247
        %v5327 = vunpack.c.l.b16 %v5251
        %v5328 = vunpack.c.l.b16 %v5254
        %v5329 = vunpack.c.l.b16 %v5258
        %v5330 = vunpack.c.l.b16 %v5261
        %v5331 = vunpack.c.l.b16 %v5265
        %v5332 = vunpack.c.l.b16 %v5268
        %v5333 = vunpack.c.l.b16 %v5272
        %v5334 = vunpack.c.l.b16 %v5275
        %v5335 = vunpack.c.l.b16 %v5279
        %v5336 = vunpack.c.l.b16 %v5282
        %v5337 = vunpack.c.l.b16 %v5286
        %v5338 = vunpack.c.l.b16 %v5289
        %v5339 = vunpack.c.l.b16 %v5293
        %v5340 = vunpack.c.l.b16 %v5296
        %v5341 = vunpack.c.l.b16 %v5300
        %v5342 = vunpack.c.l.b16 %v5303
        %v5343 = vunpack.c.l.b16 %v5307
        %v5344 = vunpack.c.l.b16 %v5310
        %v5345 = vpack.c.b16 %v5314, %v5313
        %v5346 = vpack.c.b16 %v5316, %v5315
        %v5347 = vpack.c.b16 %v5318, %v5317
        %v5348 = vpack.c.b16 %v5320, %v5319
        %v5349 = vpack.c.b16 %v5322, %v5321
        %v5350 = vpack.c.b16 %v5324, %v5323
        %v5351 = vpack.c.b16 %v5326, %v5325
        %v5352 = vpack.c.b16 %v5328, %v5327
        %v5353 = vpack.c.b16 %v5330, %v5329
        %v5354 = vpack.c.b16 %v5332, %v5331
        %v5355 = vpack.c.b16 %v5334, %v5333
        %v5356 = vpack.c.b16 %v5336, %v5335
        %v5357 = vpack.c.b16 %v5338, %v5337
        %v5358 = vpack.c.b16 %v5340, %v5339
        %v5359 = vpack.c.b16 %v5342, %v5341
        %v5360 = vpack.c.b16 %v5344, %v5343
        %v5362 = vsel %vm1533, %v5345, 0
        %v5365 = vsel %vm1533, %v5346, 0
        %v5368 = vsel %vm1533, %v5347, 0
        %v5371 = vsel %vm1533, %v5348, 0
        %v5374 = vsel %vm1533, %v5349, 0
        %v5377 = vsel %vm1533, %v5350, 0
        %v5380 = vsel %vm1533, %v5351, 0
        %v5383 = vsel %vm1533, %v5352, 0
        %v5386 = vsel %vm1533, %v5353, 0
        %v5389 = vsel %vm1533, %v5354, 0
        %v5392 = vsel %vm1533, %v5355, 0
        %v5395 = vsel %vm1533, %v5356, 0
        %v5398 = vsel %vm1533, %v5357, 0
        %v5401 = vsel %vm1533, %v5358, 0
        %v5404 = vsel %vm1533, %v5359, 0
        %v5407 = vsel %vm1533, %v5360, 0
        %v5410 = vsel %vm1582, %v5312, 0
        %5412 = vmatprep.subr.bf16.mxu0 0
        %5413 = vmatpush1.bf16.msra.mxu0 %v5410
        %5414 = vmatprep.subr.bf16.mxu0 0
        %5415 = vmatpush1.bf16.msra.mxu0 0
        %5416 = vmatprep.subr.bf16.mxu0 0
        %5417 = vmatpush1.bf16.msra.mxu0 0
        %5418 = vmatprep.subr.bf16.mxu0 0
        %5419 = vmatpush1.bf16.msra.mxu0 0
        %5420 = vmatprep.subr.bf16.mxu0 0
        %5421 = vmatpush1.bf16.msra.mxu0 0
        %5422 = vmatprep.subr.bf16.mxu0 0
        %5423 = vmatpush1.bf16.msra.mxu0 0
        %5424 = vmatprep.subr.bf16.mxu0 0
        %5425 = vmatpush1.bf16.msra.mxu0 0
        %5426 = vmatprep.subr.bf16.mxu0 0
        %5427 = vmatpush1.bf16.msra.mxu0 0
        %5428 = vmatprep.subr.bf16.mxu0 0
        %5429 = vmatpush1.bf16.msra.mxu0 0
        %5430 = vmatprep.subr.bf16.mxu0 0
        %5431 = vmatpush1.bf16.msra.mxu0 0
        %5432 = vmatprep.subr.bf16.mxu0 0
        %5433 = vmatpush1.bf16.msra.mxu0 0
        %5434 = vmatprep.subr.bf16.mxu0 0
        %5435 = vmatpush1.bf16.msra.mxu0 0
        %5436 = vmatprep.subr.bf16.mxu0 0
        %5437 = vmatpush1.bf16.msra.mxu0 0
        %5438 = vmatprep.subr.bf16.mxu0 0
        %5439 = vmatpush1.bf16.msra.mxu0 0
        %5440 = vmatprep.subr.bf16.mxu0 0
        %5441 = vmatpush1.bf16.msra.mxu0 0
        %5442 = vmatprep.subr.bf16.mxu0 0
        %5443 = vmatpush1.bf16.msra.mxu0 0
        %5444 = vmatprep.mubr.bf16.mxu0 0
        %5445 = vmatmul.mubr.bf16.gmra.mrb[0].mxu0 %v5362
        %v5446 = vpop.f32.mrb[0].mxu0
        %v5447 = vadd.f32 0.0, %v5446
        %v5448 = vpop.f32.mrb[0].mxu0
        %v5449 = vpop.f32.mrb[0].mxu0
        %v5450 = vadd.f32 0.0, %v5449
        %v5451 = vpop.f32.mrb[0].mxu0
        %5452 = vmatprep.mubr.bf16.mxu0 0
        %5453 = vmatmul.mubr.bf16.gmra.mrb[0].mxu0 %v5365
        %v5454 = vpop.f32.mrb[0].mxu0
        %v5455 = vadd.f32 0.0, %v5454
        %v5456 = vpop.f32.mrb[0].mxu0
        %v5457 = vpop.f32.mrb[0].mxu0
        %v5458 = vadd.f32 0.0, %v5457
        %v5459 = vpop.f32.mrb[0].mxu0
        %5460 = vmatprep.mubr.bf16.mxu0 0
        %5461 = vmatmul.mubr.bf16.gmra.mrb[0].mxu0 %v5368
        %v5462 = vpop.f32.mrb[0].mxu0
        %v5463 = vadd.f32 0.0, %v5462
        %v5464 = vpop.f32.mrb[0].mxu0
        %v5465 = vpop.f32.mrb[0].mxu0
        %v5466 = vadd.f32 0.0, %v5465
        %v5467 = vpop.f32.mrb[0].mxu0
        %5468 = vmatprep.mubr.bf16.mxu0 0
        %5469 = vmatmul.mubr.bf16.gmra.mrb[0].mxu0 %v5371
        %v5470 = vpop.f32.mrb[0].mxu0
        %v5471 = vadd.f32 0.0, %v5470
        %v5472 = vpop.f32.mrb[0].mxu0
        %v5473 = vpop.f32.mrb[0].mxu0
        %v5474 = vadd.f32 0.0, %v5473
        %v5475 = vpop.f32.mrb[0].mxu0
        %5476 = vmatprep.mubr.bf16.mxu0 0
        %5477 = vmatmul.mubr.bf16.gmra.mrb[0].mxu0 %v5374
        %v5478 = vpop.f32.mrb[0].mxu0
        %v5479 = vadd.f32 0.0, %v5478
        %v5480 = vpop.f32.mrb[0].mxu0
        %v5481 = vpop.f32.mrb[0].mxu0
        %v5482 = vadd.f32 0.0, %v5481
        %v5483 = vpop.f32.mrb[0].mxu0
        %5484 = vmatprep.mubr.bf16.mxu0 0
        %5485 = vmatmul.mubr.bf16.gmra.mrb[0].mxu0 %v5377
        %v5486 = vpop.f32.mrb[0].mxu0
        %v5487 = vadd.f32 0.0, %v5486
        %v5488 = vpop.f32.mrb[0].mxu0
        %v5489 = vpop.f32.mrb[0].mxu0
        %v5490 = vadd.f32 0.0, %v5489
        %v5491 = vpop.f32.mrb[0].mxu0
        %5492 = vmatprep.mubr.bf16.mxu0 0
        %5493 = vmatmul.mubr.bf16.gmra.mrb[0].mxu0 %v5380
        %v5494 = vpop.f32.mrb[0].mxu0
        %v5495 = vadd.f32 0.0, %v5494
        %v5496 = vpop.f32.mrb[0].mxu0
        %v5497 = vpop.f32.mrb[0].mxu0
        %v5498 = vadd.f32 0.0, %v5497
        %v5499 = vpop.f32.mrb[0].mxu0
        %5500 = vmatprep.mubr.bf16.mxu0 0
        %5501 = vmatmul.mubr.bf16.gmra.mrb[0].mxu0 %v5383
        %v5502 = vpop.f32.mrb[0].mxu0
        %v5503 = vadd.f32 0.0, %v5502
        %v5504 = vpop.f32.mrb[0].mxu0
        %v5505 = vpop.f32.mrb[0].mxu0
        %v5506 = vadd.f32 0.0, %v5505
        %v5507 = vpop.f32.mrb[0].mxu0
        %5508 = vmatprep.mubr.bf16.mxu0 0
        %5509 = vmatmul.mubr.bf16.gmra.mrb[0].mxu0 %v5386
        %v5510 = vpop.f32.mrb[0].mxu0
        %v5511 = vadd.f32 0.0, %v5510
        %v5512 = vpop.f32.mrb[0].mxu0
        %v5513 = vpop.f32.mrb[0].mxu0
        %v5514 = vadd.f32 0.0, %v5513
        %v5515 = vpop.f32.mrb[0].mxu0
        %5516 = vmatprep.mubr.bf16.mxu0 0
        %5517 = vmatmul.mubr.bf16.gmra.mrb[0].mxu0 %v5389
        %v5518 = vpop.f32.mrb[0].mxu0
        %v5519 = vadd.f32 0.0, %v5518
        %v5520 = vpop.f32.mrb[0].mxu0
        %v5521 = vpop.f32.mrb[0].mxu0
        %v5522 = vadd.f32 0.0, %v5521
        %v5523 = vpop.f32.mrb[0].mxu0
        %5524 = vmatprep.mubr.bf16.mxu0 0
        %5525 = vmatmul.mubr.bf16.gmra.mrb[0].mxu0 %v5392
        %v5526 = vpop.f32.mrb[0].mxu0
        %v5527 = vadd.f32 0.0, %v5526
        %v5528 = vpop.f32.mrb[0].mxu0
        %v5529 = vpop.f32.mrb[0].mxu0
        %v5530 = vadd.f32 0.0, %v5529
        %v5531 = vpop.f32.mrb[0].mxu0
        %5532 = vmatprep.mubr.bf16.mxu0 0
        %5533 = vmatmul.mubr.bf16.gmra.mrb[0].mxu0 %v5395
        %v5534 = vpop.f32.mrb[0].mxu0
        %v5535 = vadd.f32 0.0, %v5534
        %v5536 = vpop.f32.mrb[0].mxu0
        %v5537 = vpop.f32.mrb[0].mxu0
        %v5538 = vadd.f32 0.0, %v5537
        %v5539 = vpop.f32.mrb[0].mxu0
        %5540 = vmatprep.mubr.bf16.mxu0 0
        %5541 = vmatmul.mubr.bf16.gmra.mrb[0].mxu0 %v5398
        %v5542 = vpop.f32.mrb[0].mxu0
        %v5543 = vadd.f32 0.0, %v5542
        %v5544 = vpop.f32.mrb[0].mxu0
        %v5545 = vpop.f32.mrb[0].mxu0
        %v5546 = vadd.f32 0.0, %v5545
        %v5547 = vpop.f32.mrb[0].mxu0
        %5548 = vmatprep.mubr.bf16.mxu0 0
        %5549 = vmatmul.mubr.bf16.gmra.mrb[0].mxu0 %v5401
        %v5550 = vpop.f32.mrb[0].mxu0
        %v5551 = vadd.f32 0.0, %v5550
        %v5552 = vpop.f32.mrb[0].mxu0
        %v5553 = vpop.f32.mrb[0].mxu0
        %v5554 = vadd.f32 0.0, %v5553
        %v5555 = vpop.f32.mrb[0].mxu0
        %5556 = vmatprep.mubr.bf16.mxu0 0
        %5557 = vmatmul.mubr.bf16.gmra.mrb[0].mxu0 %v5404
        %v5558 = vpop.f32.mrb[0].mxu0
        %v5559 = vadd.f32 0.0, %v5558
        %v5560 = vpop.f32.mrb[0].mxu0
        %v5561 = vpop.f32.mrb[0].mxu0
        %v5562 = vadd.f32 0.0, %v5561
        %v5563 = vpop.f32.mrb[0].mxu0
        %5564 = vmatprep.mubr.bf16.mxu0 0
        %5565 = vmatmul.mubr.bf16.gmra.mrb[0].mxu0 %v5407
        %v5566 = vpop.f32.mrb[0].mxu0
        %v5567 = vadd.f32 0.0, %v5566
        %v5568 = vpop.f32.mrb[0].mxu0
        %v5569 = vpop.f32.mrb[0].mxu0
        %v5570 = vadd.f32 0.0, %v5569
        %v5571 = vpop.f32.mrb[0].mxu0
        %5572 = vdwg.mxu0
        %v5573 = vadd.f32 %v5103, %v5447
        %v5574 = vadd.f32 %v5104, %v5450
        %v5575 = vadd.f32 %v5105, %v5455
        %v5576 = vadd.f32 %v5106, %v5458
        %v5577 = vadd.f32 %v5107, %v5463
        %v5578 = vadd.f32 %v5108, %v5466
        %v5579 = vadd.f32 %v5109, %v5471
        %v5580 = vadd.f32 %v5110, %v5474
        %v5581 = vadd.f32 %v5111, %v5479
        %v5582 = vadd.f32 %v5112, %v5482
        %v5583 = vadd.f32 %v5113, %v5487
        %v5584 = vadd.f32 %v5114, %v5490
        %v5585 = vadd.f32 %v5115, %v5495
        %v5586 = vadd.f32 %v5116, %v5498
        %v5587 = vadd.f32 %v5117, %v5503
        %v5588 = vadd.f32 %v5118, %v5506
        %v5589 = vadd.f32 %v5119, %v5511
        %v5590 = vadd.f32 %v5120, %v5514
        %v5591 = vadd.f32 %v5121, %v5519
        %v5592 = vadd.f32 %v5122, %v5522
        %v5593 = vadd.f32 %v5123, %v5527
        %v5594 = vadd.f32 %v5124, %v5530
        %v5595 = vadd.f32 %v5125, %v5535
        %v5596 = vadd.f32 %v5126, %v5538
        %v5597 = vadd.f32 %v5127, %v5543
        %v5598 = vadd.f32 %v5128, %v5546
        %v5599 = vadd.f32 %v5129, %v5551
        %v5600 = vadd.f32 %v5130, %v5554
        %v5601 = vadd.f32 %v5131, %v5559
        %v5602 = vadd.f32 %v5132, %v5562
        %v5603 = vadd.f32 %v5133, %v5567
        %v5604 = vadd.f32 %v5134, %v5570
        %v5605 = vld [vmem:[%s2] sm:$0x1]
        %v5607 = vlaneseq
        %v5608 = vshrl.u32 %v5607, 7
        %v5609 = vsub.s32 0, %v5608
        %v5610 = vrot.slane %v5605, %v5609
        %v5612 = vmul.f32 %v5573, %v5610
        %v5613 = vmul.f32 %v5574, %v5610
        %v5614 = vmul.f32 %v5575, %v5610
        %v5615 = vmul.f32 %v5576, %v5610
        %v5616 = vmul.f32 %v5577, %v5610
        %v5617 = vmul.f32 %v5578, %v5610
        %v5618 = vmul.f32 %v5579, %v5610
        %v5619 = vmul.f32 %v5580, %v5610
        %v5620 = vmul.f32 %v5581, %v5610
        %v5621 = vmul.f32 %v5582, %v5610
        %v5622 = vmul.f32 %v5583, %v5610
        %v5623 = vmul.f32 %v5584, %v5610
        %v5624 = vmul.f32 %v5585, %v5610
        %v5625 = vmul.f32 %v5586, %v5610
        %v5626 = vmul.f32 %v5587, %v5610
        %v5627 = vmul.f32 %v5588, %v5610
        %v5628 = vmul.f32 %v5589, %v5610
        %v5629 = vmul.f32 %v5590, %v5610
        %v5630 = vmul.f32 %v5591, %v5610
        %v5631 = vmul.f32 %v5592, %v5610
        %v5632 = vmul.f32 %v5593, %v5610
        %v5633 = vmul.f32 %v5594, %v5610
        %v5634 = vmul.f32 %v5595, %v5610
        %v5635 = vmul.f32 %v5596, %v5610
        %v5636 = vmul.f32 %v5597, %v5610
        %v5637 = vmul.f32 %v5598, %v5610
        %v5638 = vmul.f32 %v5599, %v5610
        %v5639 = vmul.f32 %v5600, %v5610
        %v5640 = vmul.f32 %v5601, %v5610
        %v5641 = vmul.f32 %v5602, %v5610
        %v5642 = vmul.f32 %v5603, %v5610
        %v5643 = vmul.f32 %v5604, %v5610
        %v5644 = vld [vmem:[%s3] sm:$0x1]
        %v5646 = vlaneseq
        %v5647 = vshrl.u32 %v5646, 7
        %v5648 = vsub.s32 0, %v5647
        %v5649 = vrot.slane %v5644, %v5648
        %v5651 = vadd.f32 %v5612, %v5649
        %v5652 = vadd.f32 %v5613, %v5649
        %v5653 = vadd.f32 %v5614, %v5649
        %v5654 = vadd.f32 %v5615, %v5649
        %v5655 = vadd.f32 %v5616, %v5649
        %v5656 = vadd.f32 %v5617, %v5649
        %v5657 = vadd.f32 %v5618, %v5649
        %v5658 = vadd.f32 %v5619, %v5649
        %v5659 = vadd.f32 %v5620, %v5649
        %v5660 = vadd.f32 %v5621, %v5649
        %v5661 = vadd.f32 %v5622, %v5649
        %v5662 = vadd.f32 %v5623, %v5649
        %v5663 = vadd.f32 %v5624, %v5649
        %v5664 = vadd.f32 %v5625, %v5649
        %v5665 = vadd.f32 %v5626, %v5649
        %v5666 = vadd.f32 %v5627, %v5649
        %v5667 = vadd.f32 %v5628, %v5649
        %v5668 = vadd.f32 %v5629, %v5649
        %v5669 = vadd.f32 %v5630, %v5649
        %v5670 = vadd.f32 %v5631, %v5649
        %v5671 = vadd.f32 %v5632, %v5649
        %v5672 = vadd.f32 %v5633, %v5649
        %v5673 = vadd.f32 %v5634, %v5649
        %v5674 = vadd.f32 %v5635, %v5649
        %v5675 = vadd.f32 %v5636, %v5649
        %v5676 = vadd.f32 %v5637, %v5649
        %v5677 = vadd.f32 %v5638, %v5649
        %v5678 = vadd.f32 %v5639, %v5649
        %v5679 = vadd.f32 %v5640, %v5649
        %v5680 = vadd.f32 %v5641, %v5649
        %v5681 = vadd.f32 %v5642, %v5649
        %v5682 = vadd.f32 %v5643, %v5649
        %v5683 = vmax.f32 %v5651, 0.0
        %v5684 = vmax.f32 %v5652, 0.0
        %v5685 = vmax.f32 %v5653, 0.0
        %v5686 = vmax.f32 %v5654, 0.0
        %v5687 = vmax.f32 %v5655, 0.0
        %v5688 = vmax.f32 %v5656, 0.0
        %v5689 = vmax.f32 %v5657, 0.0
        %v5690 = vmax.f32 %v5658, 0.0
        %v5691 = vmax.f32 %v5659, 0.0
        %v5692 = vmax.f32 %v5660, 0.0
        %v5693 = vmax.f32 %v5661, 0.0
        %v5694 = vmax.f32 %v5662, 0.0
        %v5695 = vmax.f32 %v5663, 0.0
        %v5696 = vmax.f32 %v5664, 0.0
        %v5697 = vmax.f32 %v5665, 0.0
        %v5698 = vmax.f32 %v5666, 0.0
        %v5699 = vmax.f32 %v5667, 0.0
        %v5700 = vmax.f32 %v5668, 0.0
        %v5701 = vmax.f32 %v5669, 0.0
        %v5702 = vmax.f32 %v5670, 0.0
        %v5703 = vmax.f32 %v5671, 0.0
        %v5704 = vmax.f32 %v5672, 0.0
        %v5705 = vmax.f32 %v5673, 0.0
        %v5706 = vmax.f32 %v5674, 0.0
        %v5707 = vmax.f32 %v5675, 0.0
        %v5708 = vmax.f32 %v5676, 0.0
        %v5709 = vmax.f32 %v5677, 0.0
        %v5710 = vmax.f32 %v5678, 0.0
        %v5711 = vmax.f32 %v5679, 0.0
        %v5712 = vmax.f32 %v5680, 0.0
        %v5713 = vmax.f32 %v5681, 0.0
        %v5714 = vmax.f32 %v5682, 0.0
        %v5715 = vpack.c.bf16 %v5684, %v5683
        %v5716 = vpack.c.bf16 %v5686, %v5685
        %v5717 = vpack.c.bf16 %v5688, %v5687
        %v5718 = vpack.c.bf16 %v5690, %v5689
        %v5719 = vpack.c.bf16 %v5692, %v5691
        %v5720 = vpack.c.bf16 %v5694, %v5693
        %v5721 = vpack.c.bf16 %v5696, %v5695
        %v5722 = vpack.c.bf16 %v5698, %v5697
        %v5723 = vpack.c.bf16 %v5700, %v5699
        %v5724 = vpack.c.bf16 %v5702, %v5701
        %v5725 = vpack.c.bf16 %v5704, %v5703
        %v5726 = vpack.c.bf16 %v5706, %v5705
        %v5727 = vpack.c.bf16 %v5708, %v5707
        %v5728 = vpack.c.bf16 %v5710, %v5709
        %v5729 = vpack.c.bf16 %v5712, %v5711
        %v5730 = vpack.c.bf16 %v5714, %v5713
        %v5731 = vld [vmem:[%s4] sm:$0xff]
        %v5732 = vld [vmem:[%s4 + $0x8] sm:$0xf]
        %v5733 = vld [vmem:[%s4 + $0xc] sm:$0xff]
        %v5734 = vld [vmem:[%s4 + $0x14] sm:$0xf]
        %v5735 = vld [vmem:[%s4 + $0x18] sm:$0xff]
        %v5736 = vld [vmem:[%s4 + $0x20] sm:$0xf]
        %v5737 = vld [vmem:[%s4 + $0x24] sm:$0xff]
        %v5738 = vld [vmem:[%s4 + $0x2c] sm:$0xf]
        %v5739 = vld [vmem:[%s5] sm:$0x7]
        %v5741 = vlaneseq
        %v5742 = vshrl.u32 %v5741, 7
        %v5743 = vsub.s32 0, %v5742
        %v5744 = vrot.slane %v5739, %v5743
        %v5745 = vlaneseq
        %v5746 = vshrl.u32 %v5745, 7
        %v5747 = vsub.s32 1, %v5746
        %v5748 = vrot.slane %v5739, %v5747
        %v5749 = vlaneseq
        %v5750 = vshrl.u32 %v5749, 7
        %v5751 = vsub.s32 2, %v5750
        %v5752 = vrot.slane %v5739, %v5751
        %v5764 = vunpack.c.l.b16 %v5731
        %v5765 = vunpack.c.h.b16 %v5731
        %v5766 = vunpack.c.l.b16 %v5732
        %v5767 = vunpack.c.l.b16 %v5733
        %v5768 = vunpack.c.h.b16 %v5733
        %v5769 = vunpack.c.l.b16 %v5734
        %v5770 = vunpack.c.l.b16 %v5735
        %v5771 = vunpack.c.h.b16 %v5735
        %v5772 = vunpack.c.l.b16 %v5736
        %v5773 = vunpack.c.l.b16 %v5737
        %v5774 = vunpack.c.h.b16 %v5737
        %v5775 = vunpack.c.l.b16 %v5738
        %v5776 = vpack.c.b16 %v5767, %v5764
        %v5777 = vpack.c.b16 %v5768, %v5765
        %v5778 = vpack.c.b16 %v5769, %v5766
        %v5779 = vpack.c.b16 %v5773, %v5770
        %v5780 = vpack.c.b16 %v5774, %v5771
        %v5781 = vpack.c.b16 %v5775, %v5772
        %vm5788 = vcmask 261120
        %v5790 = vsel %vm5788, %v5715, 0
        %v5793 = vsel %vm5788, %v5716, 0
        %v5796 = vsel %vm5788, %v5717, 0
        %v5799 = vsel %vm5788, %v5718, 0
        %v5802 = vsel %vm5788, %v5719, 0
        %v5805 = vsel %vm5788, %v5720, 0
        %v5808 = vsel %vm5788, %v5721, 0
        %v5811 = vsel %vm5788, %v5722, 0
        %v5814 = vsel %vm5788, %v5723, 0
        %v5817 = vsel %vm5788, %v5724, 0
        %v5820 = vsel %vm5788, %v5725, 0
        %v5823 = vsel %vm5788, %v5726, 0
        %v5826 = vsel %vm5788, %v5727, 0
        %v5829 = vsel %vm5788, %v5728, 0
        %v5832 = vsel %vm5788, %v5729, 0
        %v5835 = vsel %vm5788, %v5730, 0
        %5837 = vmatprep.subr.bf16.mxu0 %v5777
        %5838 = vmatpush1.bf16.msra.mxu0 %v5776
        %5839 = vmatprep.subr.bf16.mxu0 %v5780
        %5840 = vmatpush1.bf16.msra.mxu0 %v5779
        %5841 = vmatprep.subr.bf16.mxu0 0
        %5842 = vmatpush1.bf16.msra.mxu0 0
        %5843 = vmatprep.subr.bf16.mxu0 0
        %5844 = vmatpush1.bf16.msra.mxu0 0
        %5845 = vmatprep.subr.bf16.mxu0 0
        %5846 = vmatpush1.bf16.msra.mxu0 0
        %5847 = vmatprep.subr.bf16.mxu0 0
        %5848 = vmatpush1.bf16.msra.mxu0 0
        %5849 = vmatprep.subr.bf16.mxu0 0
        %5850 = vmatpush1.bf16.msra.mxu0 0
        %5851 = vmatprep.subr.bf16.mxu0 0
        %5852 = vmatpush1.bf16.msra.mxu0 0
        %5853 = vmatprep.subr.bf16.mxu0 0
        %5854 = vmatpush1.bf16.msra.mxu0 0
        %5855 = vmatprep.subr.bf16.mxu0 0
        %5856 = vmatpush1.bf16.msra.mxu0 0
        %5857 = vmatprep.subr.bf16.mxu0 0
        %5858 = vmatpush1.bf16.msra.mxu0 0
        %5859 = vmatprep.subr.bf16.mxu0 0
        %5860 = vmatpush1.bf16.msra.mxu0 0
        %5861 = vmatprep.subr.bf16.mxu0 0
        %5862 = vmatpush1.bf16.msra.mxu0 0
        %5863 = vmatprep.subr.bf16.mxu0 0
        %5864 = vmatpush1.bf16.msra.mxu0 0
        %5865 = vmatprep.subr.bf16.mxu0 0
        %5866 = vmatpush1.bf16.msra.mxu0 0
        %5867 = vmatprep.subr.bf16.mxu0 0
        %5868 = vmatpush1.bf16.msra.mxu0 0
        %5869 = vmatprep.mubr.bf16.mxu0 0
        %5870 = vmatmul.mubr.bf16.gmra.mrb[0].mxu0 %v5790
        %v5871 = vpop.f32.mrb[0].mxu0
        %v5872 = vadd.f32 %v5744, %v5871
        %v5873 = vpop.f32.mrb[0].mxu0
        %v5874 = vadd.f32 %v5748, %v5873
        %v5875 = vpop.f32.mrb[0].mxu0
        %v5876 = vadd.f32 %v5744, %v5875
        %v5877 = vpop.f32.mrb[0].mxu0
        %v5878 = vadd.f32 %v5748, %v5877
        %5879 = vmatprep.mubr.bf16.mxu0 0
        %5880 = vmatmul.mubr.bf16.gmra.mrb[0].mxu0 %v5793
        %v5881 = vpop.f32.mrb[0].mxu0
        %v5882 = vadd.f32 %v5744, %v5881
        %v5883 = vpop.f32.mrb[0].mxu0
        %v5884 = vadd.f32 %v5748, %v5883
        %v5885 = vpop.f32.mrb[0].mxu0
        %v5886 = vadd.f32 %v5744, %v5885
        %v5887 = vpop.f32.mrb[0].mxu0
        %v5888 = vadd.f32 %v5748, %v5887
        %5889 = vmatprep.mubr.bf16.mxu0 0
        %5890 = vmatmul.mubr.bf16.gmra.mrb[0].mxu0 %v5796
        %v5891 = vpop.f32.mrb[0].mxu0
        %v5892 = vadd.f32 %v5744, %v5891
        %v5893 = vpop.f32.mrb[0].mxu0
        %v5894 = vadd.f32 %v5748, %v5893
        %v5895 = vpop.f32.mrb[0].mxu0
        %v5896 = vadd.f32 %v5744, %v5895
        %v5897 = vpop.f32.mrb[0].mxu0
        %v5898 = vadd.f32 %v5748, %v5897
        %5899 = vmatprep.mubr.bf16.mxu0 0
        %5900 = vmatmul.mubr.bf16.gmra.mrb[0].mxu0 %v5799
        %v5901 = vpop.f32.mrb[0].mxu0
        %v5902 = vadd.f32 %v5744, %v5901
        %v5903 = vpop.f32.mrb[0].mxu0
        %v5904 = vadd.f32 %v5748, %v5903
        %v5905 = vpop.f32.mrb[0].mxu0
        %v5906 = vadd.f32 %v5744, %v5905
        %v5907 = vpop.f32.mrb[0].mxu0
        %v5908 = vadd.f32 %v5748, %v5907
        %5909 = vmatprep.mubr.bf16.mxu0 0
        %5910 = vmatmul.mubr.bf16.gmra.mrb[0].mxu0 %v5802
        %v5911 = vpop.f32.mrb[0].mxu0
        %v5912 = vadd.f32 %v5744, %v5911
        %v5913 = vpop.f32.mrb[0].mxu0
        %v5914 = vadd.f32 %v5748, %v5913
        %v5915 = vpop.f32.mrb[0].mxu0
        %v5916 = vadd.f32 %v5744, %v5915
        %v5917 = vpop.f32.mrb[0].mxu0
        %v5918 = vadd.f32 %v5748, %v5917
        %5919 = vmatprep.mubr.bf16.mxu0 0
        %5920 = vmatmul.mubr.bf16.gmra.mrb[0].mxu0 %v5805
        %v5921 = vpop.f32.mrb[0].mxu0
        %v5922 = vadd.f32 %v5744, %v5921
        %v5923 = vpop.f32.mrb[0].mxu0
        %v5924 = vadd.f32 %v5748, %v5923
        %v5925 = vpop.f32.mrb[0].mxu0
        %v5926 = vadd.f32 %v5744, %v5925
        %v5927 = vpop.f32.mrb[0].mxu0
        %v5928 = vadd.f32 %v5748, %v5927
        %5929 = vmatprep.mubr.bf16.mxu0 0
        %5930 = vmatmul.mubr.bf16.gmra.mrb[0].mxu0 %v5808
        %v5931 = vpop.f32.mrb[0].mxu0
        %v5932 = vadd.f32 %v5744, %v5931
        %v5933 = vpop.f32.mrb[0].mxu0
        %v5934 = vadd.f32 %v5748, %v5933
        %v5935 = vpop.f32.mrb[0].mxu0
        %v5936 = vadd.f32 %v5744, %v5935
        %v5937 = vpop.f32.mrb[0].mxu0
        %v5938 = vadd.f32 %v5748, %v5937
        %5939 = vmatprep.mubr.bf16.mxu0 0
        %5940 = vmatmul.mubr.bf16.gmra.mrb[0].mxu0 %v5811
        %v5941 = vpop.f32.mrb[0].mxu0
        %v5942 = vadd.f32 %v5744, %v5941
        %v5943 = vpop.f32.mrb[0].mxu0
        %v5944 = vadd.f32 %v5748, %v5943
        %v5945 = vpop.f32.mrb[0].mxu0
        %v5946 = vadd.f32 %v5744, %v5945
        %v5947 = vpop.f32.mrb[0].mxu0
        %v5948 = vadd.f32 %v5748, %v5947
        %5949 = vmatprep.mubr.bf16.mxu0 0
        %5950 = vmatmul.mubr.bf16.gmra.mrb[0].mxu0 %v5814
        %v5951 = vpop.f32.mrb[0].mxu0
        %v5952 = vadd.f32 %v5744, %v5951
        %v5953 = vpop.f32.mrb[0].mxu0
        %v5954 = vadd.f32 %v5748, %v5953
        %v5955 = vpop.f32.mrb[0].mxu0
        %v5956 = vadd.f32 %v5744, %v5955
        %v5957 = vpop.f32.mrb[0].mxu0
        %v5958 = vadd.f32 %v5748, %v5957
        %5959 = vmatprep.mubr.bf16.mxu0 0
        %5960 = vmatmul.mubr.bf16.gmra.mrb[0].mxu0 %v5817
        %v5961 = vpop.f32.mrb[0].mxu0
        %v5962 = vadd.f32 %v5744, %v5961
        %v5963 = vpop.f32.mrb[0].mxu0
        %v5964 = vadd.f32 %v5748, %v5963
        %v5965 = vpop.f32.mrb[0].mxu0
        %v5966 = vadd.f32 %v5744, %v5965
        %v5967 = vpop.f32.mrb[0].mxu0
        %v5968 = vadd.f32 %v5748, %v5967
        %5969 = vmatprep.mubr.bf16.mxu0 0
        %5970 = vmatmul.mubr.bf16.gmra.mrb[0].mxu0 %v5820
        %v5971 = vpop.f32.mrb[0].mxu0
        %v5972 = vadd.f32 %v5744, %v5971
        %v5973 = vpop.f32.mrb[0].mxu0
        %v5974 = vadd.f32 %v5748, %v5973
        %v5975 = vpop.f32.mrb[0].mxu0
        %v5976 = vadd.f32 %v5744, %v5975
        %v5977 = vpop.f32.mrb[0].mxu0
        %v5978 = vadd.f32 %v5748, %v5977
        %5979 = vmatprep.mubr.bf16.mxu0 0
        %5980 = vmatmul.mubr.bf16.gmra.mrb[0].mxu0 %v5823
        %v5981 = vpop.f32.mrb[0].mxu0
        %v5982 = vadd.f32 %v5744, %v5981
        %v5983 = vpop.f32.mrb[0].mxu0
        %v5984 = vadd.f32 %v5748, %v5983
        %v5985 = vpop.f32.mrb[0].mxu0
        %v5986 = vadd.f32 %v5744, %v5985
        %v5987 = vpop.f32.mrb[0].mxu0
        %v5988 = vadd.f32 %v5748, %v5987
        %5989 = vmatprep.mubr.bf16.mxu0 0
        %5990 = vmatmul.mubr.bf16.gmra.mrb[0].mxu0 %v5826
        %v5991 = vpop.f32.mrb[0].mxu0
        %v5992 = vadd.f32 %v5744, %v5991
        %v5993 = vpop.f32.mrb[0].mxu0
        %v5994 = vadd.f32 %v5748, %v5993
        %v5995 = vpop.f32.mrb[0].mxu0
        %v5996 = vadd.f32 %v5744, %v5995
        %v5997 = vpop.f32.mrb[0].mxu0
        %v5998 = vadd.f32 %v5748, %v5997
        %5999 = vmatprep.mubr.bf16.mxu0 0
        %6000 = vmatmul.mubr.bf16.gmra.mrb[0].mxu0 %v5829
        %v6001 = vpop.f32.mrb[0].mxu0
        %v6002 = vadd.f32 %v5744, %v6001
        %v6003 = vpop.f32.mrb[0].mxu0
        %v6004 = vadd.f32 %v5748, %v6003
        %v6005 = vpop.f32.mrb[0].mxu0
        %v6006 = vadd.f32 %v5744, %v6005
        %v6007 = vpop.f32.mrb[0].mxu0
        %v6008 = vadd.f32 %v5748, %v6007
        %6009 = vmatprep.mubr.bf16.mxu0 0
        %6010 = vmatmul.mubr.bf16.gmra.mrb[0].mxu0 %v5832
        %v6011 = vpop.f32.mrb[0].mxu0
        %v6012 = vadd.f32 %v5744, %v6011
        %v6013 = vpop.f32.mrb[0].mxu0
        %v6014 = vadd.f32 %v5748, %v6013
        %v6015 = vpop.f32.mrb[0].mxu0
        %v6016 = vadd.f32 %v5744, %v6015
        %v6017 = vpop.f32.mrb[0].mxu0
        %v6018 = vadd.f32 %v5748, %v6017
        %6019 = vmatprep.mubr.bf16.mxu0 0
        %6020 = vmatmul.mubr.bf16.gmra.mrb[0].mxu0 %v5835
        %v6021 = vpop.f32.mrb[0].mxu0
        %v6022 = vadd.f32 %v5744, %v6021
        %v6023 = vpop.f32.mrb[0].mxu0
        %v6024 = vadd.f32 %v5748, %v6023
        %v6025 = vpop.f32.mrb[0].mxu0
        %v6026 = vadd.f32 %v5744, %v6025
        %v6027 = vpop.f32.mrb[0].mxu0
        %v6028 = vadd.f32 %v5748, %v6027
        %6029 = vdwg.mxu0
        %6030 = vmatprep.subr.bf16.mxu0 0
        %6031 = vmatpush1.bf16.msra.mxu0 %v5778
        %6032 = vmatprep.subr.bf16.mxu0 0
        %6033 = vmatpush1.bf16.msra.mxu0 %v5781
        %6034 = vmatprep.subr.bf16.mxu0 0
        %6035 = vmatpush1.bf16.msra.mxu0 0
        %6036 = vmatprep.subr.bf16.mxu0 0
        %6037 = vmatpush1.bf16.msra.mxu0 0
        %6038 = vmatprep.subr.bf16.mxu0 0
        %6039 = vmatpush1.bf16.msra.mxu0 0
        %6040 = vmatprep.subr.bf16.mxu0 0
        %6041 = vmatpush1.bf16.msra.mxu0 0
        %6042 = vmatprep.subr.bf16.mxu0 0
        %6043 = vmatpush1.bf16.msra.mxu0 0
        %6044 = vmatprep.subr.bf16.mxu0 0
        %6045 = vmatpush1.bf16.msra.mxu0 0
        %6046 = vmatprep.subr.bf16.mxu0 0
        %6047 = vmatpush1.bf16.msra.mxu0 0
        %6048 = vmatprep.subr.bf16.mxu0 0
        %6049 = vmatpush1.bf16.msra.mxu0 0
        %6050 = vmatprep.subr.bf16.mxu0 0
        %6051 = vmatpush1.bf16.msra.mxu0 0
        %6052 = vmatprep.subr.bf16.mxu0 0
        %6053 = vmatpush1.bf16.msra.mxu0 0
        %6054 = vmatprep.subr.bf16.mxu0 0
        %6055 = vmatpush1.bf16.msra.mxu0 0
        %6056 = vmatprep.subr.bf16.mxu0 0
        %6057 = vmatpush1.bf16.msra.mxu0 0
        %6058 = vmatprep.subr.bf16.mxu0 0
        %6059 = vmatpush1.bf16.msra.mxu0 0
        %6060 = vmatprep.subr.bf16.mxu0 0
        %6061 = vmatpush1.bf16.msra.mxu0 0
        %6062 = vmatprep.mubr.bf16.mxu0 0
        %6063 = vmatmul.mubr.bf16.gmra.mrb[0].mxu0 %v5790
        %v6064 = vpop.f32.mrb[0].mxu0
        %v6065 = vadd.f32 %v5752, %v6064
        %v6066 = vpop.f32.mrb[0].mxu0
        %v6067 = vpop.f32.mrb[0].mxu0
        %v6068 = vadd.f32 %v5752, %v6067
        %v6069 = vpop.f32.mrb[0].mxu0
        %6070 = vmatprep.mubr.bf16.mxu0 0
        %6071 = vmatmul.mubr.bf16.gmra.mrb[0].mxu0 %v5793
        %v6072 = vpop.f32.mrb[0].mxu0
        %v6073 = vadd.f32 %v5752, %v6072
        %v6074 = vpop.f32.mrb[0].mxu0
        %v6075 = vpop.f32.mrb[0].mxu0
        %v6076 = vadd.f32 %v5752, %v6075
        %v6077 = vpop.f32.mrb[0].mxu0
        %6078 = vmatprep.mubr.bf16.mxu0 0
        %6079 = vmatmul.mubr.bf16.gmra.mrb[0].mxu0 %v5796
        %v6080 = vpop.f32.mrb[0].mxu0
        %v6081 = vadd.f32 %v5752, %v6080
        %v6082 = vpop.f32.mrb[0].mxu0
        %v6083 = vpop.f32.mrb[0].mxu0
        %v6084 = vadd.f32 %v5752, %v6083
        %v6085 = vpop.f32.mrb[0].mxu0
        %6086 = vmatprep.mubr.bf16.mxu0 0
        %6087 = vmatmul.mubr.bf16.gmra.mrb[0].mxu0 %v5799
        %v6088 = vpop.f32.mrb[0].mxu0
        %v6089 = vadd.f32 %v5752, %v6088
        %v6090 = vpop.f32.mrb[0].mxu0
        %v6091 = vpop.f32.mrb[0].mxu0
        %v6092 = vadd.f32 %v5752, %v6091
        %v6093 = vpop.f32.mrb[0].mxu0
        %6094 = vmatprep.mubr.bf16.mxu0 0
        %6095 = vmatmul.mubr.bf16.gmra.mrb[0].mxu0 %v5802
        %v6096 = vpop.f32.mrb[0].mxu0
        %v6097 = vadd.f32 %v5752, %v6096
        %v6098 = vpop.f32.mrb[0].mxu0
        %v6099 = vpop.f32.mrb[0].mxu0
        %v6100 = vadd.f32 %v5752, %v6099
        %v6101 = vpop.f32.mrb[0].mxu0
        %6102 = vmatprep.mubr.bf16.mxu0 0
        %6103 = vmatmul.mubr.bf16.gmra.mrb[0].mxu0 %v5805
        %v6104 = vpop.f32.mrb[0].mxu0
        %v6105 = vadd.f32 %v5752, %v6104
        %v6106 = vpop.f32.mrb[0].mxu0
        %v6107 = vpop.f32.mrb[0].mxu0
        %v6108 = vadd.f32 %v5752, %v6107
        %v6109 = vpop.f32.mrb[0].mxu0
        %6110 = vmatprep.mubr.bf16.mxu0 0
        %6111 = vmatmul.mubr.bf16.gmra.mrb[0].mxu0 %v5808
        %v6112 = vpop.f32.mrb[0].mxu0
        %v6113 = vadd.f32 %v5752, %v6112
        %v6114 = vpop.f32.mrb[0].mxu0
        %v6115 = vpop.f32.mrb[0].mxu0
        %v6116 = vadd.f32 %v5752, %v6115
        %v6117 = vpop.f32.mrb[0].mxu0
        %6118 = vmatprep.mubr.bf16.mxu0 0
        %6119 = vmatmul.mubr.bf16.gmra.mrb[0].mxu0 %v5811
        %v6120 = vpop.f32.mrb[0].mxu0
        %v6121 = vadd.f32 %v5752, %v6120
        %v6122 = vpop.f32.mrb[0].mxu0
        %v6123 = vpop.f32.mrb[0].mxu0
        %v6124 = vadd.f32 %v5752, %v6123
        %v6125 = vpop.f32.mrb[0].mxu0
        %6126 = vmatprep.mubr.bf16.mxu0 0
        %6127 = vmatmul.mubr.bf16.gmra.mrb[0].mxu0 %v5814
        %v6128 = vpop.f32.mrb[0].mxu0
        %v6129 = vadd.f32 %v5752, %v6128
        %v6130 = vpop.f32.mrb[0].mxu0
        %v6131 = vpop.f32.mrb[0].mxu0
        %v6132 = vadd.f32 %v5752, %v6131
        %v6133 = vpop.f32.mrb[0].mxu0
        %6134 = vmatprep.mubr.bf16.mxu0 0
        %6135 = vmatmul.mubr.bf16.gmra.mrb[0].mxu0 %v5817
        %v6136 = vpop.f32.mrb[0].mxu0
        %v6137 = vadd.f32 %v5752, %v6136
        %v6138 = vpop.f32.mrb[0].mxu0
        %v6139 = vpop.f32.mrb[0].mxu0
        %v6140 = vadd.f32 %v5752, %v6139
        %v6141 = vpop.f32.mrb[0].mxu0
        %6142 = vmatprep.mubr.bf16.mxu0 0
        %6143 = vmatmul.mubr.bf16.gmra.mrb[0].mxu0 %v5820
        %v6144 = vpop.f32.mrb[0].mxu0
        %v6145 = vadd.f32 %v5752, %v6144
        %v6146 = vpop.f32.mrb[0].mxu0
        %v6147 = vpop.f32.mrb[0].mxu0
        %v6148 = vadd.f32 %v5752, %v6147
        %v6149 = vpop.f32.mrb[0].mxu0
        %6150 = vmatprep.mubr.bf16.mxu0 0
        %6151 = vmatmul.mubr.bf16.gmra.mrb[0].mxu0 %v5823
        %v6152 = vpop.f32.mrb[0].mxu0
        %v6153 = vadd.f32 %v5752, %v6152
        %v6154 = vpop.f32.mrb[0].mxu0
        %v6155 = vpop.f32.mrb[0].mxu0
        %v6156 = vadd.f32 %v5752, %v6155
        %v6157 = vpop.f32.mrb[0].mxu0
        %6158 = vmatprep.mubr.bf16.mxu0 0
        %6159 = vmatmul.mubr.bf16.gmra.mrb[0].mxu0 %v5826
        %v6160 = vpop.f32.mrb[0].mxu0
        %v6161 = vadd.f32 %v5752, %v6160
        %v6162 = vpop.f32.mrb[0].mxu0
        %v6163 = vpop.f32.mrb[0].mxu0
        %v6164 = vadd.f32 %v5752, %v6163
        %v6165 = vpop.f32.mrb[0].mxu0
        %6166 = vmatprep.mubr.bf16.mxu0 0
        %6167 = vmatmul.mubr.bf16.gmra.mrb[0].mxu0 %v5829
        %v6168 = vpop.f32.mrb[0].mxu0
        %v6169 = vadd.f32 %v5752, %v6168
        %v6170 = vpop.f32.mrb[0].mxu0
        %v6171 = vpop.f32.mrb[0].mxu0
        %v6172 = vadd.f32 %v5752, %v6171
        %v6173 = vpop.f32.mrb[0].mxu0
        %6174 = vmatprep.mubr.bf16.mxu0 0
        %6175 = vmatmul.mubr.bf16.gmra.mrb[0].mxu0 %v5832
        %v6176 = vpop.f32.mrb[0].mxu0
        %v6177 = vadd.f32 %v5752, %v6176
        %v6178 = vpop.f32.mrb[0].mxu0
        %v6179 = vpop.f32.mrb[0].mxu0
        %v6180 = vadd.f32 %v5752, %v6179
        %v6181 = vpop.f32.mrb[0].mxu0
        %6182 = vmatprep.mubr.bf16.mxu0 0
        %6183 = vmatmul.mubr.bf16.gmra.mrb[0].mxu0 %v5835
        %v6184 = vpop.f32.mrb[0].mxu0
        %v6185 = vadd.f32 %v5752, %v6184
        %v6186 = vpop.f32.mrb[0].mxu0
        %v6187 = vpop.f32.mrb[0].mxu0
        %v6188 = vadd.f32 %v5752, %v6187
        %v6189 = vpop.f32.mrb[0].mxu0
        %6190 = vdwg.mxu0
        %v6191 = vpack.c.bf16 %v5876, %v5872
        %v6192 = vpack.c.bf16 %v5886, %v5882
        %v6193 = vpack.c.bf16 %v5896, %v5892
        %v6194 = vpack.c.bf16 %v5906, %v5902
        %v6195 = vpack.c.bf16 %v5916, %v5912
        %v6196 = vpack.c.bf16 %v5926, %v5922
        %v6197 = vpack.c.bf16 %v5936, %v5932
        %v6198 = vpack.c.bf16 %v5946, %v5942
        %v6199 = vpack.c.bf16 %v5956, %v5952
        %v6200 = vpack.c.bf16 %v5966, %v5962
        %v6201 = vpack.c.bf16 %v5976, %v5972
        %v6202 = vpack.c.bf16 %v5986, %v5982
        %v6203 = vpack.c.bf16 %v5996, %v5992
        %v6204 = vpack.c.bf16 %v6006, %v6002
        %v6205 = vpack.c.bf16 %v6016, %v6012
        %v6206 = vpack.c.bf16 %v6026, %v6022
        %v6207 = vpack.c.bf16 %v5878, %v5874
        %v6208 = vpack.c.bf16 %v5888, %v5884
        %v6209 = vpack.c.bf16 %v5898, %v5894
        %v6210 = vpack.c.bf16 %v5908, %v5904
        %v6211 = vpack.c.bf16 %v5918, %v5914
        %v6212 = vpack.c.bf16 %v5928, %v5924
        %v6213 = vpack.c.bf16 %v5938, %v5934
        %v6214 = vpack.c.bf16 %v5948, %v5944
        %v6215 = vpack.c.bf16 %v5958, %v5954
        %v6216 = vpack.c.bf16 %v5968, %v5964
        %v6217 = vpack.c.bf16 %v5978, %v5974
        %v6218 = vpack.c.bf16 %v5988, %v5984
        %v6219 = vpack.c.bf16 %v5998, %v5994
        %v6220 = vpack.c.bf16 %v6008, %v6004
        %v6221 = vpack.c.bf16 %v6018, %v6014
        %v6222 = vpack.c.bf16 %v6028, %v6024
        %6223 = vmatprep.subr.bf16.mxu0 0
        %6224 = vmatpush1.bf16.xpose.msra.mxu0 %v6207
        %6225 = vmatprep.subr.bf16.mxu0 0
        %6226 = vmatpush1.bf16.xpose.msra.mxu0 %v6208
        %6227 = vmatprep.subr.bf16.mxu0 0
        %6228 = vmatpush1.bf16.xpose.msra.mxu0 %v6209
        %6229 = vmatprep.subr.bf16.mxu0 0
        %6230 = vmatpush1.bf16.xpose.msra.mxu0 %v6210
        %6231 = vmatprep.subr.bf16.mxu0 0
        %6232 = vmatpush1.bf16.xpose.msra.mxu0 %v6211
        %6233 = vmatprep.subr.bf16.mxu0 0
        %6234 = vmatpush1.bf16.xpose.msra.mxu0 %v6212
        %6235 = vmatprep.subr.bf16.mxu0 0
        %6236 = vmatpush1.bf16.xpose.msra.mxu0 %v6213
        %6237 = vmatprep.subr.bf16.mxu0 0
        %6238 = vmatpush1.bf16.xpose.msra.mxu0 %v6214
        %6239 = vmatprep.subr.bf16.mxu0 0
        %6240 = vmatpush1.bf16.xpose.msra.mxu0 %v6215
        %6241 = vmatprep.subr.bf16.mxu0 0
        %6242 = vmatpush1.bf16.xpose.msra.mxu0 %v6216
        %6243 = vmatprep.subr.bf16.mxu0 0
        %6244 = vmatpush1.bf16.xpose.msra.mxu0 %v6217
        %6245 = vmatprep.subr.bf16.mxu0 0
        %6246 = vmatpush1.bf16.xpose.msra.mxu0 %v6218
        %6247 = vmatprep.subr.bf16.mxu0 0
        %6248 = vmatpush1.bf16.xpose.msra.mxu0 %v6219
        %6249 = vmatprep.subr.bf16.mxu0 0
        %6250 = vmatpush1.bf16.xpose.msra.mxu0 %v6220
        %6251 = vmatprep.subr.bf16.mxu0 0
        %6252 = vmatpush1.bf16.xpose.msra.mxu0 %v6221
        %6253 = vmatprep.subr.bf16.mxu0 0
        %6254 = vmatpush1.bf16.xpose.msra.mxu0 %v6222
        %6255 = vmatprep.mubr.bf16.mxu0 0
        %6256 = vmatmul.mubr.bf16.gmra.mrb[0].mxu0 %v6191
        %v6257 = vpop.f32.mrb[0].mxu0
        %v6258 = vadd.f32 0.0, %v6257
        %v6259 = vpop.f32.mrb[0].mxu0
        %v6260 = vadd.f32 0.0, %v6259
        %v6261 = vpop.f32.mrb[0].mxu0
        %v6262 = vadd.f32 0.0, %v6261
        %v6263 = vpop.f32.mrb[0].mxu0
        %v6264 = vadd.f32 0.0, %v6263
        %6265 = vmatprep.mubr.bf16.mxu0 0
        %6266 = vmatmul.mubr.bf16.gmra.mrb[0].mxu0 %v6192
        %v6267 = vpop.f32.mrb[0].mxu0
        %v6268 = vadd.f32 0.0, %v6267
        %v6269 = vpop.f32.mrb[0].mxu0
        %v6270 = vadd.f32 0.0, %v6269
        %v6271 = vpop.f32.mrb[0].mxu0
        %v6272 = vadd.f32 0.0, %v6271
        %v6273 = vpop.f32.mrb[0].mxu0
        %v6274 = vadd.f32 0.0, %v6273
        %6275 = vmatprep.mubr.bf16.mxu0 0
        %6276 = vmatmul.mubr.bf16.gmra.mrb[0].mxu0 %v6193
        %v6277 = vpop.f32.mrb[0].mxu0
        %v6278 = vadd.f32 0.0, %v6277
        %v6279 = vpop.f32.mrb[0].mxu0
        %v6280 = vadd.f32 0.0, %v6279
        %v6281 = vpop.f32.mrb[0].mxu0
        %v6282 = vadd.f32 0.0, %v6281
        %v6283 = vpop.f32.mrb[0].mxu0
        %v6284 = vadd.f32 0.0, %v6283
        %6285 = vmatprep.mubr.bf16.mxu0 0
        %6286 = vmatmul.mubr.bf16.gmra.mrb[0].mxu0 %v6194
        %v6287 = vpop.f32.mrb[0].mxu0
        %v6288 = vadd.f32 0.0, %v6287
        %v6289 = vpop.f32.mrb[0].mxu0
        %v6290 = vadd.f32 0.0, %v6289
        %v6291 = vpop.f32.mrb[0].mxu0
        %v6292 = vadd.f32 0.0, %v6291
        %v6293 = vpop.f32.mrb[0].mxu0
        %v6294 = vadd.f32 0.0, %v6293
        %6295 = vmatprep.mubr.bf16.mxu0 0
        %6296 = vmatmul.mubr.bf16.gmra.mrb[0].mxu0 %v6195
        %v6297 = vpop.f32.mrb[0].mxu0
        %v6298 = vadd.f32 0.0, %v6297
        %v6299 = vpop.f32.mrb[0].mxu0
        %v6300 = vadd.f32 0.0, %v6299
        %v6301 = vpop.f32.mrb[0].mxu0
        %v6302 = vadd.f32 0.0, %v6301
        %v6303 = vpop.f32.mrb[0].mxu0
        %v6304 = vadd.f32 0.0, %v6303
        %6305 = vmatprep.mubr.bf16.mxu0 0
        %6306 = vmatmul.mubr.bf16.gmra.mrb[0].mxu0 %v6196
        %v6307 = vpop.f32.mrb[0].mxu0
        %v6308 = vadd.f32 0.0, %v6307
        %v6309 = vpop.f32.mrb[0].mxu0
        %v6310 = vadd.f32 0.0, %v6309
        %v6311 = vpop.f32.mrb[0].mxu0
        %v6312 = vadd.f32 0.0, %v6311
        %v6313 = vpop.f32.mrb[0].mxu0
        %v6314 = vadd.f32 0.0, %v6313
        %6315 = vmatprep.mubr.bf16.mxu0 0
        %6316 = vmatmul.mubr.bf16.gmra.mrb[0].mxu0 %v6197
        %v6317 = vpop.f32.mrb[0].mxu0
        %v6318 = vadd.f32 0.0, %v6317
        %v6319 = vpop.f32.mrb[0].mxu0
        %v6320 = vadd.f32 0.0, %v6319
        %v6321 = vpop.f32.mrb[0].mxu0
        %v6322 = vadd.f32 0.0, %v6321
        %v6323 = vpop.f32.mrb[0].mxu0
        %v6324 = vadd.f32 0.0, %v6323
        %6325 = vmatprep.mubr.bf16.mxu0 0
        %6326 = vmatmul.mubr.bf16.gmra.mrb[0].mxu0 %v6198
        %v6327 = vpop.f32.mrb[0].mxu0
        %v6328 = vadd.f32 0.0, %v6327
        %v6329 = vpop.f32.mrb[0].mxu0
        %v6330 = vadd.f32 0.0, %v6329
        %v6331 = vpop.f32.mrb[0].mxu0
        %v6332 = vadd.f32 0.0, %v6331
        %v6333 = vpop.f32.mrb[0].mxu0
        %v6334 = vadd.f32 0.0, %v6333
        %6335 = vmatprep.mubr.bf16.mxu0 0
        %6336 = vmatmul.mubr.bf16.gmra.mrb[0].mxu0 %v6199
        %v6337 = vpop.f32.mrb[0].mxu0
        %v6338 = vadd.f32 0.0, %v6337
        %v6339 = vpop.f32.mrb[0].mxu0
        %v6340 = vadd.f32 0.0, %v6339
        %v6341 = vpop.f32.mrb[0].mxu0
        %v6342 = vadd.f32 0.0, %v6341
        %v6343 = vpop.f32.mrb[0].mxu0
        %v6344 = vadd.f32 0.0, %v6343
        %6345 = vmatprep.mubr.bf16.mxu0 0
        %6346 = vmatmul.mubr.bf16.gmra.mrb[0].mxu0 %v6200
        %v6347 = vpop.f32.mrb[0].mxu0
        %v6348 = vadd.f32 0.0, %v6347
        %v6349 = vpop.f32.mrb[0].mxu0
        %v6350 = vadd.f32 0.0, %v6349
        %v6351 = vpop.f32.mrb[0].mxu0
        %v6352 = vadd.f32 0.0, %v6351
        %v6353 = vpop.f32.mrb[0].mxu0
        %v6354 = vadd.f32 0.0, %v6353
        %6355 = vmatprep.mubr.bf16.mxu0 0
        %6356 = vmatmul.mubr.bf16.gmra.mrb[0].mxu0 %v6201
        %v6357 = vpop.f32.mrb[0].mxu0
        %v6358 = vadd.f32 0.0, %v6357
        %v6359 = vpop.f32.mrb[0].mxu0
        %v6360 = vadd.f32 0.0, %v6359
        %v6361 = vpop.f32.mrb[0].mxu0
        %v6362 = vadd.f32 0.0, %v6361
        %v6363 = vpop.f32.mrb[0].mxu0
        %v6364 = vadd.f32 0.0, %v6363
        %6365 = vmatprep.mubr.bf16.mxu0 0
        %6366 = vmatmul.mubr.bf16.gmra.mrb[0].mxu0 %v6202
        %v6367 = vpop.f32.mrb[0].mxu0
        %v6368 = vadd.f32 0.0, %v6367
        %v6369 = vpop.f32.mrb[0].mxu0
        %v6370 = vadd.f32 0.0, %v6369
        %v6371 = vpop.f32.mrb[0].mxu0
        %v6372 = vadd.f32 0.0, %v6371
        %v6373 = vpop.f32.mrb[0].mxu0
        %v6374 = vadd.f32 0.0, %v6373
        %6375 = vmatprep.mubr.bf16.mxu0 0
        %6376 = vmatmul.mubr.bf16.gmra.mrb[0].mxu0 %v6203
        %v6377 = vpop.f32.mrb[0].mxu0
        %v6378 = vadd.f32 0.0, %v6377
        %v6379 = vpop.f32.mrb[0].mxu0
        %v6380 = vadd.f32 0.0, %v6379
        %v6381 = vpop.f32.mrb[0].mxu0
        %v6382 = vadd.f32 0.0, %v6381
        %v6383 = vpop.f32.mrb[0].mxu0
        %v6384 = vadd.f32 0.0, %v6383
        %6385 = vmatprep.mubr.bf16.mxu0 0
        %6386 = vmatmul.mubr.bf16.gmra.mrb[0].mxu0 %v6204
        %v6387 = vpop.f32.mrb[0].mxu0
        %v6388 = vadd.f32 0.0, %v6387
        %v6389 = vpop.f32.mrb[0].mxu0
        %v6390 = vadd.f32 0.0, %v6389
        %v6391 = vpop.f32.mrb[0].mxu0
        %v6392 = vadd.f32 0.0, %v6391
        %v6393 = vpop.f32.mrb[0].mxu0
        %v6394 = vadd.f32 0.0, %v6393
        %6395 = vmatprep.mubr.bf16.mxu0 0
        %6396 = vmatmul.mubr.bf16.gmra.mrb[0].mxu0 %v6205
        %v6397 = vpop.f32.mrb[0].mxu0
        %v6398 = vadd.f32 0.0, %v6397
        %v6399 = vpop.f32.mrb[0].mxu0
        %v6400 = vadd.f32 0.0, %v6399
        %v6401 = vpop.f32.mrb[0].mxu0
        %v6402 = vadd.f32 0.0, %v6401
        %v6403 = vpop.f32.mrb[0].mxu0
        %v6404 = vadd.f32 0.0, %v6403
        %6405 = vmatprep.mubr.bf16.mxu0 0
        %6406 = vmatmul.mubr.bf16.gmra.mrb[0].mxu0 %v6206
        %v6407 = vpop.f32.mrb[0].mxu0
        %v6408 = vadd.f32 0.0, %v6407
        %v6409 = vpop.f32.mrb[0].mxu0
        %v6410 = vadd.f32 0.0, %v6409
        %v6411 = vpop.f32.mrb[0].mxu0
        %v6412 = vadd.f32 0.0, %v6411
        %v6413 = vpop.f32.mrb[0].mxu0
        %v6414 = vadd.f32 0.0, %v6413
        %6415 = vdwg.mxu0
        %v6416 = vmax.f32 %v6258, %v6260
        %6417 = vmax.xlane.f32.xlu0 %v6416
        %v6418 = vpop.xlane.xlu0 %6417
        %v6419 = vmax.f32 %v6262, %v6264
        %6420 = vmax.xlane.f32.xlu0 %v6419
        %v6421 = vpop.xlane.xlu0 %6420
        %v6422 = vmax.f32 %v6268, %v6270
        %6423 = vmax.xlane.f32.xlu0 %v6422
        %v6424 = vpop.xlane.xlu0 %6423
        %v6425 = vmax.f32 %v6272, %v6274
        %6426 = vmax.xlane.f32.xlu0 %v6425
        %v6427 = vpop.xlane.xlu0 %6426
        %v6428 = vmax.f32 %v6278, %v6280
        %6429 = vmax.xlane.f32.xlu0 %v6428
        %v6430 = vpop.xlane.xlu0 %6429
        %v6431 = vmax.f32 %v6282, %v6284
        %6432 = vmax.xlane.f32.xlu0 %v6431
        %v6433 = vpop.xlane.xlu0 %6432
        %v6434 = vmax.f32 %v6288, %v6290
        %6435 = vmax.xlane.f32.xlu0 %v6434
        %v6436 = vpop.xlane.xlu0 %6435
        %v6437 = vmax.f32 %v6292, %v6294
        %6438 = vmax.xlane.f32.xlu0 %v6437
        %v6439 = vpop.xlane.xlu0 %6438
        %v6440 = vmax.f32 %v6298, %v6300
        %6441 = vmax.xlane.f32.xlu0 %v6440
        %v6442 = vpop.xlane.xlu0 %6441
        %v6443 = vmax.f32 %v6302, %v6304
        %6444 = vmax.xlane.f32.xlu0 %v6443
        %v6445 = vpop.xlane.xlu0 %6444
        %v6446 = vmax.f32 %v6308, %v6310
        %6447 = vmax.xlane.f32.xlu0 %v6446
        %v6448 = vpop.xlane.xlu0 %6447
        %v6449 = vmax.f32 %v6312, %v6314
        %6450 = vmax.xlane.f32.xlu0 %v6449
        %v6451 = vpop.xlane.xlu0 %6450
        %v6452 = vmax.f32 %v6318, %v6320
        %6453 = vmax.xlane.f32.xlu0 %v6452
        %v6454 = vpop.xlane.xlu0 %6453
        %v6455 = vmax.f32 %v6322, %v6324
        %6456 = vmax.xlane.f32.xlu0 %v6455
        %v6457 = vpop.xlane.xlu0 %6456
        %v6458 = vmax.f32 %v6328, %v6330
        %6459 = vmax.xlane.f32.xlu0 %v6458
        %v6460 = vpop.xlane.xlu0 %6459
        %v6461 = vmax.f32 %v6332, %v6334
        %6462 = vmax.xlane.f32.xlu0 %v6461
        %v6463 = vpop.xlane.xlu0 %6462
        %v6464 = vmax.f32 %v6338, %v6340
        %6465 = vmax.xlane.f32.xlu0 %v6464
        %v6466 = vpop.xlane.xlu0 %6465
        %v6467 = vmax.f32 %v6342, %v6344
        %6468 = vmax.xlane.f32.xlu0 %v6467
        %v6469 = vpop.xlane.xlu0 %6468
        %v6470 = vmax.f32 %v6348, %v6350
        %6471 = vmax.xlane.f32.xlu0 %v6470
        %v6472 = vpop.xlane.xlu0 %6471
        %v6473 = vmax.f32 %v6352, %v6354
        %6474 = vmax.xlane.f32.xlu0 %v6473
        %v6475 = vpop.xlane.xlu0 %6474
        %v6476 = vmax.f32 %v6358, %v6360
        %6477 = vmax.xlane.f32.xlu0 %v6476
        %v6478 = vpop.xlane.xlu0 %6477
        %v6479 = vmax.f32 %v6362, %v6364
        %6480 = vmax.xlane.f32.xlu0 %v6479
        %v6481 = vpop.xlane.xlu0 %6480
        %v6482 = vmax.f32 %v6368, %v6370
        %6483 = vmax.xlane.f32.xlu0 %v6482
        %v6484 = vpop.xlane.xlu0 %6483
        %v6485 = vmax.f32 %v6372, %v6374
        %6486 = vmax.xlane.f32.xlu0 %v6485
        %v6487 = vpop.xlane.xlu0 %6486
        %v6488 = vmax.f32 %v6378, %v6380
        %6489 = vmax.xlane.f32.xlu0 %v6488
        %v6490 = vpop.xlane.xlu0 %6489
        %v6491 = vmax.f32 %v6382, %v6384
        %6492 = vmax.xlane.f32.xlu0 %v6491
        %v6493 = vpop.xlane.xlu0 %6492
        %v6494 = vmax.f32 %v6388, %v6390
        %6495 = vmax.xlane.f32.xlu0 %v6494
        %v6496 = vpop.xlane.xlu0 %6495
        %v6497 = vmax.f32 %v6392, %v6394
        %6498 = vmax.xlane.f32.xlu0 %v6497
        %v6499 = vpop.xlane.xlu0 %6498
        %v6500 = vmax.f32 %v6398, %v6400
        %6501 = vmax.xlane.f32.xlu0 %v6500
        %v6502 = vpop.xlane.xlu0 %6501
        %v6503 = vmax.f32 %v6402, %v6404
        %6504 = vmax.xlane.f32.xlu0 %v6503
        %v6505 = vpop.xlane.xlu0 %6504
        %v6506 = vmax.f32 %v6408, %v6410
        %6507 = vmax.xlane.f32.xlu0 %v6506
        %v6508 = vpop.xlane.xlu0 %6507
        %v6509 = vmax.f32 %v6412, %v6414
        %6510 = vmax.xlane.f32.xlu0 %v6509
        %v6511 = vpop.xlane.xlu0 %6510
        %v6512 = vsub.f32 %v6258, %v6418
        %v6513 = vsub.f32 %v6260, %v6418
        %v6514 = vsub.f32 %v6262, %v6421
        %v6515 = vsub.f32 %v6264, %v6421
        %v6516 = vsub.f32 %v6268, %v6424
        %v6517 = vsub.f32 %v6270, %v6424
        %v6518 = vsub.f32 %v6272, %v6427
        %v6519 = vsub.f32 %v6274, %v6427
        %v6520 = vsub.f32 %v6278, %v6430
        %v6521 = vsub.f32 %v6280, %v6430
        %v6522 = vsub.f32 %v6282, %v6433
        %v6523 = vsub.f32 %v6284, %v6433
        %v6524 = vsub.f32 %v6288, %v6436
        %v6525 = vsub.f32 %v6290, %v6436
        %v6526 = vsub.f32 %v6292, %v6439
        %v6527 = vsub.f32 %v6294, %v6439
        %v6528 = vsub.f32 %v6298, %v6442
        %v6529 = vsub.f32 %v6300, %v6442
        %v6530 = vsub.f32 %v6302, %v6445
        %v6531 = vsub.f32 %v6304, %v6445
        %v6532 = vsub.f32 %v6308, %v6448
        %v6533 = vsub.f32 %v6310, %v6448
        %v6534 = vsub.f32 %v6312, %v6451
        %v6535 = vsub.f32 %v6314, %v6451
        %v6536 = vsub.f32 %v6318, %v6454
        %v6537 = vsub.f32 %v6320, %v6454
        %v6538 = vsub.f32 %v6322, %v6457
        %v6539 = vsub.f32 %v6324, %v6457
        %v6540 = vsub.f32 %v6328, %v6460
        %v6541 = vsub.f32 %v6330, %v6460
        %v6542 = vsub.f32 %v6332, %v6463
        %v6543 = vsub.f32 %v6334, %v6463
        %v6544 = vsub.f32 %v6338, %v6466
        %v6545 = vsub.f32 %v6340, %v6466
        %v6546 = vsub.f32 %v6342, %v6469
        %v6547 = vsub.f32 %v6344, %v6469
        %v6548 = vsub.f32 %v6348, %v6472
        %v6549 = vsub.f32 %v6350, %v6472
        %v6550 = vsub.f32 %v6352, %v6475
        %v6551 = vsub.f32 %v6354, %v6475
        %v6552 = vsub.f32 %v6358, %v6478
        %v6553 = vsub.f32 %v6360, %v6478
        %v6554 = vsub.f32 %v6362, %v6481
        %v6555 = vsub.f32 %v6364, %v6481
        %v6556 = vsub.f32 %v6368, %v6484
        %v6557 = vsub.f32 %v6370, %v6484
        %v6558 = vsub.f32 %v6372, %v6487
        %v6559 = vsub.f32 %v6374, %v6487
        %v6560 = vsub.f32 %v6378, %v6490
        %v6561 = vsub.f32 %v6380, %v6490
        %v6562 = vsub.f32 %v6382, %v6493
        %v6563 = vsub.f32 %v6384, %v6493
        %v6564 = vsub.f32 %v6388, %v6496
        %v6565 = vsub.f32 %v6390, %v6496
        %v6566 = vsub.f32 %v6392, %v6499
        %v6567 = vsub.f32 %v6394, %v6499
        %v6568 = vsub.f32 %v6398, %v6502
        %v6569 = vsub.f32 %v6400, %v6502
        %v6570 = vsub.f32 %v6402, %v6505
        %v6571 = vsub.f32 %v6404, %v6505
        %v6572 = vsub.f32 %v6408, %v6508
        %v6573 = vsub.f32 %v6410, %v6508
        %v6574 = vsub.f32 %v6412, %v6511
        %v6575 = vsub.f32 %v6414, %v6511
        %v6576 = vmul.f32 %v6512, 1.442695
        %v6577 = vpow.pop %v6576
        %v6578 = vmul.f32 %v6513, 1.442695
        %v6579 = vpow.pop %v6578
        %v6580 = vmul.f32 %v6514, 1.442695
        %v6581 = vpow.pop %v6580
        %v6582 = vmul.f32 %v6515, 1.442695
        %v6583 = vpow.pop %v6582
        %v6584 = vmul.f32 %v6516, 1.442695
        %v6585 = vpow.pop %v6584
        %v6586 = vmul.f32 %v6517, 1.442695
        %v6587 = vpow.pop %v6586
        %v6588 = vmul.f32 %v6518, 1.442695
        %v6589 = vpow.pop %v6588
        %v6590 = vmul.f32 %v6519, 1.442695
        %v6591 = vpow.pop %v6590
        %v6592 = vmul.f32 %v6520, 1.442695
        %v6593 = vpow.pop %v6592
        %v6594 = vmul.f32 %v6521, 1.442695
        %v6595 = vpow.pop %v6594
        %v6596 = vmul.f32 %v6522, 1.442695
        %v6597 = vpow.pop %v6596
        %v6598 = vmul.f32 %v6523, 1.442695
        %v6599 = vpow.pop %v6598
        %v6600 = vmul.f32 %v6524, 1.442695
        %v6601 = vpow.pop %v6600
        %v6602 = vmul.f32 %v6525, 1.442695
        %v6603 = vpow.pop %v6602
        %v6604 = vmul.f32 %v6526, 1.442695
        %v6605 = vpow.pop %v6604
        %v6606 = vmul.f32 %v6527, 1.442695
        %v6607 = vpow.pop %v6606
        %v6608 = vmul.f32 %v6528, 1.442695
        %v6609 = vpow.pop %v6608
        %v6610 = vmul.f32 %v6529, 1.442695
        %v6611 = vpow.pop %v6610
        %v6612 = vmul.f32 %v6530, 1.442695
        %v6613 = vpow.pop %v6612
        %v6614 = vmul.f32 %v6531, 1.442695
        %v6615 = vpow.pop %v6614
        %v6616 = vmul.f32 %v6532, 1.442695
        %v6617 = vpow.pop %v6616
        %v6618 = vmul.f32 %v6533, 1.442695
        %v6619 = vpow.pop %v6618
        %v6620 = vmul.f32 %v6534, 1.442695
        %v6621 = vpow.pop %v6620
        %v6622 = vmul.f32 %v6535, 1.442695
        %v6623 = vpow.pop %v6622
        %v6624 = vmul.f32 %v6536, 1.442695
        %v6625 = vpow.pop %v6624
        %v6626 = vmul.f32 %v6537, 1.442695
        %v6627 = vpow.pop %v6626
        %v6628 = vmul.f32 %v6538, 1.442695
        %v6629 = vpow.pop %v6628
        %v6630 = vmul.f32 %v6539, 1.442695
        %v6631 = vpow.pop %v6630
        %v6632 = vmul.f32 %v6540, 1.442695
        %v6633 = vpow.pop %v6632
        %v6634 = vmul.f32 %v6541, 1.442695
        %v6635 = vpow.pop %v6634
        %v6636 = vmul.f32 %v6542, 1.442695
        %v6637 = vpow.pop %v6636
        %v6638 = vmul.f32 %v6543, 1.442695
        %v6639 = vpow.pop %v6638
        %v6640 = vmul.f32 %v6544, 1.442695
        %v6641 = vpow.pop %v6640
        %v6642 = vmul.f32 %v6545, 1.442695
        %v6643 = vpow.pop %v6642
        %v6644 = vmul.f32 %v6546, 1.442695
        %v6645 = vpow.pop %v6644
        %v6646 = vmul.f32 %v6547, 1.442695
        %v6647 = vpow.pop %v6646
        %v6648 = vmul.f32 %v6548, 1.442695
        %v6649 = vpow.pop %v6648
        %v6650 = vmul.f32 %v6549, 1.442695
        %v6651 = vpow.pop %v6650
        %v6652 = vmul.f32 %v6550, 1.442695
        %v6653 = vpow.pop %v6652
        %v6654 = vmul.f32 %v6551, 1.442695
        %v6655 = vpow.pop %v6654
        %v6656 = vmul.f32 %v6552, 1.442695
        %v6657 = vpow.pop %v6656
        %v6658 = vmul.f32 %v6553, 1.442695
        %v6659 = vpow.pop %v6658
        %v6660 = vmul.f32 %v6554, 1.442695
        %v6661 = vpow.pop %v6660
        %v6662 = vmul.f32 %v6555, 1.442695
        %v6663 = vpow.pop %v6662
        %v6664 = vmul.f32 %v6556, 1.442695
        %v6665 = vpow.pop %v6664
        %v6666 = vmul.f32 %v6557, 1.442695
        %v6667 = vpow.pop %v6666
        %v6668 = vmul.f32 %v6558, 1.442695
        %v6669 = vpow.pop %v6668
        %v6670 = vmul.f32 %v6559, 1.442695
        %v6671 = vpow.pop %v6670
        %v6672 = vmul.f32 %v6560, 1.442695
        %v6673 = vpow.pop %v6672
        %v6674 = vmul.f32 %v6561, 1.442695
        %v6675 = vpow.pop %v6674
        %v6676 = vmul.f32 %v6562, 1.442695
        %v6677 = vpow.pop %v6676
        %v6678 = vmul.f32 %v6563, 1.442695
        %v6679 = vpow.pop %v6678
        %v6680 = vmul.f32 %v6564, 1.442695
        %v6681 = vpow.pop %v6680
        %v6682 = vmul.f32 %v6565, 1.442695
        %v6683 = vpow.pop %v6682
        %v6684 = vmul.f32 %v6566, 1.442695
        %v6685 = vpow.pop %v6684
        %v6686 = vmul.f32 %v6567, 1.442695
        %v6687 = vpow.pop %v6686
        %v6688 = vmul.f32 %v6568, 1.442695
        %v6689 = vpow.pop %v6688
        %v6690 = vmul.f32 %v6569, 1.442695
        %v6691 = vpow.pop %v6690
        %v6692 = vmul.f32 %v6570, 1.442695
        %v6693 = vpow.pop %v6692
        %v6694 = vmul.f32 %v6571, 1.442695
        %v6695 = vpow.pop %v6694
        %v6696 = vmul.f32 %v6572, 1.442695
        %v6697 = vpow.pop %v6696
        %v6698 = vmul.f32 %v6573, 1.442695
        %v6699 = vpow.pop %v6698
        %v6700 = vmul.f32 %v6574, 1.442695
        %v6701 = vpow.pop %v6700
        %v6702 = vmul.f32 %v6575, 1.442695
        %v6703 = vpow.pop %v6702
        %v6704 = vadd.f32 %v6577, %v6579
        %6705 = vadd.xlane.f32.xlu0 %v6704
        %v6706 = vpop.xlane.xlu0 %6705
        %v6707 = vadd.f32 %v6581, %v6583
        %6708 = vadd.xlane.f32.xlu0 %v6707
        %v6709 = vpop.xlane.xlu0 %6708
        %v6710 = vadd.f32 %v6585, %v6587
        %6711 = vadd.xlane.f32.xlu0 %v6710
        %v6712 = vpop.xlane.xlu0 %6711
        %v6713 = vadd.f32 %v6589, %v6591
        %6714 = vadd.xlane.f32.xlu0 %v6713
        %v6715 = vpop.xlane.xlu0 %6714
        %v6716 = vadd.f32 %v6593, %v6595
        %6717 = vadd.xlane.f32.xlu0 %v6716
        %v6718 = vpop.xlane.xlu0 %6717
        %v6719 = vadd.f32 %v6597, %v6599
        %6720 = vadd.xlane.f32.xlu0 %v6719
        %v6721 = vpop.xlane.xlu0 %6720
        %v6722 = vadd.f32 %v6601, %v6603
        %6723 = vadd.xlane.f32.xlu0 %v6722
        %v6724 = vpop.xlane.xlu0 %6723
        %v6725 = vadd.f32 %v6605, %v6607
        %6726 = vadd.xlane.f32.xlu0 %v6725
        %v6727 = vpop.xlane.xlu0 %6726
        %v6728 = vadd.f32 %v6609, %v6611
        %6729 = vadd.xlane.f32.xlu0 %v6728
        %v6730 = vpop.xlane.xlu0 %6729
        %v6731 = vadd.f32 %v6613, %v6615
        %6732 = vadd.xlane.f32.xlu0 %v6731
        %v6733 = vpop.xlane.xlu0 %6732
        %v6734 = vadd.f32 %v6617, %v6619
        %6735 = vadd.xlane.f32.xlu0 %v6734
        %v6736 = vpop.xlane.xlu0 %6735
        %v6737 = vadd.f32 %v6621, %v6623
        %6738 = vadd.xlane.f32.xlu0 %v6737
        %v6739 = vpop.xlane.xlu0 %6738
        %v6740 = vadd.f32 %v6625, %v6627
        %6741 = vadd.xlane.f32.xlu0 %v6740
        %v6742 = vpop.xlane.xlu0 %6741
        %v6743 = vadd.f32 %v6629, %v6631
        %6744 = vadd.xlane.f32.xlu0 %v6743
        %v6745 = vpop.xlane.xlu0 %6744
        %v6746 = vadd.f32 %v6633, %v6635
        %6747 = vadd.xlane.f32.xlu0 %v6746
        %v6748 = vpop.xlane.xlu0 %6747
        %v6749 = vadd.f32 %v6637, %v6639
        %6750 = vadd.xlane.f32.xlu0 %v6749
        %v6751 = vpop.xlane.xlu0 %6750
        %v6752 = vadd.f32 %v6641, %v6643
        %6753 = vadd.xlane.f32.xlu0 %v6752
        %v6754 = vpop.xlane.xlu0 %6753
        %v6755 = vadd.f32 %v6645, %v6647
        %6756 = vadd.xlane.f32.xlu0 %v6755
        %v6757 = vpop.xlane.xlu0 %6756
        %v6758 = vadd.f32 %v6649, %v6651
        %6759 = vadd.xlane.f32.xlu0 %v6758
        %v6760 = vpop.xlane.xlu0 %6759
        %v6761 = vadd.f32 %v6653, %v6655
        %6762 = vadd.xlane.f32.xlu0 %v6761
        %v6763 = vpop.xlane.xlu0 %6762
        %v6764 = vadd.f32 %v6657, %v6659
        %6765 = vadd.xlane.f32.xlu0 %v6764
        %v6766 = vpop.xlane.xlu0 %6765
        %v6767 = vadd.f32 %v6661, %v6663
        %6768 = vadd.xlane.f32.xlu0 %v6767
        %v6769 = vpop.xlane.xlu0 %6768
        %v6770 = vadd.f32 %v6665, %v6667
        %6771 = vadd.xlane.f32.xlu0 %v6770
        %v6772 = vpop.xlane.xlu0 %6771
        %v6773 = vadd.f32 %v6669, %v6671
        %6774 = vadd.xlane.f32.xlu0 %v6773
        %v6775 = vpop.xlane.xlu0 %6774
        %v6776 = vadd.f32 %v6673, %v6675
        %6777 = vadd.xlane.f32.xlu0 %v6776
        %v6778 = vpop.xlane.xlu0 %6777
        %v6779 = vadd.f32 %v6677, %v6679
        %6780 = vadd.xlane.f32.xlu0 %v6779
        %v6781 = vpop.xlane.xlu0 %6780
        %v6782 = vadd.f32 %v6681, %v6683
        %6783 = vadd.xlane.f32.xlu0 %v6782
        %v6784 = vpop.xlane.xlu0 %6783
        %v6785 = vadd.f32 %v6685, %v6687
        %6786 = vadd.xlane.f32.xlu0 %v6785
        %v6787 = vpop.xlane.xlu0 %6786
        %v6788 = vadd.f32 %v6689, %v6691
        %6789 = vadd.xlane.f32.xlu0 %v6788
        %v6790 = vpop.xlane.xlu0 %6789
        %v6791 = vadd.f32 %v6693, %v6695
        %6792 = vadd.xlane.f32.xlu0 %v6791
        %v6793 = vpop.xlane.xlu0 %6792
        %v6794 = vadd.f32 %v6697, %v6699
        %6795 = vadd.xlane.f32.xlu0 %v6794
        %v6796 = vpop.xlane.xlu0 %6795
        %v6797 = vadd.f32 %v6701, %v6703
        %6798 = vadd.xlane.f32.xlu0 %v6797
        %v6799 = vpop.xlane.xlu0 %6798
        %v6800 = vrcp.pop %v6706
        %v6801 = vrcp.pop %v6709
        %v6802 = vrcp.pop %v6712
        %v6803 = vrcp.pop %v6715
        %v6804 = vrcp.pop %v6718
        %v6805 = vrcp.pop %v6721
        %v6806 = vrcp.pop %v6724
        %v6807 = vrcp.pop %v6727
        %v6808 = vrcp.pop %v6730
        %v6809 = vrcp.pop %v6733
        %v6810 = vrcp.pop %v6736
        %v6811 = vrcp.pop %v6739
        %v6812 = vrcp.pop %v6742
        %v6813 = vrcp.pop %v6745
        %v6814 = vrcp.pop %v6748
        %v6815 = vrcp.pop %v6751
        %v6816 = vrcp.pop %v6754
        %v6817 = vrcp.pop %v6757
        %v6818 = vrcp.pop %v6760
        %v6819 = vrcp.pop %v6763
        %v6820 = vrcp.pop %v6766
        %v6821 = vrcp.pop %v6769
        %v6822 = vrcp.pop %v6772
        %v6823 = vrcp.pop %v6775
        %v6824 = vrcp.pop %v6778
        %v6825 = vrcp.pop %v6781
        %v6826 = vrcp.pop %v6784
        %v6827 = vrcp.pop %v6787
        %v6828 = vrcp.pop %v6790
        %v6829 = vrcp.pop %v6793
        %v6830 = vrcp.pop %v6796
        %v6831 = vrcp.pop %v6799
        %v6832 = vmul.f32 %v6577, %v6800
        %v6833 = vmul.f32 %v6579, %v6800
        %v6834 = vmul.f32 %v6581, %v6801
        %v6835 = vmul.f32 %v6583, %v6801
        %v6836 = vmul.f32 %v6585, %v6802
        %v6837 = vmul.f32 %v6587, %v6802
        %v6838 = vmul.f32 %v6589, %v6803
        %v6839 = vmul.f32 %v6591, %v6803
        %v6840 = vmul.f32 %v6593, %v6804
        %v6841 = vmul.f32 %v6595, %v6804
        %v6842 = vmul.f32 %v6597, %v6805
        %v6843 = vmul.f32 %v6599, %v6805
        %v6844 = vmul.f32 %v6601, %v6806
        %v6845 = vmul.f32 %v6603, %v6806
        %v6846 = vmul.f32 %v6605, %v6807
        %v6847 = vmul.f32 %v6607, %v6807
        %v6848 = vmul.f32 %v6609, %v6808
        %v6849 = vmul.f32 %v6611, %v6808
        %v6850 = vmul.f32 %v6613, %v6809
        %v6851 = vmul.f32 %v6615, %v6809
        %v6852 = vmul.f32 %v6617, %v6810
        %v6853 = vmul.f32 %v6619, %v6810
        %v6854 = vmul.f32 %v6621, %v6811
        %v6855 = vmul.f32 %v6623, %v6811
        %v6856 = vmul.f32 %v6625, %v6812
        %v6857 = vmul.f32 %v6627, %v6812
        %v6858 = vmul.f32 %v6629, %v6813
        %v6859 = vmul.f32 %v6631, %v6813
        %v6860 = vmul.f32 %v6633, %v6814
        %v6861 = vmul.f32 %v6635, %v6814
        %v6862 = vmul.f32 %v6637, %v6815
        %v6863 = vmul.f32 %v6639, %v6815
        %v6864 = vmul.f32 %v6641, %v6816
        %v6865 = vmul.f32 %v6643, %v6816
        %v6866 = vmul.f32 %v6645, %v6817
        %v6867 = vmul.f32 %v6647, %v6817
        %v6868 = vmul.f32 %v6649, %v6818
        %v6869 = vmul.f32 %v6651, %v6818
        %v6870 = vmul.f32 %v6653, %v6819
        %v6871 = vmul.f32 %v6655, %v6819
        %v6872 = vmul.f32 %v6657, %v6820
        %v6873 = vmul.f32 %v6659, %v6820
        %v6874 = vmul.f32 %v6661, %v6821
        %v6875 = vmul.f32 %v6663, %v6821
        %v6876 = vmul.f32 %v6665, %v6822
        %v6877 = vmul.f32 %v6667, %v6822
        %v6878 = vmul.f32 %v6669, %v6823
        %v6879 = vmul.f32 %v6671, %v6823
        %v6880 = vmul.f32 %v6673, %v6824
        %v6881 = vmul.f32 %v6675, %v6824
        %v6882 = vmul.f32 %v6677, %v6825
        %v6883 = vmul.f32 %v6679, %v6825
        %v6884 = vmul.f32 %v6681, %v6826
        %v6885 = vmul.f32 %v6683, %v6826
        %v6886 = vmul.f32 %v6685, %v6827
        %v6887 = vmul.f32 %v6687, %v6827
        %v6888 = vmul.f32 %v6689, %v6828
        %v6889 = vmul.f32 %v6691, %v6828
        %v6890 = vmul.f32 %v6693, %v6829
        %v6891 = vmul.f32 %v6695, %v6829
        %v6892 = vmul.f32 %v6697, %v6830
        %v6893 = vmul.f32 %v6699, %v6830
        %v6894 = vmul.f32 %v6701, %v6831
        %v6895 = vmul.f32 %v6703, %v6831
        %v6896 = vpack.c.bf16 %v6834, %v6832
        %v6897 = vpack.c.bf16 %v6835, %v6833
        %v6898 = vpack.c.bf16 %v6838, %v6836
        %v6899 = vpack.c.bf16 %v6839, %v6837
        %v6900 = vpack.c.bf16 %v6842, %v6840
        %v6901 = vpack.c.bf16 %v6843, %v6841
        %v6902 = vpack.c.bf16 %v6846, %v6844
        %v6903 = vpack.c.bf16 %v6847, %v6845
        %v6904 = vpack.c.bf16 %v6850, %v6848
        %v6905 = vpack.c.bf16 %v6851, %v6849
        %v6906 = vpack.c.bf16 %v6854, %v6852
        %v6907 = vpack.c.bf16 %v6855, %v6853
        %v6908 = vpack.c.bf16 %v6858, %v6856
        %v6909 = vpack.c.bf16 %v6859, %v6857
        %v6910 = vpack.c.bf16 %v6862, %v6860
        %v6911 = vpack.c.bf16 %v6863, %v6861
        %v6912 = vpack.c.bf16 %v6866, %v6864
        %v6913 = vpack.c.bf16 %v6867, %v6865
        %v6914 = vpack.c.bf16 %v6870, %v6868
        %v6915 = vpack.c.bf16 %v6871, %v6869
        %v6916 = vpack.c.bf16 %v6874, %v6872
        %v6917 = vpack.c.bf16 %v6875, %v6873
        %v6918 = vpack.c.bf16 %v6878, %v6876
        %v6919 = vpack.c.bf16 %v6879, %v6877
        %v6920 = vpack.c.bf16 %v6882, %v6880
        %v6921 = vpack.c.bf16 %v6883, %v6881
        %v6922 = vpack.c.bf16 %v6886, %v6884
        %v6923 = vpack.c.bf16 %v6887, %v6885
        %v6924 = vpack.c.bf16 %v6890, %v6888
        %v6925 = vpack.c.bf16 %v6891, %v6889
        %v6926 = vpack.c.bf16 %v6894, %v6892
        %v6927 = vpack.c.bf16 %v6895, %v6893
        %v6928 = vpack.c.bf16 %v6068, %v6065
        %v6929 = vpack.c.bf16 %v6076, %v6073
        %v6930 = vpack.c.bf16 %v6084, %v6081
        %v6931 = vpack.c.bf16 %v6092, %v6089
        %v6932 = vpack.c.bf16 %v6100, %v6097
        %v6933 = vpack.c.bf16 %v6108, %v6105
        %v6934 = vpack.c.bf16 %v6116, %v6113
        %v6935 = vpack.c.bf16 %v6124, %v6121
        %v6936 = vpack.c.bf16 %v6132, %v6129
        %v6937 = vpack.c.bf16 %v6140, %v6137
        %v6938 = vpack.c.bf16 %v6148, %v6145
        %v6939 = vpack.c.bf16 %v6156, %v6153
        %v6940 = vpack.c.bf16 %v6164, %v6161
        %v6941 = vpack.c.bf16 %v6172, %v6169
        %v6942 = vpack.c.bf16 %v6180, %v6177
        %v6943 = vpack.c.bf16 %v6188, %v6185
        %6944 = vmatprep.subr.bf16.mxu0 0
        %6945 = vmatpush1.bf16.msra.mxu0 %v6928
        %6946 = vmatprep.subr.bf16.mxu0 0
        %6947 = vmatpush1.bf16.msra.mxu0 %v6929
        %6948 = vmatprep.subr.bf16.mxu0 0
        %6949 = vmatpush1.bf16.msra.mxu0 %v6930
        %6950 = vmatprep.subr.bf16.mxu0 0
        %6951 = vmatpush1.bf16.msra.mxu0 %v6931
        %6952 = vmatprep.subr.bf16.mxu0 0
        %6953 = vmatpush1.bf16.msra.mxu0 %v6932
        %6954 = vmatprep.subr.bf16.mxu0 0
        %6955 = vmatpush1.bf16.msra.mxu0 %v6933
        %6956 = vmatprep.subr.bf16.mxu0 0
        %6957 = vmatpush1.bf16.msra.mxu0 %v6934
        %6958 = vmatprep.subr.bf16.mxu0 0
        %6959 = vmatpush1.bf16.msra.mxu0 %v6935
        %6960 = vmatprep.subr.bf16.mxu0 0
        %6961 = vmatpush1.bf16.msra.mxu0 %v6936
        %6962 = vmatprep.subr.bf16.mxu0 0
        %6963 = vmatpush1.bf16.msra.mxu0 %v6937
        %6964 = vmatprep.subr.bf16.mxu0 0
        %6965 = vmatpush1.bf16.msra.mxu0 %v6938
        %6966 = vmatprep.subr.bf16.mxu0 0
        %6967 = vmatpush1.bf16.msra.mxu0 %v6939
        %6968 = vmatprep.subr.bf16.mxu0 0
        %6969 = vmatpush1.bf16.msra.mxu0 %v6940
        %6970 = vmatprep.subr.bf16.mxu0 0
        %6971 = vmatpush1.bf16.msra.mxu0 %v6941
        %6972 = vmatprep.subr.bf16.mxu0 0
        %6973 = vmatpush1.bf16.msra.mxu0 %v6942
        %6974 = vmatprep.subr.bf16.mxu0 0
        %6975 = vmatpush1.bf16.msra.mxu0 %v6943
        %6976 = vmatprep.mubr.bf16.mxu0 %v6897
        %6977 = vmatmul.mubr.bf16.gmra.mrb[0].mxu0 %v6896
        %v6978 = vpop.f32.mrb[0].mxu0
        %v6979 = vadd.f32 0.0, %v6978
        %v6980 = vpop.f32.mrb[0].mxu0
        %v6981 = vpop.f32.mrb[0].mxu0
        %v6982 = vadd.f32 0.0, %v6981
        %v6983 = vpop.f32.mrb[0].mxu0
        %6984 = vmatprep.mubr.bf16.mxu0 %v6899
        %6985 = vmatmul.mubr.bf16.gmra.mrb[0].mxu0 %v6898
        %v6986 = vpop.f32.mrb[0].mxu0
        %v6987 = vadd.f32 0.0, %v6986
        %v6988 = vpop.f32.mrb[0].mxu0
        %v6989 = vpop.f32.mrb[0].mxu0
        %v6990 = vadd.f32 0.0, %v6989
        %v6991 = vpop.f32.mrb[0].mxu0
        %6992 = vmatprep.mubr.bf16.mxu0 %v6901
        %6993 = vmatmul.mubr.bf16.gmra.mrb[0].mxu0 %v6900
        %v6994 = vpop.f32.mrb[0].mxu0
        %v6995 = vadd.f32 0.0, %v6994
        %v6996 = vpop.f32.mrb[0].mxu0
        %v6997 = vpop.f32.mrb[0].mxu0
        %v6998 = vadd.f32 0.0, %v6997
        %v6999 = vpop.f32.mrb[0].mxu0
        %7000 = vmatprep.mubr.bf16.mxu0 %v6903
        %7001 = vmatmul.mubr.bf16.gmra.mrb[0].mxu0 %v6902
        %v7002 = vpop.f32.mrb[0].mxu0
        %v7003 = vadd.f32 0.0, %v7002
        %v7004 = vpop.f32.mrb[0].mxu0
        %v7005 = vpop.f32.mrb[0].mxu0
        %v7006 = vadd.f32 0.0, %v7005
        %v7007 = vpop.f32.mrb[0].mxu0
        %7008 = vmatprep.mubr.bf16.mxu0 %v6905
        %7009 = vmatmul.mubr.bf16.gmra.mrb[0].mxu0 %v6904
        %v7010 = vpop.f32.mrb[0].mxu0
        %v7011 = vadd.f32 0.0, %v7010
        %v7012 = vpop.f32.mrb[0].mxu0
        %v7013 = vpop.f32.mrb[0].mxu0
        %v7014 = vadd.f32 0.0, %v7013
        %v7015 = vpop.f32.mrb[0].mxu0
        %7016 = vmatprep.mubr.bf16.mxu0 %v6907
        %7017 = vmatmul.mubr.bf16.gmra.mrb[0].mxu0 %v6906
        %v7018 = vpop.f32.mrb[0].mxu0
        %v7019 = vadd.f32 0.0, %v7018
        %v7020 = vpop.f32.mrb[0].mxu0
        %v7021 = vpop.f32.mrb[0].mxu0
        %v7022 = vadd.f32 0.0, %v7021
        %v7023 = vpop.f32.mrb[0].mxu0
        %7024 = vmatprep.mubr.bf16.mxu0 %v6909
        %7025 = vmatmul.mubr.bf16.gmra.mrb[0].mxu0 %v6908
        %v7026 = vpop.f32.mrb[0].mxu0
        %v7027 = vadd.f32 0.0, %v7026
        %v7028 = vpop.f32.mrb[0].mxu0
        %v7029 = vpop.f32.mrb[0].mxu0
        %v7030 = vadd.f32 0.0, %v7029
        %v7031 = vpop.f32.mrb[0].mxu0
        %7032 = vmatprep.mubr.bf16.mxu0 %v6911
        %7033 = vmatmul.mubr.bf16.gmra.mrb[0].mxu0 %v6910
        %v7034 = vpop.f32.mrb[0].mxu0
        %v7035 = vadd.f32 0.0, %v7034
        %v7036 = vpop.f32.mrb[0].mxu0
        %v7037 = vpop.f32.mrb[0].mxu0
        %v7038 = vadd.f32 0.0, %v7037
        %v7039 = vpop.f32.mrb[0].mxu0
        %7040 = vmatprep.mubr.bf16.mxu0 %v6913
        %7041 = vmatmul.mubr.bf16.gmra.mrb[0].mxu0 %v6912
        %v7042 = vpop.f32.mrb[0].mxu0
        %v7043 = vadd.f32 0.0, %v7042
        %v7044 = vpop.f32.mrb[0].mxu0
        %v7045 = vpop.f32.mrb[0].mxu0
        %v7046 = vadd.f32 0.0, %v7045
        %v7047 = vpop.f32.mrb[0].mxu0
        %7048 = vmatprep.mubr.bf16.mxu0 %v6915
        %7049 = vmatmul.mubr.bf16.gmra.mrb[0].mxu0 %v6914
        %v7050 = vpop.f32.mrb[0].mxu0
        %v7051 = vadd.f32 0.0, %v7050
        %v7052 = vpop.f32.mrb[0].mxu0
        %v7053 = vpop.f32.mrb[0].mxu0
        %v7054 = vadd.f32 0.0, %v7053
        %v7055 = vpop.f32.mrb[0].mxu0
        %7056 = vmatprep.mubr.bf16.mxu0 %v6917
        %7057 = vmatmul.mubr.bf16.gmra.mrb[0].mxu0 %v6916
        %v7058 = vpop.f32.mrb[0].mxu0
        %v7059 = vadd.f32 0.0, %v7058
        %v7060 = vpop.f32.mrb[0].mxu0
        %v7061 = vpop.f32.mrb[0].mxu0
        %v7062 = vadd.f32 0.0, %v7061
        %v7063 = vpop.f32.mrb[0].mxu0
        %7064 = vmatprep.mubr.bf16.mxu0 %v6919
        %7065 = vmatmul.mubr.bf16.gmra.mrb[0].mxu0 %v6918
        %v7066 = vpop.f32.mrb[0].mxu0
        %v7067 = vadd.f32 0.0, %v7066
        %v7068 = vpop.f32.mrb[0].mxu0
        %v7069 = vpop.f32.mrb[0].mxu0
        %v7070 = vadd.f32 0.0, %v7069
        %v7071 = vpop.f32.mrb[0].mxu0
        %7072 = vmatprep.mubr.bf16.mxu0 %v6921
        %7073 = vmatmul.mubr.bf16.gmra.mrb[0].mxu0 %v6920
        %v7074 = vpop.f32.mrb[0].mxu0
        %v7075 = vadd.f32 0.0, %v7074
        %v7076 = vpop.f32.mrb[0].mxu0
        %v7077 = vpop.f32.mrb[0].mxu0
        %v7078 = vadd.f32 0.0, %v7077
        %v7079 = vpop.f32.mrb[0].mxu0
        %7080 = vmatprep.mubr.bf16.mxu0 %v6923
        %7081 = vmatmul.mubr.bf16.gmra.mrb[0].mxu0 %v6922
        %v7082 = vpop.f32.mrb[0].mxu0
        %v7083 = vadd.f32 0.0, %v7082
        %v7084 = vpop.f32.mrb[0].mxu0
        %v7085 = vpop.f32.mrb[0].mxu0
        %v7086 = vadd.f32 0.0, %v7085
        %v7087 = vpop.f32.mrb[0].mxu0
        %7088 = vmatprep.mubr.bf16.mxu0 %v6925
        %7089 = vmatmul.mubr.bf16.gmra.mrb[0].mxu0 %v6924
        %v7090 = vpop.f32.mrb[0].mxu0
        %v7091 = vadd.f32 0.0, %v7090
        %v7092 = vpop.f32.mrb[0].mxu0
        %v7093 = vpop.f32.mrb[0].mxu0
        %v7094 = vadd.f32 0.0, %v7093
        %v7095 = vpop.f32.mrb[0].mxu0
        %7096 = vmatprep.mubr.bf16.mxu0 %v6927
        %7097 = vmatmul.mubr.bf16.gmra.mrb[0].mxu0 %v6926
        %v7098 = vpop.f32.mrb[0].mxu0
        %v7099 = vadd.f32 0.0, %v7098
        %v7100 = vpop.f32.mrb[0].mxu0
        %v7101 = vpop.f32.mrb[0].mxu0
        %v7102 = vadd.f32 0.0, %v7101
        %v7103 = vpop.f32.mrb[0].mxu0
        %7104 = vdwg.mxu0
        %s7105 = sld [smem:[#allocation4]]
        %v7106 = vstv %s7105
        %v7107 = vmul.f32 %v7106, %v6979
        %v7108 = vmul.f32 %v7106, %v6982
        %v7109 = vmul.f32 %v7106, %v6987
        %v7110 = vmul.f32 %v7106, %v6990
        %v7111 = vmul.f32 %v7106, %v6995
        %v7112 = vmul.f32 %v7106, %v6998
        %v7113 = vmul.f32 %v7106, %v7003
        %v7114 = vmul.f32 %v7106, %v7006
        %v7115 = vmul.f32 %v7106, %v7011
        %v7116 = vmul.f32 %v7106, %v7014
        %v7117 = vmul.f32 %v7106, %v7019
        %v7118 = vmul.f32 %v7106, %v7022
        %v7119 = vmul.f32 %v7106, %v7027
        %v7120 = vmul.f32 %v7106, %v7030
        %v7121 = vmul.f32 %v7106, %v7035
        %v7122 = vmul.f32 %v7106, %v7038
        %v7123 = vmul.f32 %v7106, %v7043
        %v7124 = vmul.f32 %v7106, %v7046
        %v7125 = vmul.f32 %v7106, %v7051
        %v7126 = vmul.f32 %v7106, %v7054
        %v7127 = vmul.f32 %v7106, %v7059
        %v7128 = vmul.f32 %v7106, %v7062
        %v7129 = vmul.f32 %v7106, %v7067
        %v7130 = vmul.f32 %v7106, %v7070
        %v7131 = vmul.f32 %v7106, %v7075
        %v7132 = vmul.f32 %v7106, %v7078
        %v7133 = vmul.f32 %v7106, %v7083
        %v7134 = vmul.f32 %v7106, %v7086
        %v7135 = vmul.f32 %v7106, %v7091
        %v7136 = vmul.f32 %v7106, %v7094
        %v7137 = vmul.f32 %v7106, %v7099
        %v7138 = vmul.f32 %v7106, %v7102
        %v7139 = vadd.f32 %v7107, %v5683
        %v7140 = vadd.f32 %v7108, %v5684
        %v7141 = vadd.f32 %v7109, %v5685
        %v7142 = vadd.f32 %v7110, %v5686
        %v7143 = vadd.f32 %v7111, %v5687
        %v7144 = vadd.f32 %v7112, %v5688
        %v7145 = vadd.f32 %v7113, %v5689
        %v7146 = vadd.f32 %v7114, %v5690
        %v7147 = vadd.f32 %v7115, %v5691
        %v7148 = vadd.f32 %v7116, %v5692
        %v7149 = vadd.f32 %v7117, %v5693
        %v7150 = vadd.f32 %v7118, %v5694
        %v7151 = vadd.f32 %v7119, %v5695
        %v7152 = vadd.f32 %v7120, %v5696
        %v7153 = vadd.f32 %v7121, %v5697
        %v7154 = vadd.f32 %v7122, %v5698
        %v7155 = vadd.f32 %v7123, %v5699
        %v7156 = vadd.f32 %v7124, %v5700
        %v7157 = vadd.f32 %v7125, %v5701
        %v7158 = vadd.f32 %v7126, %v5702
        %v7159 = vadd.f32 %v7127, %v5703
        %v7160 = vadd.f32 %v7128, %v5704
        %v7161 = vadd.f32 %v7129, %v5705
        %v7162 = vadd.f32 %v7130, %v5706
        %v7163 = vadd.f32 %v7131, %v5707
        %v7164 = vadd.f32 %v7132, %v5708
        %v7165 = vadd.f32 %v7133, %v5709
        %v7166 = vadd.f32 %v7134, %v5710
        %v7167 = vadd.f32 %v7135, %v5711
        %v7168 = vadd.f32 %v7136, %v5712
        %v7169 = vadd.f32 %v7137, %v5713
        %v7170 = vadd.f32 %v7138, %v5714
        %v7171 = vpack.c.bf16 %v7140, %v7139
        %v7172 = vpack.c.bf16 %v7142, %v7141
        %v7173 = vpack.c.bf16 %v7144, %v7143
        %v7174 = vpack.c.bf16 %v7146, %v7145
        %v7175 = vpack.c.bf16 %v7148, %v7147
        %v7176 = vpack.c.bf16 %v7150, %v7149
        %v7177 = vpack.c.bf16 %v7152, %v7151
        %v7178 = vpack.c.bf16 %v7154, %v7153
        %v7179 = vpack.c.bf16 %v7156, %v7155
        %v7180 = vpack.c.bf16 %v7158, %v7157
        %v7181 = vpack.c.bf16 %v7160, %v7159
        %v7182 = vpack.c.bf16 %v7162, %v7161
        %v7183 = vpack.c.bf16 %v7164, %v7163
        %v7184 = vpack.c.bf16 %v7166, %v7165
        %v7185 = vpack.c.bf16 %v7168, %v7167
        %v7186 = vpack.c.bf16 %v7170, %v7169
        %vm7187 = vcmask 257024
        %7188 = vst.msk [vmem:[#allocation3] sm:$0xf] %vm7187, 0
        %7189 = vst.msk [vmem:[#allocation3 + $0x4] sm:$0xf] %vm7187, 0
        %vm7190 = vcmask 253952
        %7191 = vst.msk [vmem:[#allocation3 + $0x8] sm:$0x1] %vm7190, 0
        %s7192 = scalar_lea.vmem [#allocation3], 204
        %7193 = vst.msk [vmem:[%s7192] sm:$0xf] %vm7187, 0
        %7194 = vst.msk [vmem:[%s7192 + $0x4] sm:$0xf] %vm7187, 0
        %7195 = vst.msk [vmem:[%s7192 + $0x8] sm:$0x1] %vm7190, 0
        %vm7196 = vcmask 253952
        %vm7197 = vmand %vm7196, %vm418
        %v7198 = vld [vmem:[#allocation3] sm:$0x1]
        %v7199 = vsel %vm7197, 0, %v7198
        %7200 = vst [vmem:[#allocation3] sm:$0x1] %v7199
        %v7201 = vld [vmem:[#allocation3 + $0xc] sm:$0x1]
        %v7202 = vsel %vm7197, 0, %v7201
        %7203 = vst [vmem:[#allocation3 + $0xc] sm:$0x1] %v7202
        %v7204 = vld [vmem:[#allocation3 + $0x18] sm:$0x1]
        %v7205 = vsel %vm7197, 0, %v7204
        %7206 = vst [vmem:[#allocation3 + $0x18] sm:$0x1] %v7205
        %v7207 = vld [vmem:[#allocation3 + $0x24] sm:$0x1]
        %v7208 = vsel %vm7197, 0, %v7207
        %7209 = vst [vmem:[#allocation3 + $0x24] sm:$0x1] %v7208
        %v7210 = vld [vmem:[#allocation3 + $0x30] sm:$0x1]
        %v7211 = vsel %vm7197, 0, %v7210
        %7212 = vst [vmem:[#allocation3 + $0x30] sm:$0x1] %v7211
        %v7213 = vld [vmem:[#allocation3 + $0x3c] sm:$0x1]
        %v7214 = vsel %vm7197, 0, %v7213
        %7215 = vst [vmem:[#allocation3 + $0x3c] sm:$0x1] %v7214
        %v7216 = vld [vmem:[#allocation3 + $0x48] sm:$0x1]
        %v7217 = vsel %vm7197, 0, %v7216
        %7218 = vst [vmem:[#allocation3 + $0x48] sm:$0x1] %v7217
        %v7219 = vld [vmem:[#allocation3 + $0x54] sm:$0x1]
        %v7220 = vsel %vm7197, 0, %v7219
        %7221 = vst [vmem:[#allocation3 + $0x54] sm:$0x1] %v7220
        %v7222 = vld [vmem:[#allocation3 + $0x60] sm:$0x1]
        %v7223 = vsel %vm7197, 0, %v7222
        %7224 = vst [vmem:[#allocation3 + $0x60] sm:$0x1] %v7223
        %v7225 = vld [vmem:[#allocation3 + $0x6c] sm:$0x1]
        %v7226 = vsel %vm7197, 0, %v7225
        %7227 = vst [vmem:[#allocation3 + $0x6c] sm:$0x1] %v7226
        %v7228 = vld [vmem:[#allocation3 + $0x78] sm:$0x1]
        %v7229 = vsel %vm7197, 0, %v7228
        %7230 = vst [vmem:[#allocation3 + $0x78] sm:$0x1] %v7229
        %v7231 = vld [vmem:[#allocation3 + $0x84] sm:$0x1]
        %v7232 = vsel %vm7197, 0, %v7231
        %7233 = vst [vmem:[#allocation3 + $0x84] sm:$0x1] %v7232
        %v7234 = vld [vmem:[#allocation3 + $0x90] sm:$0x1]
        %v7235 = vsel %vm7197, 0, %v7234
        %7236 = vst [vmem:[#allocation3 + $0x90] sm:$0x1] %v7235
        %v7237 = vld [vmem:[#allocation3 + $0x9c] sm:$0x1]
        %v7238 = vsel %vm7197, 0, %v7237
        %7239 = vst [vmem:[#allocation3 + $0x9c] sm:$0x1] %v7238
        %v7240 = vld [vmem:[#allocation3 + $0xa8] sm:$0x1]
        %v7241 = vsel %vm7197, 0, %v7240
        %7242 = vst [vmem:[#allocation3 + $0xa8] sm:$0x1] %v7241
        %v7243 = vld [vmem:[#allocation3 + $0xb4] sm:$0x1]
        %v7244 = vsel %vm7197, 0, %v7243
        %7245 = vst [vmem:[#allocation3 + $0xb4] sm:$0x1] %v7244
        %v7246 = vld [vmem:[#allocation3 + $0xc0] sm:$0x1]
        %v7247 = vsel %vm7197, 0, %v7246
        %7248 = vst [vmem:[#allocation3 + $0xc0] sm:$0x1] %v7247
        %v7249 = vld [vmem:[#allocation3 + $0xcc] sm:$0x1]
        %v7250 = vsel %vm7197, 0, %v7249
        %7251 = vst [vmem:[#allocation3 + $0xcc] sm:$0x1] %v7250
        %vm7252 = vmand %vm7196, %vm474
        %v7253 = vld [vmem:[#allocation3 + $0x8] sm:$0x1]
        %v7254 = vsel %vm7252, 0, %v7253
        %7255 = vst [vmem:[#allocation3 + $0x8] sm:$0x1] %v7254
        %v7256 = vld [vmem:[#allocation3 + $0x14] sm:$0x1]
        %v7257 = vsel %vm7252, 0, %v7256
        %7258 = vst [vmem:[#allocation3 + $0x14] sm:$0x1] %v7257
        %v7259 = vld [vmem:[#allocation3 + $0x20] sm:$0x1]
        %v7260 = vsel %vm7252, 0, %v7259
        %7261 = vst [vmem:[#allocation3 + $0x20] sm:$0x1] %v7260
        %v7262 = vld [vmem:[#allocation3 + $0x2c] sm:$0x1]
        %v7263 = vsel %vm7252, 0, %v7262
        %7264 = vst [vmem:[#allocation3 + $0x2c] sm:$0x1] %v7263
        %v7265 = vld [vmem:[#allocation3 + $0x38] sm:$0x1]
        %v7266 = vsel %vm7252, 0, %v7265
        %7267 = vst [vmem:[#allocation3 + $0x38] sm:$0x1] %v7266
        %v7268 = vld [vmem:[#allocation3 + $0x44] sm:$0x1]
        %v7269 = vsel %vm7252, 0, %v7268
        %7270 = vst [vmem:[#allocation3 + $0x44] sm:$0x1] %v7269
        %v7271 = vld [vmem:[#allocation3 + $0x50] sm:$0x1]
        %v7272 = vsel %vm7252, 0, %v7271
        %7273 = vst [vmem:[#allocation3 + $0x50] sm:$0x1] %v7272
        %v7274 = vld [vmem:[#allocation3 + $0x5c] sm:$0x1]
        %v7275 = vsel %vm7252, 0, %v7274
        %7276 = vst [vmem:[#allocation3 + $0x5c] sm:$0x1] %v7275
        %v7277 = vld [vmem:[#allocation3 + $0x68] sm:$0x1]
        %v7278 = vsel %vm7252, 0, %v7277
        %7279 = vst [vmem:[#allocation3 + $0x68] sm:$0x1] %v7278
        %v7280 = vld [vmem:[#allocation3 + $0x74] sm:$0x1]
        %v7281 = vsel %vm7252, 0, %v7280
        %7282 = vst [vmem:[#allocation3 + $0x74] sm:$0x1] %v7281
        %v7283 = vld [vmem:[#allocation3 + $0x80] sm:$0x1]
        %v7284 = vsel %vm7252, 0, %v7283
        %7285 = vst [vmem:[#allocation3 + $0x80] sm:$0x1] %v7284
        %v7286 = vld [vmem:[#allocation3 + $0x8c] sm:$0x1]
        %v7287 = vsel %vm7252, 0, %v7286
        %7288 = vst [vmem:[#allocation3 + $0x8c] sm:$0x1] %v7287
        %v7289 = vld [vmem:[#allocation3 + $0x98] sm:$0x1]
        %v7290 = vsel %vm7252, 0, %v7289
        %7291 = vst [vmem:[#allocation3 + $0x98] sm:$0x1] %v7290
        %v7292 = vld [vmem:[#allocation3 + $0xa4] sm:$0x1]
        %v7293 = vsel %vm7252, 0, %v7292
        %7294 = vst [vmem:[#allocation3 + $0xa4] sm:$0x1] %v7293
        %v7295 = vld [vmem:[#allocation3 + $0xb0] sm:$0x1]
        %v7296 = vsel %vm7252, 0, %v7295
        %7297 = vst [vmem:[#allocation3 + $0xb0] sm:$0x1] %v7296
        %v7298 = vld [vmem:[#allocation3 + $0xbc] sm:$0x1]
        %v7299 = vsel %vm7252, 0, %v7298
        %7300 = vst [vmem:[#allocation3 + $0xbc] sm:$0x1] %v7299
        %v7301 = vld [vmem:[#allocation3 + $0xc8] sm:$0x1]
        %v7302 = vsel %vm7252, 0, %v7301
        %7303 = vst [vmem:[#allocation3 + $0xc8] sm:$0x1] %v7302
        %v7304 = vld [vmem:[#allocation3 + $0xd4] sm:$0x1]
        %v7305 = vsel %vm7252, 0, %v7304
        %7306 = vst [vmem:[#allocation3 + $0xd4] sm:$0x1] %v7305
        %v7323 = vunpack.c.l.b16 %v7171
        %v7324 = vunpack.c.h.b16 %v7171
        %v7325 = vunpack.c.l.b16 %v7172
        %v7326 = vunpack.c.h.b16 %v7172
        %v7327 = vunpack.c.l.b16 %v7173
        %v7328 = vunpack.c.h.b16 %v7173
        %v7329 = vunpack.c.l.b16 %v7174
        %v7330 = vunpack.c.h.b16 %v7174
        %v7331 = vunpack.c.l.b16 %v7175
        %v7332 = vunpack.c.h.b16 %v7175
        %v7333 = vunpack.c.l.b16 %v7176
        %v7334 = vunpack.c.h.b16 %v7176
        %v7335 = vunpack.c.l.b16 %v7177
        %v7336 = vunpack.c.h.b16 %v7177
        %v7337 = vunpack.c.l.b16 %v7178
        %v7338 = vunpack.c.h.b16 %v7178
        %v7339 = vunpack.c.l.b16 %v7179
        %v7340 = vunpack.c.h.b16 %v7179
        %v7341 = vunpack.c.l.b16 %v7180
        %v7342 = vunpack.c.h.b16 %v7180
        %v7343 = vunpack.c.l.b16 %v7181
        %v7344 = vunpack.c.h.b16 %v7181
        %v7345 = vunpack.c.l.b16 %v7182
        %v7346 = vunpack.c.h.b16 %v7182
        %v7347 = vunpack.c.l.b16 %v7183
        %v7348 = vunpack.c.h.b16 %v7183
        %v7349 = vunpack.c.l.b16 %v7184
        %v7350 = vunpack.c.h.b16 %v7184
        %v7351 = vunpack.c.l.b16 %v7185
        %v7352 = vunpack.c.h.b16 %v7185
        %v7353 = vunpack.c.l.b16 %v7186
        %v7354 = vunpack.c.h.b16 %v7186
        %v7355 = vpack.c.b16 %v7323, %v7323
        %v7356 = vpack.c.b16 %v7324, %v7324
        %v7357 = vpack.c.b16 %v7325, %v7325
        %v7358 = vpack.c.b16 %v7326, %v7326
        %v7359 = vpack.c.b16 %v7327, %v7327
        %v7360 = vpack.c.b16 %v7328, %v7328
        %v7361 = vpack.c.b16 %v7329, %v7329
        %v7362 = vpack.c.b16 %v7330, %v7330
        %v7363 = vpack.c.b16 %v7331, %v7331
        %v7364 = vpack.c.b16 %v7332, %v7332
        %v7365 = vpack.c.b16 %v7333, %v7333
        %v7366 = vpack.c.b16 %v7334, %v7334
        %v7367 = vpack.c.b16 %v7335, %v7335
        %v7368 = vpack.c.b16 %v7336, %v7336
        %v7369 = vpack.c.b16 %v7337, %v7337
        %v7370 = vpack.c.b16 %v7338, %v7338
        %v7371 = vpack.c.b16 %v7339, %v7339
        %v7372 = vpack.c.b16 %v7340, %v7340
        %v7373 = vpack.c.b16 %v7341, %v7341
        %v7374 = vpack.c.b16 %v7342, %v7342
        %v7375 = vpack.c.b16 %v7343, %v7343
        %v7376 = vpack.c.b16 %v7344, %v7344
        %v7377 = vpack.c.b16 %v7345, %v7345
        %v7378 = vpack.c.b16 %v7346, %v7346
        %v7379 = vpack.c.b16 %v7347, %v7347
        %v7380 = vpack.c.b16 %v7348, %v7348
        %v7381 = vpack.c.b16 %v7349, %v7349
        %v7382 = vpack.c.b16 %v7350, %v7350
        %v7383 = vpack.c.b16 %v7351, %v7351
        %v7384 = vpack.c.b16 %v7352, %v7352
        %v7385 = vpack.c.b16 %v7353, %v7353
        %v7386 = vpack.c.b16 %v7354, %v7354
        %v7388 = vshrl.u32 %v7355, 16
        %v7390 = vrot.slane %v7388, 7
        %v7391 = vshll.u32 %v7355, 16
        %v7393 = vor.u32 %v7390, %v7391
        %v7394 = vrot.slane %v7390, 4
        %v7396 = vshrl.u32 %v7356, 16
        %v7398 = vrot.slane %v7396, 7
        %v7399 = vshll.u32 %v7356, 16
        %v7401 = vor.u32 %v7398, %v7399
        %v7402 = vsel %vm611, %v7394, %v7401
        %v7403 = vrot.slane %v7398, 4
        %v7405 = vshrl.u32 %v7357, 16
        %v7407 = vrot.slane %v7405, 7
        %v7408 = vshll.u32 %v7357, 16
        %v7410 = vor.u32 %v7407, %v7408
        %v7411 = vrot.slane %v7407, 4
        %v7413 = vshrl.u32 %v7358, 16
        %v7415 = vrot.slane %v7413, 7
        %v7416 = vshll.u32 %v7358, 16
        %v7418 = vor.u32 %v7415, %v7416
        %v7419 = vsel %vm611, %v7411, %v7418
        %v7420 = vrot.slane %v7415, 4
        %v7422 = vshrl.u32 %v7359, 16
        %v7424 = vrot.slane %v7422, 7
        %v7425 = vshll.u32 %v7359, 16
        %v7427 = vor.u32 %v7424, %v7425
        %v7428 = vrot.slane %v7424, 4
        %v7430 = vshrl.u32 %v7360, 16
        %v7432 = vrot.slane %v7430, 7
        %v7433 = vshll.u32 %v7360, 16
        %v7435 = vor.u32 %v7432, %v7433
        %v7436 = vsel %vm611, %v7428, %v7435
        %v7437 = vrot.slane %v7432, 4
        %v7439 = vshrl.u32 %v7361, 16
        %v7441 = vrot.slane %v7439, 7
        %v7442 = vshll.u32 %v7361, 16
        %v7444 = vor.u32 %v7441, %v7442
        %v7445 = vrot.slane %v7441, 4
        %v7447 = vshrl.u32 %v7362, 16
        %v7449 = vrot.slane %v7447, 7
        %v7450 = vshll.u32 %v7362, 16
        %v7452 = vor.u32 %v7449, %v7450
        %v7453 = vsel %vm611, %v7445, %v7452
        %v7454 = vrot.slane %v7449, 4
        %v7456 = vshrl.u32 %v7363, 16
        %v7458 = vrot.slane %v7456, 7
        %v7459 = vshll.u32 %v7363, 16
        %v7461 = vor.u32 %v7458, %v7459
        %v7462 = vrot.slane %v7458, 4
        %v7464 = vshrl.u32 %v7364, 16
        %v7466 = vrot.slane %v7464, 7
        %v7467 = vshll.u32 %v7364, 16
        %v7469 = vor.u32 %v7466, %v7467
        %v7470 = vsel %vm611, %v7462, %v7469
        %v7471 = vrot.slane %v7466, 4
        %v7473 = vshrl.u32 %v7365, 16
        %v7475 = vrot.slane %v7473, 7
        %v7476 = vshll.u32 %v7365, 16
        %v7478 = vor.u32 %v7475, %v7476
        %v7479 = vrot.slane %v7475, 4
        %v7481 = vshrl.u32 %v7366, 16
        %v7483 = vrot.slane %v7481, 7
        %v7484 = vshll.u32 %v7366, 16
        %v7486 = vor.u32 %v7483, %v7484
        %v7487 = vsel %vm611, %v7479, %v7486
        %v7488 = vrot.slane %v7483, 4
        %v7490 = vshrl.u32 %v7367, 16
        %v7492 = vrot.slane %v7490, 7
        %v7493 = vshll.u32 %v7367, 16
        %v7495 = vor.u32 %v7492, %v7493
        %v7496 = vrot.slane %v7492, 4
        %v7498 = vshrl.u32 %v7368, 16
        %v7500 = vrot.slane %v7498, 7
        %v7501 = vshll.u32 %v7368, 16
        %v7503 = vor.u32 %v7500, %v7501
        %v7504 = vsel %vm611, %v7496, %v7503
        %v7505 = vrot.slane %v7500, 4
        %v7507 = vshrl.u32 %v7369, 16
        %v7509 = vrot.slane %v7507, 7
        %v7510 = vshll.u32 %v7369, 16
        %v7512 = vor.u32 %v7509, %v7510
        %v7513 = vrot.slane %v7509, 4
        %v7515 = vshrl.u32 %v7370, 16
        %v7517 = vrot.slane %v7515, 7
        %v7518 = vshll.u32 %v7370, 16
        %v7520 = vor.u32 %v7517, %v7518
        %v7521 = vsel %vm611, %v7513, %v7520
        %v7522 = vrot.slane %v7517, 4
        %v7524 = vshrl.u32 %v7371, 16
        %v7526 = vrot.slane %v7524, 7
        %v7527 = vshll.u32 %v7371, 16
        %v7529 = vor.u32 %v7526, %v7527
        %v7530 = vrot.slane %v7526, 4
        %v7532 = vshrl.u32 %v7372, 16
        %v7534 = vrot.slane %v7532, 7
        %v7535 = vshll.u32 %v7372, 16
        %v7537 = vor.u32 %v7534, %v7535
        %v7538 = vsel %vm611, %v7530, %v7537
        %v7539 = vrot.slane %v7534, 4
        %v7541 = vshrl.u32 %v7373, 16
        %v7543 = vrot.slane %v7541, 7
        %v7544 = vshll.u32 %v7373, 16
        %v7546 = vor.u32 %v7543, %v7544
        %v7547 = vrot.slane %v7543, 4
        %v7549 = vshrl.u32 %v7374, 16
        %v7551 = vrot.slane %v7549, 7
        %v7552 = vshll.u32 %v7374, 16
        %v7554 = vor.u32 %v7551, %v7552
        %v7555 = vsel %vm611, %v7547, %v7554
        %v7556 = vrot.slane %v7551, 4
        %v7558 = vshrl.u32 %v7375, 16
        %v7560 = vrot.slane %v7558, 7
        %v7561 = vshll.u32 %v7375, 16
        %v7563 = vor.u32 %v7560, %v7561
        %v7564 = vrot.slane %v7560, 4
        %v7566 = vshrl.u32 %v7376, 16
        %v7568 = vrot.slane %v7566, 7
        %v7569 = vshll.u32 %v7376, 16
        %v7571 = vor.u32 %v7568, %v7569
        %v7572 = vsel %vm611, %v7564, %v7571
        %v7573 = vrot.slane %v7568, 4
        %v7575 = vshrl.u32 %v7377, 16
        %v7577 = vrot.slane %v7575, 7
        %v7578 = vshll.u32 %v7377, 16
        %v7580 = vor.u32 %v7577, %v7578
        %v7581 = vrot.slane %v7577, 4
        %v7583 = vshrl.u32 %v7378, 16
        %v7585 = vrot.slane %v7583, 7
        %v7586 = vshll.u32 %v7378, 16
        %v7588 = vor.u32 %v7585, %v7586
        %v7589 = vsel %vm611, %v7581, %v7588
        %v7590 = vrot.slane %v7585, 4
        %v7592 = vshrl.u32 %v7379, 16
        %v7594 = vrot.slane %v7592, 7
        %v7595 = vshll.u32 %v7379, 16
        %v7597 = vor.u32 %v7594, %v7595
        %v7598 = vrot.slane %v7594, 4
        %v7600 = vshrl.u32 %v7380, 16
        %v7602 = vrot.slane %v7600, 7
        %v7603 = vshll.u32 %v7380, 16
        %v7605 = vor.u32 %v7602, %v7603
        %v7606 = vsel %vm611, %v7598, %v7605
        %v7607 = vrot.slane %v7602, 4
        %v7609 = vshrl.u32 %v7381, 16
        %v7611 = vrot.slane %v7609, 7
        %v7612 = vshll.u32 %v7381, 16
        %v7614 = vor.u32 %v7611, %v7612
        %v7615 = vrot.slane %v7611, 4
        %v7617 = vshrl.u32 %v7382, 16
        %v7619 = vrot.slane %v7617, 7
        %v7620 = vshll.u32 %v7382, 16
        %v7622 = vor.u32 %v7619, %v7620
        %v7623 = vsel %vm611, %v7615, %v7622
        %v7624 = vrot.slane %v7619, 4
        %v7626 = vshrl.u32 %v7383, 16
        %v7628 = vrot.slane %v7626, 7
        %v7629 = vshll.u32 %v7383, 16
        %v7631 = vor.u32 %v7628, %v7629
        %v7632 = vrot.slane %v7628, 4
        %v7634 = vshrl.u32 %v7384, 16
        %v7636 = vrot.slane %v7634, 7
        %v7637 = vshll.u32 %v7384, 16
        %v7639 = vor.u32 %v7636, %v7637
        %v7640 = vsel %vm611, %v7632, %v7639
        %v7641 = vrot.slane %v7636, 4
        %v7643 = vshrl.u32 %v7385, 16
        %v7645 = vrot.slane %v7643, 7
        %v7646 = vshll.u32 %v7385, 16
        %v7648 = vor.u32 %v7645, %v7646
        %v7649 = vrot.slane %v7645, 4
        %v7651 = vshrl.u32 %v7386, 16
        %v7653 = vrot.slane %v7651, 7
        %v7654 = vshll.u32 %v7386, 16
        %v7656 = vor.u32 %v7653, %v7654
        %v7657 = vsel %vm611, %v7649, %v7656
        %v7658 = vrot.slane %v7653, 4
        %s7707 = scalar_lea.vmem [#allocation3], 12
        %vm7708 = vcmask 257024
        %vm7709 = vmand %vm7708, %vm474
        %v7710 = vld [vmem:[%s7707] sm:$0xf]
        %v7711 = vsel %vm7709, %v7393, %v7710
        %7712 = vst [vmem:[%s7707] sm:$0xf] %v7711
        %7713 = vst.msk [vmem:[%s7707 + $0x4] sm:$0xf] %vm7187, %v7402
        %v7714 = vld [vmem:[%s7707 + $0x8] sm:$0x1]
        %v7715 = vsel %vm7197, %v7403, %v7714
        %7716 = vst [vmem:[%s7707 + $0x8] sm:$0x1] %v7715
        %v7717 = vld [vmem:[%s7707 + $0xc] sm:$0xf]
        %v7718 = vsel %vm7709, %v7410, %v7717
        %7719 = vst [vmem:[%s7707 + $0xc] sm:$0xf] %v7718
        %7720 = vst.msk [vmem:[%s7707 + $0x10] sm:$0xf] %vm7187, %v7419
        %v7721 = vld [vmem:[%s7707 + $0x14] sm:$0x1]
        %v7722 = vsel %vm7197, %v7420, %v7721
        %7723 = vst [vmem:[%s7707 + $0x14] sm:$0x1] %v7722
        %v7724 = vld [vmem:[%s7707 + $0x18] sm:$0xf]
        %v7725 = vsel %vm7709, %v7427, %v7724
        %7726 = vst [vmem:[%s7707 + $0x18] sm:$0xf] %v7725
        %7727 = vst.msk [vmem:[%s7707 + $0x1c] sm:$0xf] %vm7187, %v7436
        %v7728 = vld [vmem:[%s7707 + $0x20] sm:$0x1]
        %v7729 = vsel %vm7197, %v7437, %v7728
        %7730 = vst [vmem:[%s7707 + $0x20] sm:$0x1] %v7729
        %v7731 = vld [vmem:[%s7707 + $0x24] sm:$0xf]
        %v7732 = vsel %vm7709, %v7444, %v7731
        %7733 = vst [vmem:[%s7707 + $0x24] sm:$0xf] %v7732
        %7734 = vst.msk [vmem:[%s7707 + $0x28] sm:$0xf] %vm7187, %v7453
        %v7735 = vld [vmem:[%s7707 + $0x2c] sm:$0x1]
        %v7736 = vsel %vm7197, %v7454, %v7735
        %7737 = vst [vmem:[%s7707 + $0x2c] sm:$0x1] %v7736
        %v7738 = vld [vmem:[%s7707 + $0x30] sm:$0xf]
        %v7739 = vsel %vm7709, %v7461, %v7738
        %7740 = vst [vmem:[%s7707 + $0x30] sm:$0xf] %v7739
        %7741 = vst.msk [vmem:[%s7707 + $0x34] sm:$0xf] %vm7187, %v7470
        %v7742 = vld [vmem:[%s7707 + $0x38] sm:$0x1]
        %v7743 = vsel %vm7197, %v7471, %v7742
        %7744 = vst [vmem:[%s7707 + $0x38] sm:$0x1] %v7743
        %v7745 = vld [vmem:[%s7707 + $0x3c] sm:$0xf]
        %v7746 = vsel %vm7709, %v7478, %v7745
        %7747 = vst [vmem:[%s7707 + $0x3c] sm:$0xf] %v7746
        %7748 = vst.msk [vmem:[%s7707 + $0x40] sm:$0xf] %vm7187, %v7487
        %v7749 = vld [vmem:[%s7707 + $0x44] sm:$0x1]
        %v7750 = vsel %vm7197, %v7488, %v7749
        %7751 = vst [vmem:[%s7707 + $0x44] sm:$0x1] %v7750
        %v7752 = vld [vmem:[%s7707 + $0x48] sm:$0xf]
        %v7753 = vsel %vm7709, %v7495, %v7752
        %7754 = vst [vmem:[%s7707 + $0x48] sm:$0xf] %v7753
        %7755 = vst.msk [vmem:[%s7707 + $0x4c] sm:$0xf] %vm7187, %v7504
        %v7756 = vld [vmem:[%s7707 + $0x50] sm:$0x1]
        %v7757 = vsel %vm7197, %v7505, %v7756
        %7758 = vst [vmem:[%s7707 + $0x50] sm:$0x1] %v7757
        %v7759 = vld [vmem:[%s7707 + $0x54] sm:$0xf]
        %v7760 = vsel %vm7709, %v7512, %v7759
        %7761 = vst [vmem:[%s7707 + $0x54] sm:$0xf] %v7760
        %7762 = vst.msk [vmem:[%s7707 + $0x58] sm:$0xf] %vm7187, %v7521
        %v7763 = vld [vmem:[%s7707 + $0x5c] sm:$0x1]
        %v7764 = vsel %vm7197, %v7522, %v7763
        %7765 = vst [vmem:[%s7707 + $0x5c] sm:$0x1] %v7764
        %v7766 = vld [vmem:[%s7707 + $0x60] sm:$0xf]
        %v7767 = vsel %vm7709, %v7529, %v7766
        %7768 = vst [vmem:[%s7707 + $0x60] sm:$0xf] %v7767
        %7769 = vst.msk [vmem:[%s7707 + $0x64] sm:$0xf] %vm7187, %v7538
        %v7770 = vld [vmem:[%s7707 + $0x68] sm:$0x1]
        %v7771 = vsel %vm7197, %v7539, %v7770
        %7772 = vst [vmem:[%s7707 + $0x68] sm:$0x1] %v7771
        %v7773 = vld [vmem:[%s7707 + $0x6c] sm:$0xf]
        %v7774 = vsel %vm7709, %v7546, %v7773
        %7775 = vst [vmem:[%s7707 + $0x6c] sm:$0xf] %v7774
        %7776 = vst.msk [vmem:[%s7707 + $0x70] sm:$0xf] %vm7187, %v7555
        %v7777 = vld [vmem:[%s7707 + $0x74] sm:$0x1]
        %v7778 = vsel %vm7197, %v7556, %v7777
        %7779 = vst [vmem:[%s7707 + $0x74] sm:$0x1] %v7778
        %v7780 = vld [vmem:[%s7707 + $0x78] sm:$0xf]
        %v7781 = vsel %vm7709, %v7563, %v7780
        %7782 = vst [vmem:[%s7707 + $0x78] sm:$0xf] %v7781
        %7783 = vst.msk [vmem:[%s7707 + $0x7c] sm:$0xf] %vm7187, %v7572
        %v7784 = vld [vmem:[%s7707 + $0x80] sm:$0x1]
        %v7785 = vsel %vm7197, %v7573, %v7784
        %7786 = vst [vmem:[%s7707 + $0x80] sm:$0x1] %v7785
        %v7787 = vld [vmem:[%s7707 + $0x84] sm:$0xf]
        %v7788 = vsel %vm7709, %v7580, %v7787
        %7789 = vst [vmem:[%s7707 + $0x84] sm:$0xf] %v7788
        %7790 = vst.msk [vmem:[%s7707 + $0x88] sm:$0xf] %vm7187, %v7589
        %v7791 = vld [vmem:[%s7707 + $0x8c] sm:$0x1]
        %v7792 = vsel %vm7197, %v7590, %v7791
        %7793 = vst [vmem:[%s7707 + $0x8c] sm:$0x1] %v7792
        %v7794 = vld [vmem:[%s7707 + $0x90] sm:$0xf]
        %v7795 = vsel %vm7709, %v7597, %v7794
        %7796 = vst [vmem:[%s7707 + $0x90] sm:$0xf] %v7795
        %7797 = vst.msk [vmem:[%s7707 + $0x94] sm:$0xf] %vm7187, %v7606
        %v7798 = vld [vmem:[%s7707 + $0x98] sm:$0x1]
        %v7799 = vsel %vm7197, %v7607, %v7798
        %7800 = vst [vmem:[%s7707 + $0x98] sm:$0x1] %v7799
        %v7801 = vld [vmem:[%s7707 + $0x9c] sm:$0xf]
        %v7802 = vsel %vm7709, %v7614, %v7801
        %7803 = vst [vmem:[%s7707 + $0x9c] sm:$0xf] %v7802
        %7804 = vst.msk [vmem:[%s7707 + $0xa0] sm:$0xf] %vm7187, %v7623
        %v7805 = vld [vmem:[%s7707 + $0xa4] sm:$0x1]
        %v7806 = vsel %vm7197, %v7624, %v7805
        %7807 = vst [vmem:[%s7707 + $0xa4] sm:$0x1] %v7806
        %v7808 = vld [vmem:[%s7707 + $0xa8] sm:$0xf]
        %v7809 = vsel %vm7709, %v7631, %v7808
        %7810 = vst [vmem:[%s7707 + $0xa8] sm:$0xf] %v7809
        %7811 = vst.msk [vmem:[%s7707 + $0xac] sm:$0xf] %vm7187, %v7640
        %v7812 = vld [vmem:[%s7707 + $0xb0] sm:$0x1]
        %v7813 = vsel %vm7197, %v7641, %v7812
        %7814 = vst [vmem:[%s7707 + $0xb0] sm:$0x1] %v7813
        %v7815 = vld [vmem:[%s7707 + $0xb4] sm:$0xf]
        %v7816 = vsel %vm7709, %v7648, %v7815
        %7817 = vst [vmem:[%s7707 + $0xb4] sm:$0xf] %v7816
        %7818 = vst.msk [vmem:[%s7707 + $0xb8] sm:$0xf] %vm7187, %v7657
        %v7819 = vld [vmem:[%s7707 + $0xbc] sm:$0x1]
        %v7820 = vsel %vm7197, %v7658, %v7819
        %7821 = vst [vmem:[%s7707 + $0xbc] sm:$0x1] %v7820
        %v7822 = vld [vmem:[#allocation3] sm:$0xf]
        %v7823 = vld [vmem:[#allocation3 + $0x4] sm:$0xf]
        %v7824 = vld [vmem:[#allocation3 + $0xc] sm:$0xf]
        %v7825 = vld [vmem:[#allocation3 + $0x10] sm:$0xf]
        %v7826 = vld [vmem:[#allocation3 + $0x18] sm:$0xf]
        %v7827 = vld [vmem:[#allocation3 + $0x1c] sm:$0xf]
        %v7828 = vld [vmem:[#allocation3 + $0x24] sm:$0xf]
        %v7829 = vld [vmem:[#allocation3 + $0x28] sm:$0xf]
        %v7830 = vld [vmem:[#allocation3 + $0x30] sm:$0xf]
        %v7831 = vld [vmem:[#allocation3 + $0x34] sm:$0xf]
        %v7832 = vld [vmem:[#allocation3 + $0x3c] sm:$0xf]
        %v7833 = vld [vmem:[#allocation3 + $0x40] sm:$0xf]
        %v7834 = vld [vmem:[#allocation3 + $0x48] sm:$0xf]
        %v7835 = vld [vmem:[#allocation3 + $0x4c] sm:$0xf]
        %v7836 = vld [vmem:[#allocation3 + $0x54] sm:$0xf]
        %v7837 = vld [vmem:[#allocation3 + $0x58] sm:$0xf]
        %v7838 = vld [vmem:[#allocation3 + $0x60] sm:$0xf]
        %v7839 = vld [vmem:[#allocation3 + $0x64] sm:$0xf]
        %v7840 = vld [vmem:[#allocation3 + $0x6c] sm:$0xf]
        %v7841 = vld [vmem:[#allocation3 + $0x70] sm:$0xf]
        %v7842 = vld [vmem:[#allocation3 + $0x78] sm:$0xf]
        %v7843 = vld [vmem:[#allocation3 + $0x7c] sm:$0xf]
        %v7844 = vld [vmem:[#allocation3 + $0x84] sm:$0xf]
        %v7845 = vld [vmem:[#allocation3 + $0x88] sm:$0xf]
        %v7846 = vld [vmem:[#allocation3 + $0x90] sm:$0xf]
        %v7847 = vld [vmem:[#allocation3 + $0x94] sm:$0xf]
        %v7848 = vld [vmem:[#allocation3 + $0x9c] sm:$0xf]
        %v7849 = vld [vmem:[#allocation3 + $0xa0] sm:$0xf]
        %v7850 = vld [vmem:[#allocation3 + $0xa8] sm:$0xf]
        %v7851 = vld [vmem:[#allocation3 + $0xac] sm:$0xf]
        %v7852 = vld [vmem:[#allocation3 + $0xb4] sm:$0xf]
        %v7853 = vld [vmem:[#allocation3 + $0xb8] sm:$0xf]
        %v7854 = vld [vmem:[%s7] sm:$0xf]
        %v7855 = vld [vmem:[%s7 + $0x4] sm:$0xf]
        %v7856 = vld [vmem:[%s7 + $0x8] sm:$0xf]
        %v7857 = vld [vmem:[%s7 + $0xc] sm:$0xf]
        %v7858 = vld [vmem:[#allocation3 + $0x8] sm:$0x1]
        %v7859 = vld [vmem:[#allocation3 + $0x14] sm:$0x1]
        %v7860 = vld [vmem:[#allocation3 + $0x20] sm:$0x1]
        %v7861 = vld [vmem:[#allocation3 + $0x2c] sm:$0x1]
        %v7862 = vld [vmem:[#allocation3 + $0x38] sm:$0x1]
        %v7863 = vld [vmem:[#allocation3 + $0x44] sm:$0x1]
        %v7864 = vld [vmem:[#allocation3 + $0x50] sm:$0x1]
        %v7865 = vld [vmem:[#allocation3 + $0x5c] sm:$0x1]
        %v7866 = vld [vmem:[#allocation3 + $0x68] sm:$0x1]
        %v7867 = vld [vmem:[#allocation3 + $0x74] sm:$0x1]
        %v7868 = vld [vmem:[#allocation3 + $0x80] sm:$0x1]
        %v7869 = vld [vmem:[#allocation3 + $0x8c] sm:$0x1]
        %v7870 = vld [vmem:[#allocation3 + $0x98] sm:$0x1]
        %v7871 = vld [vmem:[#allocation3 + $0xa4] sm:$0x1]
        %v7872 = vld [vmem:[#allocation3 + $0xb0] sm:$0x1]
        %v7873 = vld [vmem:[#allocation3 + $0xbc] sm:$0x1]
        %v7875 = vshrl.u32 %v7822, 16
        %v7877 = vrot.slane %v7875, 4
        %v7878 = vshll.u32 %v7822, 16
        %v7880 = vrot.slane %v7878, 5
        %v7881 = vor.u32 %v7877, %v7880
        %v7882 = vrot.slane %v7881, 4
        %v7884 = vshll.u32 %v7823, 16
        %v7886 = vrot.slane %v7884, 5
        %v7887 = vsel %vm1098, %v7882, %v7886
        %v7888 = vshrl.u32 %v7823, 16
        %v7890 = vrot.slane %v7888, 4
        %v7891 = vor.u32 %v7890, %v7886
        %v7892 = vrot.slane %v7891, 4
        %v7894 = vshll.u32 %v7858, 16
        %v7896 = vrot.slane %v7894, 5
        %v7897 = vsel %vm1098, %v7892, %v7896
        %v7899 = vshrl.u32 %v7824, 16
        %v7901 = vrot.slane %v7899, 4
        %v7902 = vshll.u32 %v7824, 16
        %v7904 = vrot.slane %v7902, 5
        %v7905 = vor.u32 %v7901, %v7904
        %v7906 = vrot.slane %v7905, 4
        %v7908 = vshll.u32 %v7825, 16
        %v7910 = vrot.slane %v7908, 5
        %v7911 = vsel %vm1098, %v7906, %v7910
        %v7912 = vshrl.u32 %v7825, 16
        %v7914 = vrot.slane %v7912, 4
        %v7915 = vor.u32 %v7914, %v7910
        %v7916 = vrot.slane %v7915, 4
        %v7918 = vshll.u32 %v7859, 16
        %v7920 = vrot.slane %v7918, 5
        %v7921 = vsel %vm1098, %v7916, %v7920
        %v7923 = vshrl.u32 %v7826, 16
        %v7925 = vrot.slane %v7923, 4
        %v7926 = vshll.u32 %v7826, 16
        %v7928 = vrot.slane %v7926, 5
        %v7929 = vor.u32 %v7925, %v7928
        %v7930 = vrot.slane %v7929, 4
        %v7932 = vshll.u32 %v7827, 16
        %v7934 = vrot.slane %v7932, 5
        %v7935 = vsel %vm1098, %v7930, %v7934
        %v7936 = vshrl.u32 %v7827, 16
        %v7938 = vrot.slane %v7936, 4
        %v7939 = vor.u32 %v7938, %v7934
        %v7940 = vrot.slane %v7939, 4
        %v7942 = vshll.u32 %v7860, 16
        %v7944 = vrot.slane %v7942, 5
        %v7945 = vsel %vm1098, %v7940, %v7944
        %v7947 = vshrl.u32 %v7828, 16
        %v7949 = vrot.slane %v7947, 4
        %v7950 = vshll.u32 %v7828, 16
        %v7952 = vrot.slane %v7950, 5
        %v7953 = vor.u32 %v7949, %v7952
        %v7954 = vrot.slane %v7953, 4
        %v7956 = vshll.u32 %v7829, 16
        %v7958 = vrot.slane %v7956, 5
        %v7959 = vsel %vm1098, %v7954, %v7958
        %v7960 = vshrl.u32 %v7829, 16
        %v7962 = vrot.slane %v7960, 4
        %v7963 = vor.u32 %v7962, %v7958
        %v7964 = vrot.slane %v7963, 4
        %v7966 = vshll.u32 %v7861, 16
        %v7968 = vrot.slane %v7966, 5
        %v7969 = vsel %vm1098, %v7964, %v7968
        %v7971 = vshrl.u32 %v7830, 16
        %v7973 = vrot.slane %v7971, 4
        %v7974 = vshll.u32 %v7830, 16
        %v7976 = vrot.slane %v7974, 5
        %v7977 = vor.u32 %v7973, %v7976
        %v7978 = vrot.slane %v7977, 4
        %v7980 = vshll.u32 %v7831, 16
        %v7982 = vrot.slane %v7980, 5
        %v7983 = vsel %vm1098, %v7978, %v7982
        %v7984 = vshrl.u32 %v7831, 16
        %v7986 = vrot.slane %v7984, 4
        %v7987 = vor.u32 %v7986, %v7982
        %v7988 = vrot.slane %v7987, 4
        %v7990 = vshll.u32 %v7862, 16
        %v7992 = vrot.slane %v7990, 5
        %v7993 = vsel %vm1098, %v7988, %v7992
        %v7995 = vshrl.u32 %v7832, 16
        %v7997 = vrot.slane %v7995, 4
        %v7998 = vshll.u32 %v7832, 16
        %v8000 = vrot.slane %v7998, 5
        %v8001 = vor.u32 %v7997, %v8000
        %v8002 = vrot.slane %v8001, 4
        %v8004 = vshll.u32 %v7833, 16
        %v8006 = vrot.slane %v8004, 5
        %v8007 = vsel %vm1098, %v8002, %v8006
        %v8008 = vshrl.u32 %v7833, 16
        %v8010 = vrot.slane %v8008, 4
        %v8011 = vor.u32 %v8010, %v8006
        %v8012 = vrot.slane %v8011, 4
        %v8014 = vshll.u32 %v7863, 16
        %v8016 = vrot.slane %v8014, 5
        %v8017 = vsel %vm1098, %v8012, %v8016
        %v8019 = vshrl.u32 %v7834, 16
        %v8021 = vrot.slane %v8019, 4
        %v8022 = vshll.u32 %v7834, 16
        %v8024 = vrot.slane %v8022, 5
        %v8025 = vor.u32 %v8021, %v8024
        %v8026 = vrot.slane %v8025, 4
        %v8028 = vshll.u32 %v7835, 16
        %v8030 = vrot.slane %v8028, 5
        %v8031 = vsel %vm1098, %v8026, %v8030
        %v8032 = vshrl.u32 %v7835, 16
        %v8034 = vrot.slane %v8032, 4
        %v8035 = vor.u32 %v8034, %v8030
        %v8036 = vrot.slane %v8035, 4
        %v8038 = vshll.u32 %v7864, 16
        %v8040 = vrot.slane %v8038, 5
        %v8041 = vsel %vm1098, %v8036, %v8040
        %v8043 = vshrl.u32 %v7836, 16
        %v8045 = vrot.slane %v8043, 4
        %v8046 = vshll.u32 %v7836, 16
        %v8048 = vrot.slane %v8046, 5
        %v8049 = vor.u32 %v8045, %v8048
        %v8050 = vrot.slane %v8049, 4
        %v8052 = vshll.u32 %v7837, 16
        %v8054 = vrot.slane %v8052, 5
        %v8055 = vsel %vm1098, %v8050, %v8054
        %v8056 = vshrl.u32 %v7837, 16
        %v8058 = vrot.slane %v8056, 4
        %v8059 = vor.u32 %v8058, %v8054
        %v8060 = vrot.slane %v8059, 4
        %v8062 = vshll.u32 %v7865, 16
        %v8064 = vrot.slane %v8062, 5
        %v8065 = vsel %vm1098, %v8060, %v8064
        %v8067 = vshrl.u32 %v7838, 16
        %v8069 = vrot.slane %v8067, 4
        %v8070 = vshll.u32 %v7838, 16
        %v8072 = vrot.slane %v8070, 5
        %v8073 = vor.u32 %v8069, %v8072
        %v8074 = vrot.slane %v8073, 4
        %v8076 = vshll.u32 %v7839, 16
        %v8078 = vrot.slane %v8076, 5
        %v8079 = vsel %vm1098, %v8074, %v8078
        %v8080 = vshrl.u32 %v7839, 16
        %v8082 = vrot.slane %v8080, 4
        %v8083 = vor.u32 %v8082, %v8078
        %v8084 = vrot.slane %v8083, 4
        %v8086 = vshll.u32 %v7866, 16
        %v8088 = vrot.slane %v8086, 5
        %v8089 = vsel %vm1098, %v8084, %v8088
        %v8091 = vshrl.u32 %v7840, 16
        %v8093 = vrot.slane %v8091, 4
        %v8094 = vshll.u32 %v7840, 16
        %v8096 = vrot.slane %v8094, 5
        %v8097 = vor.u32 %v8093, %v8096
        %v8098 = vrot.slane %v8097, 4
        %v8100 = vshll.u32 %v7841, 16
        %v8102 = vrot.slane %v8100, 5
        %v8103 = vsel %vm1098, %v8098, %v8102
        %v8104 = vshrl.u32 %v7841, 16
        %v8106 = vrot.slane %v8104, 4
        %v8107 = vor.u32 %v8106, %v8102
        %v8108 = vrot.slane %v8107, 4
        %v8110 = vshll.u32 %v7867, 16
        %v8112 = vrot.slane %v8110, 5
        %v8113 = vsel %vm1098, %v8108, %v8112
        %v8115 = vshrl.u32 %v7842, 16
        %v8117 = vrot.slane %v8115, 4
        %v8118 = vshll.u32 %v7842, 16
        %v8120 = vrot.slane %v8118, 5
        %v8121 = vor.u32 %v8117, %v8120
        %v8122 = vrot.slane %v8121, 4
        %v8124 = vshll.u32 %v7843, 16
        %v8126 = vrot.slane %v8124, 5
        %v8127 = vsel %vm1098, %v8122, %v8126
        %v8128 = vshrl.u32 %v7843, 16
        %v8130 = vrot.slane %v8128, 4
        %v8131 = vor.u32 %v8130, %v8126
        %v8132 = vrot.slane %v8131, 4
        %v8134 = vshll.u32 %v7868, 16
        %v8136 = vrot.slane %v8134, 5
        %v8137 = vsel %vm1098, %v8132, %v8136
        %v8139 = vshrl.u32 %v7844, 16
        %v8141 = vrot.slane %v8139, 4
        %v8142 = vshll.u32 %v7844, 16
        %v8144 = vrot.slane %v8142, 5
        %v8145 = vor.u32 %v8141, %v8144
        %v8146 = vrot.slane %v8145, 4
        %v8148 = vshll.u32 %v7845, 16
        %v8150 = vrot.slane %v8148, 5
        %v8151 = vsel %vm1098, %v8146, %v8150
        %v8152 = vshrl.u32 %v7845, 16
        %v8154 = vrot.slane %v8152, 4
        %v8155 = vor.u32 %v8154, %v8150
        %v8156 = vrot.slane %v8155, 4
        %v8158 = vshll.u32 %v7869, 16
        %v8160 = vrot.slane %v8158, 5
        %v8161 = vsel %vm1098, %v8156, %v8160
        %v8163 = vshrl.u32 %v7846, 16
        %v8165 = vrot.slane %v8163, 4
        %v8166 = vshll.u32 %v7846, 16
        %v8168 = vrot.slane %v8166, 5
        %v8169 = vor.u32 %v8165, %v8168
        %v8170 = vrot.slane %v8169, 4
        %v8172 = vshll.u32 %v7847, 16
        %v8174 = vrot.slane %v8172, 5
        %v8175 = vsel %vm1098, %v8170, %v8174
        %v8176 = vshrl.u32 %v7847, 16
        %v8178 = vrot.slane %v8176, 4
        %v8179 = vor.u32 %v8178, %v8174
        %v8180 = vrot.slane %v8179, 4
        %v8182 = vshll.u32 %v7870, 16
        %v8184 = vrot.slane %v8182, 5
        %v8185 = vsel %vm1098, %v8180, %v8184
        %v8187 = vshrl.u32 %v7848, 16
        %v8189 = vrot.slane %v8187, 4
        %v8190 = vshll.u32 %v7848, 16
        %v8192 = vrot.slane %v8190, 5
        %v8193 = vor.u32 %v8189, %v8192
        %v8194 = vrot.slane %v8193, 4
        %v8196 = vshll.u32 %v7849, 16
        %v8198 = vrot.slane %v8196, 5
        %v8199 = vsel %vm1098, %v8194, %v8198
        %v8200 = vshrl.u32 %v7849, 16
        %v8202 = vrot.slane %v8200, 4
        %v8203 = vor.u32 %v8202, %v8198
        %v8204 = vrot.slane %v8203, 4
        %v8206 = vshll.u32 %v7871, 16
        %v8208 = vrot.slane %v8206, 5
        %v8209 = vsel %vm1098, %v8204, %v8208
        %v8211 = vshrl.u32 %v7850, 16
        %v8213 = vrot.slane %v8211, 4
        %v8214 = vshll.u32 %v7850, 16
        %v8216 = vrot.slane %v8214, 5
        %v8217 = vor.u32 %v8213, %v8216
        %v8218 = vrot.slane %v8217, 4
        %v8220 = vshll.u32 %v7851, 16
        %v8222 = vrot.slane %v8220, 5
        %v8223 = vsel %vm1098, %v8218, %v8222
        %v8224 = vshrl.u32 %v7851, 16
        %v8226 = vrot.slane %v8224, 4
        %v8227 = vor.u32 %v8226, %v8222
        %v8228 = vrot.slane %v8227, 4
        %v8230 = vshll.u32 %v7872, 16
        %v8232 = vrot.slane %v8230, 5
        %v8233 = vsel %vm1098, %v8228, %v8232
        %v8235 = vshrl.u32 %v7852, 16
        %v8237 = vrot.slane %v8235, 4
        %v8238 = vshll.u32 %v7852, 16
        %v8240 = vrot.slane %v8238, 5
        %v8241 = vor.u32 %v8237, %v8240
        %v8242 = vrot.slane %v8241, 4
        %v8244 = vshll.u32 %v7853, 16
        %v8246 = vrot.slane %v8244, 5
        %v8247 = vsel %vm1098, %v8242, %v8246
        %v8248 = vshrl.u32 %v7853, 16
        %v8250 = vrot.slane %v8248, 4
        %v8251 = vor.u32 %v8250, %v8246
        %v8252 = vrot.slane %v8251, 4
        %v8254 = vshll.u32 %v7873, 16
        %v8256 = vrot.slane %v8254, 5
        %v8257 = vsel %vm1098, %v8252, %v8256
        %s8258 = scalar_lea.vmem %s7, 16
        %v8259 = vld [vmem:[%s8258] sm:$0xf]
        %v8260 = vld [vmem:[%s8258 + $0x4] sm:$0xf]
        %v8261 = vld [vmem:[%s8258 + $0x8] sm:$0xf]
        %v8262 = vld [vmem:[%s8258 + $0xc] sm:$0xf]
        %v8267 = vunpack.c.l.b16 %v8259
        %v8268 = vunpack.c.l.b16 %v8260
        %v8269 = vunpack.c.l.b16 %v8261
        %v8270 = vunpack.c.l.b16 %v8262
        %v8271 = vpack.c.b16 %v8268, %v8267
        %v8272 = vpack.c.b16 %v8270, %v8269
        %v8273 = vunpack.c.l.b16 %v7887
        %v8274 = vunpack.c.l.b16 %v7897
        %v8275 = vunpack.c.l.b16 %v7911
        %v8276 = vunpack.c.l.b16 %v7921
        %v8277 = vunpack.c.l.b16 %v7935
        %v8278 = vunpack.c.l.b16 %v7945
        %v8279 = vunpack.c.l.b16 %v7959
        %v8280 = vunpack.c.l.b16 %v7969
        %v8281 = vunpack.c.l.b16 %v7983
        %v8282 = vunpack.c.l.b16 %v7993
        %v8283 = vunpack.c.l.b16 %v8007
        %v8284 = vunpack.c.l.b16 %v8017
        %v8285 = vunpack.c.l.b16 %v8031
        %v8286 = vunpack.c.l.b16 %v8041
        %v8287 = vunpack.c.l.b16 %v8055
        %v8288 = vunpack.c.l.b16 %v8065
        %v8289 = vunpack.c.l.b16 %v8079
        %v8290 = vunpack.c.l.b16 %v8089
        %v8291 = vunpack.c.l.b16 %v8103
        %v8292 = vunpack.c.l.b16 %v8113
        %v8293 = vunpack.c.l.b16 %v8127
        %v8294 = vunpack.c.l.b16 %v8137
        %v8295 = vunpack.c.l.b16 %v8151
        %v8296 = vunpack.c.l.b16 %v8161
        %v8297 = vunpack.c.l.b16 %v8175
        %v8298 = vunpack.c.l.b16 %v8185
        %v8299 = vunpack.c.l.b16 %v8199
        %v8300 = vunpack.c.l.b16 %v8209
        %v8301 = vunpack.c.l.b16 %v8223
        %v8302 = vunpack.c.l.b16 %v8233
        %v8303 = vunpack.c.l.b16 %v8247
        %v8304 = vunpack.c.l.b16 %v8257
        %v8305 = vpack.c.b16 %v8274, %v8273
        %v8306 = vpack.c.b16 %v8276, %v8275
        %v8307 = vpack.c.b16 %v8278, %v8277
        %v8308 = vpack.c.b16 %v8280, %v8279
        %v8309 = vpack.c.b16 %v8282, %v8281
        %v8310 = vpack.c.b16 %v8284, %v8283
        %v8311 = vpack.c.b16 %v8286, %v8285
        %v8312 = vpack.c.b16 %v8288, %v8287
        %v8313 = vpack.c.b16 %v8290, %v8289
        %v8314 = vpack.c.b16 %v8292, %v8291
        %v8315 = vpack.c.b16 %v8294, %v8293
        %v8316 = vpack.c.b16 %v8296, %v8295
        %v8317 = vpack.c.b16 %v8298, %v8297
        %v8318 = vpack.c.b16 %v8300, %v8299
        %v8319 = vpack.c.b16 %v8302, %v8301
        %v8320 = vpack.c.b16 %v8304, %v8303
        %v8322 = vsel %vm5788, %v8271, 0
        %v8325 = vsel %vm5788, %v8272, 0
        %v8328 = vsel %vm5788, %v8305, 0
        %v8331 = vsel %vm5788, %v8306, 0
        %v8334 = vsel %vm5788, %v8307, 0
        %v8337 = vsel %vm5788, %v8308, 0
        %v8340 = vsel %vm5788, %v8309, 0
        %v8343 = vsel %vm5788, %v8310, 0
        %v8346 = vsel %vm5788, %v8311, 0
        %v8349 = vsel %vm5788, %v8312, 0
        %v8352 = vsel %vm5788, %v8313, 0
        %v8355 = vsel %vm5788, %v8314, 0
        %v8358 = vsel %vm5788, %v8315, 0
        %v8361 = vsel %vm5788, %v8316, 0
        %v8364 = vsel %vm5788, %v8317, 0
        %v8367 = vsel %vm5788, %v8318, 0
        %v8370 = vsel %vm5788, %v8319, 0
        %v8373 = vsel %vm5788, %v8320, 0
        %8375 = vmatprep.subr.bf16.mxu0 0
        %8376 = vmatpush1.bf16.xpose.msra.mxu0 %v8328
        %8377 = vmatprep.subr.bf16.mxu0 0
        %8378 = vmatpush1.bf16.xpose.msra.mxu0 %v8331
        %8379 = vmatprep.subr.bf16.mxu0 0
        %8380 = vmatpush1.bf16.xpose.msra.mxu0 %v8334
        %8381 = vmatprep.subr.bf16.mxu0 0
        %8382 = vmatpush1.bf16.xpose.msra.mxu0 %v8337
        %8383 = vmatprep.subr.bf16.mxu0 0
        %8384 = vmatpush1.bf16.xpose.msra.mxu0 %v8340
        %8385 = vmatprep.subr.bf16.mxu0 0
        %8386 = vmatpush1.bf16.xpose.msra.mxu0 %v8343
        %8387 = vmatprep.subr.bf16.mxu0 0
        %8388 = vmatpush1.bf16.xpose.msra.mxu0 %v8346
        %8389 = vmatprep.subr.bf16.mxu0 0
        %8390 = vmatpush1.bf16.xpose.msra.mxu0 %v8349
        %8391 = vmatprep.subr.bf16.mxu0 0
        %8392 = vmatpush1.bf16.xpose.msra.mxu0 %v8352
        %8393 = vmatprep.subr.bf16.mxu0 0
        %8394 = vmatpush1.bf16.xpose.msra.mxu0 %v8355
        %8395 = vmatprep.subr.bf16.mxu0 0
        %8396 = vmatpush1.bf16.xpose.msra.mxu0 %v8358
        %8397 = vmatprep.subr.bf16.mxu0 0
        %8398 = vmatpush1.bf16.xpose.msra.mxu0 %v8361
        %8399 = vmatprep.subr.bf16.mxu0 0
        %8400 = vmatpush1.bf16.xpose.msra.mxu0 %v8364
        %8401 = vmatprep.subr.bf16.mxu0 0
        %8402 = vmatpush1.bf16.xpose.msra.mxu0 %v8367
        %8403 = vmatprep.subr.bf16.mxu0 0
        %8404 = vmatpush1.bf16.xpose.msra.mxu0 %v8370
        %8405 = vmatprep.subr.bf16.mxu0 0
        %8406 = vmatpush1.bf16.xpose.msra.mxu0 %v8373
        %8407 = vmatprep.mubr.bf16.mxu0 0
        %8408 = vmatmul.mubr.bf16.gmra.mrb[0].mxu0 %v8322
        %v8409 = vpop.f32.mrb[0].mxu0
        %v8410 = vadd.f32 0.0, %v8409
        %v8411 = vpop.f32.mrb[0].mxu0
        %v8412 = vadd.f32 0.0, %v8411
        %v8413 = vpop.f32.mrb[0].mxu0
        %v8414 = vadd.f32 0.0, %v8413
        %v8415 = vpop.f32.mrb[0].mxu0
        %v8416 = vadd.f32 0.0, %v8415
        %8417 = vmatprep.mubr.bf16.mxu0 0
        %8418 = vmatmul.mubr.bf16.gmra.mrb[0].mxu0 %v8325
        %v8419 = vpop.f32.mrb[0].mxu0
        %v8420 = vadd.f32 0.0, %v8419
        %v8421 = vpop.f32.mrb[0].mxu0
        %v8422 = vadd.f32 0.0, %v8421
        %v8423 = vpop.f32.mrb[0].mxu0
        %v8424 = vadd.f32 0.0, %v8423
        %v8425 = vpop.f32.mrb[0].mxu0
        %v8426 = vadd.f32 0.0, %v8425
        %8427 = vdwg.mxu0
        %v8432 = vunpack.c.l.b16 %v7854
        %v8433 = vunpack.c.l.b16 %v7855
        %v8434 = vunpack.c.l.b16 %v7856
        %v8435 = vunpack.c.l.b16 %v7857
        %v8436 = vpack.c.b16 %v8433, %v8432
        %v8437 = vpack.c.b16 %v8435, %v8434
        %v8470 = vunpack.c.l.b16 %v7822
        %v8471 = vunpack.c.l.b16 %v7823
        %v8472 = vunpack.c.l.b16 %v7824
        %v8473 = vunpack.c.l.b16 %v7825
        %v8474 = vunpack.c.l.b16 %v7826
        %v8475 = vunpack.c.l.b16 %v7827
        %v8476 = vunpack.c.l.b16 %v7828
        %v8477 = vunpack.c.l.b16 %v7829
        %v8478 = vunpack.c.l.b16 %v7830
        %v8479 = vunpack.c.l.b16 %v7831
        %v8480 = vunpack.c.l.b16 %v7832
        %v8481 = vunpack.c.l.b16 %v7833
        %v8482 = vunpack.c.l.b16 %v7834
        %v8483 = vunpack.c.l.b16 %v7835
        %v8484 = vunpack.c.l.b16 %v7836
        %v8485 = vunpack.c.l.b16 %v7837
        %v8486 = vunpack.c.l.b16 %v7838
        %v8487 = vunpack.c.l.b16 %v7839
        %v8488 = vunpack.c.l.b16 %v7840
        %v8489 = vunpack.c.l.b16 %v7841
        %v8490 = vunpack.c.l.b16 %v7842
        %v8491 = vunpack.c.l.b16 %v7843
        %v8492 = vunpack.c.l.b16 %v7844
        %v8493 = vunpack.c.l.b16 %v7845
        %v8494 = vunpack.c.l.b16 %v7846
        %v8495 = vunpack.c.l.b16 %v7847
        %v8496 = vunpack.c.l.b16 %v7848
        %v8497 = vunpack.c.l.b16 %v7849
        %v8498 = vunpack.c.l.b16 %v7850
        %v8499 = vunpack.c.l.b16 %v7851
        %v8500 = vunpack.c.l.b16 %v7852
        %v8501 = vunpack.c.l.b16 %v7853
        %v8502 = vpack.c.b16 %v8471, %v8470
        %v8503 = vpack.c.b16 %v8473, %v8472
        %v8504 = vpack.c.b16 %v8475, %v8474
        %v8505 = vpack.c.b16 %v8477, %v8476
        %v8506 = vpack.c.b16 %v8479, %v8478
        %v8507 = vpack.c.b16 %v8481, %v8480
        %v8508 = vpack.c.b16 %v8483, %v8482
        %v8509 = vpack.c.b16 %v8485, %v8484
        %v8510 = vpack.c.b16 %v8487, %v8486
        %v8511 = vpack.c.b16 %v8489, %v8488
        %v8512 = vpack.c.b16 %v8491, %v8490
        %v8513 = vpack.c.b16 %v8493, %v8492
        %v8514 = vpack.c.b16 %v8495, %v8494
        %v8515 = vpack.c.b16 %v8497, %v8496
        %v8516 = vpack.c.b16 %v8499, %v8498
        %v8517 = vpack.c.b16 %v8501, %v8500
        %v8519 = vsel %vm5788, %v8436, 0
        %v8522 = vsel %vm5788, %v8437, 0
        %v8525 = vsel %vm5788, %v8502, 0
        %v8528 = vsel %vm5788, %v8503, 0
        %v8531 = vsel %vm5788, %v8504, 0
        %v8534 = vsel %vm5788, %v8505, 0
        %v8537 = vsel %vm5788, %v8506, 0
        %v8540 = vsel %vm5788, %v8507, 0
        %v8543 = vsel %vm5788, %v8508, 0
        %v8546 = vsel %vm5788, %v8509, 0
        %v8549 = vsel %vm5788, %v8510, 0
        %v8552 = vsel %vm5788, %v8511, 0
        %v8555 = vsel %vm5788, %v8512, 0
        %v8558 = vsel %vm5788, %v8513, 0
        %v8561 = vsel %vm5788, %v8514, 0
        %v8564 = vsel %vm5788, %v8515, 0
        %v8567 = vsel %vm5788, %v8516, 0
        %v8570 = vsel %vm5788, %v8517, 0
        %8572 = vmatprep.subr.bf16.mxu0 0
        %8573 = vmatpush1.bf16.xpose.msra.mxu0 %v8525
        %8574 = vmatprep.subr.bf16.mxu0 0
        %8575 = vmatpush1.bf16.xpose.msra.mxu0 %v8528
        %8576 = vmatprep.subr.bf16.mxu0 0
        %8577 = vmatpush1.bf16.xpose.msra.mxu0 %v8531
        %8578 = vmatprep.subr.bf16.mxu0 0
        %8579 = vmatpush1.bf16.xpose.msra.mxu0 %v8534
        %8580 = vmatprep.subr.bf16.mxu0 0
        %8581 = vmatpush1.bf16.xpose.msra.mxu0 %v8537
        %8582 = vmatprep.subr.bf16.mxu0 0
        %8583 = vmatpush1.bf16.xpose.msra.mxu0 %v8540
        %8584 = vmatprep.subr.bf16.mxu0 0
        %8585 = vmatpush1.bf16.xpose.msra.mxu0 %v8543
        %8586 = vmatprep.subr.bf16.mxu0 0
        %8587 = vmatpush1.bf16.xpose.msra.mxu0 %v8546
        %8588 = vmatprep.subr.bf16.mxu0 0
        %8589 = vmatpush1.bf16.xpose.msra.mxu0 %v8549
        %8590 = vmatprep.subr.bf16.mxu0 0
        %8591 = vmatpush1.bf16.xpose.msra.mxu0 %v8552
        %8592 = vmatprep.subr.bf16.mxu0 0
        %8593 = vmatpush1.bf16.xpose.msra.mxu0 %v8555
        %8594 = vmatprep.subr.bf16.mxu0 0
        %8595 = vmatpush1.bf16.xpose.msra.mxu0 %v8558
        %8596 = vmatprep.subr.bf16.mxu0 0
        %8597 = vmatpush1.bf16.xpose.msra.mxu0 %v8561
        %8598 = vmatprep.subr.bf16.mxu0 0
        %8599 = vmatpush1.bf16.xpose.msra.mxu0 %v8564
        %8600 = vmatprep.subr.bf16.mxu0 0
        %8601 = vmatpush1.bf16.xpose.msra.mxu0 %v8567
        %8602 = vmatprep.subr.bf16.mxu0 0
        %8603 = vmatpush1.bf16.xpose.msra.mxu0 %v8570
        %8604 = vmatprep.mubr.bf16.mxu0 0
        %8605 = vmatmul.mubr.bf16.gmra.mrb[0].mxu0 %v8519
        %v8606 = vpop.f32.mrb[0].mxu0
        %v8607 = vadd.f32 %v8410, %v8606
        %v8608 = vpop.f32.mrb[0].mxu0
        %v8609 = vadd.f32 %v8412, %v8608
        %v8610 = vpop.f32.mrb[0].mxu0
        %v8611 = vadd.f32 %v8414, %v8610
        %v8612 = vpop.f32.mrb[0].mxu0
        %v8613 = vadd.f32 %v8416, %v8612
        %8614 = vmatprep.mubr.bf16.mxu0 0
        %8615 = vmatmul.mubr.bf16.gmra.mrb[0].mxu0 %v8522
        %v8616 = vpop.f32.mrb[0].mxu0
        %v8617 = vadd.f32 %v8420, %v8616
        %v8618 = vpop.f32.mrb[0].mxu0
        %v8619 = vadd.f32 %v8422, %v8618
        %v8620 = vpop.f32.mrb[0].mxu0
        %v8621 = vadd.f32 %v8424, %v8620
        %v8622 = vpop.f32.mrb[0].mxu0
        %v8623 = vadd.f32 %v8426, %v8622
        %8624 = vdwg.mxu0
        %v8625 = vld [vmem:[#allocation3] sm:$0xe]
        %v8626 = vld [vmem:[#allocation3 + $0xc] sm:$0xe]
        %v8627 = vld [vmem:[#allocation3 + $0x18] sm:$0xe]
        %v8628 = vld [vmem:[#allocation3 + $0x24] sm:$0xe]
        %v8629 = vld [vmem:[#allocation3 + $0x30] sm:$0xe]
        %v8630 = vld [vmem:[#allocation3 + $0x3c] sm:$0xe]
        %v8631 = vld [vmem:[#allocation3 + $0x48] sm:$0xe]
        %v8632 = vld [vmem:[#allocation3 + $0x54] sm:$0xe]
        %v8633 = vld [vmem:[#allocation3 + $0x60] sm:$0xe]
        %v8634 = vld [vmem:[#allocation3 + $0x6c] sm:$0xe]
        %v8635 = vld [vmem:[#allocation3 + $0x78] sm:$0xe]
        %v8636 = vld [vmem:[#allocation3 + $0x84] sm:$0xe]
        %v8637 = vld [vmem:[#allocation3 + $0x90] sm:$0xe]
        %v8638 = vld [vmem:[#allocation3 + $0x9c] sm:$0xe]
        %v8639 = vld [vmem:[#allocation3 + $0xa8] sm:$0xe]
        %v8640 = vld [vmem:[#allocation3 + $0xb4] sm:$0xe]
        %v8673 = vrot.slane %v8625, 5
        %v8674 = vrot.slane %v8673, 4
        %v8675 = vrot.slane %v7823, 5
        %v8676 = vsel %vm2089, %v8674, %v8675
        %v8677 = vrot.slane %v8675, 4
        %v8678 = vrot.slane %v7858, 5
        %v8679 = vsel %vm2089, %v8677, %v8678
        %v8680 = vrot.slane %v8626, 5
        %v8681 = vrot.slane %v8680, 4
        %v8682 = vrot.slane %v7825, 5
        %v8683 = vsel %vm2089, %v8681, %v8682
        %v8684 = vrot.slane %v8682, 4
        %v8685 = vrot.slane %v7859, 5
        %v8686 = vsel %vm2089, %v8684, %v8685
        %v8687 = vrot.slane %v8627, 5
        %v8688 = vrot.slane %v8687, 4
        %v8689 = vrot.slane %v7827, 5
        %v8690 = vsel %vm2089, %v8688, %v8689
        %v8691 = vrot.slane %v8689, 4
        %v8692 = vrot.slane %v7860, 5
        %v8693 = vsel %vm2089, %v8691, %v8692
        %v8694 = vrot.slane %v8628, 5
        %v8695 = vrot.slane %v8694, 4
        %v8696 = vrot.slane %v7829, 5
        %v8697 = vsel %vm2089, %v8695, %v8696
        %v8698 = vrot.slane %v8696, 4
        %v8699 = vrot.slane %v7861, 5
        %v8700 = vsel %vm2089, %v8698, %v8699
        %v8701 = vrot.slane %v8629, 5
        %v8702 = vrot.slane %v8701, 4
        %v8703 = vrot.slane %v7831, 5
        %v8704 = vsel %vm2089, %v8702, %v8703
        %v8705 = vrot.slane %v8703, 4
        %v8706 = vrot.slane %v7862, 5
        %v8707 = vsel %vm2089, %v8705, %v8706
        %v8708 = vrot.slane %v8630, 5
        %v8709 = vrot.slane %v8708, 4
        %v8710 = vrot.slane %v7833, 5
        %v8711 = vsel %vm2089, %v8709, %v8710
        %v8712 = vrot.slane %v8710, 4
        %v8713 = vrot.slane %v7863, 5
        %v8714 = vsel %vm2089, %v8712, %v8713
        %v8715 = vrot.slane %v8631, 5
        %v8716 = vrot.slane %v8715, 4
        %v8717 = vrot.slane %v7835, 5
        %v8718 = vsel %vm2089, %v8716, %v8717
        %v8719 = vrot.slane %v8717, 4
        %v8720 = vrot.slane %v7864, 5
        %v8721 = vsel %vm2089, %v8719, %v8720
        %v8722 = vrot.slane %v8632, 5
        %v8723 = vrot.slane %v8722, 4
        %v8724 = vrot.slane %v7837, 5
        %v8725 = vsel %vm2089, %v8723, %v8724
        %v8726 = vrot.slane %v8724, 4
        %v8727 = vrot.slane %v7865, 5
        %v8728 = vsel %vm2089, %v8726, %v8727
        %v8729 = vrot.slane %v8633, 5
        %v8730 = vrot.slane %v8729, 4
        %v8731 = vrot.slane %v7839, 5
        %v8732 = vsel %vm2089, %v8730, %v8731
        %v8733 = vrot.slane %v8731, 4
        %v8734 = vrot.slane %v7866, 5
        %v8735 = vsel %vm2089, %v8733, %v8734
        %v8736 = vrot.slane %v8634, 5
        %v8737 = vrot.slane %v8736, 4
        %v8738 = vrot.slane %v7841, 5
        %v8739 = vsel %vm2089, %v8737, %v8738
        %v8740 = vrot.slane %v8738, 4
        %v8741 = vrot.slane %v7867, 5
        %v8742 = vsel %vm2089, %v8740, %v8741
        %v8743 = vrot.slane %v8635, 5
        %v8744 = vrot.slane %v8743, 4
        %v8745 = vrot.slane %v7843, 5
        %v8746 = vsel %vm2089, %v8744, %v8745
        %v8747 = vrot.slane %v8745, 4
        %v8748 = vrot.slane %v7868, 5
        %v8749 = vsel %vm2089, %v8747, %v8748
        %v8750 = vrot.slane %v8636, 5
        %v8751 = vrot.slane %v8750, 4
        %v8752 = vrot.slane %v7845, 5
        %v8753 = vsel %vm2089, %v8751, %v8752
        %v8754 = vrot.slane %v8752, 4
        %v8755 = vrot.slane %v7869, 5
        %v8756 = vsel %vm2089, %v8754, %v8755
        %v8757 = vrot.slane %v8637, 5
        %v8758 = vrot.slane %v8757, 4
        %v8759 = vrot.slane %v7847, 5
        %v8760 = vsel %vm2089, %v8758, %v8759
        %v8761 = vrot.slane %v8759, 4
        %v8762 = vrot.slane %v7870, 5
        %v8763 = vsel %vm2089, %v8761, %v8762
        %v8764 = vrot.slane %v8638, 5
        %v8765 = vrot.slane %v8764, 4
        %v8766 = vrot.slane %v7849, 5
        %v8767 = vsel %vm2089, %v8765, %v8766
        %v8768 = vrot.slane %v8766, 4
        %v8769 = vrot.slane %v7871, 5
        %v8770 = vsel %vm2089, %v8768, %v8769
        %v8771 = vrot.slane %v8639, 5
        %v8772 = vrot.slane %v8771, 4
        %v8773 = vrot.slane %v7851, 5
        %v8774 = vsel %vm2089, %v8772, %v8773
        %v8775 = vrot.slane %v8773, 4
        %v8776 = vrot.slane %v7872, 5
        %v8777 = vsel %vm2089, %v8775, %v8776
        %v8778 = vrot.slane %v8640, 5
        %v8779 = vrot.slane %v8778, 4
        %v8780 = vrot.slane %v7853, 5
        %v8781 = vsel %vm2089, %v8779, %v8780
        %v8782 = vrot.slane %v8780, 4
        %v8783 = vrot.slane %v7873, 5
        %v8784 = vsel %vm2089, %v8782, %v8783
        %s8785 = scalar_lea.vmem %s7, 32
        %v8786 = vld [vmem:[%s8785] sm:$0xf]
        %v8787 = vld [vmem:[%s8785 + $0x4] sm:$0xf]
        %v8788 = vld [vmem:[%s8785 + $0x8] sm:$0xf]
        %v8789 = vld [vmem:[%s8785 + $0xc] sm:$0xf]
        %v8794 = vunpack.c.l.b16 %v8786
        %v8795 = vunpack.c.l.b16 %v8787
        %v8796 = vunpack.c.l.b16 %v8788
        %v8797 = vunpack.c.l.b16 %v8789
        %v8798 = vpack.c.b16 %v8795, %v8794
        %v8799 = vpack.c.b16 %v8797, %v8796
        %v8800 = vunpack.c.l.b16 %v8676
        %v8801 = vunpack.c.l.b16 %v8679
        %v8802 = vunpack.c.l.b16 %v8683
        %v8803 = vunpack.c.l.b16 %v8686
        %v8804 = vunpack.c.l.b16 %v8690
        %v8805 = vunpack.c.l.b16 %v8693
        %v8806 = vunpack.c.l.b16 %v8697
        %v8807 = vunpack.c.l.b16 %v8700
        %v8808 = vunpack.c.l.b16 %v8704
        %v8809 = vunpack.c.l.b16 %v8707
        %v8810 = vunpack.c.l.b16 %v8711
        %v8811 = vunpack.c.l.b16 %v8714
        %v8812 = vunpack.c.l.b16 %v8718
        %v8813 = vunpack.c.l.b16 %v8721
        %v8814 = vunpack.c.l.b16 %v8725
        %v8815 = vunpack.c.l.b16 %v8728
        %v8816 = vunpack.c.l.b16 %v8732
        %v8817 = vunpack.c.l.b16 %v8735
        %v8818 = vunpack.c.l.b16 %v8739
        %v8819 = vunpack.c.l.b16 %v8742
        %v8820 = vunpack.c.l.b16 %v8746
        %v8821 = vunpack.c.l.b16 %v8749
        %v8822 = vunpack.c.l.b16 %v8753
        %v8823 = vunpack.c.l.b16 %v8756
        %v8824 = vunpack.c.l.b16 %v8760
        %v8825 = vunpack.c.l.b16 %v8763
        %v8826 = vunpack.c.l.b16 %v8767
        %v8827 = vunpack.c.l.b16 %v8770
        %v8828 = vunpack.c.l.b16 %v8774
        %v8829 = vunpack.c.l.b16 %v8777
        %v8830 = vunpack.c.l.b16 %v8781
        %v8831 = vunpack.c.l.b16 %v8784
        %v8832 = vpack.c.b16 %v8801, %v8800
        %v8833 = vpack.c.b16 %v8803, %v8802
        %v8834 = vpack.c.b16 %v8805, %v8804
        %v8835 = vpack.c.b16 %v8807, %v8806
        %v8836 = vpack.c.b16 %v8809, %v8808
        %v8837 = vpack.c.b16 %v8811, %v8810
        %v8838 = vpack.c.b16 %v8813, %v8812
        %v8839 = vpack.c.b16 %v8815, %v8814
        %v8840 = vpack.c.b16 %v8817, %v8816
        %v8841 = vpack.c.b16 %v8819, %v8818
        %v8842 = vpack.c.b16 %v8821, %v8820
        %v8843 = vpack.c.b16 %v8823, %v8822
        %v8844 = vpack.c.b16 %v8825, %v8824
        %v8845 = vpack.c.b16 %v8827, %v8826
        %v8846 = vpack.c.b16 %v8829, %v8828
        %v8847 = vpack.c.b16 %v8831, %v8830
        %v8849 = vsel %vm5788, %v8798, 0
        %v8852 = vsel %vm5788, %v8799, 0
        %v8855 = vsel %vm5788, %v8832, 0
        %v8858 = vsel %vm5788, %v8833, 0
        %v8861 = vsel %vm5788, %v8834, 0
        %v8864 = vsel %vm5788, %v8835, 0
        %v8867 = vsel %vm5788, %v8836, 0
        %v8870 = vsel %vm5788, %v8837, 0
        %v8873 = vsel %vm5788, %v8838, 0
        %v8876 = vsel %vm5788, %v8839, 0
        %v8879 = vsel %vm5788, %v8840, 0
        %v8882 = vsel %vm5788, %v8841, 0
        %v8885 = vsel %vm5788, %v8842, 0
        %v8888 = vsel %vm5788, %v8843, 0
        %v8891 = vsel %vm5788, %v8844, 0
        %v8894 = vsel %vm5788, %v8845, 0
        %v8897 = vsel %vm5788, %v8846, 0
        %v8900 = vsel %vm5788, %v8847, 0
        %8902 = vmatprep.subr.bf16.mxu0 0
        %8903 = vmatpush1.bf16.xpose.msra.mxu0 %v8855
        %8904 = vmatprep.subr.bf16.mxu0 0
        %8905 = vmatpush1.bf16.xpose.msra.mxu0 %v8858
        %8906 = vmatprep.subr.bf16.mxu0 0
        %8907 = vmatpush1.bf16.xpose.msra.mxu0 %v8861
        %8908 = vmatprep.subr.bf16.mxu0 0
        %8909 = vmatpush1.bf16.xpose.msra.mxu0 %v8864
        %8910 = vmatprep.subr.bf16.mxu0 0
        %8911 = vmatpush1.bf16.xpose.msra.mxu0 %v8867
        %8912 = vmatprep.subr.bf16.mxu0 0
        %8913 = vmatpush1.bf16.xpose.msra.mxu0 %v8870
        %8914 = vmatprep.subr.bf16.mxu0 0
        %8915 = vmatpush1.bf16.xpose.msra.mxu0 %v8873
        %8916 = vmatprep.subr.bf16.mxu0 0
        %8917 = vmatpush1.bf16.xpose.msra.mxu0 %v8876
        %8918 = vmatprep.subr.bf16.mxu0 0
        %8919 = vmatpush1.bf16.xpose.msra.mxu0 %v8879
        %8920 = vmatprep.subr.bf16.mxu0 0
        %8921 = vmatpush1.bf16.xpose.msra.mxu0 %v8882
        %8922 = vmatprep.subr.bf16.mxu0 0
        %8923 = vmatpush1.bf16.xpose.msra.mxu0 %v8885
        %8924 = vmatprep.subr.bf16.mxu0 0
        %8925 = vmatpush1.bf16.xpose.msra.mxu0 %v8888
        %8926 = vmatprep.subr.bf16.mxu0 0
        %8927 = vmatpush1.bf16.xpose.msra.mxu0 %v8891
        %8928 = vmatprep.subr.bf16.mxu0 0
        %8929 = vmatpush1.bf16.xpose.msra.mxu0 %v8894
        %8930 = vmatprep.subr.bf16.mxu0 0
        %8931 = vmatpush1.bf16.xpose.msra.mxu0 %v8897
        %8932 = vmatprep.subr.bf16.mxu0 0
        %8933 = vmatpush1.bf16.xpose.msra.mxu0 %v8900
        %8934 = vmatprep.mubr.bf16.mxu0 0
        %8935 = vmatmul.mubr.bf16.gmra.mrb[0].mxu0 %v8849
        %v8936 = vpop.f32.mrb[0].mxu0
        %v8937 = vadd.f32 0.0, %v8936
        %v8938 = vpop.f32.mrb[0].mxu0
        %v8939 = vadd.f32 0.0, %v8938
        %v8940 = vpop.f32.mrb[0].mxu0
        %v8941 = vadd.f32 0.0, %v8940
        %v8942 = vpop.f32.mrb[0].mxu0
        %v8943 = vadd.f32 0.0, %v8942
        %8944 = vmatprep.mubr.bf16.mxu0 0
        %8945 = vmatmul.mubr.bf16.gmra.mrb[0].mxu0 %v8852
        %v8946 = vpop.f32.mrb[0].mxu0
        %v8947 = vadd.f32 0.0, %v8946
        %v8948 = vpop.f32.mrb[0].mxu0
        %v8949 = vadd.f32 0.0, %v8948
        %v8950 = vpop.f32.mrb[0].mxu0
        %v8951 = vadd.f32 0.0, %v8950
        %v8952 = vpop.f32.mrb[0].mxu0
        %v8953 = vadd.f32 0.0, %v8952
        %8954 = vdwg.mxu0
        %v8955 = vadd.f32 %v8607, %v8937
        %v8956 = vadd.f32 %v8609, %v8939
        %v8957 = vadd.f32 %v8611, %v8941
        %v8958 = vadd.f32 %v8613, %v8943
        %v8959 = vadd.f32 %v8617, %v8947
        %v8960 = vadd.f32 %v8619, %v8949
        %v8961 = vadd.f32 %v8621, %v8951
        %v8962 = vadd.f32 %v8623, %v8953
        %v8963 = vld [vmem:[%s7707] sm:$0xf]
        %v8964 = vld [vmem:[%s7707 + $0x4] sm:$0xf]
        %v8965 = vld [vmem:[%s7707 + $0xc] sm:$0xf]
        %v8966 = vld [vmem:[%s7707 + $0x10] sm:$0xf]
        %v8967 = vld [vmem:[%s7707 + $0x18] sm:$0xf]
        %v8968 = vld [vmem:[%s7707 + $0x1c] sm:$0xf]
        %v8969 = vld [vmem:[%s7707 + $0x24] sm:$0xf]
        %v8970 = vld [vmem:[%s7707 + $0x28] sm:$0xf]
        %v8971 = vld [vmem:[%s7707 + $0x30] sm:$0xf]
        %v8972 = vld [vmem:[%s7707 + $0x34] sm:$0xf]
        %v8973 = vld [vmem:[%s7707 + $0x3c] sm:$0xf]
        %v8974 = vld [vmem:[%s7707 + $0x40] sm:$0xf]
        %v8975 = vld [vmem:[%s7707 + $0x48] sm:$0xf]
        %v8976 = vld [vmem:[%s7707 + $0x4c] sm:$0xf]
        %v8977 = vld [vmem:[%s7707 + $0x54] sm:$0xf]
        %v8978 = vld [vmem:[%s7707 + $0x58] sm:$0xf]
        %v8979 = vld [vmem:[%s7707 + $0x60] sm:$0xf]
        %v8980 = vld [vmem:[%s7707 + $0x64] sm:$0xf]
        %v8981 = vld [vmem:[%s7707 + $0x6c] sm:$0xf]
        %v8982 = vld [vmem:[%s7707 + $0x70] sm:$0xf]
        %v8983 = vld [vmem:[%s7707 + $0x78] sm:$0xf]
        %v8984 = vld [vmem:[%s7707 + $0x7c] sm:$0xf]
        %v8985 = vld [vmem:[%s7707 + $0x84] sm:$0xf]
        %v8986 = vld [vmem:[%s7707 + $0x88] sm:$0xf]
        %v8987 = vld [vmem:[%s7707 + $0x90] sm:$0xf]
        %v8988 = vld [vmem:[%s7707 + $0x94] sm:$0xf]
        %v8989 = vld [vmem:[%s7707 + $0x9c] sm:$0xf]
        %v8990 = vld [vmem:[%s7707 + $0xa0] sm:$0xf]
        %v8991 = vld [vmem:[%s7707 + $0xa8] sm:$0xf]
        %v8992 = vld [vmem:[%s7707 + $0xac] sm:$0xf]
        %v8993 = vld [vmem:[%s7707 + $0xb4] sm:$0xf]
        %v8994 = vld [vmem:[%s7707 + $0xb8] sm:$0xf]
        %s8995 = scalar_lea.vmem %s7, 48
        %v8996 = vld [vmem:[%s8995] sm:$0xf]
        %v8997 = vld [vmem:[%s8995 + $0x4] sm:$0xf]
        %v8998 = vld [vmem:[%s8995 + $0x8] sm:$0xf]
        %v8999 = vld [vmem:[%s8995 + $0xc] sm:$0xf]
        %v9004 = vunpack.c.l.b16 %v8996
        %v9005 = vunpack.c.l.b16 %v8997
        %v9006 = vunpack.c.l.b16 %v8998
        %v9007 = vunpack.c.l.b16 %v8999
        %v9008 = vpack.c.b16 %v9005, %v9004
        %v9009 = vpack.c.b16 %v9007, %v9006
        %v9042 = vunpack.c.l.b16 %v8963
        %v9043 = vunpack.c.l.b16 %v8964
        %v9044 = vunpack.c.l.b16 %v8965
        %v9045 = vunpack.c.l.b16 %v8966
        %v9046 = vunpack.c.l.b16 %v8967
        %v9047 = vunpack.c.l.b16 %v8968
        %v9048 = vunpack.c.l.b16 %v8969
        %v9049 = vunpack.c.l.b16 %v8970
        %v9050 = vunpack.c.l.b16 %v8971
        %v9051 = vunpack.c.l.b16 %v8972
        %v9052 = vunpack.c.l.b16 %v8973
        %v9053 = vunpack.c.l.b16 %v8974
        %v9054 = vunpack.c.l.b16 %v8975
        %v9055 = vunpack.c.l.b16 %v8976
        %v9056 = vunpack.c.l.b16 %v8977
        %v9057 = vunpack.c.l.b16 %v8978
        %v9058 = vunpack.c.l.b16 %v8979
        %v9059 = vunpack.c.l.b16 %v8980
        %v9060 = vunpack.c.l.b16 %v8981
        %v9061 = vunpack.c.l.b16 %v8982
        %v9062 = vunpack.c.l.b16 %v8983
        %v9063 = vunpack.c.l.b16 %v8984
        %v9064 = vunpack.c.l.b16 %v8985
        %v9065 = vunpack.c.l.b16 %v8986
        %v9066 = vunpack.c.l.b16 %v8987
        %v9067 = vunpack.c.l.b16 %v8988
        %v9068 = vunpack.c.l.b16 %v8989
        %v9069 = vunpack.c.l.b16 %v8990
        %v9070 = vunpack.c.l.b16 %v8991
        %v9071 = vunpack.c.l.b16 %v8992
        %v9072 = vunpack.c.l.b16 %v8993
        %v9073 = vunpack.c.l.b16 %v8994
        %v9074 = vpack.c.b16 %v9043, %v9042
        %v9075 = vpack.c.b16 %v9045, %v9044
        %v9076 = vpack.c.b16 %v9047, %v9046
        %v9077 = vpack.c.b16 %v9049, %v9048
        %v9078 = vpack.c.b16 %v9051, %v9050
        %v9079 = vpack.c.b16 %v9053, %v9052
        %v9080 = vpack.c.b16 %v9055, %v9054
        %v9081 = vpack.c.b16 %v9057, %v9056
        %v9082 = vpack.c.b16 %v9059, %v9058
        %v9083 = vpack.c.b16 %v9061, %v9060
        %v9084 = vpack.c.b16 %v9063, %v9062
        %v9085 = vpack.c.b16 %v9065, %v9064
        %v9086 = vpack.c.b16 %v9067, %v9066
        %v9087 = vpack.c.b16 %v9069, %v9068
        %v9088 = vpack.c.b16 %v9071, %v9070
        %v9089 = vpack.c.b16 %v9073, %v9072
        %v9091 = vsel %vm5788, %v9008, 0
        %v9094 = vsel %vm5788, %v9009, 0
        %v9097 = vsel %vm5788, %v9074, 0
        %v9100 = vsel %vm5788, %v9075, 0
        %v9103 = vsel %vm5788, %v9076, 0
        %v9106 = vsel %vm5788, %v9077, 0
        %v9109 = vsel %vm5788, %v9078, 0
        %v9112 = vsel %vm5788, %v9079, 0
        %v9115 = vsel %vm5788, %v9080, 0
        %v9118 = vsel %vm5788, %v9081, 0
        %v9121 = vsel %vm5788, %v9082, 0
        %v9124 = vsel %vm5788, %v9083, 0
        %v9127 = vsel %vm5788, %v9084, 0
        %v9130 = vsel %vm5788, %v9085, 0
        %v9133 = vsel %vm5788, %v9086, 0
        %v9136 = vsel %vm5788, %v9087, 0
        %v9139 = vsel %vm5788, %v9088, 0
        %v9142 = vsel %vm5788, %v9089, 0
        %9144 = vmatprep.subr.bf16.mxu0 0
        %9145 = vmatpush1.bf16.xpose.msra.mxu0 %v9097
        %9146 = vmatprep.subr.bf16.mxu0 0
        %9147 = vmatpush1.bf16.xpose.msra.mxu0 %v9100
        %9148 = vmatprep.subr.bf16.mxu0 0
        %9149 = vmatpush1.bf16.xpose.msra.mxu0 %v9103
        %9150 = vmatprep.subr.bf16.mxu0 0
        %9151 = vmatpush1.bf16.xpose.msra.mxu0 %v9106
        %9152 = vmatprep.subr.bf16.mxu0 0
        %9153 = vmatpush1.bf16.xpose.msra.mxu0 %v9109
        %9154 = vmatprep.subr.bf16.mxu0 0
        %9155 = vmatpush1.bf16.xpose.msra.mxu0 %v9112
        %9156 = vmatprep.subr.bf16.mxu0 0
        %9157 = vmatpush1.bf16.xpose.msra.mxu0 %v9115
        %9158 = vmatprep.subr.bf16.mxu0 0
        %9159 = vmatpush1.bf16.xpose.msra.mxu0 %v9118
        %9160 = vmatprep.subr.bf16.mxu0 0
        %9161 = vmatpush1.bf16.xpose.msra.mxu0 %v9121
        %9162 = vmatprep.subr.bf16.mxu0 0
        %9163 = vmatpush1.bf16.xpose.msra.mxu0 %v9124
        %9164 = vmatprep.subr.bf16.mxu0 0
        %9165 = vmatpush1.bf16.xpose.msra.mxu0 %v9127
        %9166 = vmatprep.subr.bf16.mxu0 0
        %9167 = vmatpush1.bf16.xpose.msra.mxu0 %v9130
        %9168 = vmatprep.subr.bf16.mxu0 0
        %9169 = vmatpush1.bf16.xpose.msra.mxu0 %v9133
        %9170 = vmatprep.subr.bf16.mxu0 0
        %9171 = vmatpush1.bf16.xpose.msra.mxu0 %v9136
        %9172 = vmatprep.subr.bf16.mxu0 0
        %9173 = vmatpush1.bf16.xpose.msra.mxu0 %v9139
        %9174 = vmatprep.subr.bf16.mxu0 0
        %9175 = vmatpush1.bf16.xpose.msra.mxu0 %v9142
        %9176 = vmatprep.mubr.bf16.mxu0 0
        %9177 = vmatmul.mubr.bf16.gmra.mrb[0].mxu0 %v9091
        %v9178 = vpop.f32.mrb[0].mxu0
        %v9179 = vadd.f32 0.0, %v9178
        %v9180 = vpop.f32.mrb[0].mxu0
        %v9181 = vadd.f32 0.0, %v9180
        %v9182 = vpop.f32.mrb[0].mxu0
        %v9183 = vadd.f32 0.0, %v9182
        %v9184 = vpop.f32.mrb[0].mxu0
        %v9185 = vadd.f32 0.0, %v9184
        %9186 = vmatprep.mubr.bf16.mxu0 0
        %9187 = vmatmul.mubr.bf16.gmra.mrb[0].mxu0 %v9094
        %v9188 = vpop.f32.mrb[0].mxu0
        %v9189 = vadd.f32 0.0, %v9188
        %v9190 = vpop.f32.mrb[0].mxu0
        %v9191 = vadd.f32 0.0, %v9190
        %v9192 = vpop.f32.mrb[0].mxu0
        %v9193 = vadd.f32 0.0, %v9192
        %v9194 = vpop.f32.mrb[0].mxu0
        %v9195 = vadd.f32 0.0, %v9194
        %9196 = vdwg.mxu0
        %v9197 = vadd.f32 %v8955, %v9179
        %v9198 = vadd.f32 %v8956, %v9181
        %v9199 = vadd.f32 %v8957, %v9183
        %v9200 = vadd.f32 %v8958, %v9185
        %v9201 = vadd.f32 %v8959, %v9189
        %v9202 = vadd.f32 %v8960, %v9191
        %v9203 = vadd.f32 %v8961, %v9193
        %v9204 = vadd.f32 %v8962, %v9195
        %v9205 = vld [vmem:[%s7707] sm:$0xf]
        %v9206 = vld [vmem:[%s7707 + $0x4] sm:$0xf]
        %v9207 = vld [vmem:[%s7707 + $0x8] sm:$0x1]
        %v9208 = vld [vmem:[%s7707 + $0xc] sm:$0xf]
        %v9209 = vld [vmem:[%s7707 + $0x10] sm:$0xf]
        %v9210 = vld [vmem:[%s7707 + $0x14] sm:$0x1]
        %v9211 = vld [vmem:[%s7707 + $0x18] sm:$0xf]
        %v9212 = vld [vmem:[%s7707 + $0x1c] sm:$0xf]
        %v9213 = vld [vmem:[%s7707 + $0x20] sm:$0x1]
        %v9214 = vld [vmem:[%s7707 + $0x24] sm:$0xf]
        %v9215 = vld [vmem:[%s7707 + $0x28] sm:$0xf]
        %v9216 = vld [vmem:[%s7707 + $0x2c] sm:$0x1]
        %v9217 = vld [vmem:[%s7707 + $0x30] sm:$0xf]
        %v9218 = vld [vmem:[%s7707 + $0x34] sm:$0xf]
        %v9219 = vld [vmem:[%s7707 + $0x38] sm:$0x1]
        %v9220 = vld [vmem:[%s7707 + $0x3c] sm:$0xf]
        %v9221 = vld [vmem:[%s7707 + $0x40] sm:$0xf]
        %v9222 = vld [vmem:[%s7707 + $0x44] sm:$0x1]
        %v9223 = vld [vmem:[%s7707 + $0x48] sm:$0xf]
        %v9224 = vld [vmem:[%s7707 + $0x4c] sm:$0xf]
        %v9225 = vld [vmem:[%s7707 + $0x50] sm:$0x1]
        %v9226 = vld [vmem:[%s7707 + $0x54] sm:$0xf]
        %v9227 = vld [vmem:[%s7707 + $0x58] sm:$0xf]
        %v9228 = vld [vmem:[%s7707 + $0x5c] sm:$0x1]
        %v9229 = vld [vmem:[%s7707 + $0x60] sm:$0xf]
        %v9230 = vld [vmem:[%s7707 + $0x64] sm:$0xf]
        %v9231 = vld [vmem:[%s7707 + $0x68] sm:$0x1]
        %v9232 = vld [vmem:[%s7707 + $0x6c] sm:$0xf]
        %v9233 = vld [vmem:[%s7707 + $0x70] sm:$0xf]
        %v9234 = vld [vmem:[%s7707 + $0x74] sm:$0x1]
        %v9235 = vld [vmem:[%s7707 + $0x78] sm:$0xf]
        %v9236 = vld [vmem:[%s7707 + $0x7c] sm:$0xf]
        %v9237 = vld [vmem:[%s7707 + $0x80] sm:$0x1]
        %v9238 = vld [vmem:[%s7707 + $0x84] sm:$0xf]
        %v9239 = vld [vmem:[%s7707 + $0x88] sm:$0xf]
        %v9240 = vld [vmem:[%s7707 + $0x8c] sm:$0x1]
        %v9241 = vld [vmem:[%s7707 + $0x90] sm:$0xf]
        %v9242 = vld [vmem:[%s7707 + $0x94] sm:$0xf]
        %v9243 = vld [vmem:[%s7707 + $0x98] sm:$0x1]
        %v9244 = vld [vmem:[%s7707 + $0x9c] sm:$0xf]
        %v9245 = vld [vmem:[%s7707 + $0xa0] sm:$0xf]
        %v9246 = vld [vmem:[%s7707 + $0xa4] sm:$0x1]
        %v9247 = vld [vmem:[%s7707 + $0xa8] sm:$0xf]
        %v9248 = vld [vmem:[%s7707 + $0xac] sm:$0xf]
        %v9249 = vld [vmem:[%s7707 + $0xb0] sm:$0x1]
        %v9250 = vld [vmem:[%s7707 + $0xb4] sm:$0xf]
        %v9251 = vld [vmem:[%s7707 + $0xb8] sm:$0xf]
        %v9252 = vld [vmem:[%s7707 + $0xbc] sm:$0x1]
        %v9254 = vshrl.u32 %v9205, 16
        %v9256 = vrot.slane %v9254, 4
        %v9257 = vshll.u32 %v9205, 16
        %v9259 = vrot.slane %v9257, 5
        %v9260 = vor.u32 %v9256, %v9259
        %v9261 = vrot.slane %v9260, 4
        %v9263 = vshll.u32 %v9206, 16
        %v9265 = vrot.slane %v9263, 5
        %v9266 = vsel %vm1098, %v9261, %v9265
        %v9267 = vshrl.u32 %v9206, 16
        %v9269 = vrot.slane %v9267, 4
        %v9270 = vor.u32 %v9269, %v9265
        %v9271 = vrot.slane %v9270, 4
        %v9273 = vshll.u32 %v9207, 16
        %v9275 = vrot.slane %v9273, 5
        %v9276 = vsel %vm1098, %v9271, %v9275
        %v9278 = vshrl.u32 %v9208, 16
        %v9280 = vrot.slane %v9278, 4
        %v9281 = vshll.u32 %v9208, 16
        %v9283 = vrot.slane %v9281, 5
        %v9284 = vor.u32 %v9280, %v9283
        %v9285 = vrot.slane %v9284, 4
        %v9287 = vshll.u32 %v9209, 16
        %v9289 = vrot.slane %v9287, 5
        %v9290 = vsel %vm1098, %v9285, %v9289
        %v9291 = vshrl.u32 %v9209, 16
        %v9293 = vrot.slane %v9291, 4
        %v9294 = vor.u32 %v9293, %v9289
        %v9295 = vrot.slane %v9294, 4
        %v9297 = vshll.u32 %v9210, 16
        %v9299 = vrot.slane %v9297, 5
        %v9300 = vsel %vm1098, %v9295, %v9299
        %v9302 = vshrl.u32 %v9211, 16
        %v9304 = vrot.slane %v9302, 4
        %v9305 = vshll.u32 %v9211, 16
        %v9307 = vrot.slane %v9305, 5
        %v9308 = vor.u32 %v9304, %v9307
        %v9309 = vrot.slane %v9308, 4
        %v9311 = vshll.u32 %v9212, 16
        %v9313 = vrot.slane %v9311, 5
        %v9314 = vsel %vm1098, %v9309, %v9313
        %v9315 = vshrl.u32 %v9212, 16
        %v9317 = vrot.slane %v9315, 4
        %v9318 = vor.u32 %v9317, %v9313
        %v9319 = vrot.slane %v9318, 4
        %v9321 = vshll.u32 %v9213, 16
        %v9323 = vrot.slane %v9321, 5
        %v9324 = vsel %vm1098, %v9319, %v9323
        %v9326 = vshrl.u32 %v9214, 16
        %v9328 = vrot.slane %v9326, 4
        %v9329 = vshll.u32 %v9214, 16
        %v9331 = vrot.slane %v9329, 5
        %v9332 = vor.u32 %v9328, %v9331
        %v9333 = vrot.slane %v9332, 4
        %v9335 = vshll.u32 %v9215, 16
        %v9337 = vrot.slane %v9335, 5
        %v9338 = vsel %vm1098, %v9333, %v9337
        %v9339 = vshrl.u32 %v9215, 16
        %v9341 = vrot.slane %v9339, 4
        %v9342 = vor.u32 %v9341, %v9337
        %v9343 = vrot.slane %v9342, 4
        %v9345 = vshll.u32 %v9216, 16
        %v9347 = vrot.slane %v9345, 5
        %v9348 = vsel %vm1098, %v9343, %v9347
        %v9350 = vshrl.u32 %v9217, 16
        %v9352 = vrot.slane %v9350, 4
        %v9353 = vshll.u32 %v9217, 16
        %v9355 = vrot.slane %v9353, 5
        %v9356 = vor.u32 %v9352, %v9355
        %v9357 = vrot.slane %v9356, 4
        %v9359 = vshll.u32 %v9218, 16
        %v9361 = vrot.slane %v9359, 5
        %v9362 = vsel %vm1098, %v9357, %v9361
        %v9363 = vshrl.u32 %v9218, 16
        %v9365 = vrot.slane %v9363, 4
        %v9366 = vor.u32 %v9365, %v9361
        %v9367 = vrot.slane %v9366, 4
        %v9369 = vshll.u32 %v9219, 16
        %v9371 = vrot.slane %v9369, 5
        %v9372 = vsel %vm1098, %v9367, %v9371
        %v9374 = vshrl.u32 %v9220, 16
        %v9376 = vrot.slane %v9374, 4
        %v9377 = vshll.u32 %v9220, 16
        %v9379 = vrot.slane %v9377, 5
        %v9380 = vor.u32 %v9376, %v9379
        %v9381 = vrot.slane %v9380, 4
        %v9383 = vshll.u32 %v9221, 16
        %v9385 = vrot.slane %v9383, 5
        %v9386 = vsel %vm1098, %v9381, %v9385
        %v9387 = vshrl.u32 %v9221, 16
        %v9389 = vrot.slane %v9387, 4
        %v9390 = vor.u32 %v9389, %v9385
        %v9391 = vrot.slane %v9390, 4
        %v9393 = vshll.u32 %v9222, 16
        %v9395 = vrot.slane %v9393, 5
        %v9396 = vsel %vm1098, %v9391, %v9395
        %v9398 = vshrl.u32 %v9223, 16
        %v9400 = vrot.slane %v9398, 4
        %v9401 = vshll.u32 %v9223, 16
        %v9403 = vrot.slane %v9401, 5
        %v9404 = vor.u32 %v9400, %v9403
        %v9405 = vrot.slane %v9404, 4
        %v9407 = vshll.u32 %v9224, 16
        %v9409 = vrot.slane %v9407, 5
        %v9410 = vsel %vm1098, %v9405, %v9409
        %v9411 = vshrl.u32 %v9224, 16
        %v9413 = vrot.slane %v9411, 4
        %v9414 = vor.u32 %v9413, %v9409
        %v9415 = vrot.slane %v9414, 4
        %v9417 = vshll.u32 %v9225, 16
        %v9419 = vrot.slane %v9417, 5
        %v9420 = vsel %vm1098, %v9415, %v9419
        %v9422 = vshrl.u32 %v9226, 16
        %v9424 = vrot.slane %v9422, 4
        %v9425 = vshll.u32 %v9226, 16
        %v9427 = vrot.slane %v9425, 5
        %v9428 = vor.u32 %v9424, %v9427
        %v9429 = vrot.slane %v9428, 4
        %v9431 = vshll.u32 %v9227, 16
        %v9433 = vrot.slane %v9431, 5
        %v9434 = vsel %vm1098, %v9429, %v9433
        %v9435 = vshrl.u32 %v9227, 16
        %v9437 = vrot.slane %v9435, 4
        %v9438 = vor.u32 %v9437, %v9433
        %v9439 = vrot.slane %v9438, 4
        %v9441 = vshll.u32 %v9228, 16
        %v9443 = vrot.slane %v9441, 5
        %v9444 = vsel %vm1098, %v9439, %v9443
        %v9446 = vshrl.u32 %v9229, 16
        %v9448 = vrot.slane %v9446, 4
        %v9449 = vshll.u32 %v9229, 16
        %v9451 = vrot.slane %v9449, 5
        %v9452 = vor.u32 %v9448, %v9451
        %v9453 = vrot.slane %v9452, 4
        %v9455 = vshll.u32 %v9230, 16
        %v9457 = vrot.slane %v9455, 5
        %v9458 = vsel %vm1098, %v9453, %v9457
        %v9459 = vshrl.u32 %v9230, 16
        %v9461 = vrot.slane %v9459, 4
        %v9462 = vor.u32 %v9461, %v9457
        %v9463 = vrot.slane %v9462, 4
        %v9465 = vshll.u32 %v9231, 16
        %v9467 = vrot.slane %v9465, 5
        %v9468 = vsel %vm1098, %v9463, %v9467
        %v9470 = vshrl.u32 %v9232, 16
        %v9472 = vrot.slane %v9470, 4
        %v9473 = vshll.u32 %v9232, 16
        %v9475 = vrot.slane %v9473, 5
        %v9476 = vor.u32 %v9472, %v9475
        %v9477 = vrot.slane %v9476, 4
        %v9479 = vshll.u32 %v9233, 16
        %v9481 = vrot.slane %v9479, 5
        %v9482 = vsel %vm1098, %v9477, %v9481
        %v9483 = vshrl.u32 %v9233, 16
        %v9485 = vrot.slane %v9483, 4
        %v9486 = vor.u32 %v9485, %v9481
        %v9487 = vrot.slane %v9486, 4
        %v9489 = vshll.u32 %v9234, 16
        %v9491 = vrot.slane %v9489, 5
        %v9492 = vsel %vm1098, %v9487, %v9491
        %v9494 = vshrl.u32 %v9235, 16
        %v9496 = vrot.slane %v9494, 4
        %v9497 = vshll.u32 %v9235, 16
        %v9499 = vrot.slane %v9497, 5
        %v9500 = vor.u32 %v9496, %v9499
        %v9501 = vrot.slane %v9500, 4
        %v9503 = vshll.u32 %v9236, 16
        %v9505 = vrot.slane %v9503, 5
        %v9506 = vsel %vm1098, %v9501, %v9505
        %v9507 = vshrl.u32 %v9236, 16
        %v9509 = vrot.slane %v9507, 4
        %v9510 = vor.u32 %v9509, %v9505
        %v9511 = vrot.slane %v9510, 4
        %v9513 = vshll.u32 %v9237, 16
        %v9515 = vrot.slane %v9513, 5
        %v9516 = vsel %vm1098, %v9511, %v9515
        %v9518 = vshrl.u32 %v9238, 16
        %v9520 = vrot.slane %v9518, 4
        %v9521 = vshll.u32 %v9238, 16
        %v9523 = vrot.slane %v9521, 5
        %v9524 = vor.u32 %v9520, %v9523
        %v9525 = vrot.slane %v9524, 4
        %v9527 = vshll.u32 %v9239, 16
        %v9529 = vrot.slane %v9527, 5
        %v9530 = vsel %vm1098, %v9525, %v9529
        %v9531 = vshrl.u32 %v9239, 16
        %v9533 = vrot.slane %v9531, 4
        %v9534 = vor.u32 %v9533, %v9529
        %v9535 = vrot.slane %v9534, 4
        %v9537 = vshll.u32 %v9240, 16
        %v9539 = vrot.slane %v9537, 5
        %v9540 = vsel %vm1098, %v9535, %v9539
        %v9542 = vshrl.u32 %v9241, 16
        %v9544 = vrot.slane %v9542, 4
        %v9545 = vshll.u32 %v9241, 16
        %v9547 = vrot.slane %v9545, 5
        %v9548 = vor.u32 %v9544, %v9547
        %v9549 = vrot.slane %v9548, 4
        %v9551 = vshll.u32 %v9242, 16
        %v9553 = vrot.slane %v9551, 5
        %v9554 = vsel %vm1098, %v9549, %v9553
        %v9555 = vshrl.u32 %v9242, 16
        %v9557 = vrot.slane %v9555, 4
        %v9558 = vor.u32 %v9557, %v9553
        %v9559 = vrot.slane %v9558, 4
        %v9561 = vshll.u32 %v9243, 16
        %v9563 = vrot.slane %v9561, 5
        %v9564 = vsel %vm1098, %v9559, %v9563
        %v9566 = vshrl.u32 %v9244, 16
        %v9568 = vrot.slane %v9566, 4
        %v9569 = vshll.u32 %v9244, 16
        %v9571 = vrot.slane %v9569, 5
        %v9572 = vor.u32 %v9568, %v9571
        %v9573 = vrot.slane %v9572, 4
        %v9575 = vshll.u32 %v9245, 16
        %v9577 = vrot.slane %v9575, 5
        %v9578 = vsel %vm1098, %v9573, %v9577
        %v9579 = vshrl.u32 %v9245, 16
        %v9581 = vrot.slane %v9579, 4
        %v9582 = vor.u32 %v9581, %v9577
        %v9583 = vrot.slane %v9582, 4
        %v9585 = vshll.u32 %v9246, 16
        %v9587 = vrot.slane %v9585, 5
        %v9588 = vsel %vm1098, %v9583, %v9587
        %v9590 = vshrl.u32 %v9247, 16
        %v9592 = vrot.slane %v9590, 4
        %v9593 = vshll.u32 %v9247, 16
        %v9595 = vrot.slane %v9593, 5
        %v9596 = vor.u32 %v9592, %v9595
        %v9597 = vrot.slane %v9596, 4
        %v9599 = vshll.u32 %v9248, 16
        %v9601 = vrot.slane %v9599, 5
        %v9602 = vsel %vm1098, %v9597, %v9601
        %v9603 = vshrl.u32 %v9248, 16
        %v9605 = vrot.slane %v9603, 4
        %v9606 = vor.u32 %v9605, %v9601
        %v9607 = vrot.slane %v9606, 4
        %v9609 = vshll.u32 %v9249, 16
        %v9611 = vrot.slane %v9609, 5
        %v9612 = vsel %vm1098, %v9607, %v9611
        %v9614 = vshrl.u32 %v9250, 16
        %v9616 = vrot.slane %v9614, 4
        %v9617 = vshll.u32 %v9250, 16
        %v9619 = vrot.slane %v9617, 5
        %v9620 = vor.u32 %v9616, %v9619
        %v9621 = vrot.slane %v9620, 4
        %v9623 = vshll.u32 %v9251, 16
        %v9625 = vrot.slane %v9623, 5
        %v9626 = vsel %vm1098, %v9621, %v9625
        %v9627 = vshrl.u32 %v9251, 16
        %v9629 = vrot.slane %v9627, 4
        %v9630 = vor.u32 %v9629, %v9625
        %v9631 = vrot.slane %v9630, 4
        %v9633 = vshll.u32 %v9252, 16
        %v9635 = vrot.slane %v9633, 5
        %v9636 = vsel %vm1098, %v9631, %v9635
        %s9637 = scalar_lea.vmem %s7, 64
        %v9638 = vld [vmem:[%s9637] sm:$0xf]
        %v9639 = vld [vmem:[%s9637 + $0x4] sm:$0xf]
        %v9640 = vld [vmem:[%s9637 + $0x8] sm:$0xf]
        %v9641 = vld [vmem:[%s9637 + $0xc] sm:$0xf]
        %v9646 = vunpack.c.l.b16 %v9638
        %v9647 = vunpack.c.l.b16 %v9639
        %v9648 = vunpack.c.l.b16 %v9640
        %v9649 = vunpack.c.l.b16 %v9641
        %v9650 = vpack.c.b16 %v9647, %v9646
        %v9651 = vpack.c.b16 %v9649, %v9648
        %v9652 = vunpack.c.l.b16 %v9266
        %v9653 = vunpack.c.l.b16 %v9276
        %v9654 = vunpack.c.l.b16 %v9290
        %v9655 = vunpack.c.l.b16 %v9300
        %v9656 = vunpack.c.l.b16 %v9314
        %v9657 = vunpack.c.l.b16 %v9324
        %v9658 = vunpack.c.l.b16 %v9338
        %v9659 = vunpack.c.l.b16 %v9348
        %v9660 = vunpack.c.l.b16 %v9362
        %v9661 = vunpack.c.l.b16 %v9372
        %v9662 = vunpack.c.l.b16 %v9386
        %v9663 = vunpack.c.l.b16 %v9396
        %v9664 = vunpack.c.l.b16 %v9410
        %v9665 = vunpack.c.l.b16 %v9420
        %v9666 = vunpack.c.l.b16 %v9434
        %v9667 = vunpack.c.l.b16 %v9444
        %v9668 = vunpack.c.l.b16 %v9458
        %v9669 = vunpack.c.l.b16 %v9468
        %v9670 = vunpack.c.l.b16 %v9482
        %v9671 = vunpack.c.l.b16 %v9492
        %v9672 = vunpack.c.l.b16 %v9506
        %v9673 = vunpack.c.l.b16 %v9516
        %v9674 = vunpack.c.l.b16 %v9530
        %v9675 = vunpack.c.l.b16 %v9540
        %v9676 = vunpack.c.l.b16 %v9554
        %v9677 = vunpack.c.l.b16 %v9564
        %v9678 = vunpack.c.l.b16 %v9578
        %v9679 = vunpack.c.l.b16 %v9588
        %v9680 = vunpack.c.l.b16 %v9602
        %v9681 = vunpack.c.l.b16 %v9612
        %v9682 = vunpack.c.l.b16 %v9626
        %v9683 = vunpack.c.l.b16 %v9636
        %v9684 = vpack.c.b16 %v9653, %v9652
        %v9685 = vpack.c.b16 %v9655, %v9654
        %v9686 = vpack.c.b16 %v9657, %v9656
        %v9687 = vpack.c.b16 %v9659, %v9658
        %v9688 = vpack.c.b16 %v9661, %v9660
        %v9689 = vpack.c.b16 %v9663, %v9662
        %v9690 = vpack.c.b16 %v9665, %v9664
        %v9691 = vpack.c.b16 %v9667, %v9666
        %v9692 = vpack.c.b16 %v9669, %v9668
        %v9693 = vpack.c.b16 %v9671, %v9670
        %v9694 = vpack.c.b16 %v9673, %v9672
        %v9695 = vpack.c.b16 %v9675, %v9674
        %v9696 = vpack.c.b16 %v9677, %v9676
        %v9697 = vpack.c.b16 %v9679, %v9678
        %v9698 = vpack.c.b16 %v9681, %v9680
        %v9699 = vpack.c.b16 %v9683, %v9682
        %v9701 = vsel %vm5788, %v9650, 0
        %v9704 = vsel %vm5788, %v9651, 0
        %v9707 = vsel %vm5788, %v9684, 0
        %v9710 = vsel %vm5788, %v9685, 0
        %v9713 = vsel %vm5788, %v9686, 0
        %v9716 = vsel %vm5788, %v9687, 0
        %v9719 = vsel %vm5788, %v9688, 0
        %v9722 = vsel %vm5788, %v9689, 0
        %v9725 = vsel %vm5788, %v9690, 0
        %v9728 = vsel %vm5788, %v9691, 0
        %v9731 = vsel %vm5788, %v9692, 0
        %v9734 = vsel %vm5788, %v9693, 0
        %v9737 = vsel %vm5788, %v9694, 0
        %v9740 = vsel %vm5788, %v9695, 0
        %v9743 = vsel %vm5788, %v9696, 0
        %v9746 = vsel %vm5788, %v9697, 0
        %v9749 = vsel %vm5788, %v9698, 0
        %v9752 = vsel %vm5788, %v9699, 0
        %9754 = vmatprep.subr.bf16.mxu0 0
        %9755 = vmatpush1.bf16.xpose.msra.mxu0 %v9707
        %9756 = vmatprep.subr.bf16.mxu0 0
        %9757 = vmatpush1.bf16.xpose.msra.mxu0 %v9710
        %9758 = vmatprep.subr.bf16.mxu0 0
        %9759 = vmatpush1.bf16.xpose.msra.mxu0 %v9713
        %9760 = vmatprep.subr.bf16.mxu0 0
        %9761 = vmatpush1.bf16.xpose.msra.mxu0 %v9716
        %9762 = vmatprep.subr.bf16.mxu0 0
        %9763 = vmatpush1.bf16.xpose.msra.mxu0 %v9719
        %9764 = vmatprep.subr.bf16.mxu0 0
        %9765 = vmatpush1.bf16.xpose.msra.mxu0 %v9722
        %9766 = vmatprep.subr.bf16.mxu0 0
        %9767 = vmatpush1.bf16.xpose.msra.mxu0 %v9725
        %9768 = vmatprep.subr.bf16.mxu0 0
        %9769 = vmatpush1.bf16.xpose.msra.mxu0 %v9728
        %9770 = vmatprep.subr.bf16.mxu0 0
        %9771 = vmatpush1.bf16.xpose.msra.mxu0 %v9731
        %9772 = vmatprep.subr.bf16.mxu0 0
        %9773 = vmatpush1.bf16.xpose.msra.mxu0 %v9734
        %9774 = vmatprep.subr.bf16.mxu0 0
        %9775 = vmatpush1.bf16.xpose.msra.mxu0 %v9737
        %9776 = vmatprep.subr.bf16.mxu0 0
        %9777 = vmatpush1.bf16.xpose.msra.mxu0 %v9740
        %9778 = vmatprep.subr.bf16.mxu0 0
        %9779 = vmatpush1.bf16.xpose.msra.mxu0 %v9743
        %9780 = vmatprep.subr.bf16.mxu0 0
        %9781 = vmatpush1.bf16.xpose.msra.mxu0 %v9746
        %9782 = vmatprep.subr.bf16.mxu0 0
        %9783 = vmatpush1.bf16.xpose.msra.mxu0 %v9749
        %9784 = vmatprep.subr.bf16.mxu0 0
        %9785 = vmatpush1.bf16.xpose.msra.mxu0 %v9752
        %9786 = vmatprep.mubr.bf16.mxu0 0
        %9787 = vmatmul.mubr.bf16.gmra.mrb[0].mxu0 %v9701
        %v9788 = vpop.f32.mrb[0].mxu0
        %v9789 = vadd.f32 0.0, %v9788
        %v9790 = vpop.f32.mrb[0].mxu0
        %v9791 = vadd.f32 0.0, %v9790
        %v9792 = vpop.f32.mrb[0].mxu0
        %v9793 = vadd.f32 0.0, %v9792
        %v9794 = vpop.f32.mrb[0].mxu0
        %v9795 = vadd.f32 0.0, %v9794
        %9796 = vmatprep.mubr.bf16.mxu0 0
        %9797 = vmatmul.mubr.bf16.gmra.mrb[0].mxu0 %v9704
        %v9798 = vpop.f32.mrb[0].mxu0
        %v9799 = vadd.f32 0.0, %v9798
        %v9800 = vpop.f32.mrb[0].mxu0
        %v9801 = vadd.f32 0.0, %v9800
        %v9802 = vpop.f32.mrb[0].mxu0
        %v9803 = vadd.f32 0.0, %v9802
        %v9804 = vpop.f32.mrb[0].mxu0
        %v9805 = vadd.f32 0.0, %v9804
        %9806 = vdwg.mxu0
        %v9807 = vadd.f32 %v9197, %v9789
        %v9808 = vadd.f32 %v9198, %v9791
        %v9809 = vadd.f32 %v9199, %v9793
        %v9810 = vadd.f32 %v9200, %v9795
        %v9811 = vadd.f32 %v9201, %v9799
        %v9812 = vadd.f32 %v9202, %v9801
        %v9813 = vadd.f32 %v9203, %v9803
        %v9814 = vadd.f32 %v9204, %v9805
        %v9815 = vld [vmem:[%s7707] sm:$0xe]
        %v9816 = vld [vmem:[%s7707 + $0xc] sm:$0xe]
        %v9817 = vld [vmem:[%s7707 + $0x18] sm:$0xe]
        %v9818 = vld [vmem:[%s7707 + $0x24] sm:$0xe]
        %v9819 = vld [vmem:[%s7707 + $0x30] sm:$0xe]
        %v9820 = vld [vmem:[%s7707 + $0x3c] sm:$0xe]
        %v9821 = vld [vmem:[%s7707 + $0x48] sm:$0xe]
        %v9822 = vld [vmem:[%s7707 + $0x54] sm:$0xe]
        %v9823 = vld [vmem:[%s7707 + $0x60] sm:$0xe]
        %v9824 = vld [vmem:[%s7707 + $0x6c] sm:$0xe]
        %v9825 = vld [vmem:[%s7707 + $0x78] sm:$0xe]
        %v9826 = vld [vmem:[%s7707 + $0x84] sm:$0xe]
        %v9827 = vld [vmem:[%s7707 + $0x90] sm:$0xe]
        %v9828 = vld [vmem:[%s7707 + $0x9c] sm:$0xe]
        %v9829 = vld [vmem:[%s7707 + $0xa8] sm:$0xe]
        %v9830 = vld [vmem:[%s7707 + $0xb4] sm:$0xe]
        %v9879 = vrot.slane %v9815, 5
        %v9880 = vrot.slane %v9879, 4
        %v9881 = vrot.slane %v9206, 5
        %v9882 = vsel %vm2089, %v9880, %v9881
        %v9883 = vrot.slane %v9881, 4
        %v9884 = vrot.slane %v9207, 5
        %v9885 = vsel %vm2089, %v9883, %v9884
        %v9886 = vrot.slane %v9816, 5
        %v9887 = vrot.slane %v9886, 4
        %v9888 = vrot.slane %v9209, 5
        %v9889 = vsel %vm2089, %v9887, %v9888
        %v9890 = vrot.slane %v9888, 4
        %v9891 = vrot.slane %v9210, 5
        %v9892 = vsel %vm2089, %v9890, %v9891
        %v9893 = vrot.slane %v9817, 5
        %v9894 = vrot.slane %v9893, 4
        %v9895 = vrot.slane %v9212, 5
        %v9896 = vsel %vm2089, %v9894, %v9895
        %v9897 = vrot.slane %v9895, 4
        %v9898 = vrot.slane %v9213, 5
        %v9899 = vsel %vm2089, %v9897, %v9898
        %v9900 = vrot.slane %v9818, 5
        %v9901 = vrot.slane %v9900, 4
        %v9902 = vrot.slane %v9215, 5
        %v9903 = vsel %vm2089, %v9901, %v9902
        %v9904 = vrot.slane %v9902, 4
        %v9905 = vrot.slane %v9216, 5
        %v9906 = vsel %vm2089, %v9904, %v9905
        %v9907 = vrot.slane %v9819, 5
        %v9908 = vrot.slane %v9907, 4
        %v9909 = vrot.slane %v9218, 5
        %v9910 = vsel %vm2089, %v9908, %v9909
        %v9911 = vrot.slane %v9909, 4
        %v9912 = vrot.slane %v9219, 5
        %v9913 = vsel %vm2089, %v9911, %v9912
        %v9914 = vrot.slane %v9820, 5
        %v9915 = vrot.slane %v9914, 4
        %v9916 = vrot.slane %v9221, 5
        %v9917 = vsel %vm2089, %v9915, %v9916
        %v9918 = vrot.slane %v9916, 4
        %v9919 = vrot.slane %v9222, 5
        %v9920 = vsel %vm2089, %v9918, %v9919
        %v9921 = vrot.slane %v9821, 5
        %v9922 = vrot.slane %v9921, 4
        %v9923 = vrot.slane %v9224, 5
        %v9924 = vsel %vm2089, %v9922, %v9923
        %v9925 = vrot.slane %v9923, 4
        %v9926 = vrot.slane %v9225, 5
        %v9927 = vsel %vm2089, %v9925, %v9926
        %v9928 = vrot.slane %v9822, 5
        %v9929 = vrot.slane %v9928, 4
        %v9930 = vrot.slane %v9227, 5
        %v9931 = vsel %vm2089, %v9929, %v9930
        %v9932 = vrot.slane %v9930, 4
        %v9933 = vrot.slane %v9228, 5
        %v9934 = vsel %vm2089, %v9932, %v9933
        %v9935 = vrot.slane %v9823, 5
        %v9936 = vrot.slane %v9935, 4
        %v9937 = vrot.slane %v9230, 5
        %v9938 = vsel %vm2089, %v9936, %v9937
        %v9939 = vrot.slane %v9937, 4
        %v9940 = vrot.slane %v9231, 5
        %v9941 = vsel %vm2089, %v9939, %v9940
        %v9942 = vrot.slane %v9824, 5
        %v9943 = vrot.slane %v9942, 4
        %v9944 = vrot.slane %v9233, 5
        %v9945 = vsel %vm2089, %v9943, %v9944
        %v9946 = vrot.slane %v9944, 4
        %v9947 = vrot.slane %v9234, 5
        %v9948 = vsel %vm2089, %v9946, %v9947
        %v9949 = vrot.slane %v9825, 5
        %v9950 = vrot.slane %v9949, 4
        %v9951 = vrot.slane %v9236, 5
        %v9952 = vsel %vm2089, %v9950, %v9951
        %v9953 = vrot.slane %v9951, 4
        %v9954 = vrot.slane %v9237, 5
        %v9955 = vsel %vm2089, %v9953, %v9954
        %v9956 = vrot.slane %v9826, 5
        %v9957 = vrot.slane %v9956, 4
        %v9958 = vrot.slane %v9239, 5
        %v9959 = vsel %vm2089, %v9957, %v9958
        %v9960 = vrot.slane %v9958, 4
        %v9961 = vrot.slane %v9240, 5
        %v9962 = vsel %vm2089, %v9960, %v9961
        %v9963 = vrot.slane %v9827, 5
        %v9964 = vrot.slane %v9963, 4
        %v9965 = vrot.slane %v9242, 5
        %v9966 = vsel %vm2089, %v9964, %v9965
        %v9967 = vrot.slane %v9965, 4
        %v9968 = vrot.slane %v9243, 5
        %v9969 = vsel %vm2089, %v9967, %v9968
        %v9970 = vrot.slane %v9828, 5
        %v9971 = vrot.slane %v9970, 4
        %v9972 = vrot.slane %v9245, 5
        %v9973 = vsel %vm2089, %v9971, %v9972
        %v9974 = vrot.slane %v9972, 4
        %v9975 = vrot.slane %v9246, 5
        %v9976 = vsel %vm2089, %v9974, %v9975
        %v9977 = vrot.slane %v9829, 5
        %v9978 = vrot.slane %v9977, 4
        %v9979 = vrot.slane %v9248, 5
        %v9980 = vsel %vm2089, %v9978, %v9979
        %v9981 = vrot.slane %v9979, 4
        %v9982 = vrot.slane %v9249, 5
        %v9983 = vsel %vm2089, %v9981, %v9982
        %v9984 = vrot.slane %v9830, 5
        %v9985 = vrot.slane %v9984, 4
        %v9986 = vrot.slane %v9251, 5
        %v9987 = vsel %vm2089, %v9985, %v9986
        %v9988 = vrot.slane %v9986, 4
        %v9989 = vrot.slane %v9252, 5
        %v9990 = vsel %vm2089, %v9988, %v9989
        %s9991 = scalar_lea.vmem %s7, 80
        %v9992 = vld [vmem:[%s9991] sm:$0xf]
        %v9993 = vld [vmem:[%s9991 + $0x4] sm:$0xf]
        %v9994 = vld [vmem:[%s9991 + $0x8] sm:$0xf]
        %v9995 = vld [vmem:[%s9991 + $0xc] sm:$0xf]
        %v10000 = vunpack.c.l.b16 %v9992
        %v10001 = vunpack.c.l.b16 %v9993
        %v10002 = vunpack.c.l.b16 %v9994
        %v10003 = vunpack.c.l.b16 %v9995
        %v10004 = vpack.c.b16 %v10001, %v10000
        %v10005 = vpack.c.b16 %v10003, %v10002
        %v10006 = vunpack.c.l.b16 %v9882
        %v10007 = vunpack.c.l.b16 %v9885
        %v10008 = vunpack.c.l.b16 %v9889
        %v10009 = vunpack.c.l.b16 %v9892
        %v10010 = vunpack.c.l.b16 %v9896
        %v10011 = vunpack.c.l.b16 %v9899
        %v10012 = vunpack.c.l.b16 %v9903
        %v10013 = vunpack.c.l.b16 %v9906
        %v10014 = vunpack.c.l.b16 %v9910
        %v10015 = vunpack.c.l.b16 %v9913
        %v10016 = vunpack.c.l.b16 %v9917
        %v10017 = vunpack.c.l.b16 %v9920
        %v10018 = vunpack.c.l.b16 %v9924
        %v10019 = vunpack.c.l.b16 %v9927
        %v10020 = vunpack.c.l.b16 %v9931
        %v10021 = vunpack.c.l.b16 %v9934
        %v10022 = vunpack.c.l.b16 %v9938
        %v10023 = vunpack.c.l.b16 %v9941
        %v10024 = vunpack.c.l.b16 %v9945
        %v10025 = vunpack.c.l.b16 %v9948
        %v10026 = vunpack.c.l.b16 %v9952
        %v10027 = vunpack.c.l.b16 %v9955
        %v10028 = vunpack.c.l.b16 %v9959
        %v10029 = vunpack.c.l.b16 %v9962
        %v10030 = vunpack.c.l.b16 %v9966
        %v10031 = vunpack.c.l.b16 %v9969
        %v10032 = vunpack.c.l.b16 %v9973
        %v10033 = vunpack.c.l.b16 %v9976
        %v10034 = vunpack.c.l.b16 %v9980
        %v10035 = vunpack.c.l.b16 %v9983
        %v10036 = vunpack.c.l.b16 %v9987
        %v10037 = vunpack.c.l.b16 %v9990
        %v10038 = vpack.c.b16 %v10007, %v10006
        %v10039 = vpack.c.b16 %v10009, %v10008
        %v10040 = vpack.c.b16 %v10011, %v10010
        %v10041 = vpack.c.b16 %v10013, %v10012
        %v10042 = vpack.c.b16 %v10015, %v10014
        %v10043 = vpack.c.b16 %v10017, %v10016
        %v10044 = vpack.c.b16 %v10019, %v10018
        %v10045 = vpack.c.b16 %v10021, %v10020
        %v10046 = vpack.c.b16 %v10023, %v10022
        %v10047 = vpack.c.b16 %v10025, %v10024
        %v10048 = vpack.c.b16 %v10027, %v10026
        %v10049 = vpack.c.b16 %v10029, %v10028
        %v10050 = vpack.c.b16 %v10031, %v10030
        %v10051 = vpack.c.b16 %v10033, %v10032
        %v10052 = vpack.c.b16 %v10035, %v10034
        %v10053 = vpack.c.b16 %v10037, %v10036
        %v10055 = vsel %vm5788, %v10004, 0
        %v10058 = vsel %vm5788, %v10005, 0
        %v10061 = vsel %vm5788, %v10038, 0
        %v10064 = vsel %vm5788, %v10039, 0
        %v10067 = vsel %vm5788, %v10040, 0
        %v10070 = vsel %vm5788, %v10041, 0
        %v10073 = vsel %vm5788, %v10042, 0
        %v10076 = vsel %vm5788, %v10043, 0
        %v10079 = vsel %vm5788, %v10044, 0
        %v10082 = vsel %vm5788, %v10045, 0
        %v10085 = vsel %vm5788, %v10046, 0
        %v10088 = vsel %vm5788, %v10047, 0
        %v10091 = vsel %vm5788, %v10048, 0
        %v10094 = vsel %vm5788, %v10049, 0
        %v10097 = vsel %vm5788, %v10050, 0
        %v10100 = vsel %vm5788, %v10051, 0
        %v10103 = vsel %vm5788, %v10052, 0
        %v10106 = vsel %vm5788, %v10053, 0
        %10108 = vmatprep.subr.bf16.mxu0 0
        %10109 = vmatpush1.bf16.xpose.msra.mxu0 %v10061
        %10110 = vmatprep.subr.bf16.mxu0 0
        %10111 = vmatpush1.bf16.xpose.msra.mxu0 %v10064
        %10112 = vmatprep.subr.bf16.mxu0 0
        %10113 = vmatpush1.bf16.xpose.msra.mxu0 %v10067
        %10114 = vmatprep.subr.bf16.mxu0 0
        %10115 = vmatpush1.bf16.xpose.msra.mxu0 %v10070
        %10116 = vmatprep.subr.bf16.mxu0 0
        %10117 = vmatpush1.bf16.xpose.msra.mxu0 %v10073
        %10118 = vmatprep.subr.bf16.mxu0 0
        %10119 = vmatpush1.bf16.xpose.msra.mxu0 %v10076
        %10120 = vmatprep.subr.bf16.mxu0 0
        %10121 = vmatpush1.bf16.xpose.msra.mxu0 %v10079
        %10122 = vmatprep.subr.bf16.mxu0 0
        %10123 = vmatpush1.bf16.xpose.msra.mxu0 %v10082
        %10124 = vmatprep.subr.bf16.mxu0 0
        %10125 = vmatpush1.bf16.xpose.msra.mxu0 %v10085
        %10126 = vmatprep.subr.bf16.mxu0 0
        %10127 = vmatpush1.bf16.xpose.msra.mxu0 %v10088
        %10128 = vmatprep.subr.bf16.mxu0 0
        %10129 = vmatpush1.bf16.xpose.msra.mxu0 %v10091
        %10130 = vmatprep.subr.bf16.mxu0 0
        %10131 = vmatpush1.bf16.xpose.msra.mxu0 %v10094
        %10132 = vmatprep.subr.bf16.mxu0 0
        %10133 = vmatpush1.bf16.xpose.msra.mxu0 %v10097
        %10134 = vmatprep.subr.bf16.mxu0 0
        %10135 = vmatpush1.bf16.xpose.msra.mxu0 %v10100
        %10136 = vmatprep.subr.bf16.mxu0 0
        %10137 = vmatpush1.bf16.xpose.msra.mxu0 %v10103
        %10138 = vmatprep.subr.bf16.mxu0 0
        %10139 = vmatpush1.bf16.xpose.msra.mxu0 %v10106
        %10140 = vmatprep.mubr.bf16.mxu0 0
        %10141 = vmatmul.mubr.bf16.gmra.mrb[0].mxu0 %v10055
        %v10142 = vpop.f32.mrb[0].mxu0
        %v10143 = vadd.f32 0.0, %v10142
        %v10144 = vpop.f32.mrb[0].mxu0
        %v10145 = vadd.f32 0.0, %v10144
        %v10146 = vpop.f32.mrb[0].mxu0
        %v10147 = vadd.f32 0.0, %v10146
        %v10148 = vpop.f32.mrb[0].mxu0
        %v10149 = vadd.f32 0.0, %v10148
        %10150 = vmatprep.mubr.bf16.mxu0 0
        %10151 = vmatmul.mubr.bf16.gmra.mrb[0].mxu0 %v10058
        %v10152 = vpop.f32.mrb[0].mxu0
        %v10153 = vadd.f32 0.0, %v10152
        %v10154 = vpop.f32.mrb[0].mxu0
        %v10155 = vadd.f32 0.0, %v10154
        %v10156 = vpop.f32.mrb[0].mxu0
        %v10157 = vadd.f32 0.0, %v10156
        %v10158 = vpop.f32.mrb[0].mxu0
        %v10159 = vadd.f32 0.0, %v10158
        %10160 = vdwg.mxu0
        %v10161 = vadd.f32 %v9807, %v10143
        %v10162 = vadd.f32 %v9808, %v10145
        %v10163 = vadd.f32 %v9809, %v10147
        %v10164 = vadd.f32 %v9810, %v10149
        %v10165 = vadd.f32 %v9811, %v10153
        %v10166 = vadd.f32 %v9812, %v10155
        %v10167 = vadd.f32 %v9813, %v10157
        %v10168 = vadd.f32 %v9814, %v10159
        %s10169 = scalar_lea.vmem [#allocation3], 24
        %v10170 = vld [vmem:[%s10169] sm:$0xf]
        %v10171 = vld [vmem:[%s10169 + $0x4] sm:$0xf]
        %v10172 = vld [vmem:[%s10169 + $0xc] sm:$0xf]
        %v10173 = vld [vmem:[%s10169 + $0x10] sm:$0xf]
        %v10174 = vld [vmem:[%s10169 + $0x18] sm:$0xf]
        %v10175 = vld [vmem:[%s10169 + $0x1c] sm:$0xf]
        %v10176 = vld [vmem:[%s10169 + $0x24] sm:$0xf]
        %v10177 = vld [vmem:[%s10169 + $0x28] sm:$0xf]
        %v10178 = vld [vmem:[%s10169 + $0x30] sm:$0xf]
        %v10179 = vld [vmem:[%s10169 + $0x34] sm:$0xf]
        %v10180 = vld [vmem:[%s10169 + $0x3c] sm:$0xf]
        %v10181 = vld [vmem:[%s10169 + $0x40] sm:$0xf]
        %v10182 = vld [vmem:[%s10169 + $0x48] sm:$0xf]
        %v10183 = vld [vmem:[%s10169 + $0x4c] sm:$0xf]
        %v10184 = vld [vmem:[%s10169 + $0x54] sm:$0xf]
        %v10185 = vld [vmem:[%s10169 + $0x58] sm:$0xf]
        %v10186 = vld [vmem:[%s10169 + $0x60] sm:$0xf]
        %v10187 = vld [vmem:[%s10169 + $0x64] sm:$0xf]
        %v10188 = vld [vmem:[%s10169 + $0x6c] sm:$0xf]
        %v10189 = vld [vmem:[%s10169 + $0x70] sm:$0xf]
        %v10190 = vld [vmem:[%s10169 + $0x78] sm:$0xf]
        %v10191 = vld [vmem:[%s10169 + $0x7c] sm:$0xf]
        %v10192 = vld [vmem:[%s10169 + $0x84] sm:$0xf]
        %v10193 = vld [vmem:[%s10169 + $0x88] sm:$0xf]
        %v10194 = vld [vmem:[%s10169 + $0x90] sm:$0xf]
        %v10195 = vld [vmem:[%s10169 + $0x94] sm:$0xf]
        %v10196 = vld [vmem:[%s10169 + $0x9c] sm:$0xf]
        %v10197 = vld [vmem:[%s10169 + $0xa0] sm:$0xf]
        %v10198 = vld [vmem:[%s10169 + $0xa8] sm:$0xf]
        %v10199 = vld [vmem:[%s10169 + $0xac] sm:$0xf]
        %v10200 = vld [vmem:[%s10169 + $0xb4] sm:$0xf]
        %v10201 = vld [vmem:[%s10169 + $0xb8] sm:$0xf]
        %s10202 = scalar_lea.vmem %s7, 96
        %v10203 = vld [vmem:[%s10202] sm:$0xf]
        %v10204 = vld [vmem:[%s10202 + $0x4] sm:$0xf]
        %v10205 = vld [vmem:[%s10202 + $0x8] sm:$0xf]
        %v10206 = vld [vmem:[%s10202 + $0xc] sm:$0xf]
        %v10211 = vunpack.c.l.b16 %v10203
        %v10212 = vunpack.c.l.b16 %v10204
        %v10213 = vunpack.c.l.b16 %v10205
        %v10214 = vunpack.c.l.b16 %v10206
        %v10215 = vpack.c.b16 %v10212, %v10211
        %v10216 = vpack.c.b16 %v10214, %v10213
        %v10249 = vunpack.c.l.b16 %v10170
        %v10250 = vunpack.c.l.b16 %v10171
        %v10251 = vunpack.c.l.b16 %v10172
        %v10252 = vunpack.c.l.b16 %v10173
        %v10253 = vunpack.c.l.b16 %v10174
        %v10254 = vunpack.c.l.b16 %v10175
        %v10255 = vunpack.c.l.b16 %v10176
        %v10256 = vunpack.c.l.b16 %v10177
        %v10257 = vunpack.c.l.b16 %v10178
        %v10258 = vunpack.c.l.b16 %v10179
        %v10259 = vunpack.c.l.b16 %v10180
        %v10260 = vunpack.c.l.b16 %v10181
        %v10261 = vunpack.c.l.b16 %v10182
        %v10262 = vunpack.c.l.b16 %v10183
        %v10263 = vunpack.c.l.b16 %v10184
        %v10264 = vunpack.c.l.b16 %v10185
        %v10265 = vunpack.c.l.b16 %v10186
        %v10266 = vunpack.c.l.b16 %v10187
        %v10267 = vunpack.c.l.b16 %v10188
        %v10268 = vunpack.c.l.b16 %v10189
        %v10269 = vunpack.c.l.b16 %v10190
        %v10270 = vunpack.c.l.b16 %v10191
        %v10271 = vunpack.c.l.b16 %v10192
        %v10272 = vunpack.c.l.b16 %v10193
        %v10273 = vunpack.c.l.b16 %v10194
        %v10274 = vunpack.c.l.b16 %v10195
        %v10275 = vunpack.c.l.b16 %v10196
        %v10276 = vunpack.c.l.b16 %v10197
        %v10277 = vunpack.c.l.b16 %v10198
        %v10278 = vunpack.c.l.b16 %v10199
        %v10279 = vunpack.c.l.b16 %v10200
        %v10280 = vunpack.c.l.b16 %v10201
        %v10281 = vpack.c.b16 %v10250, %v10249
        %v10282 = vpack.c.b16 %v10252, %v10251
        %v10283 = vpack.c.b16 %v10254, %v10253
        %v10284 = vpack.c.b16 %v10256, %v10255
        %v10285 = vpack.c.b16 %v10258, %v10257
        %v10286 = vpack.c.b16 %v10260, %v10259
        %v10287 = vpack.c.b16 %v10262, %v10261
        %v10288 = vpack.c.b16 %v10264, %v10263
        %v10289 = vpack.c.b16 %v10266, %v10265
        %v10290 = vpack.c.b16 %v10268, %v10267
        %v10291 = vpack.c.b16 %v10270, %v10269
        %v10292 = vpack.c.b16 %v10272, %v10271
        %v10293 = vpack.c.b16 %v10274, %v10273
        %v10294 = vpack.c.b16 %v10276, %v10275
        %v10295 = vpack.c.b16 %v10278, %v10277
        %v10296 = vpack.c.b16 %v10280, %v10279
        %v10298 = vsel %vm5788, %v10215, 0
        %v10301 = vsel %vm5788, %v10216, 0
        %v10304 = vsel %vm5788, %v10281, 0
        %v10307 = vsel %vm5788, %v10282, 0
        %v10310 = vsel %vm5788, %v10283, 0
        %v10313 = vsel %vm5788, %v10284, 0
        %v10316 = vsel %vm5788, %v10285, 0
        %v10319 = vsel %vm5788, %v10286, 0
        %v10322 = vsel %vm5788, %v10287, 0
        %v10325 = vsel %vm5788, %v10288, 0
        %v10328 = vsel %vm5788, %v10289, 0
        %v10331 = vsel %vm5788, %v10290, 0
        %v10334 = vsel %vm5788, %v10291, 0
        %v10337 = vsel %vm5788, %v10292, 0
        %v10340 = vsel %vm5788, %v10293, 0
        %v10343 = vsel %vm5788, %v10294, 0
        %v10346 = vsel %vm5788, %v10295, 0
        %v10349 = vsel %vm5788, %v10296, 0
        %10351 = vmatprep.subr.bf16.mxu0 0
        %10352 = vmatpush1.bf16.xpose.msra.mxu0 %v10304
        %10353 = vmatprep.subr.bf16.mxu0 0
        %10354 = vmatpush1.bf16.xpose.msra.mxu0 %v10307
        %10355 = vmatprep.subr.bf16.mxu0 0
        %10356 = vmatpush1.bf16.xpose.msra.mxu0 %v10310
        %10357 = vmatprep.subr.bf16.mxu0 0
        %10358 = vmatpush1.bf16.xpose.msra.mxu0 %v10313
        %10359 = vmatprep.subr.bf16.mxu0 0
        %10360 = vmatpush1.bf16.xpose.msra.mxu0 %v10316
        %10361 = vmatprep.subr.bf16.mxu0 0
        %10362 = vmatpush1.bf16.xpose.msra.mxu0 %v10319
        %10363 = vmatprep.subr.bf16.mxu0 0
        %10364 = vmatpush1.bf16.xpose.msra.mxu0 %v10322
        %10365 = vmatprep.subr.bf16.mxu0 0
        %10366 = vmatpush1.bf16.xpose.msra.mxu0 %v10325
        %10367 = vmatprep.subr.bf16.mxu0 0
        %10368 = vmatpush1.bf16.xpose.msra.mxu0 %v10328
        %10369 = vmatprep.subr.bf16.mxu0 0
        %10370 = vmatpush1.bf16.xpose.msra.mxu0 %v10331
        %10371 = vmatprep.subr.bf16.mxu0 0
        %10372 = vmatpush1.bf16.xpose.msra.mxu0 %v10334
        %10373 = vmatprep.subr.bf16.mxu0 0
        %10374 = vmatpush1.bf16.xpose.msra.mxu0 %v10337
        %10375 = vmatprep.subr.bf16.mxu0 0
        %10376 = vmatpush1.bf16.xpose.msra.mxu0 %v10340
        %10377 = vmatprep.subr.bf16.mxu0 0
        %10378 = vmatpush1.bf16.xpose.msra.mxu0 %v10343
        %10379 = vmatprep.subr.bf16.mxu0 0
        %10380 = vmatpush1.bf16.xpose.msra.mxu0 %v10346
        %10381 = vmatprep.subr.bf16.mxu0 0
        %10382 = vmatpush1.bf16.xpose.msra.mxu0 %v10349
        %10383 = vmatprep.mubr.bf16.mxu0 0
        %10384 = vmatmul.mubr.bf16.gmra.mrb[0].mxu0 %v10298
        %v10385 = vpop.f32.mrb[0].mxu0
        %v10386 = vadd.f32 0.0, %v10385
        %v10387 = vpop.f32.mrb[0].mxu0
        %v10388 = vadd.f32 0.0, %v10387
        %v10389 = vpop.f32.mrb[0].mxu0
        %v10390 = vadd.f32 0.0, %v10389
        %v10391 = vpop.f32.mrb[0].mxu0
        %v10392 = vadd.f32 0.0, %v10391
        %10393 = vmatprep.mubr.bf16.mxu0 0
        %10394 = vmatmul.mubr.bf16.gmra.mrb[0].mxu0 %v10301
        %v10395 = vpop.f32.mrb[0].mxu0
        %v10396 = vadd.f32 0.0, %v10395
        %v10397 = vpop.f32.mrb[0].mxu0
        %v10398 = vadd.f32 0.0, %v10397
        %v10399 = vpop.f32.mrb[0].mxu0
        %v10400 = vadd.f32 0.0, %v10399
        %v10401 = vpop.f32.mrb[0].mxu0
        %v10402 = vadd.f32 0.0, %v10401
        %10403 = vdwg.mxu0
        %v10404 = vadd.f32 %v10161, %v10386
        %v10405 = vadd.f32 %v10162, %v10388
        %v10406 = vadd.f32 %v10163, %v10390
        %v10407 = vadd.f32 %v10164, %v10392
        %v10408 = vadd.f32 %v10165, %v10396
        %v10409 = vadd.f32 %v10166, %v10398
        %v10410 = vadd.f32 %v10167, %v10400
        %v10411 = vadd.f32 %v10168, %v10402
        %v10412 = vld [vmem:[%s10169] sm:$0xf]
        %v10413 = vld [vmem:[%s10169 + $0x4] sm:$0xf]
        %v10414 = vld [vmem:[%s10169 + $0x8] sm:$0x1]
        %v10415 = vld [vmem:[%s10169 + $0xc] sm:$0xf]
        %v10416 = vld [vmem:[%s10169 + $0x10] sm:$0xf]
        %v10417 = vld [vmem:[%s10169 + $0x14] sm:$0x1]
        %v10418 = vld [vmem:[%s10169 + $0x18] sm:$0xf]
        %v10419 = vld [vmem:[%s10169 + $0x1c] sm:$0xf]
        %v10420 = vld [vmem:[%s10169 + $0x20] sm:$0x1]
        %v10421 = vld [vmem:[%s10169 + $0x24] sm:$0xf]
        %v10422 = vld [vmem:[%s10169 + $0x28] sm:$0xf]
        %v10423 = vld [vmem:[%s10169 + $0x2c] sm:$0x1]
        %v10424 = vld [vmem:[%s10169 + $0x30] sm:$0xf]
        %v10425 = vld [vmem:[%s10169 + $0x34] sm:$0xf]
        %v10426 = vld [vmem:[%s10169 + $0x38] sm:$0x1]
        %v10427 = vld [vmem:[%s10169 + $0x3c] sm:$0xf]
        %v10428 = vld [vmem:[%s10169 + $0x40] sm:$0xf]
        %v10429 = vld [vmem:[%s10169 + $0x44] sm:$0x1]
        %v10430 = vld [vmem:[%s10169 + $0x48] sm:$0xf]
        %v10431 = vld [vmem:[%s10169 + $0x4c] sm:$0xf]
        %v10432 = vld [vmem:[%s10169 + $0x50] sm:$0x1]
        %v10433 = vld [vmem:[%s10169 + $0x54] sm:$0xf]
        %v10434 = vld [vmem:[%s10169 + $0x58] sm:$0xf]
        %v10435 = vld [vmem:[%s10169 + $0x5c] sm:$0x1]
        %v10436 = vld [vmem:[%s10169 + $0x60] sm:$0xf]
        %v10437 = vld [vmem:[%s10169 + $0x64] sm:$0xf]
        %v10438 = vld [vmem:[%s10169 + $0x68] sm:$0x1]
        %v10439 = vld [vmem:[%s10169 + $0x6c] sm:$0xf]
        %v10440 = vld [vmem:[%s10169 + $0x70] sm:$0xf]
        %v10441 = vld [vmem:[%s10169 + $0x74] sm:$0x1]
        %v10442 = vld [vmem:[%s10169 + $0x78] sm:$0xf]
        %v10443 = vld [vmem:[%s10169 + $0x7c] sm:$0xf]
        %v10444 = vld [vmem:[%s10169 + $0x80] sm:$0x1]
        %v10445 = vld [vmem:[%s10169 + $0x84] sm:$0xf]
        %v10446 = vld [vmem:[%s10169 + $0x88] sm:$0xf]
        %v10447 = vld [vmem:[%s10169 + $0x8c] sm:$0x1]
        %v10448 = vld [vmem:[%s10169 + $0x90] sm:$0xf]
        %v10449 = vld [vmem:[%s10169 + $0x94] sm:$0xf]
        %v10450 = vld [vmem:[%s10169 + $0x98] sm:$0x1]
        %v10451 = vld [vmem:[%s10169 + $0x9c] sm:$0xf]
        %v10452 = vld [vmem:[%s10169 + $0xa0] sm:$0xf]
        %v10453 = vld [vmem:[%s10169 + $0xa4] sm:$0x1]
        %v10454 = vld [vmem:[%s10169 + $0xa8] sm:$0xf]
        %v10455 = vld [vmem:[%s10169 + $0xac] sm:$0xf]
        %v10456 = vld [vmem:[%s10169 + $0xb0] sm:$0x1]
        %v10457 = vld [vmem:[%s10169 + $0xb4] sm:$0xf]
        %v10458 = vld [vmem:[%s10169 + $0xb8] sm:$0xf]
        %v10459 = vld [vmem:[%s10169 + $0xbc] sm:$0x1]
        %v10461 = vshrl.u32 %v10412, 16
        %v10463 = vrot.slane %v10461, 4
        %v10464 = vshll.u32 %v10412, 16
        %v10466 = vrot.slane %v10464, 5
        %v10467 = vor.u32 %v10463, %v10466
        %v10468 = vrot.slane %v10467, 4
        %v10470 = vshll.u32 %v10413, 16
        %v10472 = vrot.slane %v10470, 5
        %v10473 = vsel %vm1098, %v10468, %v10472
        %v10474 = vshrl.u32 %v10413, 16
        %v10476 = vrot.slane %v10474, 4
        %v10477 = vor.u32 %v10476, %v10472
        %v10478 = vrot.slane %v10477, 4
        %v10480 = vshll.u32 %v10414, 16
        %v10482 = vrot.slane %v10480, 5
        %v10483 = vsel %vm1098, %v10478, %v10482
        %v10485 = vshrl.u32 %v10415, 16
        %v10487 = vrot.slane %v10485, 4
        %v10488 = vshll.u32 %v10415, 16
        %v10490 = vrot.slane %v10488, 5
        %v10491 = vor.u32 %v10487, %v10490
        %v10492 = vrot.slane %v10491, 4
        %v10494 = vshll.u32 %v10416, 16
        %v10496 = vrot.slane %v10494, 5
        %v10497 = vsel %vm1098, %v10492, %v10496
        %v10498 = vshrl.u32 %v10416, 16
        %v10500 = vrot.slane %v10498, 4
        %v10501 = vor.u32 %v10500, %v10496
        %v10502 = vrot.slane %v10501, 4
        %v10504 = vshll.u32 %v10417, 16
        %v10506 = vrot.slane %v10504, 5
        %v10507 = vsel %vm1098, %v10502, %v10506
        %v10509 = vshrl.u32 %v10418, 16
        %v10511 = vrot.slane %v10509, 4
        %v10512 = vshll.u32 %v10418, 16
        %v10514 = vrot.slane %v10512, 5
        %v10515 = vor.u32 %v10511, %v10514
        %v10516 = vrot.slane %v10515, 4
        %v10518 = vshll.u32 %v10419, 16
        %v10520 = vrot.slane %v10518, 5
        %v10521 = vsel %vm1098, %v10516, %v10520
        %v10522 = vshrl.u32 %v10419, 16
        %v10524 = vrot.slane %v10522, 4
        %v10525 = vor.u32 %v10524, %v10520
        %v10526 = vrot.slane %v10525, 4
        %v10528 = vshll.u32 %v10420, 16
        %v10530 = vrot.slane %v10528, 5
        %v10531 = vsel %vm1098, %v10526, %v10530
        %v10533 = vshrl.u32 %v10421, 16
        %v10535 = vrot.slane %v10533, 4
        %v10536 = vshll.u32 %v10421, 16
        %v10538 = vrot.slane %v10536, 5
        %v10539 = vor.u32 %v10535, %v10538
        %v10540 = vrot.slane %v10539, 4
        %v10542 = vshll.u32 %v10422, 16
        %v10544 = vrot.slane %v10542, 5
        %v10545 = vsel %vm1098, %v10540, %v10544
        %v10546 = vshrl.u32 %v10422, 16
        %v10548 = vrot.slane %v10546, 4
        %v10549 = vor.u32 %v10548, %v10544
        %v10550 = vrot.slane %v10549, 4
        %v10552 = vshll.u32 %v10423, 16
        %v10554 = vrot.slane %v10552, 5
        %v10555 = vsel %vm1098, %v10550, %v10554
        %v10557 = vshrl.u32 %v10424, 16
        %v10559 = vrot.slane %v10557, 4
        %v10560 = vshll.u32 %v10424, 16
        %v10562 = vrot.slane %v10560, 5
        %v10563 = vor.u32 %v10559, %v10562
        %v10564 = vrot.slane %v10563, 4
        %v10566 = vshll.u32 %v10425, 16
        %v10568 = vrot.slane %v10566, 5
        %v10569 = vsel %vm1098, %v10564, %v10568
        %v10570 = vshrl.u32 %v10425, 16
        %v10572 = vrot.slane %v10570, 4
        %v10573 = vor.u32 %v10572, %v10568
        %v10574 = vrot.slane %v10573, 4
        %v10576 = vshll.u32 %v10426, 16
        %v10578 = vrot.slane %v10576, 5
        %v10579 = vsel %vm1098, %v10574, %v10578
        %v10581 = vshrl.u32 %v10427, 16
        %v10583 = vrot.slane %v10581, 4
        %v10584 = vshll.u32 %v10427, 16
        %v10586 = vrot.slane %v10584, 5
        %v10587 = vor.u32 %v10583, %v10586
        %v10588 = vrot.slane %v10587, 4
        %v10590 = vshll.u32 %v10428, 16
        %v10592 = vrot.slane %v10590, 5
        %v10593 = vsel %vm1098, %v10588, %v10592
        %v10594 = vshrl.u32 %v10428, 16
        %v10596 = vrot.slane %v10594, 4
        %v10597 = vor.u32 %v10596, %v10592
        %v10598 = vrot.slane %v10597, 4
        %v10600 = vshll.u32 %v10429, 16
        %v10602 = vrot.slane %v10600, 5
        %v10603 = vsel %vm1098, %v10598, %v10602
        %v10605 = vshrl.u32 %v10430, 16
        %v10607 = vrot.slane %v10605, 4
        %v10608 = vshll.u32 %v10430, 16
        %v10610 = vrot.slane %v10608, 5
        %v10611 = vor.u32 %v10607, %v10610
        %v10612 = vrot.slane %v10611, 4
        %v10614 = vshll.u32 %v10431, 16
        %v10616 = vrot.slane %v10614, 5
        %v10617 = vsel %vm1098, %v10612, %v10616
        %v10618 = vshrl.u32 %v10431, 16
        %v10620 = vrot.slane %v10618, 4
        %v10621 = vor.u32 %v10620, %v10616
        %v10622 = vrot.slane %v10621, 4
        %v10624 = vshll.u32 %v10432, 16
        %v10626 = vrot.slane %v10624, 5
        %v10627 = vsel %vm1098, %v10622, %v10626
        %v10629 = vshrl.u32 %v10433, 16
        %v10631 = vrot.slane %v10629, 4
        %v10632 = vshll.u32 %v10433, 16
        %v10634 = vrot.slane %v10632, 5
        %v10635 = vor.u32 %v10631, %v10634
        %v10636 = vrot.slane %v10635, 4
        %v10638 = vshll.u32 %v10434, 16
        %v10640 = vrot.slane %v10638, 5
        %v10641 = vsel %vm1098, %v10636, %v10640
        %v10642 = vshrl.u32 %v10434, 16
        %v10644 = vrot.slane %v10642, 4
        %v10645 = vor.u32 %v10644, %v10640
        %v10646 = vrot.slane %v10645, 4
        %v10648 = vshll.u32 %v10435, 16
        %v10650 = vrot.slane %v10648, 5
        %v10651 = vsel %vm1098, %v10646, %v10650
        %v10653 = vshrl.u32 %v10436, 16
        %v10655 = vrot.slane %v10653, 4
        %v10656 = vshll.u32 %v10436, 16
        %v10658 = vrot.slane %v10656, 5
        %v10659 = vor.u32 %v10655, %v10658
        %v10660 = vrot.slane %v10659, 4
        %v10662 = vshll.u32 %v10437, 16
        %v10664 = vrot.slane %v10662, 5
        %v10665 = vsel %vm1098, %v10660, %v10664
        %v10666 = vshrl.u32 %v10437, 16
        %v10668 = vrot.slane %v10666, 4
        %v10669 = vor.u32 %v10668, %v10664
        %v10670 = vrot.slane %v10669, 4
        %v10672 = vshll.u32 %v10438, 16
        %v10674 = vrot.slane %v10672, 5
        %v10675 = vsel %vm1098, %v10670, %v10674
        %v10677 = vshrl.u32 %v10439, 16
        %v10679 = vrot.slane %v10677, 4
        %v10680 = vshll.u32 %v10439, 16
        %v10682 = vrot.slane %v10680, 5
        %v10683 = vor.u32 %v10679, %v10682
        %v10684 = vrot.slane %v10683, 4
        %v10686 = vshll.u32 %v10440, 16
        %v10688 = vrot.slane %v10686, 5
        %v10689 = vsel %vm1098, %v10684, %v10688
        %v10690 = vshrl.u32 %v10440, 16
        %v10692 = vrot.slane %v10690, 4
        %v10693 = vor.u32 %v10692, %v10688
        %v10694 = vrot.slane %v10693, 4
        %v10696 = vshll.u32 %v10441, 16
        %v10698 = vrot.slane %v10696, 5
        %v10699 = vsel %vm1098, %v10694, %v10698
        %v10701 = vshrl.u32 %v10442, 16
        %v10703 = vrot.slane %v10701, 4
        %v10704 = vshll.u32 %v10442, 16
        %v10706 = vrot.slane %v10704, 5
        %v10707 = vor.u32 %v10703, %v10706
        %v10708 = vrot.slane %v10707, 4
        %v10710 = vshll.u32 %v10443, 16
        %v10712 = vrot.slane %v10710, 5
        %v10713 = vsel %vm1098, %v10708, %v10712
        %v10714 = vshrl.u32 %v10443, 16
        %v10716 = vrot.slane %v10714, 4
        %v10717 = vor.u32 %v10716, %v10712
        %v10718 = vrot.slane %v10717, 4
        %v10720 = vshll.u32 %v10444, 16
        %v10722 = vrot.slane %v10720, 5
        %v10723 = vsel %vm1098, %v10718, %v10722
        %v10725 = vshrl.u32 %v10445, 16
        %v10727 = vrot.slane %v10725, 4
        %v10728 = vshll.u32 %v10445, 16
        %v10730 = vrot.slane %v10728, 5
        %v10731 = vor.u32 %v10727, %v10730
        %v10732 = vrot.slane %v10731, 4
        %v10734 = vshll.u32 %v10446, 16
        %v10736 = vrot.slane %v10734, 5
        %v10737 = vsel %vm1098, %v10732, %v10736
        %v10738 = vshrl.u32 %v10446, 16
        %v10740 = vrot.slane %v10738, 4
        %v10741 = vor.u32 %v10740, %v10736
        %v10742 = vrot.slane %v10741, 4
        %v10744 = vshll.u32 %v10447, 16
        %v10746 = vrot.slane %v10744, 5
        %v10747 = vsel %vm1098, %v10742, %v10746
        %v10749 = vshrl.u32 %v10448, 16
        %v10751 = vrot.slane %v10749, 4
        %v10752 = vshll.u32 %v10448, 16
        %v10754 = vrot.slane %v10752, 5
        %v10755 = vor.u32 %v10751, %v10754
        %v10756 = vrot.slane %v10755, 4
        %v10758 = vshll.u32 %v10449, 16
        %v10760 = vrot.slane %v10758, 5
        %v10761 = vsel %vm1098, %v10756, %v10760
        %v10762 = vshrl.u32 %v10449, 16
        %v10764 = vrot.slane %v10762, 4
        %v10765 = vor.u32 %v10764, %v10760
        %v10766 = vrot.slane %v10765, 4
        %v10768 = vshll.u32 %v10450, 16
        %v10770 = vrot.slane %v10768, 5
        %v10771 = vsel %vm1098, %v10766, %v10770
        %v10773 = vshrl.u32 %v10451, 16
        %v10775 = vrot.slane %v10773, 4
        %v10776 = vshll.u32 %v10451, 16
        %v10778 = vrot.slane %v10776, 5
        %v10779 = vor.u32 %v10775, %v10778
        %v10780 = vrot.slane %v10779, 4
        %v10782 = vshll.u32 %v10452, 16
        %v10784 = vrot.slane %v10782, 5
        %v10785 = vsel %vm1098, %v10780, %v10784
        %v10786 = vshrl.u32 %v10452, 16
        %v10788 = vrot.slane %v10786, 4
        %v10789 = vor.u32 %v10788, %v10784
        %v10790 = vrot.slane %v10789, 4
        %v10792 = vshll.u32 %v10453, 16
        %v10794 = vrot.slane %v10792, 5
        %v10795 = vsel %vm1098, %v10790, %v10794
        %v10797 = vshrl.u32 %v10454, 16
        %v10799 = vrot.slane %v10797, 4
        %v10800 = vshll.u32 %v10454, 16
        %v10802 = vrot.slane %v10800, 5
        %v10803 = vor.u32 %v10799, %v10802
        %v10804 = vrot.slane %v10803, 4
        %v10806 = vshll.u32 %v10455, 16
        %v10808 = vrot.slane %v10806, 5
        %v10809 = vsel %vm1098, %v10804, %v10808
        %v10810 = vshrl.u32 %v10455, 16
        %v10812 = vrot.slane %v10810, 4
        %v10813 = vor.u32 %v10812, %v10808
        %v10814 = vrot.slane %v10813, 4
        %v10816 = vshll.u32 %v10456, 16
        %v10818 = vrot.slane %v10816, 5
        %v10819 = vsel %vm1098, %v10814, %v10818
        %v10821 = vshrl.u32 %v10457, 16
        %v10823 = vrot.slane %v10821, 4
        %v10824 = vshll.u32 %v10457, 16
        %v10826 = vrot.slane %v10824, 5
        %v10827 = vor.u32 %v10823, %v10826
        %v10828 = vrot.slane %v10827, 4
        %v10830 = vshll.u32 %v10458, 16
        %v10832 = vrot.slane %v10830, 5
        %v10833 = vsel %vm1098, %v10828, %v10832
        %v10834 = vshrl.u32 %v10458, 16
        %v10836 = vrot.slane %v10834, 4
        %v10837 = vor.u32 %v10836, %v10832
        %v10838 = vrot.slane %v10837, 4
        %v10840 = vshll.u32 %v10459, 16
        %v10842 = vrot.slane %v10840, 5
        %v10843 = vsel %vm1098, %v10838, %v10842
        %s10844 = scalar_lea.vmem %s7, 112
        %v10845 = vld [vmem:[%s10844] sm:$0xf]
        %v10846 = vld [vmem:[%s10844 + $0x4] sm:$0xf]
        %v10847 = vld [vmem:[%s10844 + $0x8] sm:$0xf]
        %v10848 = vld [vmem:[%s10844 + $0xc] sm:$0xf]
        %v10853 = vunpack.c.l.b16 %v10845
        %v10854 = vunpack.c.l.b16 %v10846
        %v10855 = vunpack.c.l.b16 %v10847
        %v10856 = vunpack.c.l.b16 %v10848
        %v10857 = vpack.c.b16 %v10854, %v10853
        %v10858 = vpack.c.b16 %v10856, %v10855
        %v10859 = vunpack.c.l.b16 %v10473
        %v10860 = vunpack.c.l.b16 %v10483
        %v10861 = vunpack.c.l.b16 %v10497
        %v10862 = vunpack.c.l.b16 %v10507
        %v10863 = vunpack.c.l.b16 %v10521
        %v10864 = vunpack.c.l.b16 %v10531
        %v10865 = vunpack.c.l.b16 %v10545
        %v10866 = vunpack.c.l.b16 %v10555
        %v10867 = vunpack.c.l.b16 %v10569
        %v10868 = vunpack.c.l.b16 %v10579
        %v10869 = vunpack.c.l.b16 %v10593
        %v10870 = vunpack.c.l.b16 %v10603
        %v10871 = vunpack.c.l.b16 %v10617
        %v10872 = vunpack.c.l.b16 %v10627
        %v10873 = vunpack.c.l.b16 %v10641
        %v10874 = vunpack.c.l.b16 %v10651
        %v10875 = vunpack.c.l.b16 %v10665
        %v10876 = vunpack.c.l.b16 %v10675
        %v10877 = vunpack.c.l.b16 %v10689
        %v10878 = vunpack.c.l.b16 %v10699
        %v10879 = vunpack.c.l.b16 %v10713
        %v10880 = vunpack.c.l.b16 %v10723
        %v10881 = vunpack.c.l.b16 %v10737
        %v10882 = vunpack.c.l.b16 %v10747
        %v10883 = vunpack.c.l.b16 %v10761
        %v10884 = vunpack.c.l.b16 %v10771
        %v10885 = vunpack.c.l.b16 %v10785
        %v10886 = vunpack.c.l.b16 %v10795
        %v10887 = vunpack.c.l.b16 %v10809
        %v10888 = vunpack.c.l.b16 %v10819
        %v10889 = vunpack.c.l.b16 %v10833
        %v10890 = vunpack.c.l.b16 %v10843
        %v10891 = vpack.c.b16 %v10860, %v10859
        %v10892 = vpack.c.b16 %v10862, %v10861
        %v10893 = vpack.c.b16 %v10864, %v10863
        %v10894 = vpack.c.b16 %v10866, %v10865
        %v10895 = vpack.c.b16 %v10868, %v10867
        %v10896 = vpack.c.b16 %v10870, %v10869
        %v10897 = vpack.c.b16 %v10872, %v10871
        %v10898 = vpack.c.b16 %v10874, %v10873
        %v10899 = vpack.c.b16 %v10876, %v10875
        %v10900 = vpack.c.b16 %v10878, %v10877
        %v10901 = vpack.c.b16 %v10880, %v10879
        %v10902 = vpack.c.b16 %v10882, %v10881
        %v10903 = vpack.c.b16 %v10884, %v10883
        %v10904 = vpack.c.b16 %v10886, %v10885
        %v10905 = vpack.c.b16 %v10888, %v10887
        %v10906 = vpack.c.b16 %v10890, %v10889
        %v10908 = vsel %vm5788, %v10857, 0
        %v10911 = vsel %vm5788, %v10858, 0
        %v10914 = vsel %vm5788, %v10891, 0
        %v10917 = vsel %vm5788, %v10892, 0
        %v10920 = vsel %vm5788, %v10893, 0
        %v10923 = vsel %vm5788, %v10894, 0
        %v10926 = vsel %vm5788, %v10895, 0
        %v10929 = vsel %vm5788, %v10896, 0
        %v10932 = vsel %vm5788, %v10897, 0
        %v10935 = vsel %vm5788, %v10898, 0
        %v10938 = vsel %vm5788, %v10899, 0
        %v10941 = vsel %vm5788, %v10900, 0
        %v10944 = vsel %vm5788, %v10901, 0
        %v10947 = vsel %vm5788, %v10902, 0
        %v10950 = vsel %vm5788, %v10903, 0
        %v10953 = vsel %vm5788, %v10904, 0
        %v10956 = vsel %vm5788, %v10905, 0
        %v10959 = vsel %vm5788, %v10906, 0
        %10961 = vmatprep.subr.bf16.mxu0 0
        %10962 = vmatpush1.bf16.xpose.msra.mxu0 %v10914
        %10963 = vmatprep.subr.bf16.mxu0 0
        %10964 = vmatpush1.bf16.xpose.msra.mxu0 %v10917
        %10965 = vmatprep.subr.bf16.mxu0 0
        %10966 = vmatpush1.bf16.xpose.msra.mxu0 %v10920
        %10967 = vmatprep.subr.bf16.mxu0 0
        %10968 = vmatpush1.bf16.xpose.msra.mxu0 %v10923
        %10969 = vmatprep.subr.bf16.mxu0 0
        %10970 = vmatpush1.bf16.xpose.msra.mxu0 %v10926
        %10971 = vmatprep.subr.bf16.mxu0 0
        %10972 = vmatpush1.bf16.xpose.msra.mxu0 %v10929
        %10973 = vmatprep.subr.bf16.mxu0 0
        %10974 = vmatpush1.bf16.xpose.msra.mxu0 %v10932
        %10975 = vmatprep.subr.bf16.mxu0 0
        %10976 = vmatpush1.bf16.xpose.msra.mxu0 %v10935
        %10977 = vmatprep.subr.bf16.mxu0 0
        %10978 = vmatpush1.bf16.xpose.msra.mxu0 %v10938
        %10979 = vmatprep.subr.bf16.mxu0 0
        %10980 = vmatpush1.bf16.xpose.msra.mxu0 %v10941
        %10981 = vmatprep.subr.bf16.mxu0 0
        %10982 = vmatpush1.bf16.xpose.msra.mxu0 %v10944
        %10983 = vmatprep.subr.bf16.mxu0 0
        %10984 = vmatpush1.bf16.xpose.msra.mxu0 %v10947
        %10985 = vmatprep.subr.bf16.mxu0 0
        %10986 = vmatpush1.bf16.xpose.msra.mxu0 %v10950
        %10987 = vmatprep.subr.bf16.mxu0 0
        %10988 = vmatpush1.bf16.xpose.msra.mxu0 %v10953
        %10989 = vmatprep.subr.bf16.mxu0 0
        %10990 = vmatpush1.bf16.xpose.msra.mxu0 %v10956
        %10991 = vmatprep.subr.bf16.mxu0 0
        %10992 = vmatpush1.bf16.xpose.msra.mxu0 %v10959
        %10993 = vmatprep.mubr.bf16.mxu0 0
        %10994 = vmatmul.mubr.bf16.gmra.mrb[0].mxu0 %v10908
        %v10995 = vpop.f32.mrb[0].mxu0
        %v10996 = vadd.f32 0.0, %v10995
        %v10997 = vpop.f32.mrb[0].mxu0
        %v10998 = vadd.f32 0.0, %v10997
        %v10999 = vpop.f32.mrb[0].mxu0
        %v11000 = vadd.f32 0.0, %v10999
        %v11001 = vpop.f32.mrb[0].mxu0
        %v11002 = vadd.f32 0.0, %v11001
        %11003 = vmatprep.mubr.bf16.mxu0 0
        %11004 = vmatmul.mubr.bf16.gmra.mrb[0].mxu0 %v10911
        %v11005 = vpop.f32.mrb[0].mxu0
        %v11006 = vadd.f32 0.0, %v11005
        %v11007 = vpop.f32.mrb[0].mxu0
        %v11008 = vadd.f32 0.0, %v11007
        %v11009 = vpop.f32.mrb[0].mxu0
        %v11010 = vadd.f32 0.0, %v11009
        %v11011 = vpop.f32.mrb[0].mxu0
        %v11012 = vadd.f32 0.0, %v11011
        %11013 = vdwg.mxu0
        %v11014 = vadd.f32 %v10404, %v10996
        %v11015 = vadd.f32 %v10405, %v10998
        %v11016 = vadd.f32 %v10406, %v11000
        %v11017 = vadd.f32 %v10407, %v11002
        %v11018 = vadd.f32 %v10408, %v11006
        %v11019 = vadd.f32 %v10409, %v11008
        %v11020 = vadd.f32 %v10410, %v11010
        %v11021 = vadd.f32 %v10411, %v11012
        %v11022 = vld [vmem:[%s10169] sm:$0xe]
        %v11023 = vld [vmem:[%s10169 + $0xc] sm:$0xe]
        %v11024 = vld [vmem:[%s10169 + $0x18] sm:$0xe]
        %v11025 = vld [vmem:[%s10169 + $0x24] sm:$0xe]
        %v11026 = vld [vmem:[%s10169 + $0x30] sm:$0xe]
        %v11027 = vld [vmem:[%s10169 + $0x3c] sm:$0xe]
        %v11028 = vld [vmem:[%s10169 + $0x48] sm:$0xe]
        %v11029 = vld [vmem:[%s10169 + $0x54] sm:$0xe]
        %v11030 = vld [vmem:[%s10169 + $0x60] sm:$0xe]
        %v11031 = vld [vmem:[%s10169 + $0x6c] sm:$0xe]
        %v11032 = vld [vmem:[%s10169 + $0x78] sm:$0xe]
        %v11033 = vld [vmem:[%s10169 + $0x84] sm:$0xe]
        %v11034 = vld [vmem:[%s10169 + $0x90] sm:$0xe]
        %v11035 = vld [vmem:[%s10169 + $0x9c] sm:$0xe]
        %v11036 = vld [vmem:[%s10169 + $0xa8] sm:$0xe]
        %v11037 = vld [vmem:[%s10169 + $0xb4] sm:$0xe]
        %v11086 = vrot.slane %v11022, 5
        %v11087 = vrot.slane %v11086, 4
        %v11088 = vrot.slane %v10413, 5
        %v11089 = vsel %vm2089, %v11087, %v11088
        %v11090 = vrot.slane %v11088, 4
        %v11091 = vrot.slane %v10414, 5
        %v11092 = vsel %vm2089, %v11090, %v11091
        %v11093 = vrot.slane %v11023, 5
        %v11094 = vrot.slane %v11093, 4
        %v11095 = vrot.slane %v10416, 5
        %v11096 = vsel %vm2089, %v11094, %v11095
        %v11097 = vrot.slane %v11095, 4
        %v11098 = vrot.slane %v10417, 5
        %v11099 = vsel %vm2089, %v11097, %v11098
        %v11100 = vrot.slane %v11024, 5
        %v11101 = vrot.slane %v11100, 4
        %v11102 = vrot.slane %v10419, 5
        %v11103 = vsel %vm2089, %v11101, %v11102
        %v11104 = vrot.slane %v11102, 4
        %v11105 = vrot.slane %v10420, 5
        %v11106 = vsel %vm2089, %v11104, %v11105
        %v11107 = vrot.slane %v11025, 5
        %v11108 = vrot.slane %v11107, 4
        %v11109 = vrot.slane %v10422, 5
        %v11110 = vsel %vm2089, %v11108, %v11109
        %v11111 = vrot.slane %v11109, 4
        %v11112 = vrot.slane %v10423, 5
        %v11113 = vsel %vm2089, %v11111, %v11112
        %v11114 = vrot.slane %v11026, 5
        %v11115 = vrot.slane %v11114, 4
        %v11116 = vrot.slane %v10425, 5
        %v11117 = vsel %vm2089, %v11115, %v11116
        %v11118 = vrot.slane %v11116, 4
        %v11119 = vrot.slane %v10426, 5
        %v11120 = vsel %vm2089, %v11118, %v11119
        %v11121 = vrot.slane %v11027, 5
        %v11122 = vrot.slane %v11121, 4
        %v11123 = vrot.slane %v10428, 5
        %v11124 = vsel %vm2089, %v11122, %v11123
        %v11125 = vrot.slane %v11123, 4
        %v11126 = vrot.slane %v10429, 5
        %v11127 = vsel %vm2089, %v11125, %v11126
        %v11128 = vrot.slane %v11028, 5
        %v11129 = vrot.slane %v11128, 4
        %v11130 = vrot.slane %v10431, 5
        %v11131 = vsel %vm2089, %v11129, %v11130
        %v11132 = vrot.slane %v11130, 4
        %v11133 = vrot.slane %v10432, 5
        %v11134 = vsel %vm2089, %v11132, %v11133
        %v11135 = vrot.slane %v11029, 5
        %v11136 = vrot.slane %v11135, 4
        %v11137 = vrot.slane %v10434, 5
        %v11138 = vsel %vm2089, %v11136, %v11137
        %v11139 = vrot.slane %v11137, 4
        %v11140 = vrot.slane %v10435, 5
        %v11141 = vsel %vm2089, %v11139, %v11140
        %v11142 = vrot.slane %v11030, 5
        %v11143 = vrot.slane %v11142, 4
        %v11144 = vrot.slane %v10437, 5
        %v11145 = vsel %vm2089, %v11143, %v11144
        %v11146 = vrot.slane %v11144, 4
        %v11147 = vrot.slane %v10438, 5
        %v11148 = vsel %vm2089, %v11146, %v11147
        %v11149 = vrot.slane %v11031, 5
        %v11150 = vrot.slane %v11149, 4
        %v11151 = vrot.slane %v10440, 5
        %v11152 = vsel %vm2089, %v11150, %v11151
        %v11153 = vrot.slane %v11151, 4
        %v11154 = vrot.slane %v10441, 5
        %v11155 = vsel %vm2089, %v11153, %v11154
        %v11156 = vrot.slane %v11032, 5
        %v11157 = vrot.slane %v11156, 4
        %v11158 = vrot.slane %v10443, 5
        %v11159 = vsel %vm2089, %v11157, %v11158
        %v11160 = vrot.slane %v11158, 4
        %v11161 = vrot.slane %v10444, 5
        %v11162 = vsel %vm2089, %v11160, %v11161
        %v11163 = vrot.slane %v11033, 5
        %v11164 = vrot.slane %v11163, 4
        %v11165 = vrot.slane %v10446, 5
        %v11166 = vsel %vm2089, %v11164, %v11165
        %v11167 = vrot.slane %v11165, 4
        %v11168 = vrot.slane %v10447, 5
        %v11169 = vsel %vm2089, %v11167, %v11168
        %v11170 = vrot.slane %v11034, 5
        %v11171 = vrot.slane %v11170, 4
        %v11172 = vrot.slane %v10449, 5
        %v11173 = vsel %vm2089, %v11171, %v11172
        %v11174 = vrot.slane %v11172, 4
        %v11175 = vrot.slane %v10450, 5
        %v11176 = vsel %vm2089, %v11174, %v11175
        %v11177 = vrot.slane %v11035, 5
        %v11178 = vrot.slane %v11177, 4
        %v11179 = vrot.slane %v10452, 5
        %v11180 = vsel %vm2089, %v11178, %v11179
        %v11181 = vrot.slane %v11179, 4
        %v11182 = vrot.slane %v10453, 5
        %v11183 = vsel %vm2089, %v11181, %v11182
        %v11184 = vrot.slane %v11036, 5
        %v11185 = vrot.slane %v11184, 4
        %v11186 = vrot.slane %v10455, 5
        %v11187 = vsel %vm2089, %v11185, %v11186
        %v11188 = vrot.slane %v11186, 4
        %v11189 = vrot.slane %v10456, 5
        %v11190 = vsel %vm2089, %v11188, %v11189
        %v11191 = vrot.slane %v11037, 5
        %v11192 = vrot.slane %v11191, 4
        %v11193 = vrot.slane %v10458, 5
        %v11194 = vsel %vm2089, %v11192, %v11193
        %v11195 = vrot.slane %v11193, 4
        %v11196 = vrot.slane %v10459, 5
        %v11197 = vsel %vm2089, %v11195, %v11196
        %s11198 = scalar_lea.vmem %s7, 128
        %v11199 = vld [vmem:[%s11198] sm:$0xf]
        %v11200 = vld [vmem:[%s11198 + $0x4] sm:$0xf]
        %v11201 = vld [vmem:[%s11198 + $0x8] sm:$0xf]
        %v11202 = vld [vmem:[%s11198 + $0xc] sm:$0xf]
        %v11207 = vunpack.c.l.b16 %v11199
        %v11208 = vunpack.c.l.b16 %v11200
        %v11209 = vunpack.c.l.b16 %v11201
        %v11210 = vunpack.c.l.b16 %v11202
        %v11211 = vpack.c.b16 %v11208, %v11207
        %v11212 = vpack.c.b16 %v11210, %v11209
        %v11213 = vunpack.c.l.b16 %v11089
        %v11214 = vunpack.c.l.b16 %v11092
        %v11215 = vunpack.c.l.b16 %v11096
        %v11216 = vunpack.c.l.b16 %v11099
        %v11217 = vunpack.c.l.b16 %v11103
        %v11218 = vunpack.c.l.b16 %v11106
        %v11219 = vunpack.c.l.b16 %v11110
        %v11220 = vunpack.c.l.b16 %v11113
        %v11221 = vunpack.c.l.b16 %v11117
        %v11222 = vunpack.c.l.b16 %v11120
        %v11223 = vunpack.c.l.b16 %v11124
        %v11224 = vunpack.c.l.b16 %v11127
        %v11225 = vunpack.c.l.b16 %v11131
        %v11226 = vunpack.c.l.b16 %v11134
        %v11227 = vunpack.c.l.b16 %v11138
        %v11228 = vunpack.c.l.b16 %v11141
        %v11229 = vunpack.c.l.b16 %v11145
        %v11230 = vunpack.c.l.b16 %v11148
        %v11231 = vunpack.c.l.b16 %v11152
        %v11232 = vunpack.c.l.b16 %v11155
        %v11233 = vunpack.c.l.b16 %v11159
        %v11234 = vunpack.c.l.b16 %v11162
        %v11235 = vunpack.c.l.b16 %v11166
        %v11236 = vunpack.c.l.b16 %v11169
        %v11237 = vunpack.c.l.b16 %v11173
        %v11238 = vunpack.c.l.b16 %v11176
        %v11239 = vunpack.c.l.b16 %v11180
        %v11240 = vunpack.c.l.b16 %v11183
        %v11241 = vunpack.c.l.b16 %v11187
        %v11242 = vunpack.c.l.b16 %v11190
        %v11243 = vunpack.c.l.b16 %v11194
        %v11244 = vunpack.c.l.b16 %v11197
        %v11245 = vpack.c.b16 %v11214, %v11213
        %v11246 = vpack.c.b16 %v11216, %v11215
        %v11247 = vpack.c.b16 %v11218, %v11217
        %v11248 = vpack.c.b16 %v11220, %v11219
        %v11249 = vpack.c.b16 %v11222, %v11221
        %v11250 = vpack.c.b16 %v11224, %v11223
        %v11251 = vpack.c.b16 %v11226, %v11225
        %v11252 = vpack.c.b16 %v11228, %v11227
        %v11253 = vpack.c.b16 %v11230, %v11229
        %v11254 = vpack.c.b16 %v11232, %v11231
        %v11255 = vpack.c.b16 %v11234, %v11233
        %v11256 = vpack.c.b16 %v11236, %v11235
        %v11257 = vpack.c.b16 %v11238, %v11237
        %v11258 = vpack.c.b16 %v11240, %v11239
        %v11259 = vpack.c.b16 %v11242, %v11241
        %v11260 = vpack.c.b16 %v11244, %v11243
        %v11262 = vsel %vm5788, %v11211, 0
        %v11265 = vsel %vm5788, %v11212, 0
        %v11268 = vsel %vm5788, %v11245, 0
        %v11271 = vsel %vm5788, %v11246, 0
        %v11274 = vsel %vm5788, %v11247, 0
        %v11277 = vsel %vm5788, %v11248, 0
        %v11280 = vsel %vm5788, %v11249, 0
        %v11283 = vsel %vm5788, %v11250, 0
        %v11286 = vsel %vm5788, %v11251, 0
        %v11289 = vsel %vm5788, %v11252, 0
        %v11292 = vsel %vm5788, %v11253, 0
        %v11295 = vsel %vm5788, %v11254, 0
        %v11298 = vsel %vm5788, %v11255, 0
        %v11301 = vsel %vm5788, %v11256, 0
        %v11304 = vsel %vm5788, %v11257, 0
        %v11307 = vsel %vm5788, %v11258, 0
        %v11310 = vsel %vm5788, %v11259, 0
        %v11313 = vsel %vm5788, %v11260, 0
        %11315 = vmatprep.subr.bf16.mxu0 0
        %11316 = vmatpush1.bf16.xpose.msra.mxu0 %v11268
        %11317 = vmatprep.subr.bf16.mxu0 0
        %11318 = vmatpush1.bf16.xpose.msra.mxu0 %v11271
        %11319 = vmatprep.subr.bf16.mxu0 0
        %11320 = vmatpush1.bf16.xpose.msra.mxu0 %v11274
        %11321 = vmatprep.subr.bf16.mxu0 0
        %11322 = vmatpush1.bf16.xpose.msra.mxu0 %v11277
        %11323 = vmatprep.subr.bf16.mxu0 0
        %11324 = vmatpush1.bf16.xpose.msra.mxu0 %v11280
        %11325 = vmatprep.subr.bf16.mxu0 0
        %11326 = vmatpush1.bf16.xpose.msra.mxu0 %v11283
        %11327 = vmatprep.subr.bf16.mxu0 0
        %11328 = vmatpush1.bf16.xpose.msra.mxu0 %v11286
        %11329 = vmatprep.subr.bf16.mxu0 0
        %11330 = vmatpush1.bf16.xpose.msra.mxu0 %v11289
        %11331 = vmatprep.subr.bf16.mxu0 0
        %11332 = vmatpush1.bf16.xpose.msra.mxu0 %v11292
        %11333 = vmatprep.subr.bf16.mxu0 0
        %11334 = vmatpush1.bf16.xpose.msra.mxu0 %v11295
        %11335 = vmatprep.subr.bf16.mxu0 0
        %11336 = vmatpush1.bf16.xpose.msra.mxu0 %v11298
        %11337 = vmatprep.subr.bf16.mxu0 0
        %11338 = vmatpush1.bf16.xpose.msra.mxu0 %v11301
        %11339 = vmatprep.subr.bf16.mxu0 0
        %11340 = vmatpush1.bf16.xpose.msra.mxu0 %v11304
        %11341 = vmatprep.subr.bf16.mxu0 0
        %11342 = vmatpush1.bf16.xpose.msra.mxu0 %v11307
        %11343 = vmatprep.subr.bf16.mxu0 0
        %11344 = vmatpush1.bf16.xpose.msra.mxu0 %v11310
        %11345 = vmatprep.subr.bf16.mxu0 0
        %11346 = vmatpush1.bf16.xpose.msra.mxu0 %v11313
        %11347 = vmatprep.mubr.bf16.mxu0 0
        %11348 = vmatmul.mubr.bf16.gmra.mrb[0].mxu0 %v11262
        %v11349 = vpop.f32.mrb[0].mxu0
        %v11350 = vadd.f32 0.0, %v11349
        %v11351 = vpop.f32.mrb[0].mxu0
        %v11352 = vadd.f32 0.0, %v11351
        %v11353 = vpop.f32.mrb[0].mxu0
        %v11354 = vadd.f32 0.0, %v11353
        %v11355 = vpop.f32.mrb[0].mxu0
        %v11356 = vadd.f32 0.0, %v11355
        %11357 = vmatprep.mubr.bf16.mxu0 0
        %11358 = vmatmul.mubr.bf16.gmra.mrb[0].mxu0 %v11265
        %v11359 = vpop.f32.mrb[0].mxu0
        %v11360 = vadd.f32 0.0, %v11359
        %v11361 = vpop.f32.mrb[0].mxu0
        %v11362 = vadd.f32 0.0, %v11361
        %v11363 = vpop.f32.mrb[0].mxu0
        %v11364 = vadd.f32 0.0, %v11363
        %v11365 = vpop.f32.mrb[0].mxu0
        %v11366 = vadd.f32 0.0, %v11365
        %11367 = vdwg.mxu0
        %v11368 = vadd.f32 %v11014, %v11350
        %v11369 = vadd.f32 %v11015, %v11352
        %v11370 = vadd.f32 %v11016, %v11354
        %v11371 = vadd.f32 %v11017, %v11356
        %v11372 = vadd.f32 %v11018, %v11360
        %v11373 = vadd.f32 %v11019, %v11362
        %v11374 = vadd.f32 %v11020, %v11364
        %v11375 = vadd.f32 %v11021, %v11366
        %v11376 = vld [vmem:[%s8] sm:$0xff]
        %v11377 = vld [vmem:[%s8 + $0x8] sm:$0xff]
        %v11378 = vld [vmem:[%s8 + $0x10] sm:$0xff]
        %v11379 = vld [vmem:[%s8 + $0x18] sm:$0xff]
        %11381 = vset.pattern.permute.xlu0 0
        %11382 = vperm.xlu0 %11381, %v11376
        %v11383 = vpop.permute.xlu0 %11382
        %11386 = vset.pattern.permute.xlu0 0
        %11387 = vperm.xlu0 %11386, %v11377
        %v11388 = vpop.permute.xlu0 %11387
        %11391 = vset.pattern.permute.xlu0 0
        %11392 = vperm.xlu0 %11391, %v11378
        %v11393 = vpop.permute.xlu0 %11392
        %11396 = vset.pattern.permute.xlu0 0
        %11397 = vperm.xlu0 %11396, %v11379
        %v11398 = vpop.permute.xlu0 %11397
        %v11400 = vmul.f32 %v11368, %v11383
        %v11401 = vmul.f32 %v11369, %v11383
        %v11402 = vmul.f32 %v11370, %v11388
        %v11403 = vmul.f32 %v11371, %v11388
        %v11404 = vmul.f32 %v11372, %v11393
        %v11405 = vmul.f32 %v11373, %v11393
        %v11406 = vmul.f32 %v11374, %v11398
        %v11407 = vmul.f32 %v11375, %v11398
        %v11408 = vld [vmem:[%s9] sm:$0xff]
        %v11409 = vld [vmem:[%s9 + $0x8] sm:$0xff]
        %v11410 = vld [vmem:[%s9 + $0x10] sm:$0xff]
        %v11411 = vld [vmem:[%s9 + $0x18] sm:$0xff]
        %11413 = vset.pattern.permute.xlu0 0
        %11414 = vperm.xlu0 %11413, %v11408
        %v11415 = vpop.permute.xlu0 %11414
        %11418 = vset.pattern.permute.xlu0 0
        %11419 = vperm.xlu0 %11418, %v11409
        %v11420 = vpop.permute.xlu0 %11419
        %11423 = vset.pattern.permute.xlu0 0
        %11424 = vperm.xlu0 %11423, %v11410
        %v11425 = vpop.permute.xlu0 %11424
        %11428 = vset.pattern.permute.xlu0 0
        %11429 = vperm.xlu0 %11428, %v11411
        %v11430 = vpop.permute.xlu0 %11429
        %v11432 = vadd.f32 %v11400, %v11415
        %v11433 = vadd.f32 %v11401, %v11415
        %v11434 = vadd.f32 %v11402, %v11420
        %v11435 = vadd.f32 %v11403, %v11420
        %v11436 = vadd.f32 %v11404, %v11425
        %v11437 = vadd.f32 %v11405, %v11425
        %v11438 = vadd.f32 %v11406, %v11430
        %v11439 = vadd.f32 %v11407, %v11430
        %v11440 = vmax.f32 %v11432, 0.0
        %v11441 = vmax.f32 %v11433, 0.0
        %v11442 = vmax.f32 %v11434, 0.0
        %v11443 = vmax.f32 %v11435, 0.0
        %v11444 = vmax.f32 %v11436, 0.0
        %v11445 = vmax.f32 %v11437, 0.0
        %v11446 = vmax.f32 %v11438, 0.0
        %v11447 = vmax.f32 %v11439, 0.0
        %11448 = vst [vmem:[%s353] sm:$0xff] %v11440
        %11449 = vst [vmem:[%s353 + $0x8] sm:$0xff] %v11441
        %11450 = vst [vmem:[%s353 + $0x10] sm:$0xff] %v11442
        %11451 = vst [vmem:[%s353 + $0x18] sm:$0xff] %v11443
        %11452 = vst [vmem:[%s353 + $0x20] sm:$0xff] %v11444
        %11453 = vst [vmem:[%s353 + $0x28] sm:$0xff] %v11445
        %11454 = vst [vmem:[%s353 + $0x30] sm:$0xff] %v11446
        %11455 = vst [vmem:[%s353 + $0x38] sm:$0xff] %v11447
        %s11456 = sand.u32 %s248, 1
        %s11457 = scalar_lea.sflag [#allocation6], %s11456
        %s11458 = sand.u32 %s248, 1
        %s11459 = smul.addr %s11458, 64
        %s11460 = scalar_lea.vmem [#allocation5], %s11459
        // Predicated region
        $region61: #{tpu_custom_call.1} parent=59 // pred_check
          %p11461 = pneg %p258
        $region62: #{tpu_custom_call.1} parent=59 // pred_check_branch
          %11463 = sbr.rel (%p11461) target = $region64
        $region63: #{tpu_custom_call.1} parent=59 // pred_region
          %s11465 = ssub.s32 1024, 1024
          %11466 = vsyncadd %s11457, %s11465
          %s11467 = smul.addr %s25, 8
          %s11468 = smul.addr %s11467, 128
          %s11469 = scalar_lea.hbm %s10, %s11468
          %s11470 = sshll.u32 %s11460, 4
          %s11471 = int_to_ptr.vmem [resolvable:$true] %s11470
          %11476 = dma.vmem_to_hbm [thread:$0]  %s11471, 1024, %s11469, %s11457, 256, 256, 16
        $region64: #{tpu_custom_call.1} parent=59 // pred_fallthru
          _
      $region60: #{tpu_custom_call.1} parent=5 // pred_fallthru
        _
      %p11477 = scmp.le.s32.totalorder 2, %s20
      // Predicated region
      $region65: #{tpu_custom_call.1} parent=5 // pred_check
        %p11478 = pneg %p11477
      $region66: #{tpu_custom_call.1} parent=5 // pred_check_branch
        %11480 = sbr.rel (%p11478) target = $region68
      $region67: #{tpu_custom_call.1} parent=5 // pred_region
        %s11481 = ssub.s32 %s20, 2
        // Predicated region
        $region69: #{tpu_custom_call.1} parent=67 // pred_check
          %p11482 = pneg %p264
        $region70: #{tpu_custom_call.1} parent=67 // pred_check_branch
          %11484 = sbr.rel (%p11482) target = $region72
        $region71: #{tpu_custom_call.1} parent=67 // pred_region
          %s11485 = sand.u32 %s249, 1
          %s11486 = scalar_lea.sflag [#allocation6], %s11485
          %s11487 = sand.u32 %s249, 1
          %s11488 = smul.addr %s11487, 64
          %s11489 = scalar_lea.vmem [#allocation5], %s11488
          %11490 = dma.done %s11486, 1024
        $region72: #{tpu_custom_call.1} parent=67 // pred_fallthru
          _
      $region68: #{tpu_custom_call.1} parent=5 // pred_fallthru
        _
    $region6: #{tpu_custom_call.1} parent=1 // loop_footer
      %s24 = sadd.s32 1, %s20
    $region7: #{tpu_custom_call.1} parent=1 // loop_footer_branch
      %19 = sbr.rel target = $region3
    $region8: #{tpu_custom_call.1} parent=1 // loop_exit
      _
    %11491 = vsyncpa [#allocation6], 1
    %s11492 = scalar_lea.sflag [#allocation6], 1
    %11493 = vsyncpa %s11492, 1

</llo_original>
